<compile_context>
chip_gen: v6e
topology: v6e:2x2x1
jax: 0.10.0
libtpu: 0.0.40
codegen_flags: <defaults>
</compile_context>

<pallas_src>
import functools

import jax
import jax.numpy as jnp
from jax.experimental import pallas as pl
from jax.experimental.pallas import tpu as pltpu


def _choose_tile(n, max_tile=512):
    for t in (max_tile, 256, 128, 64, 32, 16, 8):
        if t <= n and n % t == 0:
            return t
    return n


# ---------------------------------------------------------------------------
# Kernel 1: STN point-MLP chain 3->64->128->1024 + max over points (fused)
# ---------------------------------------------------------------------------

def _stn_chain_kernel(x_ref, w1_ref, b1_ref, w2_ref, b2_ref, w3_ref, b3_ref,
                      gmax_ref):
    h = jnp.dot(x_ref[0].astype(jnp.bfloat16), w1_ref[...],
                preferred_element_type=jnp.float32) + b1_ref[...]
    h = jnp.maximum(h, 0.0)
    h = jnp.dot(h.astype(jnp.bfloat16), w2_ref[...],
                preferred_element_type=jnp.float32) + b2_ref[...]
    h = jnp.maximum(h, 0.0)
    h = jnp.dot(h.astype(jnp.bfloat16), w3_ref[...],
                preferred_element_type=jnp.float32) + b3_ref[...]
    h = jnp.maximum(h, 0.0)
    tmax = jnp.max(h, axis=0, keepdims=True)          # (1, 1024)

    @pl.when(pl.program_id(1) == 0)
    def _():
        gmax_ref[0] = tmax

    @pl.when(pl.program_id(1) > 0)
    def _():
        gmax_ref[0] = jnp.maximum(gmax_ref[0], tmax)


def stn_chain(x, w1, b1, w2, b2, w3, b3, tile_n):
    B, N, _ = x.shape
    nt = N // tile_n
    gmax = pl.pallas_call(
        _stn_chain_kernel,
        out_shape=jax.ShapeDtypeStruct((B, 1, 1024), jnp.float32),
        grid=(B, nt),
        in_specs=[
            pl.BlockSpec((1, tile_n, 3), lambda b, t: (b, t, 0)),
            pl.BlockSpec((3, 64), lambda b, t: (0, 0)),
            pl.BlockSpec((1, 64), lambda b, t: (0, 0)),
            pl.BlockSpec((64, 128), lambda b, t: (0, 0)),
            pl.BlockSpec((1, 128), lambda b, t: (0, 0)),
            pl.BlockSpec((128, 1024), lambda b, t: (0, 0)),
            pl.BlockSpec((1, 1024), lambda b, t: (0, 0)),
        ],
        out_specs=pl.BlockSpec((1, 1, 1024), lambda b, t: (b, 0, 0)),
        compiler_params=pltpu.CompilerParams(
            dimension_semantics=("parallel", "arbitrary")),
    )(x, w1, b1, w2, b2, w3, b3)
    return gmax.reshape(B, 1024)


# ---------------------------------------------------------------------------
# Kernel 2: fused STN FC head 1024->512->256->9 (identity folded into bias)
# ---------------------------------------------------------------------------

def _stn_fc_kernel(g_ref, w1_ref, b1_ref, w2_ref, b2_ref, w3_ref, b3_ref, o_ref):
    h = jnp.dot(g_ref[...].astype(jnp.bfloat16), w1_ref[...],
                preferred_element_type=jnp.float32) + b1_ref[...]
    h = jnp.maximum(h, 0.0)
    h = jnp.dot(h.astype(jnp.bfloat16), w2_ref[...],
                preferred_element_type=jnp.float32) + b2_ref[...]
    h = jnp.maximum(h, 0.0)
    o_ref[...] = jnp.dot(h.astype(jnp.bfloat16), w3_ref[...],
                         preferred_element_type=jnp.float32) + b3_ref[...]


def stn_fc(g, w1, b1, w2, b2, w3, b3):
    B = g.shape[0]
    return pl.pallas_call(
        _stn_fc_kernel,
        out_shape=jax.ShapeDtypeStruct((B, 9), jnp.float32),
    )(g, w1, b1, w2, b2, w3, b3)


# ---------------------------------------------------------------------------
# Kernel 3: feature chain (trans folded into per-batch conv1 weight)
#           3->64 (pointfeat out) ->128 ->1024 (BN only) + max over points
# ---------------------------------------------------------------------------

def _feat_chain_kernel(x_ref, w1_ref, b1_ref, w2_ref, b2_ref, w3_ref, b3_ref,
                       pf_ref, gmax_ref):
    h1 = jnp.dot(x_ref[0].astype(jnp.bfloat16), w1_ref[0],
                 preferred_element_type=jnp.float32) + b1_ref[...]
    h1 = jnp.maximum(h1, 0.0)                         # (TILE_N, 64) pointfeat
    pf_ref[0] = h1.astype(pf_ref.dtype)
    h2 = jnp.dot(h1.astype(jnp.bfloat16), w2_ref[...],
                 preferred_element_type=jnp.float32) + b2_ref[...]
    h2 = jnp.maximum(h2, 0.0)
    h3 = jnp.dot(h2.astype(jnp.bfloat16), w3_ref[...],
                 preferred_element_type=jnp.float32) + b3_ref[...]   # no ReLU (bn3 only)
    tmax = jnp.max(h3, axis=0, keepdims=True)

    @pl.when(pl.program_id(1) == 0)
    def _():
        gmax_ref[0] = tmax

    @pl.when(pl.program_id(1) > 0)
    def _():
        gmax_ref[0] = jnp.maximum(gmax_ref[0], tmax)


def feat_chain(x, w1_eff, b1, w2, b2, w3, b3, tile_n):
    B, N, _ = x.shape
    nt = N // tile_n
    pf, gmax = pl.pallas_call(
        _feat_chain_kernel,
        out_shape=(jax.ShapeDtypeStruct((B, N, 64), jnp.bfloat16),
                   jax.ShapeDtypeStruct((B, 1, 1024), jnp.float32)),
        grid=(B, nt),
        in_specs=[
            pl.BlockSpec((1, tile_n, 3), lambda b, t: (b, t, 0)),
            pl.BlockSpec((1, 3, 64), lambda b, t: (b, 0, 0)),
            pl.BlockSpec((1, 64), lambda b, t: (0, 0)),
            pl.BlockSpec((64, 128), lambda b, t: (0, 0)),
            pl.BlockSpec((1, 128), lambda b, t: (0, 0)),
            pl.BlockSpec((128, 1024), lambda b, t: (0, 0)),
            pl.BlockSpec((1, 1024), lambda b, t: (0, 0)),
        ],
        out_specs=(pl.BlockSpec((1, tile_n, 64), lambda b, t: (b, t, 0)),
                   pl.BlockSpec((1, 1, 1024), lambda b, t: (b, 0, 0))),
        compiler_params=pltpu.CompilerParams(
            dimension_semantics=("parallel", "arbitrary")),
    )(x, w1_eff, b1, w2, b2, w3, b3)
    return pf, gmax.reshape(B, 1024)


# ---------------------------------------------------------------------------
# Kernel 4: dense head — conv1(concat) -> conv2 -> conv3 -> conv4 -> log_softmax
#           (global-feature contribution enters as a per-batch bias row)
# ---------------------------------------------------------------------------

def _head_kernel(pf_ref, gb_ref, wp_ref, w2_ref, b2_ref, w3_ref, b3_ref,
                 w4_ref, b4_ref, o_ref):
    h = jnp.dot(pf_ref[0], wp_ref[...],
                preferred_element_type=jnp.float32) + gb_ref[0]
    h = jnp.maximum(h, 0.0)
    h = jnp.dot(h.astype(jnp.bfloat16), w2_ref[...],
                preferred_element_type=jnp.float32) + b2_ref[...]
    h = jnp.maximum(h, 0.0)
    h = jnp.dot(h.astype(jnp.bfloat16), w3_ref[...],
                preferred_element_type=jnp.float32) + b3_ref[...]
    h = jnp.maximum(h, 0.0)
    y = jnp.dot(h.astype(jnp.bfloat16), w4_ref[...],
                preferred_element_type=jnp.float32) + b4_ref[...]
    m = jnp.max(y, axis=-1, keepdims=True)
    z = y - m
    lse = jnp.log(jnp.sum(jnp.exp(z), axis=-1, keepdims=True))
    o_ref[0] = z - lse


def dense_head(pf, gbias, wp, w2, b2, w3, b3, w4, b4, tile_n):
    B, N, _ = pf.shape
    k = w4.shape[1]
    nt = N // tile_n
    gb3 = gbias.reshape(B, 1, 512)
    return pl.pallas_call(
        _head_kernel,
        out_shape=jax.ShapeDtypeStruct((B, N, k), jnp.float32),
        grid=(B, nt),
        in_specs=[
            pl.BlockSpec((1, tile_n, 64), lambda b, t: (b, t, 0)),
            pl.BlockSpec((1, 1, 512), lambda b, t: (b, 0, 0)),
            pl.BlockSpec((64, 512), lambda b, t: (0, 0)),
            pl.BlockSpec((512, 256), lambda b, t: (0, 0)),
            pl.BlockSpec((1, 256), lambda b, t: (0, 0)),
            pl.BlockSpec((256, 128), lambda b, t: (0, 0)),
            pl.BlockSpec((1, 128), lambda b, t: (0, 0)),
            pl.BlockSpec((128, k), lambda b, t: (0, 0)),
            pl.BlockSpec((1, k), lambda b, t: (0, 0)),
        ],
        out_specs=pl.BlockSpec((1, tile_n, k), lambda b, t: (b, t, 0)),
        compiler_params=pltpu.CompilerParams(
            dimension_semantics=("parallel", "parallel")),
    )(pf, gb3, wp, w2, b2, w3, b3, w4, b4)


# ---------------------------------------------------------------------------
# Deterministic parameter construction (shapes from the PyTorch __init__)
# ---------------------------------------------------------------------------

def init_params(key, k=2):
    keys = iter(jax.random.split(key, 80))

    def wmat(cin, cout):
        bound = 1.0 / (cin ** 0.5)
        return jax.random.uniform(next(keys), (cin, cout), jnp.float32, -bound, bound)

    def bvec(c, bound):
        return jax.random.uniform(next(keys), (1, c), jnp.float32, -bound, bound)

    def bn_fold(c):
        gamma = 1.0 + 0.1 * jax.random.normal(next(keys), (1, c), jnp.float32)
        beta = 0.1 * jax.random.normal(next(keys), (1, c), jnp.float32)
        rmean = 0.1 * jax.random.normal(next(keys), (1, c), jnp.float32)
        rvar = 1.0 + 0.1 * jax.random.uniform(next(keys), (1, c), jnp.float32)
        s = gamma / jnp.sqrt(rvar + 1e-5)
        t = beta - rmean * s
        return s, t

    def layer_bn(cin, cout, w_dtype=jnp.bfloat16):
        # Conv1d(k=1)/Linear weight + bias with eval-mode BN folded:
        # scale into weight columns, shift into the bias.
        w = wmat(cin, cout)
        cb = bvec(cout, 1.0 / (cin ** 0.5))
        s, t = bn_fold(cout)
        return (w * s).astype(w_dtype), (cb * s + t)

    p = {}
    # --- STN3d ---
    p["stn_c1"] = layer_bn(3, 64)
    p["stn_c2"] = layer_bn(64, 128)
    p["stn_c3"] = layer_bn(128, 1024)
    p["stn_fc1"] = layer_bn(1024, 512)
    p["stn_fc2"] = layer_bn(512, 256)
    w3 = wmat(256, 9)
    b3 = bvec(9, 1.0 / (256 ** 0.5))
    iden = jnp.array([1, 0, 0, 0, 1, 0, 0, 0, 1], jnp.float32).reshape(1, 9)
    p["stn_fc3"] = (w3.astype(jnp.bfloat16), b3 + iden)  # identity folded into bias
    # --- PointNetfeat ---  (feat_c1 kept f32: trans is folded into it at runtime)
    p["feat_c1"] = layer_bn(3, 64, w_dtype=jnp.float32)
    p["feat_c2"] = layer_bn(64, 128)
    p["feat_c3"] = layer_bn(128, 1024)
    # --- Dense head ---  cat([global(1024), pointfeat(64)]) -> split the 1088x512 weight
    wc1, bc1 = layer_bn(1088, 512, w_dtype=jnp.float32)
    p["cls_c1"] = (wc1[:1024], wc1[1024:].astype(jnp.bfloat16), bc1)  # (wg f32, wp bf16, bias)
    p["cls_c2"] = layer_bn(512, 256)
    p["cls_c3"] = layer_bn(256, 128)
    w4 = wmat(128, k)
    b4 = bvec(k, 1.0 / (128 ** 0.5))
    p["cls_c4"] = (w4.astype(jnp.bfloat16), b4)
    return p


# ---------------------------------------------------------------------------
# Forward pass
# ---------------------------------------------------------------------------

def pointnet_densecls(x_bcn, p, tile_n=None):
    """x_bcn: (B, 3, N) PyTorch layout. Returns (log-probs (B, N, k), trans (B, 3, 3))."""
    B, _, N = x_bcn.shape
    x = jnp.transpose(x_bcn, (0, 2, 1)).astype(jnp.float32)   # (B, N, 3)
    if tile_n is None:
        tile_n = _choose_tile(N)
    assert N % tile_n == 0, (N, tile_n)

    # ----- STN3d (fused point chain + fused FC head) -----
    w1, b1 = p["stn_c1"]; w2, b2 = p["stn_c2"]; w3, b3 = p["stn_c3"]
    g = stn_chain(x, w1, b1, w2, b2, w3, b3, tile_n)          # (B, 1024)
    fw1, fb1 = p["stn_fc1"]; fw2, fb2 = p["stn_fc2"]; fw3, fb3 = p["stn_fc3"]
    trans = stn_fc(g, fw1, fb1, fw2, fb2, fw3, fb3).reshape(B, 3, 3)

    # ----- PointNetfeat: bmm(x, trans) folded into per-batch conv1 weight -----
    w1, b1 = p["feat_c1"]; w2, b2 = p["feat_c2"]; w3, b3 = p["feat_c3"]
    w1_eff = jnp.einsum("bij,jk->bik", trans, w1).astype(jnp.bfloat16)   # (B, 3, 64)
    pf, g = feat_chain(x, w1_eff, b1, w2, b2, w3, b3, tile_n)  # pf (B,N,64) bf16, g (B,1024)

    # ----- Dense head: global contribution hoisted to a per-batch bias row -----
    wg, wp, cb1 = p["cls_c1"]
    gbias = jnp.dot(g, wg, preferred_element_type=jnp.float32) + cb1     # (B, 512)
    w2, b2 = p["cls_c2"]; w3, b3 = p["cls_c3"]; w4, b4 = p["cls_c4"]
    out = dense_head(pf, gbias, wp, w2, b2, w3, b3, w4, b4, tile_n)       # (B, N, k)
    return out, trans


# ---------------------------------------------------------------------------
# Pure-JAX reference (mirrors the bf16 casts) for a loose sanity check
# ---------------------------------------------------------------------------

def _reference_forward(x_bcn, p):
    B, _, N = x_bcn.shape
    x = jnp.transpose(x_bcn, (0, 2, 1)).astype(jnp.float32)

    def pw(h, w, b, relu=True):
        y = jnp.einsum("bnc,cd->bnd", h.astype(jnp.bfloat16), w,
                       preferred_element_type=jnp.float32) + b
        return jnp.maximum(y, 0.0) if relu else y

    def fc(h, w, b, relu=True):
        y = jnp.dot(h.astype(jnp.bfloat16), w, preferred_element_type=jnp.float32) + b
        return jnp.maximum(y, 0.0) if relu else y

    w1, b1 = p["stn_c1"]; w2, b2 = p["stn_c2"]; w3, b3 = p["stn_c3"]
    g = jnp.max(pw(pw(pw(x, w1, b1), w2, b2), w3, b3), axis=1)
    fw1, fb1 = p["stn_fc1"]; fw2, fb2 = p["stn_fc2"]; fw3, fb3 = p["stn_fc3"]
    trans = fc(fc(fc(g, fw1, fb1), fw2, fb2), fw3, fb3, relu=False).reshape(B, 3, 3)

    w1, b1 = p["feat_c1"]; w2, b2 = p["feat_c2"]; w3, b3 = p["feat_c3"]
    w1_eff = jnp.einsum("bij,jk->bik", trans, w1).astype(jnp.bfloat16)
    pf = jnp.maximum(jnp.einsum("bnc,bcd->bnd", x.astype(jnp.bfloat16), w1_eff,
                                preferred_element_type=jnp.float32) + b1, 0.0)
    g = jnp.max(pw(pw(pf, w2, b2), w3, b3, relu=False), axis=1)

    wg, wp, cb1 = p["cls_c1"]
    gbias = jnp.dot(g, wg, preferred_element_type=jnp.float32) + cb1
    h = jnp.maximum(jnp.einsum("bnc,cd->bnd", pf.astype(jnp.bfloat16), wp,
                               preferred_element_type=jnp.float32)
                    + gbias[:, None, :], 0.0)
    w2, b2 = p["cls_c2"]; w3, b3 = p["cls_c3"]; w4, b4 = p["cls_c4"]
    h = pw(pw(h, w2, b2), w3, b3)
    y = jnp.einsum("bnc,cd->bnd", h.astype(jnp.bfloat16), w4,
                   preferred_element_type=jnp.float32) + b4
    return jax.nn.log_softmax(y, axis=-1), trans


if __name__ == "__main__":
    B, N, K = 2, 256, 2
    key = jax.random.PRNGKey(0)
    kp, kx = jax.random.split(key)
    params = init_params(kp, k=K)
    x = jax.random.normal(kx, (B, 3, N), jnp.float32)   # PyTorch (B, C=3, N) layout

    fwd = jax.jit(functools.partial(pointnet_densecls, tile_n=128))
    out, trans = fwd(x, params)
    (out, trans) = jax.block_until_ready((out, trans))

    assert out.shape == (B, N, K), out.shape
    assert trans.shape == (B, 3, 3), trans.shape
    assert bool(jnp.all(jnp.isfinite(out))) and bool(jnp.all(jnp.isfinite(trans)))
    # log_softmax rows should sum to 1 in probability space
    assert bool(jnp.allclose(jnp.sum(jnp.exp(out), axis=-1), 1.0, atol=1e-4))

    # Loose sanity check against a pure-JAX reference with identical bf16 casting
    ref_out, ref_trans = _reference_forward(x, params)
    assert bool(jnp.allclose(trans, ref_trans, atol=5e-2, rtol=5e-2)), "trans mismatch"
    assert bool(jnp.allclose(out, ref_out, atol=5e-2, rtol=5e-2)), "log-prob mismatch"
    print("KERNEL_OK")
</pallas_src>

<mosaic_0001>
module attributes {stable_mosaic.version = 11 : i64} {
  func.func @_stn_chain_kernel(%arg0: i32, %arg1: i32, %arg2: memref<1x128x3xf32, #tpu.memory_space<vmem>>, %arg3: memref<3x64xbf16, #tpu.memory_space<vmem>>, %arg4: memref<1x64xf32, #tpu.memory_space<vmem>>, %arg5: memref<64x128xbf16, #tpu.memory_space<vmem>>, %arg6: memref<1x128xf32, #tpu.memory_space<vmem>>, %arg7: memref<128x1024xbf16, #tpu.memory_space<vmem>>, %arg8: memref<1x1024xf32, #tpu.memory_space<vmem>>, %arg9: memref<1x1x1024xf32, #tpu.memory_space<vmem>>) attributes {dimension_semantics = [#tpu.dimension_semantics<parallel>, #tpu.dimension_semantics<arbitrary>], iteration_bounds = array<i64: 2, 2>, scalar_prefetch = 0 : i64, scratch_operands = 0 : i64, tpu.core_type = #tpu.core_type<tc>, window_params = [{transform_indices = @transform_0, window_bounds = array<i64: 1, 128, 3>}, {pipeline_mode = #tpu.pipeline_mode<synchronous>, transform_indices = @transform_1, window_bounds = array<i64: 3, 64>}, {pipeline_mode = #tpu.pipeline_mode<synchronous>, transform_indices = @transform_2, window_bounds = array<i64: 1, 64>}, {pipeline_mode = #tpu.pipeline_mode<synchronous>, transform_indices = @transform_3, window_bounds = array<i64: 64, 128>}, {pipeline_mode = #tpu.pipeline_mode<synchronous>, transform_indices = @transform_4, window_bounds = array<i64: 1, 128>}, {pipeline_mode = #tpu.pipeline_mode<synchronous>, transform_indices = @transform_5, window_bounds = array<i64: 128, 1024>}, {pipeline_mode = #tpu.pipeline_mode<synchronous>, transform_indices = @transform_6, window_bounds = array<i64: 1, 1024>}, {transform_indices = @transform_7, window_bounds = array<i64: 1, 1, 1024>}]} {
    %c0 = arith.constant 0 : index
    %c0_0 = arith.constant 0 : index
    %c0_1 = arith.constant 0 : index
    %0 = vector.load %arg2[%c0, %c0_0, %c0_1] : memref<1x128x3xf32, #tpu.memory_space<vmem>>, vector<1x128x3xf32>
    %1 = vector.shape_cast %0 : vector<1x128x3xf32> to vector<128x3xf32>
    %2 = arith.truncf %1 : vector<128x3xf32> to vector<128x3xbf16>
    %c0_2 = arith.constant 0 : index
    %c0_3 = arith.constant 0 : index
    %3 = vector.load %arg3[%c0_2, %c0_3] : memref<3x64xbf16, #tpu.memory_space<vmem>>, vector<3x64xbf16>
    %cst = arith.constant dense<0.000000e+00> : vector<128x64xf32>
    %4 = tpu.matmul %2, %3, %cst {dimension_numbers = #tpu.dot_dimension_numbers<[1], [0], [0], [1], [0, 0, 1, 1], [], []>} : vector<128x3xbf16>, vector<3x64xbf16>, vector<128x64xf32> -> vector<128x64xf32>
    %c0_4 = arith.constant 0 : index
    %c0_5 = arith.constant 0 : index
    %5 = vector.load %arg4[%c0_4, %c0_5] : memref<1x64xf32, #tpu.memory_space<vmem>>, vector<1x64xf32>
    %6 = vector.broadcast %5 : vector<1x64xf32> to vector<128x64xf32>
    %7 = arith.addf %4, %6 : vector<128x64xf32>
    %cst_6 = arith.constant 0.000000e+00 : f32
    %8 = vector.broadcast %cst_6 : f32 to vector<128x64xf32>
    %9 = arith.maximumf %7, %8 : vector<128x64xf32>
    %10 = arith.truncf %9 : vector<128x64xf32> to vector<128x64xbf16>
    %c0_7 = arith.constant 0 : index
    %c0_8 = arith.constant 0 : index
    %11 = vector.load %arg5[%c0_7, %c0_8] : memref<64x128xbf16, #tpu.memory_space<vmem>>, vector<64x128xbf16>
    %cst_9 = arith.constant dense<0.000000e+00> : vector<128x128xf32>
    %12 = tpu.matmul %10, %11, %cst_9 {dimension_numbers = #tpu.dot_dimension_numbers<[1], [0], [0], [1], [0, 0, 1, 1], [], []>} : vector<128x64xbf16>, vector<64x128xbf16>, vector<128x128xf32> -> vector<128x128xf32>
    %c0_10 = arith.constant 0 : index
    %c0_11 = arith.constant 0 : index
    %13 = vector.load %arg6[%c0_10, %c0_11] : memref<1x128xf32, #tpu.memory_space<vmem>>, vector<1x128xf32>
    %14 = vector.broadcast %13 : vector<1x128xf32> to vector<128x128xf32>
    %15 = arith.addf %12, %14 : vector<128x128xf32>
    %cst_12 = arith.constant 0.000000e+00 : f32
    %16 = vector.broadcast %cst_12 : f32 to vector<128x128xf32>
    %17 = arith.maximumf %15, %16 : vector<128x128xf32>
    %18 = arith.truncf %17 : vector<128x128xf32> to vector<128x128xbf16>
    %c0_13 = arith.constant 0 : index
    %c0_14 = arith.constant 0 : index
    %19 = vector.load %arg7[%c0_13, %c0_14] : memref<128x1024xbf16, #tpu.memory_space<vmem>>, vector<128x1024xbf16>
    %cst_15 = arith.constant dense<0.000000e+00> : vector<128x1024xf32>
    %20 = tpu.matmul %18, %19, %cst_15 {dimension_numbers = #tpu.dot_dimension_numbers<[1], [0], [0], [1], [0, 0, 1, 1], [], []>} : vector<128x128xbf16>, vector<128x1024xbf16>, vector<128x1024xf32> -> vector<128x1024xf32>
    %c0_16 = arith.constant 0 : index
    %c0_17 = arith.constant 0 : index
    %21 = vector.load %arg8[%c0_16, %c0_17] : memref<1x1024xf32, #tpu.memory_space<vmem>>, vector<1x1024xf32>
    %22 = vector.broadcast %21 : vector<1x1024xf32> to vector<128x1024xf32>
    %23 = arith.addf %20, %22 : vector<128x1024xf32>
    %cst_18 = arith.constant 0.000000e+00 : f32
    %24 = vector.broadcast %cst_18 : f32 to vector<128x1024xf32>
    %25 = arith.maximumf %23, %24 : vector<128x1024xf32>
    %cst_19 = arith.constant dense<0xFF800000> : vector<1024xf32>
    %26 = vector.multi_reduction <maximumf>, %25, %cst_19 [0] : vector<128x1024xf32> to vector<1024xf32>
    %27 = vector.shape_cast %26 : vector<1024xf32> to vector<1x1024xf32>
    %c0_i32 = arith.constant 0 : i32
    %28 = arith.cmpi eq, %arg1, %c0_i32 : i32
    %29 = arith.extui %28 : i1 to i32
    %c0_i32_20 = arith.constant 0 : i32
    %30 = arith.cmpi ne, %29, %c0_i32_20 : i32
    scf.if %30 {
      %c0_23 = arith.constant 0 : index
      %c0_24 = arith.constant 0 : index
      %c0_25 = arith.constant 0 : index
      %34 = vector.load %arg9[%c0_23, %c0_24, %c0_25] : memref<1x1x1024xf32, #tpu.memory_space<vmem>>, vector<1x1x1024xf32>
      %35 = vector.shape_cast %34 : vector<1x1x1024xf32> to vector<1x1024xf32>
      %36 = vector.shape_cast %27 : vector<1x1024xf32> to vector<1x1x1024xf32>
      tpu.vector_store %arg9[%c0_23, %c0_24, %c0_25], %36 {strides = array<i32>} : memref<1x1x1024xf32, #tpu.memory_space<vmem>>, vector<1x1x1024xf32>,
    } else {
    }
    %c0_i32_21 = arith.constant 0 : i32
    %31 = arith.cmpi sgt, %arg1, %c0_i32_21 : i32
    %32 = arith.extui %31 : i1 to i32
    %c0_i32_22 = arith.constant 0 : i32
    %33 = arith.cmpi ne, %32, %c0_i32_22 : i32
    scf.if %33 {
      %c0_23 = arith.constant 0 : index
      %c0_24 = arith.constant 0 : index
      %c0_25 = arith.constant 0 : index
      %34 = vector.load %arg9[%c0_23, %c0_24, %c0_25] : memref<1x1x1024xf32, #tpu.memory_space<vmem>>, vector<1x1x1024xf32>
      %35 = vector.shape_cast %34 : vector<1x1x1024xf32> to vector<1x1024xf32>
      %36 = arith.maximumf %35, %27 : vector<1x1024xf32>
      %c0_26 = arith.constant 0 : index
      %c0_27 = arith.constant 0 : index
      %c0_28 = arith.constant 0 : index
      %37 = vector.load %arg9[%c0_26, %c0_27, %c0_28] : memref<1x1x1024xf32, #tpu.memory_space<vmem>>, vector<1x1x1024xf32>
      %38 = vector.shape_cast %37 : vector<1x1x1024xf32> to vector<1x1024xf32>
      %39 = vector.shape_cast %36 : vector<1x1024xf32> to vector<1x1x1024xf32>
      tpu.vector_store %arg9[%c0_26, %c0_27, %c0_28], %39 {strides = array<i32>} : memref<1x1x1024xf32, #tpu.memory_space<vmem>>, vector<1x1x1024xf32>,
    } else {
    }
    return
  }
  func.func @transform_0(%arg0: i32, %arg1: i32) -> (i32, i32, i32) {
    %c0_i32 = arith.constant 0 : i32
    %c0_i32_0 = arith.constant 0 : i32
    return %arg0, %arg1, %c0_i32 : i32, i32, i32
  }
  func.func @transform_1(%arg0: i32, %arg1: i32) -> (i32, i32) {
    %c0_i32 = arith.constant 0 : i32
    %c0_i32_0 = arith.constant 0 : i32
    %c0_i32_1 = arith.constant 0 : i32
    return %c0_i32, %c0_i32_0 : i32, i32
  }
  func.func @transform_2(%arg0: i32, %arg1: i32) -> (i32, i32) {
    %c0_i32 = arith.constant 0 : i32
    %c0_i32_0 = arith.constant 0 : i32
    %c0_i32_1 = arith.constant 0 : i32
    return %c0_i32, %c0_i32_0 : i32, i32
  }
  func.func @transform_3(%arg0: i32, %arg1: i32) -> (i32, i32) {
    %c0_i32 = arith.constant 0 : i32
    %c0_i32_0 = arith.constant 0 : i32
    %c0_i32_1 = arith.constant 0 : i32
    return %c0_i32, %c0_i32_0 : i32, i32
  }
  func.func @transform_4(%arg0: i32, %arg1: i32) -> (i32, i32) {
    %c0_i32 = arith.constant 0 : i32
    %c0_i32_0 = arith.constant 0 : i32
    %c0_i32_1 = arith.constant 0 : i32
    return %c0_i32, %c0_i32_0 : i32, i32
  }
  func.func @transform_5(%arg0: i32, %arg1: i32) -> (i32, i32) {
    %c0_i32 = arith.constant 0 : i32
    %c0_i32_0 = arith.constant 0 : i32
    %c0_i32_1 = arith.constant 0 : i32
    return %c0_i32, %c0_i32_0 : i32, i32
  }
  func.func @transform_6(%arg0: i32, %arg1: i32) -> (i32, i32) {
    %c0_i32 = arith.constant 0 : i32
    %c0_i32_0 = arith.constant 0 : i32
    %c0_i32_1 = arith.constant 0 : i32
    return %c0_i32, %c0_i32_0 : i32, i32
  }
  func.func @transform_7(%arg0: i32, %arg1: i32) -> (i32, i32, i32) {
    %c0_i32 = arith.constant 0 : i32
    %c0_i32_0 = arith.constant 0 : i32
    %c0_i32_1 = arith.constant 0 : i32
    return %arg0, %c0_i32, %c0_i32_0 : i32, i32, i32
  }
}

module attributes {stable_mosaic.version = 11 : i64} {
  func.func @_feat_chain_kernel(%arg0: i32, %arg1: i32, %arg2: memref<1x128x3xf32, #tpu.memory_space<vmem>>, %arg3: memref<1x3x64xbf16, #tpu.memory_space<vmem>>, %arg4: memref<1x64xf32, #tpu.memory_space<vmem>>, %arg5: memref<64x128xbf16, #tpu.memory_space<vmem>>, %arg6: memref<1x128xf32, #tpu.memory_space<vmem>>, %arg7: memref<128x1024xbf16, #tpu.memory_space<vmem>>, %arg8: memref<1x1024xf32, #tpu.memory_space<vmem>>, %arg9: memref<1x128x64xbf16, #tpu.memory_space<vmem>>, %arg10: memref<1x1x1024xf32, #tpu.memory_space<vmem>>) attributes {dimension_semantics = [#tpu.dimension_semantics<parallel>, #tpu.dimension_semantics<arbitrary>], iteration_bounds = array<i64: 2, 2>, scalar_prefetch = 0 : i64, scratch_operands = 0 : i64, tpu.core_type = #tpu.core_type<tc>, window_params = [{transform_indices = @transform_0, window_bounds = array<i64: 1, 128, 3>}, {transform_indices = @transform_1, window_bounds = array<i64: 1, 3, 64>}, {pipeline_mode = #tpu.pipeline_mode<synchronous>, transform_indices = @transform_2, window_bounds = array<i64: 1, 64>}, {pipeline_mode = #tpu.pipeline_mode<synchronous>, transform_indices = @transform_3, window_bounds = array<i64: 64, 128>}, {pipeline_mode = #tpu.pipeline_mode<synchronous>, transform_indices = @transform_4, window_bounds = array<i64: 1, 128>}, {pipeline_mode = #tpu.pipeline_mode<synchronous>, transform_indices = @transform_5, window_bounds = array<i64: 128, 1024>}, {pipeline_mode = #tpu.pipeline_mode<synchronous>, transform_indices = @transform_6, window_bounds = array<i64: 1, 1024>}, {transform_indices = @transform_7, window_bounds = array<i64: 1, 128, 64>}, {transform_indices = @transform_8, window_bounds = array<i64: 1, 1, 1024>}]} {
    %c0 = arith.constant 0 : index
    %c0_0 = arith.constant 0 : index
    %c0_1 = arith.constant 0 : index
    %0 = vector.load %arg2[%c0, %c0_0, %c0_1] : memref<1x128x3xf32, #tpu.memory_space<vmem>>, vector<1x128x3xf32>
    %1 = vector.shape_cast %0 : vector<1x128x3xf32> to vector<128x3xf32>
    %2 = arith.truncf %1 : vector<128x3xf32> to vector<128x3xbf16>
    %c0_2 = arith.constant 0 : index
    %c0_3 = arith.constant 0 : index
    %c0_4 = arith.constant 0 : index
    %3 = vector.load %arg3[%c0_2, %c0_3, %c0_4] : memref<1x3x64xbf16, #tpu.memory_space<vmem>>, vector<1x3x64xbf16>
    %4 = vector.shape_cast %3 : vector<1x3x64xbf16> to vector<3x64xbf16>
    %cst = arith.constant dense<0.000000e+00> : vector<128x64xf32>
    %5 = tpu.matmul %2, %4, %cst {dimension_numbers = #tpu.dot_dimension_numbers<[1], [0], [0], [1], [0, 0, 1, 1], [], []>} : vector<128x3xbf16>, vector<3x64xbf16>, vector<128x64xf32> -> vector<128x64xf32>
    %c0_5 = arith.constant 0 : index
    %c0_6 = arith.constant 0 : index
    %6 = vector.load %arg4[%c0_5, %c0_6] : memref<1x64xf32, #tpu.memory_space<vmem>>, vector<1x64xf32>
    %7 = vector.broadcast %6 : vector<1x64xf32> to vector<128x64xf32>
    %8 = arith.addf %5, %7 : vector<128x64xf32>
    %cst_7 = arith.constant 0.000000e+00 : f32
    %9 = vector.broadcast %cst_7 : f32 to vector<128x64xf32>
    %10 = arith.maximumf %8, %9 : vector<128x64xf32>
    %11 = arith.truncf %10 : vector<128x64xf32> to vector<128x64xbf16>
    %c0_8 = arith.constant 0 : index
    %c0_9 = arith.constant 0 : index
    %c0_10 = arith.constant 0 : index
    %12 = vector.load %arg9[%c0_8, %c0_9, %c0_10] : memref<1x128x64xbf16, #tpu.memory_space<vmem>>, vector<1x128x64xbf16>
    %13 = vector.shape_cast %12 : vector<1x128x64xbf16> to vector<128x64xbf16>
    %14 = vector.shape_cast %11 : vector<128x64xbf16> to vector<1x128x64xbf16>
    tpu.vector_store %arg9[%c0_8, %c0_9, %c0_10], %14 {strides = array<i32>} : memref<1x128x64xbf16, #tpu.memory_space<vmem>>, vector<1x128x64xbf16>,
    %15 = arith.truncf %10 : vector<128x64xf32> to vector<128x64xbf16>
    %c0_11 = arith.constant 0 : index
    %c0_12 = arith.constant 0 : index
    %16 = vector.load %arg5[%c0_11, %c0_12] : memref<64x128xbf16, #tpu.memory_space<vmem>>, vector<64x128xbf16>
    %cst_13 = arith.constant dense<0.000000e+00> : vector<128x128xf32>
    %17 = tpu.matmul %15, %16, %cst_13 {dimension_numbers = #tpu.dot_dimension_numbers<[1], [0], [0], [1], [0, 0, 1, 1], [], []>} : vector<128x64xbf16>, vector<64x128xbf16>, vector<128x128xf32> -> vector<128x128xf32>
    %c0_14 = arith.constant 0 : index
    %c0_15 = arith.constant 0 : index
    %18 = vector.load %arg6[%c0_14, %c0_15] : memref<1x128xf32, #tpu.memory_space<vmem>>, vector<1x128xf32>
    %19 = vector.broadcast %18 : vector<1x128xf32> to vector<128x128xf32>
    %20 = arith.addf %17, %19 : vector<128x128xf32>
    %cst_16 = arith.constant 0.000000e+00 : f32
    %21 = vector.broadcast %cst_16 : f32 to vector<128x128xf32>
    %22 = arith.maximumf %20, %21 : vector<128x128xf32>
    %23 = arith.truncf %22 : vector<128x128xf32> to vector<128x128xbf16>
    %c0_17 = arith.constant 0 : index
    %c0_18 = arith.constant 0 : index
    %24 = vector.load %arg7[%c0_17, %c0_18] : memref<128x1024xbf16, #tpu.memory_space<vmem>>, vector<128x1024xbf16>
    %cst_19 = arith.constant dense<0.000000e+00> : vector<128x1024xf32>
    %25 = tpu.matmul %23, %24, %cst_19 {dimension_numbers = #tpu.dot_dimension_numbers<[1], [0], [0], [1], [0, 0, 1, 1], [], []>} : vector<128x128xbf16>, vector<128x1024xbf16>, vector<128x1024xf32> -> vector<128x1024xf32>
    %c0_20 = arith.constant 0 : index
    %c0_21 = arith.constant 0 : index
    %26 = vector.load %arg8[%c0_20, %c0_21] : memref<1x1024xf32, #tpu.memory_space<vmem>>, vector<1x1024xf32>
    %27 = vector.broadcast %26 : vector<1x1024xf32> to vector<128x1024xf32>
    %28 = arith.addf %25, %27 : vector<128x1024xf32>
    %cst_22 = arith.constant dense<0xFF800000> : vector<1024xf32>
    %29 = vector.multi_reduction <maximumf>, %28, %cst_22 [0] : vector<128x1024xf32> to vector<1024xf32>
    %30 = vector.shape_cast %29 : vector<1024xf32> to vector<1x1024xf32>
    %c0_i32 = arith.constant 0 : i32
    %31 = arith.cmpi eq, %arg1, %c0_i32 : i32
    %32 = arith.extui %31 : i1 to i32
    %c0_i32_23 = arith.constant 0 : i32
    %33 = arith.cmpi ne, %32, %c0_i32_23 : i32
    scf.if %33 {
      %c0_26 = arith.constant 0 : index
      %c0_27 = arith.constant 0 : index
      %c0_28 = arith.constant 0 : index
      %37 = vector.load %arg10[%c0_26, %c0_27, %c0_28] : memref<1x1x1024xf32, #tpu.memory_space<vmem>>, vector<1x1x1024xf32>
      %38 = vector.shape_cast %37 : vector<1x1x1024xf32> to vector<1x1024xf32>
      %39 = vector.shape_cast %30 : vector<1x1024xf32> to vector<1x1x1024xf32>
      tpu.vector_store %arg10[%c0_26, %c0_27, %c0_28], %39 {strides = array<i32>} : memref<1x1x1024xf32, #tpu.memory_space<vmem>>, vector<1x1x1024xf32>,
    } else {
    }
    %c0_i32_24 = arith.constant 0 : i32
    %34 = arith.cmpi sgt, %arg1, %c0_i32_24 : i32
    %35 = arith.extui %34 : i1 to i32
    %c0_i32_25 = arith.constant 0 : i32
    %36 = arith.cmpi ne, %35, %c0_i32_25 : i32
    scf.if %36 {
      %c0_26 = arith.constant 0 : index
      %c0_27 = arith.constant 0 : index
      %c0_28 = arith.constant 0 : index
      %37 = vector.load %arg10[%c0_26, %c0_27, %c0_28] : memref<1x1x1024xf32, #tpu.memory_space<vmem>>, vector<1x1x1024xf32>
      %38 = vector.shape_cast %37 : vector<1x1x1024xf32> to vector<1x1024xf32>
      %39 = arith.maximumf %38, %30 : vector<1x1024xf32>
      %c0_29 = arith.constant 0 : index
      %c0_30 = arith.constant 0 : index
      %c0_31 = arith.constant 0 : index
      %40 = vector.load %arg10[%c0_29, %c0_30, %c0_31] : memref<1x1x1024xf32, #tpu.memory_space<vmem>>, vector<1x1x1024xf32>
      %41 = vector.shape_cast %40 : vector<1x1x1024xf32> to vector<1x1024xf32>
      %42 = vector.shape_cast %39 : vector<1x1024xf32> to vector<1x1x1024xf32>
      tpu.vector_store %arg10[%c0_29, %c0_30, %c0_31], %42 {strides = array<i32>} : memref<1x1x1024xf32, #tpu.memory_space<vmem>>, vector<1x1x1024xf32>,
    } else {
    }
    return
  }
  func.func @transform_0(%arg0: i32, %arg1: i32) -> (i32, i32, i32) {
    %c0_i32 = arith.constant 0 : i32
    %c0_i32_0 = arith.constant 0 : i32
    return %arg0, %arg1, %c0_i32 : i32, i32, i32
  }
  func.func @transform_1(%arg0: i32, %arg1: i32) -> (i32, i32, i32) {
    %c0_i32 = arith.constant 0 : i32
    %c0_i32_0 = arith.constant 0 : i32
    %c0_i32_1 = arith.constant 0 : i32
    return %arg0, %c0_i32, %c0_i32_0 : i32, i32, i32
  }
  func.func @transform_2(%arg0: i32, %arg1: i32) -> (i32, i32) {
    %c0_i32 = arith.constant 0 : i32
    %c0_i32_0 = arith.constant 0 : i32
    %c0_i32_1 = arith.constant 0 : i32
    return %c0_i32, %c0_i32_0 : i32, i32
  }
  func.func @transform_3(%arg0: i32, %arg1: i32) -> (i32, i32) {
    %c0_i32 = arith.constant 0 : i32
    %c0_i32_0 = arith.constant 0 : i32
    %c0_i32_1 = arith.constant 0 : i32
    return %c0_i32, %c0_i32_0 : i32, i32
  }
  func.func @transform_4(%arg0: i32, %arg1: i32) -> (i32, i32) {
    %c0_i32 = arith.constant 0 : i32
    %c0_i32_0 = arith.constant 0 : i32
    %c0_i32_1 = arith.constant 0 : i32
    return %c0_i32, %c0_i32_0 : i32, i32
  }
  func.func @transform_5(%arg0: i32, %arg1: i32) -> (i32, i32) {
    %c0_i32 = arith.constant 0 : i32
    %c0_i32_0 = arith.constant 0 : i32
    %c0_i32_1 = arith.constant 0 : i32
    return %c0_i32, %c0_i32_0 : i32, i32
  }
  func.func @transform_6(%arg0: i32, %arg1: i32) -> (i32, i32) {
    %c0_i32 = arith.constant 0 : i32
    %c0_i32_0 = arith.constant 0 : i32
    %c0_i32_1 = arith.constant 0 : i32
    return %c0_i32, %c0_i32_0 : i32, i32
  }
  func.func @transform_7(%arg0: i32, %arg1: i32) -> (i32, i32, i32) {
    %c0_i32 = arith.constant 0 : i32
    %c0_i32_0 = arith.constant 0 : i32
    return %arg0, %arg1, %c0_i32 : i32, i32, i32
  }
  func.func @transform_8(%arg0: i32, %arg1: i32) -> (i32, i32, i32) {
    %c0_i32 = arith.constant 0 : i32
    %c0_i32_0 = arith.constant 0 : i32
    %c0_i32_1 = arith.constant 0 : i32
    return %arg0, %c0_i32, %c0_i32_0 : i32, i32, i32
  }
}

module attributes {stable_mosaic.version = 11 : i64} {
  func.func @_stn_fc_kernel(%arg0: memref<2x1024xf32, #tpu.memory_space<vmem>>, %arg1: memref<1024x512xbf16, #tpu.memory_space<vmem>>, %arg2: memref<1x512xf32, #tpu.memory_space<vmem>>, %arg3: memref<512x256xbf16, #tpu.memory_space<vmem>>, %arg4: memref<1x256xf32, #tpu.memory_space<vmem>>, %arg5: memref<256x9xbf16, #tpu.memory_space<vmem>>, %arg6: memref<1x9xf32, #tpu.memory_space<vmem>>, %arg7: memref<2x9xf32, #tpu.memory_space<vmem>>) attributes {dimension_semantics = [], scalar_prefetch = 0 : i64, scratch_operands = 0 : i64, tpu.core_type = #tpu.core_type<tc>} {
    %c0 = arith.constant 0 : index
    %c0_0 = arith.constant 0 : index
    %0 = vector.load %arg0[%c0, %c0_0] : memref<2x1024xf32, #tpu.memory_space<vmem>>, vector<2x1024xf32>
    %1 = arith.truncf %0 : vector<2x1024xf32> to vector<2x1024xbf16>
    %c0_1 = arith.constant 0 : index
    %c0_2 = arith.constant 0 : index
    %2 = vector.load %arg1[%c0_1, %c0_2] : memref<1024x512xbf16, #tpu.memory_space<vmem>>, vector<1024x512xbf16>
    %cst = arith.constant dense<0.000000e+00> : vector<2x512xf32>
    %3 = tpu.matmul %1, %2, %cst {dimension_numbers = #tpu.dot_dimension_numbers<[1], [0], [0], [1], [0, 0, 1, 1], [], []>} : vector<2x1024xbf16>, vector<1024x512xbf16>, vector<2x512xf32> -> vector<2x512xf32>
    %c0_3 = arith.constant 0 : index
    %c0_4 = arith.constant 0 : index
    %4 = vector.load %arg2[%c0_3, %c0_4] : memref<1x512xf32, #tpu.memory_space<vmem>>, vector<1x512xf32>
    %5 = vector.broadcast %4 : vector<1x512xf32> to vector<2x512xf32>
    %6 = arith.addf %3, %5 : vector<2x512xf32>
    %cst_5 = arith.constant 0.000000e+00 : f32
    %7 = vector.broadcast %cst_5 : f32 to vector<2x512xf32>
    %8 = arith.maximumf %6, %7 : vector<2x512xf32>
    %9 = arith.truncf %8 : vector<2x512xf32> to vector<2x512xbf16>
    %c0_6 = arith.constant 0 : index
    %c0_7 = arith.constant 0 : index
    %10 = vector.load %arg3[%c0_6, %c0_7] : memref<512x256xbf16, #tpu.memory_space<vmem>>, vector<512x256xbf16>
    %cst_8 = arith.constant dense<0.000000e+00> : vector<2x256xf32>
    %11 = tpu.matmul %9, %10, %cst_8 {dimension_numbers = #tpu.dot_dimension_numbers<[1], [0], [0], [1], [0, 0, 1, 1], [], []>} : vector<2x512xbf16>, vector<512x256xbf16>, vector<2x256xf32> -> vector<2x256xf32>
    %c0_9 = arith.constant 0 : index
    %c0_10 = arith.constant 0 : index
    %12 = vector.load %arg4[%c0_9, %c0_10] : memref<1x256xf32, #tpu.memory_space<vmem>>, vector<1x256xf32>
    %13 = vector.broadcast %12 : vector<1x256xf32> to vector<2x256xf32>
    %14 = arith.addf %11, %13 : vector<2x256xf32>
    %cst_11 = arith.constant 0.000000e+00 : f32
    %15 = vector.broadcast %cst_11 : f32 to vector<2x256xf32>
    %16 = arith.maximumf %14, %15 : vector<2x256xf32>
    %17 = arith.truncf %16 : vector<2x256xf32> to vector<2x256xbf16>
    %c0_12 = arith.constant 0 : index
    %c0_13 = arith.constant 0 : index
    %18 = vector.load %arg5[%c0_12, %c0_13] : memref<256x9xbf16, #tpu.memory_space<vmem>>, vector<256x9xbf16>
    %cst_14 = arith.constant dense<0.000000e+00> : vector<2x9xf32>
    %19 = tpu.matmul %17, %18, %cst_14 {dimension_numbers = #tpu.dot_dimension_numbers<[1], [0], [0], [1], [0, 0, 1, 1], [], []>} : vector<2x256xbf16>, vector<256x9xbf16>, vector<2x9xf32> -> vector<2x9xf32>
    %c0_15 = arith.constant 0 : index
    %c0_16 = arith.constant 0 : index
    %20 = vector.load %arg6[%c0_15, %c0_16] : memref<1x9xf32, #tpu.memory_space<vmem>>, vector<1x9xf32>
    %21 = vector.broadcast %20 : vector<1x9xf32> to vector<2x9xf32>
    %22 = arith.addf %19, %21 : vector<2x9xf32>
    %c0_17 = arith.constant 0 : index
    %c0_18 = arith.constant 0 : index
    %23 = vector.load %arg7[%c0_17, %c0_18] : memref<2x9xf32, #tpu.memory_space<vmem>>, vector<2x9xf32>
    tpu.vector_store %arg7[%c0_17, %c0_18], %22 {strides = array<i32>} : memref<2x9xf32, #tpu.memory_space<vmem>>, vector<2x9xf32>,
    return
  }
}

module attributes {stable_mosaic.version = 11 : i64} {
  func.func @_head_kernel(%arg0: i32, %arg1: i32, %arg2: memref<1x128x64xbf16, #tpu.memory_space<vmem>>, %arg3: memref<1x1x512xf32, #tpu.memory_space<vmem>>, %arg4: memref<64x512xbf16, #tpu.memory_space<vmem>>, %arg5: memref<512x256xbf16, #tpu.memory_space<vmem>>, %arg6: memref<1x256xf32, #tpu.memory_space<vmem>>, %arg7: memref<256x128xbf16, #tpu.memory_space<vmem>>, %arg8: memref<1x128xf32, #tpu.memory_space<vmem>>, %arg9: memref<128x2xbf16, #tpu.memory_space<vmem>>, %arg10: memref<1x2xf32, #tpu.memory_space<vmem>>, %arg11: memref<1x128x2xf32, #tpu.memory_space<vmem>>) attributes {dimension_semantics = [#tpu.dimension_semantics<parallel>, #tpu.dimension_semantics<parallel>], iteration_bounds = array<i64: 2, 2>, scalar_prefetch = 0 : i64, scratch_operands = 0 : i64, tpu.core_type = #tpu.core_type<tc>, window_params = [{transform_indices = @transform_0, window_bounds = array<i64: 1, 128, 64>}, {transform_indices = @transform_1, window_bounds = array<i64: 1, 1, 512>}, {pipeline_mode = #tpu.pipeline_mode<synchronous>, transform_indices = @transform_2, window_bounds = array<i64: 64, 512>}, {pipeline_mode = #tpu.pipeline_mode<synchronous>, transform_indices = @transform_3, window_bounds = array<i64: 512, 256>}, {pipeline_mode = #tpu.pipeline_mode<synchronous>, transform_indices = @transform_4, window_bounds = array<i64: 1, 256>}, {pipeline_mode = #tpu.pipeline_mode<synchronous>, transform_indices = @transform_5, window_bounds = array<i64: 256, 128>}, {pipeline_mode = #tpu.pipeline_mode<synchronous>, transform_indices = @transform_6, window_bounds = array<i64: 1, 128>}, {pipeline_mode = #tpu.pipeline_mode<synchronous>, transform_indices = @transform_7, window_bounds = array<i64: 128, 2>}, {pipeline_mode = #tpu.pipeline_mode<synchronous>, transform_indices = @transform_8, window_bounds = array<i64: 1, 2>}, {transform_indices = @transform_9, window_bounds = array<i64: 1, 128, 2>}]} {
    %c0 = arith.constant 0 : index
    %c0_0 = arith.constant 0 : index
    %c0_1 = arith.constant 0 : index
    %0 = vector.load %arg2[%c0, %c0_0, %c0_1] : memref<1x128x64xbf16, #tpu.memory_space<vmem>>, vector<1x128x64xbf16>
    %1 = vector.shape_cast %0 : vector<1x128x64xbf16> to vector<128x64xbf16>
    %c0_2 = arith.constant 0 : index
    %c0_3 = arith.constant 0 : index
    %2 = vector.load %arg4[%c0_2, %c0_3] : memref<64x512xbf16, #tpu.memory_space<vmem>>, vector<64x512xbf16>
    %cst = arith.constant dense<0.000000e+00> : vector<128x512xf32>
    %3 = tpu.matmul %1, %2, %cst {dimension_numbers = #tpu.dot_dimension_numbers<[1], [0], [0], [1], [0, 0, 1, 1], [], []>} : vector<128x64xbf16>, vector<64x512xbf16>, vector<128x512xf32> -> vector<128x512xf32>
    %c0_4 = arith.constant 0 : index
    %c0_5 = arith.constant 0 : index
    %c0_6 = arith.constant 0 : index
    %4 = vector.load %arg3[%c0_4, %c0_5, %c0_6] : memref<1x1x512xf32, #tpu.memory_space<vmem>>, vector<1x1x512xf32>
    %5 = vector.shape_cast %4 : vector<1x1x512xf32> to vector<1x512xf32>
    %6 = vector.broadcast %5 : vector<1x512xf32> to vector<128x512xf32>
    %7 = arith.addf %3, %6 : vector<128x512xf32>
    %cst_7 = arith.constant 0.000000e+00 : f32
    %8 = vector.broadcast %cst_7 : f32 to vector<128x512xf32>
    %9 = arith.maximumf %7, %8 : vector<128x512xf32>
    %10 = arith.truncf %9 : vector<128x512xf32> to vector<128x512xbf16>
    %c0_8 = arith.constant 0 : index
    %c0_9 = arith.constant 0 : index
    %11 = vector.load %arg5[%c0_8, %c0_9] : memref<512x256xbf16, #tpu.memory_space<vmem>>, vector<512x256xbf16>
    %cst_10 = arith.constant dense<0.000000e+00> : vector<128x256xf32>
    %12 = tpu.matmul %10, %11, %cst_10 {dimension_numbers = #tpu.dot_dimension_numbers<[1], [0], [0], [1], [0, 0, 1, 1], [], []>} : vector<128x512xbf16>, vector<512x256xbf16>, vector<128x256xf32> -> vector<128x256xf32>
    %c0_11 = arith.constant 0 : index
    %c0_12 = arith.constant 0 : index
    %13 = vector.load %arg6[%c0_11, %c0_12] : memref<1x256xf32, #tpu.memory_space<vmem>>, vector<1x256xf32>
    %14 = vector.broadcast %13 : vector<1x256xf32> to vector<128x256xf32>
    %15 = arith.addf %12, %14 : vector<128x256xf32>
    %cst_13 = arith.constant 0.000000e+00 : f32
    %16 = vector.broadcast %cst_13 : f32 to vector<128x256xf32>
    %17 = arith.maximumf %15, %16 : vector<128x256xf32>
    %18 = arith.truncf %17 : vector<128x256xf32> to vector<128x256xbf16>
    %c0_14 = arith.constant 0 : index
    %c0_15 = arith.constant 0 : index
    %19 = vector.load %arg7[%c0_14, %c0_15] : memref<256x128xbf16, #tpu.memory_space<vmem>>, vector<256x128xbf16>
    %cst_16 = arith.constant dense<0.000000e+00> : vector<128x128xf32>
    %20 = tpu.matmul %18, %19, %cst_16 {dimension_numbers = #tpu.dot_dimension_numbers<[1], [0], [0], [1], [0, 0, 1, 1], [], []>} : vector<128x256xbf16>, vector<256x128xbf16>, vector<128x128xf32> -> vector<128x128xf32>
    %c0_17 = arith.constant 0 : index
    %c0_18 = arith.constant 0 : index
    %21 = vector.load %arg8[%c0_17, %c0_18] : memref<1x128xf32, #tpu.memory_space<vmem>>, vector<1x128xf32>
    %22 = vector.broadcast %21 : vector<1x128xf32> to vector<128x128xf32>
    %23 = arith.addf %20, %22 : vector<128x128xf32>
    %cst_19 = arith.constant 0.000000e+00 : f32
    %24 = vector.broadcast %cst_19 : f32 to vector<128x128xf32>
    %25 = arith.maximumf %23, %24 : vector<128x128xf32>
    %26 = arith.truncf %25 : vector<128x128xf32> to vector<128x128xbf16>
    %c0_20 = arith.constant 0 : index
    %c0_21 = arith.constant 0 : index
    %27 = vector.load %arg9[%c0_20, %c0_21] : memref<128x2xbf16, #tpu.memory_space<vmem>>, vector<128x2xbf16>
    %cst_22 = arith.constant dense<0.000000e+00> : vector<128x2xf32>
    %28 = tpu.matmul %26, %27, %cst_22 {dimension_numbers = #tpu.dot_dimension_numbers<[1], [0], [0], [1], [0, 0, 1, 1], [], []>} : vector<128x128xbf16>, vector<128x2xbf16>, vector<128x2xf32> -> vector<128x2xf32>
    %c0_23 = arith.constant 0 : index
    %c0_24 = arith.constant 0 : index
    %29 = vector.load %arg10[%c0_23, %c0_24] : memref<1x2xf32, #tpu.memory_space<vmem>>, vector<1x2xf32>
    %30 = vector.broadcast %29 : vector<1x2xf32> to vector<128x2xf32>
    %31 = arith.addf %28, %30 : vector<128x2xf32>
    %cst_25 = arith.constant dense<0xFF800000> : vector<128xf32>
    %32 = vector.multi_reduction <maximumf>, %31, %cst_25 [1] : vector<128x2xf32> to vector<128xf32>
    %33 = vector.shape_cast %32 : vector<128xf32> to vector<128x1xf32>
    %34 = vector.broadcast %33 : vector<128x1xf32> to vector<128x2xf32>
    %35 = arith.subf %31, %34 : vector<128x2xf32>
    %36 = math.exp %35 : vector<128x2xf32>
    %cst_26 = arith.constant dense<0.000000e+00> : vector<128xf32>
    %37 = vector.multi_reduction <add>, %36, %cst_26 [1] : vector<128x2xf32> to vector<128xf32>
    %38 = vector.shape_cast %37 : vector<128xf32> to vector<128x1xf32>
    %39 = math.log %38 : vector<128x1xf32>
    %40 = vector.broadcast %39 : vector<128x1xf32> to vector<128x2xf32>
    %41 = arith.subf %35, %40 : vector<128x2xf32>
    %c0_27 = arith.constant 0 : index
    %c0_28 = arith.constant 0 : index
    %c0_29 = arith.constant 0 : index
    %42 = vector.load %arg11[%c0_27, %c0_28, %c0_29] : memref<1x128x2xf32, #tpu.memory_space<vmem>>, vector<1x128x2xf32>
    %43 = vector.shape_cast %42 : vector<1x128x2xf32> to vector<128x2xf32>
    %44 = vector.shape_cast %41 : vector<128x2xf32> to vector<1x128x2xf32>
    tpu.vector_store %arg11[%c0_27, %c0_28, %c0_29], %44 {strides = array<i32>} : memref<1x128x2xf32, #tpu.memory_space<vmem>>, vector<1x128x2xf32>,
    return
  }
  func.func @transform_0(%arg0: i32, %arg1: i32) -> (i32, i32, i32) {
    %c0_i32 = arith.constant 0 : i32
    %c0_i32_0 = arith.constant 0 : i32
    return %arg0, %arg1, %c0_i32 : i32, i32, i32
  }
  func.func @transform_1(%arg0: i32, %arg1: i32) -> (i32, i32, i32) {
    %c0_i32 = arith.constant 0 : i32
    %c0_i32_0 = arith.constant 0 : i32
    %c0_i32_1 = arith.constant 0 : i32
    return %arg0, %c0_i32, %c0_i32_0 : i32, i32, i32
  }
  func.func @transform_2(%arg0: i32, %arg1: i32) -> (i32, i32) {
    %c0_i32 = arith.constant 0 : i32
    %c0_i32_0 = arith.constant 0 : i32
    %c0_i32_1 = arith.constant 0 : i32
    return %c0_i32, %c0_i32_0 : i32, i32
  }
  func.func @transform_3(%arg0: i32, %arg1: i32) -> (i32, i32) {
    %c0_i32 = arith.constant 0 : i32
    %c0_i32_0 = arith.constant 0 : i32
    %c0_i32_1 = arith.constant 0 : i32
    return %c0_i32, %c0_i32_0 : i32, i32
  }
  func.func @transform_4(%arg0: i32, %arg1: i32) -> (i32, i32) {
    %c0_i32 = arith.constant 0 : i32
    %c0_i32_0 = arith.constant 0 : i32
    %c0_i32_1 = arith.constant 0 : i32
    return %c0_i32, %c0_i32_0 : i32, i32
  }
  func.func @transform_5(%arg0: i32, %arg1: i32) -> (i32, i32) {
    %c0_i32 = arith.constant 0 : i32
    %c0_i32_0 = arith.constant 0 : i32
    %c0_i32_1 = arith.constant 0 : i32
    return %c0_i32, %c0_i32_0 : i32, i32
  }
  func.func @transform_6(%arg0: i32, %arg1: i32) -> (i32, i32) {
    %c0_i32 = arith.constant 0 : i32
    %c0_i32_0 = arith.constant 0 : i32
    %c0_i32_1 = arith.constant 0 : i32
    return %c0_i32, %c0_i32_0 : i32, i32
  }
  func.func @transform_7(%arg0: i32, %arg1: i32) -> (i32, i32) {
    %c0_i32 = arith.constant 0 : i32
    %c0_i32_0 = arith.constant 0 : i32
    %c0_i32_1 = arith.constant 0 : i32
    return %c0_i32, %c0_i32_0 : i32, i32
  }
  func.func @transform_8(%arg0: i32, %arg1: i32) -> (i32, i32) {
    %c0_i32 = arith.constant 0 : i32
    %c0_i32_0 = arith.constant 0 : i32
    %c0_i32_1 = arith.constant 0 : i32
    return %c0_i32, %c0_i32_0 : i32, i32
  }
  func.func @transform_9(%arg0: i32, %arg1: i32) -> (i32, i32, i32) {
    %c0_i32 = arith.constant 0 : i32
    %c0_i32_0 = arith.constant 0 : i32
    return %arg0, %arg1, %c0_i32 : i32, i32, i32
  }
}

</mosaic_0001>

<llo_original>
// kernel: pointnet_densecls.4
$region0: #{pointnet_densecls.4}
  #allocation0 [shape = 'u32[]', space=smem, size = 0x4, offset = 0x4, fixed_abs, tag = 'smem constant byte address 0x4 - core index']
  #allocation1 [shape = 'u32[144,128]{1,0:T(1,128)}', space=vmem, size = 0x12000, scoped, tag = 'internal scratch']
  %s0 = inlined_call_operand.vmem [shape: f32[2,256,3], index: 0, kind: input, shape index: {}]
  %s1 = inlined_call_operand.hbm [shape: bf16[3,64], index: 1, kind: input, shape index: {}]
  %s2 = inlined_call_operand.hbm [shape: f32[1,64], index: 2, kind: input, shape index: {}]
  %s3 = inlined_call_operand.hbm [shape: bf16[64,128], index: 3, kind: input, shape index: {}]
  %s4 = inlined_call_operand.hbm [shape: f32[1,128], index: 4, kind: input, shape index: {}]
  %s5 = inlined_call_operand.hbm [shape: bf16[128,1024], index: 5, kind: input, shape index: {}]
  %s6 = inlined_call_operand.hbm [shape: f32[1,1024], index: 6, kind: input, shape index: {}]
  %s7 = inlined_call_operand.vmem [shape: f32[2,1,1024], index: 7, kind: output, shape index: {}]
  %s8 = sld [smem:[#allocation0]]
  $region93: #{pointnet_densecls.4} parent=0
    _
  %s10 = ssub.s32 1, %s8
  %s11 = scalar_select 0, %s10, %s8
  $region1: #{pointnet_densecls.4} parent=0
    #allocation2 [shape = 'u8[1024]{0}', space=vmem, size = 0x400, scoped, tag = 'input window, operand 1, single buffered']
    #allocation3 [shape = 's32[2]{0}', space=sflag, size = 0x8, scoped, tag = 'scoped memory for pointnet_densecls.4']
    #allocation4 [shape = 'u8[512]{0}', space=vmem, size = 0x400, scoped, tag = 'input window, operand 2, single buffered']
    #allocation5 [shape = 's32[1]{0}', space=sflag, size = 0x4, scoped, tag = 'scoped memory for pointnet_densecls.4']
    #allocation6 [shape = 'u8[16384]{0}', space=vmem, size = 0x4000, scoped, tag = 'input window, operand 3, single buffered']
    #allocation7 [shape = 'u8[512]{0}', space=vmem, size = 0x400, scoped, tag = 'input window, operand 4, single buffered']
    #allocation8 [shape = 's32[1]{0}', space=sflag, size = 0x4, scoped, tag = 'scoped memory for pointnet_densecls.4']
    #allocation9 [shape = 'u8[262144]{0}', space=vmem, size = 0x40000, scoped, tag = 'input window, operand 5, single buffered']
    #allocation10 [shape = 'u8[4096]{0}', space=vmem, size = 0x1000, scoped, tag = 'input window, operand 6, single buffered']
    #allocation11 [shape = 's32[1]{0}', space=sflag, size = 0x4, scoped, tag = 'scoped memory for pointnet_densecls.4']
    %12 = vsyncpa [#allocation3], 0
    %13 = vsyncpa [#allocation5], 0
    %14 = vsyncpa [#allocation8], 0
    %15 = vsyncpa [#allocation11], 0
    loop: start=0, step=1, limit=6
    $region2: #{pointnet_densecls.4} parent=1 // loop_pre_header
      _
    $region3: #{pointnet_densecls.4} parent=1 // loop_header
      %s17 = sphi 0, %s21
      %p18 = scmp.ge.s32.totalorder %s17, 6
      %s24 = sphi 0, %s36
      %s25 = sphi 0, %s32
      %s26 = sphi 0, %s24
      %s27 = sphi 0, %s25
      %s28 = sphi 0, %s26
      %s29 = sphi 0, %s27
      %s41 = sphi 0, %s43
      %s44 = sphi 0, %s41
      %s45 = sphi 0, %s44
      %s61 = sphi 0, %s45
      %s65 = sphi 0, %s65
      %s67 = sphi 0, %s65
      %s68 = sphi 0, %s67
      %s82 = sphi 0, %s68
      %s86 = sphi 0, %s86
      %s88 = sphi 0, %s86
      %s89 = sphi 0, %s88
      %s103 = sphi 0, %s89
      %s107 = sphi 0, %s107
      %s109 = sphi 0, %s107
      %s110 = sphi 0, %s109
      %s124 = sphi 0, %s110
      %s128 = sphi 0, %s128
      %s130 = sphi 0, %s128
      %s131 = sphi 0, %s130
      %s145 = sphi 0, %s131
      %s149 = sphi 0, %s149
      %s151 = sphi 0, %s149
      %s152 = sphi 0, %s151
      %s166 = sphi 0, %s152
      %s170 = sphi 0, %s170
      %s172 = sphi 0, %s170
      %s173 = sphi 0, %s172
      %s187 = sphi 0, %s173
      %s193 = sphi 0, %s195
      %s196 = sphi 0, %s193
      %s197 = sphi 0, %s196
      %s213 = sphi 0, %s197
    $region4: #{pointnet_densecls.4} parent=1 // loop_header_branch
      %20 = sbr.rel (%p18) target = $region8
    $region5: #{pointnet_densecls.4} parent=1 // loop_body
      %s22 = ssub.s32 %s17, 1
      %s23 = ssub.s32 %s17, 2
      %s30 = sadd.s32 1, %s25
      %p31 = scmp.ge.s32.totalorder %s30, 2
      %s32 = scalar_select %p31, 0, %s30
      %s33 = sadd.s32 1, %s24
      %s34 = scalar_select %p31, %s33, %s24
      %p35 = scmp.ge.s32.totalorder %s34, 2
      %s36 = scalar_select %p35, 0, %s34
      %s37 = ssub.s32 %s24, %s36
      %s38 = ssub.s32 %s25, %s32
      %s39 = sor.u32 %s37, %s38
      %p40 = scmp.eq.s32.totalorder %s39, 0
      %s42 = sadd.s32 %s41, 1
      %s43 = scalar_select %p40, %s41, %s42
      %p46 = pneg %p40
      %p47 = scmp.eq.s32.totalorder %s17, 3
      %p48 = por %p46, %p47
      %p49 = scmp.ne.s32.totalorder %s41, %s44
      %p50 = scmp.eq.s32.totalorder %s17, 0
      %p51 = por %p49, %p50
      %p52 = scmp.ne.s32.totalorder %s41, %s44
      %p53 = scmp.eq.s32.totalorder %s22, 3
      %p54 = por %p52, %p53
      %p55 = scmp.ne.s32.totalorder %s44, %s45
      %p56 = scmp.eq.s32.totalorder %s22, 0
      %p57 = por %p55, %p56
      %p58 = scmp.ne.s32.totalorder %s44, %s45
      %p59 = scmp.eq.s32.totalorder %s23, 3
      %p60 = por %p58, %p59
      %p62 = scmp.ne.s32.totalorder %s45, %s61
      %p63 = scmp.eq.s32.totalorder %s23, 0
      %p64 = por %p62, %p63
      %s66 = sadd.s32 %s65, 1
      %p69 = scmp.eq.s32.totalorder %s17, 3
      %p70 = scmp.ne.s32.totalorder %s65, %s67
      %p71 = scmp.eq.s32.totalorder %s17, 0
      %p72 = por %p70, %p71
      %p73 = scmp.ne.s32.totalorder %s65, %s67
      %p74 = scmp.eq.s32.totalorder %s22, 3
      %p75 = por %p73, %p74
      %p76 = scmp.ne.s32.totalorder %s67, %s68
      %p77 = scmp.eq.s32.totalorder %s22, 0
      %p78 = por %p76, %p77
      %p79 = scmp.ne.s32.totalorder %s67, %s68
      %p80 = scmp.eq.s32.totalorder %s23, 3
      %p81 = por %p79, %p80
      %p83 = scmp.ne.s32.totalorder %s68, %s82
      %p84 = scmp.eq.s32.totalorder %s23, 0
      %p85 = por %p83, %p84
      %s87 = sadd.s32 %s86, 1
      %p90 = scmp.eq.s32.totalorder %s17, 3
      %p91 = scmp.ne.s32.totalorder %s86, %s88
      %p92 = scmp.eq.s32.totalorder %s17, 0
      %p93 = por %p91, %p92
      %p94 = scmp.ne.s32.totalorder %s86, %s88
      %p95 = scmp.eq.s32.totalorder %s22, 3
      %p96 = por %p94, %p95
      %p97 = scmp.ne.s32.totalorder %s88, %s89
      %p98 = scmp.eq.s32.totalorder %s22, 0
      %p99 = por %p97, %p98
      %p100 = scmp.ne.s32.totalorder %s88, %s89
      %p101 = scmp.eq.s32.totalorder %s23, 3
      %p102 = por %p100, %p101
      %p104 = scmp.ne.s32.totalorder %s89, %s103
      %p105 = scmp.eq.s32.totalorder %s23, 0
      %p106 = por %p104, %p105
      %s108 = sadd.s32 %s107, 1
      %p111 = scmp.eq.s32.totalorder %s17, 3
      %p112 = scmp.ne.s32.totalorder %s107, %s109
      %p113 = scmp.eq.s32.totalorder %s17, 0
      %p114 = por %p112, %p113
      %p115 = scmp.ne.s32.totalorder %s107, %s109
      %p116 = scmp.eq.s32.totalorder %s22, 3
      %p117 = por %p115, %p116
      %p118 = scmp.ne.s32.totalorder %s109, %s110
      %p119 = scmp.eq.s32.totalorder %s22, 0
      %p120 = por %p118, %p119
      %p121 = scmp.ne.s32.totalorder %s109, %s110
      %p122 = scmp.eq.s32.totalorder %s23, 3
      %p123 = por %p121, %p122
      %p125 = scmp.ne.s32.totalorder %s110, %s124
      %p126 = scmp.eq.s32.totalorder %s23, 0
      %p127 = por %p125, %p126
      %s129 = sadd.s32 %s128, 1
      %p132 = scmp.eq.s32.totalorder %s17, 3
      %p133 = scmp.ne.s32.totalorder %s128, %s130
      %p134 = scmp.eq.s32.totalorder %s17, 0
      %p135 = por %p133, %p134
      %p136 = scmp.ne.s32.totalorder %s128, %s130
      %p137 = scmp.eq.s32.totalorder %s22, 3
      %p138 = por %p136, %p137
      %p139 = scmp.ne.s32.totalorder %s130, %s131
      %p140 = scmp.eq.s32.totalorder %s22, 0
      %p141 = por %p139, %p140
      %p142 = scmp.ne.s32.totalorder %s130, %s131
      %p143 = scmp.eq.s32.totalorder %s23, 3
      %p144 = por %p142, %p143
      %p146 = scmp.ne.s32.totalorder %s131, %s145
      %p147 = scmp.eq.s32.totalorder %s23, 0
      %p148 = por %p146, %p147
      %s150 = sadd.s32 %s149, 1
      %p153 = scmp.eq.s32.totalorder %s17, 3
      %p154 = scmp.ne.s32.totalorder %s149, %s151
      %p155 = scmp.eq.s32.totalorder %s17, 0
      %p156 = por %p154, %p155
      %p157 = scmp.ne.s32.totalorder %s149, %s151
      %p158 = scmp.eq.s32.totalorder %s22, 3
      %p159 = por %p157, %p158
      %p160 = scmp.ne.s32.totalorder %s151, %s152
      %p161 = scmp.eq.s32.totalorder %s22, 0
      %p162 = por %p160, %p161
      %p163 = scmp.ne.s32.totalorder %s151, %s152
      %p164 = scmp.eq.s32.totalorder %s23, 3
      %p165 = por %p163, %p164
      %p167 = scmp.ne.s32.totalorder %s152, %s166
      %p168 = scmp.eq.s32.totalorder %s23, 0
      %p169 = por %p167, %p168
      %s171 = sadd.s32 %s170, 1
      %p174 = scmp.eq.s32.totalorder %s17, 3
      %p175 = scmp.ne.s32.totalorder %s170, %s172
      %p176 = scmp.eq.s32.totalorder %s17, 0
      %p177 = por %p175, %p176
      %p178 = scmp.ne.s32.totalorder %s170, %s172
      %p179 = scmp.eq.s32.totalorder %s22, 3
      %p180 = por %p178, %p179
      %p181 = scmp.ne.s32.totalorder %s172, %s173
      %p182 = scmp.eq.s32.totalorder %s22, 0
      %p183 = por %p181, %p182
      %p184 = scmp.ne.s32.totalorder %s172, %s173
      %p185 = scmp.eq.s32.totalorder %s23, 3
      %p186 = por %p184, %p185
      %p188 = scmp.ne.s32.totalorder %s173, %s187
      %p189 = scmp.eq.s32.totalorder %s23, 0
      %p190 = por %p188, %p189
      %s191 = ssub.s32 %s24, %s36
      %p192 = scmp.eq.s32.totalorder %s191, 0
      %s194 = sadd.s32 %s193, 1
      %s195 = scalar_select %p192, %s193, %s194
      %p198 = pneg %p192
      %p199 = scmp.eq.s32.totalorder %s17, 3
      %p200 = por %p198, %p199
      %p201 = scmp.ne.s32.totalorder %s193, %s196
      %p202 = scmp.eq.s32.totalorder %s17, 0
      %p203 = por %p201, %p202
      %p204 = scmp.ne.s32.totalorder %s193, %s196
      %p205 = scmp.eq.s32.totalorder %s22, 3
      %p206 = por %p204, %p205
      %p207 = scmp.ne.s32.totalorder %s196, %s197
      %p208 = scmp.eq.s32.totalorder %s22, 0
      %p209 = por %p207, %p208
      %p210 = scmp.ne.s32.totalorder %s196, %s197
      %p211 = scmp.eq.s32.totalorder %s23, 3
      %p212 = por %p210, %p211
      %p214 = scmp.ne.s32.totalorder %s197, %s213
      %p215 = scmp.eq.s32.totalorder %s23, 0
      %p216 = por %p214, %p215
      %p217 = scmp.le.s32.totalorder 1, %s17
      %p218 = scmp.lt.s32.totalorder %s17, 5
      %p219 = pnand %p217, %p218
      %p220 = pneg %p219
      // Predicated region
      $region9: #{pointnet_densecls.4} parent=5 // pred_check
        _
      $region10: #{pointnet_densecls.4} parent=5 // pred_check_branch
        %222 = sbr.rel (%p219) target = $region12
      $region11: #{pointnet_densecls.4} parent=5 // pred_region
        %s223 = ssub.s32 %s17, 1
        // Predicated region
        $region13: #{pointnet_densecls.4} parent=11 // pred_check
          %p224 = pneg %p78
        $region14: #{pointnet_densecls.4} parent=11 // pred_check_branch
          %226 = sbr.rel (%p224) target = $region16
        $region15: #{pointnet_densecls.4} parent=11 // pred_region
          %s228 = ssub.s32 32, 32
          %229 = vsyncadd [#allocation3], %s228
          %s231 = sshll.u32 [#allocation2], 4
          %s232 = int_to_ptr.vmem [resolvable:$true] %s231
          %234 = dma.hbm_to_vmem [thread:$0]  %s1, 32, %s232, [#allocation3]
        $region16: #{pointnet_densecls.4} parent=11 // pred_fallthru
          _
        // Predicated region
        $region17: #{pointnet_densecls.4} parent=11 // pred_check
          %p235 = pneg %p99
        $region18: #{pointnet_densecls.4} parent=11 // pred_check_branch
          %237 = sbr.rel (%p235) target = $region20
        $region19: #{pointnet_densecls.4} parent=11 // pred_region
          %s239 = ssub.s32 16, 16
          %240 = vsyncadd [#allocation5], %s239
          %s242 = sshll.u32 [#allocation4], 4
          %s243 = int_to_ptr.vmem [resolvable:$true] %s242
          %245 = dma.hbm_to_vmem [thread:$0]  %s2, 16, %s243, [#allocation5]
        $region20: #{pointnet_densecls.4} parent=11 // pred_fallthru
          _
        // Predicated region
        $region21: #{pointnet_densecls.4} parent=11 // pred_check
          %p246 = pneg %p120
        $region22: #{pointnet_densecls.4} parent=11 // pred_check_branch
          %248 = sbr.rel (%p246) target = $region24
        $region23: #{pointnet_densecls.4} parent=11 // pred_region
          %s250 = ssub.s32 512, 512
          %251 = vsyncadd [#allocation5], %s250
          %s252 = sshll.u32 [#allocation6], 4
          %s253 = int_to_ptr.vmem [resolvable:$true] %s252
          %258 = dma.hbm_to_vmem [thread:$0]  %s3, 512, %s253, [#allocation5], 64, 64, 4
        $region24: #{pointnet_densecls.4} parent=11 // pred_fallthru
          _
        // Predicated region
        $region25: #{pointnet_densecls.4} parent=11 // pred_check
          %p259 = pneg %p141
        $region26: #{pointnet_densecls.4} parent=11 // pred_check_branch
          %261 = sbr.rel (%p259) target = $region28
        $region27: #{pointnet_densecls.4} parent=11 // pred_region
          %s263 = ssub.s32 16, 16
          %264 = vsyncadd [#allocation8], %s263
          %s266 = sshll.u32 [#allocation7], 4
          %s267 = int_to_ptr.vmem [resolvable:$true] %s266
          %269 = dma.hbm_to_vmem [thread:$0]  %s4, 16, %s267, [#allocation8]
        $region28: #{pointnet_densecls.4} parent=11 // pred_fallthru
          _
        // Predicated region
        $region29: #{pointnet_densecls.4} parent=11 // pred_check
          %p270 = pneg %p162
        $region30: #{pointnet_densecls.4} parent=11 // pred_check_branch
          %272 = sbr.rel (%p270) target = $region32
        $region31: #{pointnet_densecls.4} parent=11 // pred_region
          %s274 = ssub.s32 8192, 8192
          %275 = vsyncadd [#allocation8], %s274
          %s276 = sshll.u32 [#allocation9], 4
          %s277 = int_to_ptr.vmem [resolvable:$true] %s276
          %282 = dma.hbm_to_vmem [thread:$0]  %s5, 8192, %s277, [#allocation8], 512, 512, 32
        $region32: #{pointnet_densecls.4} parent=11 // pred_fallthru
          _
        // Predicated region
        $region33: #{pointnet_densecls.4} parent=11 // pred_check
          %p283 = pneg %p183
        $region34: #{pointnet_densecls.4} parent=11 // pred_check_branch
          %285 = sbr.rel (%p283) target = $region36
        $region35: #{pointnet_densecls.4} parent=11 // pred_region
          %s287 = ssub.s32 128, 128
          %288 = vsyncadd [#allocation11], %s287
          %s290 = sshll.u32 [#allocation10], 4
          %s291 = int_to_ptr.vmem [resolvable:$true] %s290
          %293 = dma.hbm_to_vmem [thread:$0]  %s6, 128, %s291, [#allocation11]
        $region36: #{pointnet_densecls.4} parent=11 // pred_fallthru
          _
      $region12: #{pointnet_densecls.4} parent=5 // pred_fallthru
        _
      %p294 = scmp.lt.s32.totalorder %s17, 4
      // Predicated region
      $region37: #{pointnet_densecls.4} parent=5 // pred_check
        %p295 = pneg %p294
      $region38: #{pointnet_densecls.4} parent=5 // pred_check_branch
        %297 = sbr.rel (%p295) target = $region40
      $region39: #{pointnet_densecls.4} parent=5 // pred_region
        // Predicated region
        $region41: #{pointnet_densecls.4} parent=39 // pred_check
          %p298 = pneg %p51
        $region42: #{pointnet_densecls.4} parent=39 // pred_check_branch
          %300 = sbr.rel (%p298) target = $region44
        $region43: #{pointnet_densecls.4} parent=39 // pred_region
          %s301 = smul.u32 16, %s25
          %p302 = scmp.lt.s32.totalorder %s24, 1
          %s303 = scalar_select %p302, %s24, 1
          %p304 = scmp.lt.s32.totalorder %s301, 31
          %s305 = scalar_select %p304, %s301, 31
          %s306 = smul.addr %s303, 32
          %s307 = sadd.s32 %s305, %s306
          %s308 = smul.addr %s307, 8
          %s309 = scalar_lea.vmem %s0, %s308
          %s310 = smul.u32 16, %s25
        $region44: #{pointnet_densecls.4} parent=39 // pred_fallthru
          _
      $region40: #{pointnet_densecls.4} parent=5 // pred_fallthru
        _
      %p311 = scmp.le.s32.totalorder 1, %s17
      %p312 = scmp.lt.s32.totalorder %s17, 5
      %p313 = pnand %p311, %p312
      %p314 = pneg %p313
      // Predicated region
      $region45: #{pointnet_densecls.4} parent=5 // pred_check
        _
      $region46: #{pointnet_densecls.4} parent=5 // pred_check_branch
        %316 = sbr.rel (%p313) target = $region48
      $region47: #{pointnet_densecls.4} parent=5 // pred_region
        %s317 = ssub.s32 %s17, 1
        // Predicated region
        $region49: #{pointnet_densecls.4} parent=47 // pred_check
          %p318 = pneg %p78
        $region50: #{pointnet_densecls.4} parent=47 // pred_check_branch
          %320 = sbr.rel (%p318) target = $region52
        $region51: #{pointnet_densecls.4} parent=47 // pred_region
          %321 = dma.done [#allocation3], 32
        $region52: #{pointnet_densecls.4} parent=47 // pred_fallthru
          _
        // Predicated region
        $region53: #{pointnet_densecls.4} parent=47 // pred_check
          %p322 = pneg %p99
        $region54: #{pointnet_densecls.4} parent=47 // pred_check_branch
          %324 = sbr.rel (%p322) target = $region56
        $region55: #{pointnet_densecls.4} parent=47 // pred_region
          %325 = dma.done [#allocation5], 16
        $region56: #{pointnet_densecls.4} parent=47 // pred_fallthru
          _
        // Predicated region
        $region57: #{pointnet_densecls.4} parent=47 // pred_check
          %p326 = pneg %p120
        $region58: #{pointnet_densecls.4} parent=47 // pred_check_branch
          %328 = sbr.rel (%p326) target = $region60
        $region59: #{pointnet_densecls.4} parent=47 // pred_region
          %329 = dma.done [#allocation5], 512
        $region60: #{pointnet_densecls.4} parent=47 // pred_fallthru
          _
        // Predicated region
        $region61: #{pointnet_densecls.4} parent=47 // pred_check
          %p330 = pneg %p141
        $region62: #{pointnet_densecls.4} parent=47 // pred_check_branch
          %332 = sbr.rel (%p330) target = $region64
        $region63: #{pointnet_densecls.4} parent=47 // pred_region
          %333 = dma.done [#allocation8], 16
        $region64: #{pointnet_densecls.4} parent=47 // pred_fallthru
          _
        // Predicated region
        $region65: #{pointnet_densecls.4} parent=47 // pred_check
          %p334 = pneg %p162
        $region66: #{pointnet_densecls.4} parent=47 // pred_check_branch
          %336 = sbr.rel (%p334) target = $region68
        $region67: #{pointnet_densecls.4} parent=47 // pred_region
          %337 = dma.done [#allocation8], 8192
        $region68: #{pointnet_densecls.4} parent=47 // pred_fallthru
          _
        // Predicated region
        $region69: #{pointnet_densecls.4} parent=47 // pred_check
          %p338 = pneg %p183
        $region70: #{pointnet_densecls.4} parent=47 // pred_check_branch
          %340 = sbr.rel (%p338) target = $region72
        $region71: #{pointnet_densecls.4} parent=47 // pred_region
          %341 = dma.done [#allocation11], 128
        $region72: #{pointnet_densecls.4} parent=47 // pred_fallthru
          _
        %s342 = smul.u32 16, %s27
        %p343 = scmp.lt.s32.totalorder %s26, 1
        %s344 = scalar_select %p343, %s26, 1
        %p345 = scmp.lt.s32.totalorder %s342, 31
        %s346 = scalar_select %p345, %s342, 31
        %s347 = smul.addr %s344, 32
        %s348 = sadd.s32 %s346, %s347
        %s349 = smul.addr %s348, 8
        %s350 = scalar_lea.vmem %s0, %s349
        %p351 = pneg %p57
        %p352 = pneg %p54
        %p353 = pneg %p78
        %p354 = pneg %p75
        %p355 = pneg %p99
        %p356 = pneg %p96
        %p357 = pneg %p120
        %p358 = pneg %p117
        %p359 = pneg %p141
        %p360 = pneg %p138
        %p361 = pneg %p162
        %p362 = pneg %p159
        %p363 = pneg %p183
        %p364 = pneg %p180
        %p365 = pneg %p209
        %p366 = pneg %p206
        %p367 = scmp.lt.s32.totalorder %s26, 1
        %s368 = scalar_select %p367, %s26, 1
        %s369 = smul.addr %s368, 8
        %s370 = scalar_lea.vmem %s7, %s369
        %s371 = smul.u32 16, %s27
        %p372 = scmp.lt.s32.totalorder %s26, 1
        %s373 = scalar_select %p372, %s26, 1
        %p374 = scmp.lt.s32.totalorder %s371, 31
        %s375 = scalar_select %p374, %s371, 31
        %s376 = smul.addr %s373, 32
        %s377 = sadd.s32 %s375, %s376
        %s378 = smul.addr %s377, 8
        %s379 = scalar_lea.vmem %s0, %s378
        %s380 = smul.u32 16, %s27
        %p381 = scmp.lt.s32.totalorder %s26, 1
        %s382 = scalar_select %p381, %s26, 1
        %s383 = smul.addr %s382, 8
        %s384 = scalar_lea.vmem %s7, %s383
        %v386 = vld [vmem:[%s379] sm:$0xff]
        %v387 = vld [vmem:[%s379 + $0x8] sm:$0xff]
        %v388 = vld [vmem:[%s379 + $0x10] sm:$0xff]
        %v389 = vld [vmem:[%s379 + $0x18] sm:$0xff]
        %v390 = vld [vmem:[%s379 + $0x20] sm:$0xff]
        %v391 = vld [vmem:[%s379 + $0x28] sm:$0xff]
        %v392 = vld [vmem:[%s379 + $0x30] sm:$0xff]
        %v393 = vld [vmem:[%s379 + $0x38] sm:$0xff]
        %v394 = vld [vmem:[%s379 + $0x40] sm:$0xff]
        %v395 = vld [vmem:[%s379 + $0x48] sm:$0xff]
        %v396 = vld [vmem:[%s379 + $0x50] sm:$0xff]
        %v397 = vld [vmem:[%s379 + $0x58] sm:$0xff]
        %v398 = vld [vmem:[%s379 + $0x60] sm:$0xff]
        %v399 = vld [vmem:[%s379 + $0x68] sm:$0xff]
        %v400 = vld [vmem:[%s379 + $0x70] sm:$0xff]
        %v401 = vld [vmem:[%s379 + $0x78] sm:$0xff]
        %v402 = vpack.c.bf16 %v387, %v386
        %v403 = vpack.c.bf16 %v389, %v388
        %v404 = vpack.c.bf16 %v391, %v390
        %v405 = vpack.c.bf16 %v393, %v392
        %v406 = vpack.c.bf16 %v395, %v394
        %v407 = vpack.c.bf16 %v397, %v396
        %v408 = vpack.c.bf16 %v399, %v398
        %v409 = vpack.c.bf16 %v401, %v400
        %v410 = vld [vmem:[#allocation2] sm:$0x3]
        %v411 = vld [vmem:[#allocation4] sm:$0x1]
        %v413 = vlaneseq
        %v414 = vshrl.u32 %v413, 7
        %v415 = vsub.s32 0, %v414
        %v416 = vrot.slane %v411, %v415
        %vm418 = vcmask 23552
        %v420 = vsel %vm418, %v402, 0
        %v423 = vsel %vm418, %v403, 0
        %v426 = vsel %vm418, %v404, 0
        %v429 = vsel %vm418, %v405, 0
        %v432 = vsel %vm418, %v406, 0
        %v435 = vsel %vm418, %v407, 0
        %v438 = vsel %vm418, %v408, 0
        %v441 = vsel %vm418, %v409, 0
        %vm443 = vcmask 1040384
        %vm444 = vcmask 1041408
        %v445 = vsel %vm443, 4294967295, 65535
        %v446 = vsel %vm444, %v445, 0
        %v448 = vand.u32 %v410, %v446
        %450 = vmatprep.subr.bf16.mxu0 0
        %451 = vmatpush1.bf16.msra.mxu0 0
        %452 = vmatprep.subr.bf16.mxu0 0
        %453 = vmatpush1.bf16.msra.mxu0 0
        %454 = vmatprep.subr.bf16.mxu0 0
        %455 = vmatpush1.bf16.msra.mxu0 0
        %456 = vmatprep.subr.bf16.mxu0 0
        %457 = vmatpush1.bf16.msra.mxu0 0
        %458 = vmatprep.subr.bf16.mxu0 0
        %459 = vmatpush1.bf16.msra.mxu0 0
        %460 = vmatprep.subr.bf16.mxu0 0
        %461 = vmatpush1.bf16.msra.mxu0 0
        %462 = vmatprep.subr.bf16.mxu0 0
        %463 = vmatpush1.bf16.msra.mxu0 0
        %464 = vmatprep.subr.bf16.mxu0 0
        %465 = vmatpush1.bf16.msra.mxu0 %v448
        %466 = vmatprep.subr.bf16.mxu0 0
        %467 = vmatpush2.bf16.msra.mxu0 0
        %468 = vmatprep.subr.bf16.mxu0 0
        %469 = vmatpush2.bf16.msra.mxu0 0
        %470 = vmatprep.subr.bf16.mxu0 0
        %471 = vmatpush2.bf16.msra.mxu0 0
        %472 = vmatprep.subr.bf16.mxu0 0
        %473 = vmatpush2.bf16.msra.mxu0 0
        %474 = vmatprep.subr.bf16.mxu0 0
        %475 = vmatpush2.bf16.msra.mxu0 0
        %476 = vmatprep.subr.bf16.mxu0 0
        %477 = vmatpush2.bf16.msra.mxu0 0
        %478 = vmatprep.subr.bf16.mxu0 0
        %479 = vmatpush2.bf16.msra.mxu0 0
        %480 = vmatprep.subr.bf16.mxu0 0
        %481 = vmatpush2.bf16.msra.mxu0 0
        %482 = vmatprep.mubr.bf16.mxu0 0
        %483 = vmatmul.mubr.bf16.gmra.mxu0 %v420
        %v484 = vpop.f32.mrf.mxu0
        %v485 = vadd.f32 %v416, %v484
        %v486 = vpop.f32.mrf.mxu0
        %v487 = vpop.f32.mrf.mxu0
        %v488 = vadd.f32 %v416, %v487
        %v489 = vpop.f32.mrf.mxu0
        %490 = vmatprep.mubr.bf16.mxu0 0
        %491 = vmatmul.mubr.bf16.gmra.mxu0 %v423
        %v492 = vpop.f32.mrf.mxu0
        %v493 = vadd.f32 %v416, %v492
        %v494 = vpop.f32.mrf.mxu0
        %v495 = vpop.f32.mrf.mxu0
        %v496 = vadd.f32 %v416, %v495
        %v497 = vpop.f32.mrf.mxu0
        %498 = vmatprep.mubr.bf16.mxu0 0
        %499 = vmatmul.mubr.bf16.gmra.mxu0 %v426
        %v500 = vpop.f32.mrf.mxu0
        %v501 = vadd.f32 %v416, %v500
        %v502 = vpop.f32.mrf.mxu0
        %v503 = vpop.f32.mrf.mxu0
        %v504 = vadd.f32 %v416, %v503
        %v505 = vpop.f32.mrf.mxu0
        %506 = vmatprep.mubr.bf16.mxu0 0
        %507 = vmatmul.mubr.bf16.gmra.mxu0 %v429
        %v508 = vpop.f32.mrf.mxu0
        %v509 = vadd.f32 %v416, %v508
        %v510 = vpop.f32.mrf.mxu0
        %v511 = vpop.f32.mrf.mxu0
        %v512 = vadd.f32 %v416, %v511
        %v513 = vpop.f32.mrf.mxu0
        %514 = vmatprep.mubr.bf16.mxu0 0
        %515 = vmatmul.mubr.bf16.gmra.mxu0 %v432
        %v516 = vpop.f32.mrf.mxu0
        %v517 = vadd.f32 %v416, %v516
        %v518 = vpop.f32.mrf.mxu0
        %v519 = vpop.f32.mrf.mxu0
        %v520 = vadd.f32 %v416, %v519
        %v521 = vpop.f32.mrf.mxu0
        %522 = vmatprep.mubr.bf16.mxu0 0
        %523 = vmatmul.mubr.bf16.gmra.mxu0 %v435
        %v524 = vpop.f32.mrf.mxu0
        %v525 = vadd.f32 %v416, %v524
        %v526 = vpop.f32.mrf.mxu0
        %v527 = vpop.f32.mrf.mxu0
        %v528 = vadd.f32 %v416, %v527
        %v529 = vpop.f32.mrf.mxu0
        %530 = vmatprep.mubr.bf16.mxu0 0
        %531 = vmatmul.mubr.bf16.gmra.mxu0 %v438
        %v532 = vpop.f32.mrf.mxu0
        %v533 = vadd.f32 %v416, %v532
        %v534 = vpop.f32.mrf.mxu0
        %v535 = vpop.f32.mrf.mxu0
        %v536 = vadd.f32 %v416, %v535
        %v537 = vpop.f32.mrf.mxu0
        %538 = vmatprep.mubr.bf16.mxu0 0
        %539 = vmatmul.mubr.bf16.gmra.mxu0 %v441
        %v540 = vpop.f32.mrf.mxu0
        %v541 = vadd.f32 %v416, %v540
        %v542 = vpop.f32.mrf.mxu0
        %v543 = vpop.f32.mrf.mxu0
        %v544 = vadd.f32 %v416, %v543
        %v545 = vpop.f32.mrf.mxu0
        %546 = vdwg.mxu0
        %v547 = vmax.f32 %v485, 0.0
        %v548 = vmax.f32 %v488, 0.0
        %v549 = vmax.f32 %v493, 0.0
        %v550 = vmax.f32 %v496, 0.0
        %v551 = vmax.f32 %v501, 0.0
        %v552 = vmax.f32 %v504, 0.0
        %v553 = vmax.f32 %v509, 0.0
        %v554 = vmax.f32 %v512, 0.0
        %v555 = vmax.f32 %v517, 0.0
        %v556 = vmax.f32 %v520, 0.0
        %v557 = vmax.f32 %v525, 0.0
        %v558 = vmax.f32 %v528, 0.0
        %v559 = vmax.f32 %v533, 0.0
        %v560 = vmax.f32 %v536, 0.0
        %v561 = vmax.f32 %v541, 0.0
        %v562 = vmax.f32 %v544, 0.0
        %v563 = vpack.c.bf16 %v548, %v547
        %v564 = vpack.c.bf16 %v550, %v549
        %v565 = vpack.c.bf16 %v552, %v551
        %v566 = vpack.c.bf16 %v554, %v553
        %v567 = vpack.c.bf16 %v556, %v555
        %v568 = vpack.c.bf16 %v558, %v557
        %v569 = vpack.c.bf16 %v560, %v559
        %v570 = vpack.c.bf16 %v562, %v561
        %v571 = vld [vmem:[#allocation6] sm:$0xf]
        %v572 = vld [vmem:[#allocation6 + $0x4] sm:$0xf]
        %v573 = vld [vmem:[#allocation6 + $0x8] sm:$0xf]
        %v574 = vld [vmem:[#allocation6 + $0xc] sm:$0xf]
        %v575 = vld [vmem:[#allocation6 + $0x10] sm:$0xf]
        %v576 = vld [vmem:[#allocation6 + $0x14] sm:$0xf]
        %v577 = vld [vmem:[#allocation6 + $0x18] sm:$0xf]
        %v578 = vld [vmem:[#allocation6 + $0x1c] sm:$0xf]
        %v579 = vld [vmem:[#allocation7] sm:$0x1]
        %v581 = vlaneseq
        %v582 = vshrl.u32 %v581, 7
        %v583 = vsub.s32 0, %v582
        %v584 = vrot.slane %v579, %v583
        %v594 = vunpack.c.l.b16 %v571
        %v595 = vunpack.c.l.b16 %v572
        %v596 = vunpack.c.l.b16 %v573
        %v597 = vunpack.c.l.b16 %v574
        %v598 = vunpack.c.l.b16 %v575
        %v599 = vunpack.c.l.b16 %v576
        %v600 = vunpack.c.l.b16 %v577
        %v601 = vunpack.c.l.b16 %v578
        %v602 = vpack.c.b16 %v595, %v594
        %v603 = vpack.c.b16 %v597, %v596
        %v604 = vpack.c.b16 %v599, %v598
        %v605 = vpack.c.b16 %v601, %v600
        %vm610 = vcmask 523264
        %v612 = vsel %vm610, %v563, 0
        %v615 = vsel %vm610, %v564, 0
        %v618 = vsel %vm610, %v565, 0
        %v621 = vsel %vm610, %v566, 0
        %v624 = vsel %vm610, %v567, 0
        %v627 = vsel %vm610, %v568, 0
        %v630 = vsel %vm610, %v569, 0
        %v633 = vsel %vm610, %v570, 0
        %635 = vmatprep.subr.bf16.mxu0 0
        %636 = vmatpush1.bf16.msra.mxu0 0
        %637 = vmatprep.subr.bf16.mxu0 0
        %638 = vmatpush1.bf16.msra.mxu0 0
        %639 = vmatprep.subr.bf16.mxu0 0
        %640 = vmatpush1.bf16.msra.mxu0 0
        %641 = vmatprep.subr.bf16.mxu0 0
        %642 = vmatpush1.bf16.msra.mxu0 0
        %643 = vmatprep.subr.bf16.mxu0 0
        %644 = vmatpush1.bf16.msra.mxu0 %v605
        %645 = vmatprep.subr.bf16.mxu0 0
        %646 = vmatpush1.bf16.msra.mxu0 %v604
        %647 = vmatprep.subr.bf16.mxu0 0
        %648 = vmatpush1.bf16.msra.mxu0 %v603
        %649 = vmatprep.subr.bf16.mxu0 0
        %650 = vmatpush1.bf16.msra.mxu0 %v602
        %651 = vmatprep.subr.bf16.mxu0 0
        %652 = vmatpush2.bf16.msra.mxu0 0
        %653 = vmatprep.subr.bf16.mxu0 0
        %654 = vmatpush2.bf16.msra.mxu0 0
        %655 = vmatprep.subr.bf16.mxu0 0
        %656 = vmatpush2.bf16.msra.mxu0 0
        %657 = vmatprep.subr.bf16.mxu0 0
        %658 = vmatpush2.bf16.msra.mxu0 0
        %659 = vmatprep.subr.bf16.mxu0 0
        %660 = vmatpush2.bf16.msra.mxu0 0
        %661 = vmatprep.subr.bf16.mxu0 0
        %662 = vmatpush2.bf16.msra.mxu0 0
        %663 = vmatprep.subr.bf16.mxu0 0
        %664 = vmatpush2.bf16.msra.mxu0 0
        %665 = vmatprep.subr.bf16.mxu0 0
        %666 = vmatpush2.bf16.msra.mxu0 0
        %667 = vmatprep.mubr.bf16.mxu0 0
        %668 = vmatmul.mubr.bf16.gmra.mxu0 %v612
        %v669 = vpop.f32.mrf.mxu0
        %v670 = vadd.f32 %v584, %v669
        %v671 = vpop.f32.mrf.mxu0
        %v672 = vpop.f32.mrf.mxu0
        %v673 = vadd.f32 %v584, %v672
        %v674 = vpop.f32.mrf.mxu0
        %675 = vmatprep.mubr.bf16.mxu0 0
        %676 = vmatmul.mubr.bf16.gmra.mxu0 %v615
        %v677 = vpop.f32.mrf.mxu0
        %v678 = vadd.f32 %v584, %v677
        %v679 = vpop.f32.mrf.mxu0
        %v680 = vpop.f32.mrf.mxu0
        %v681 = vadd.f32 %v584, %v680
        %v682 = vpop.f32.mrf.mxu0
        %683 = vmatprep.mubr.bf16.mxu0 0
        %684 = vmatmul.mubr.bf16.gmra.mxu0 %v618
        %v685 = vpop.f32.mrf.mxu0
        %v686 = vadd.f32 %v584, %v685
        %v687 = vpop.f32.mrf.mxu0
        %v688 = vpop.f32.mrf.mxu0
        %v689 = vadd.f32 %v584, %v688
        %v690 = vpop.f32.mrf.mxu0
        %691 = vmatprep.mubr.bf16.mxu0 0
        %692 = vmatmul.mubr.bf16.gmra.mxu0 %v621
        %v693 = vpop.f32.mrf.mxu0
        %v694 = vadd.f32 %v584, %v693
        %v695 = vpop.f32.mrf.mxu0
        %v696 = vpop.f32.mrf.mxu0
        %v697 = vadd.f32 %v584, %v696
        %v698 = vpop.f32.mrf.mxu0
        %699 = vmatprep.mubr.bf16.mxu0 0
        %700 = vmatmul.mubr.bf16.gmra.mxu0 %v624
        %v701 = vpop.f32.mrf.mxu0
        %v702 = vadd.f32 %v584, %v701
        %v703 = vpop.f32.mrf.mxu0
        %v704 = vpop.f32.mrf.mxu0
        %v705 = vadd.f32 %v584, %v704
        %v706 = vpop.f32.mrf.mxu0
        %707 = vmatprep.mubr.bf16.mxu0 0
        %708 = vmatmul.mubr.bf16.gmra.mxu0 %v627
        %v709 = vpop.f32.mrf.mxu0
        %v710 = vadd.f32 %v584, %v709
        %v711 = vpop.f32.mrf.mxu0
        %v712 = vpop.f32.mrf.mxu0
        %v713 = vadd.f32 %v584, %v712
        %v714 = vpop.f32.mrf.mxu0
        %715 = vmatprep.mubr.bf16.mxu0 0
        %716 = vmatmul.mubr.bf16.gmra.mxu0 %v630
        %v717 = vpop.f32.mrf.mxu0
        %v718 = vadd.f32 %v584, %v717
        %v719 = vpop.f32.mrf.mxu0
        %v720 = vpop.f32.mrf.mxu0
        %v721 = vadd.f32 %v584, %v720
        %v722 = vpop.f32.mrf.mxu0
        %723 = vmatprep.mubr.bf16.mxu0 0
        %724 = vmatmul.mubr.bf16.gmra.mxu0 %v633
        %v725 = vpop.f32.mrf.mxu0
        %v726 = vadd.f32 %v584, %v725
        %v727 = vpop.f32.mrf.mxu0
        %v728 = vpop.f32.mrf.mxu0
        %v729 = vadd.f32 %v584, %v728
        %v730 = vpop.f32.mrf.mxu0
        %731 = vdwg.mxu0
        %v732 = vmax.f32 %v670, 0.0
        %v733 = vmax.f32 %v673, 0.0
        %v734 = vmax.f32 %v678, 0.0
        %v735 = vmax.f32 %v681, 0.0
        %v736 = vmax.f32 %v686, 0.0
        %v737 = vmax.f32 %v689, 0.0
        %v738 = vmax.f32 %v694, 0.0
        %v739 = vmax.f32 %v697, 0.0
        %v740 = vmax.f32 %v702, 0.0
        %v741 = vmax.f32 %v705, 0.0
        %v742 = vmax.f32 %v710, 0.0
        %v743 = vmax.f32 %v713, 0.0
        %v744 = vmax.f32 %v718, 0.0
        %v745 = vmax.f32 %v721, 0.0
        %v746 = vmax.f32 %v726, 0.0
        %v747 = vmax.f32 %v729, 0.0
        %v748 = vpack.c.bf16 %v733, %v732
        %v749 = vpack.c.bf16 %v735, %v734
        %v750 = vpack.c.bf16 %v737, %v736
        %v751 = vpack.c.bf16 %v739, %v738
        %v752 = vpack.c.bf16 %v741, %v740
        %v753 = vpack.c.bf16 %v743, %v742
        %v754 = vpack.c.bf16 %v745, %v744
        %v755 = vpack.c.bf16 %v747, %v746
        %v756 = vld [vmem:[#allocation9] sm:$0xff]
        %v757 = vld [vmem:[#allocation9 + $0x8] sm:$0xff]
        %v758 = vld [vmem:[#allocation9 + $0x10] sm:$0xff]
        %v759 = vld [vmem:[#allocation9 + $0x18] sm:$0xff]
        %v760 = vld [vmem:[#allocation9 + $0x20] sm:$0xff]
        %v761 = vld [vmem:[#allocation9 + $0x28] sm:$0xff]
        %v762 = vld [vmem:[#allocation9 + $0x30] sm:$0xff]
        %v763 = vld [vmem:[#allocation9 + $0x38] sm:$0xff]
        %v764 = vld [vmem:[#allocation9 + $0x40] sm:$0xff]
        %v765 = vld [vmem:[#allocation9 + $0x48] sm:$0xff]
        %v766 = vld [vmem:[#allocation9 + $0x50] sm:$0xff]
        %v767 = vld [vmem:[#allocation9 + $0x58] sm:$0xff]
        %v768 = vld [vmem:[#allocation9 + $0x60] sm:$0xff]
        %v769 = vld [vmem:[#allocation9 + $0x68] sm:$0xff]
        %v770 = vld [vmem:[#allocation9 + $0x70] sm:$0xff]
        %v771 = vld [vmem:[#allocation9 + $0x78] sm:$0xff]
        %v772 = vld [vmem:[#allocation9 + $0x80] sm:$0xff]
        %v773 = vld [vmem:[#allocation9 + $0x88] sm:$0xff]
        %v774 = vld [vmem:[#allocation9 + $0x90] sm:$0xff]
        %v775 = vld [vmem:[#allocation9 + $0x98] sm:$0xff]
        %v776 = vld [vmem:[#allocation9 + $0xa0] sm:$0xff]
        %v777 = vld [vmem:[#allocation9 + $0xa8] sm:$0xff]
        %v778 = vld [vmem:[#allocation9 + $0xb0] sm:$0xff]
        %v779 = vld [vmem:[#allocation9 + $0xb8] sm:$0xff]
        %v780 = vld [vmem:[#allocation9 + $0xc0] sm:$0xff]
        %v781 = vld [vmem:[#allocation9 + $0xc8] sm:$0xff]
        %v782 = vld [vmem:[#allocation9 + $0xd0] sm:$0xff]
        %v783 = vld [vmem:[#allocation9 + $0xd8] sm:$0xff]
        %v784 = vld [vmem:[#allocation9 + $0xe0] sm:$0xff]
        %v785 = vld [vmem:[#allocation9 + $0xe8] sm:$0xff]
        %v786 = vld [vmem:[#allocation9 + $0xf0] sm:$0xff]
        %v787 = vld [vmem:[#allocation9 + $0xf8] sm:$0xff]
        %v788 = vld [vmem:[#allocation9 + $0x100] sm:$0xff]
        %v789 = vld [vmem:[#allocation9 + $0x108] sm:$0xff]
        %v790 = vld [vmem:[#allocation9 + $0x110] sm:$0xff]
        %v791 = vld [vmem:[#allocation9 + $0x118] sm:$0xff]
        %v792 = vld [vmem:[#allocation9 + $0x120] sm:$0xff]
        %v793 = vld [vmem:[#allocation9 + $0x128] sm:$0xff]
        %v794 = vld [vmem:[#allocation9 + $0x130] sm:$0xff]
        %v795 = vld [vmem:[#allocation9 + $0x138] sm:$0xff]
        %v796 = vld [vmem:[#allocation9 + $0x140] sm:$0xff]
        %v797 = vld [vmem:[#allocation9 + $0x148] sm:$0xff]
        %v798 = vld [vmem:[#allocation9 + $0x150] sm:$0xff]
        %v799 = vld [vmem:[#allocation9 + $0x158] sm:$0xff]
        %v800 = vld [vmem:[#allocation9 + $0x160] sm:$0xff]
        %v801 = vld [vmem:[#allocation9 + $0x168] sm:$0xff]
        %v802 = vld [vmem:[#allocation9 + $0x170] sm:$0xff]
        %v803 = vld [vmem:[#allocation9 + $0x178] sm:$0xff]
        %v804 = vld [vmem:[#allocation9 + $0x180] sm:$0xff]
        %v805 = vld [vmem:[#allocation9 + $0x188] sm:$0xff]
        %v806 = vld [vmem:[#allocation9 + $0x190] sm:$0xff]
        %v807 = vld [vmem:[#allocation9 + $0x198] sm:$0xff]
        %v808 = vld [vmem:[#allocation9 + $0x1a0] sm:$0xff]
        %v809 = vld [vmem:[#allocation9 + $0x1a8] sm:$0xff]
        %v810 = vld [vmem:[#allocation9 + $0x1b0] sm:$0xff]
        %v811 = vld [vmem:[#allocation9 + $0x1b8] sm:$0xff]
        %v812 = vld [vmem:[#allocation9 + $0x1c0] sm:$0xff]
        %v813 = vld [vmem:[#allocation9 + $0x1c8] sm:$0xff]
        %v814 = vld [vmem:[#allocation9 + $0x1d0] sm:$0xff]
        %v815 = vld [vmem:[#allocation9 + $0x1d8] sm:$0xff]
        %v816 = vld [vmem:[#allocation9 + $0x1e0] sm:$0xff]
        %v817 = vld [vmem:[#allocation9 + $0x1e8] sm:$0xff]
        %v818 = vld [vmem:[#allocation9 + $0x1f0] sm:$0xff]
        %v819 = vld [vmem:[#allocation9 + $0x1f8] sm:$0xff]
        %v820 = vld [vmem:[#allocation10] sm:$0xff]
        %v822 = vlaneseq
        %v823 = vshrl.u32 %v822, 7
        %v824 = vsub.s32 0, %v823
        %v825 = vrot.slane %v820, %v824
        %v826 = vlaneseq
        %v827 = vshrl.u32 %v826, 7
        %v828 = vsub.s32 1, %v827
        %v829 = vrot.slane %v820, %v828
        %v830 = vlaneseq
        %v831 = vshrl.u32 %v830, 7
        %v832 = vsub.s32 2, %v831
        %v833 = vrot.slane %v820, %v832
        %v834 = vlaneseq
        %v835 = vshrl.u32 %v834, 7
        %v836 = vsub.s32 3, %v835
        %v837 = vrot.slane %v820, %v836
        %v838 = vlaneseq
        %v839 = vshrl.u32 %v838, 7
        %v840 = vsub.s32 4, %v839
        %v841 = vrot.slane %v820, %v840
        %v842 = vlaneseq
        %v843 = vshrl.u32 %v842, 7
        %v844 = vsub.s32 5, %v843
        %v845 = vrot.slane %v820, %v844
        %v846 = vlaneseq
        %v847 = vshrl.u32 %v846, 7
        %v848 = vsub.s32 6, %v847
        %v849 = vrot.slane %v820, %v848
        %v850 = vlaneseq
        %v851 = vshrl.u32 %v850, 7
        %v852 = vsub.s32 7, %v851
        %v853 = vrot.slane %v820, %v852
        %v926 = vunpack.c.l.b16 %v756
        %v927 = vunpack.c.h.b16 %v756
        %v928 = vunpack.c.l.b16 %v757
        %v929 = vunpack.c.h.b16 %v757
        %v930 = vunpack.c.l.b16 %v758
        %v931 = vunpack.c.h.b16 %v758
        %v932 = vunpack.c.l.b16 %v759
        %v933 = vunpack.c.h.b16 %v759
        %v934 = vunpack.c.l.b16 %v760
        %v935 = vunpack.c.h.b16 %v760
        %v936 = vunpack.c.l.b16 %v761
        %v937 = vunpack.c.h.b16 %v761
        %v938 = vunpack.c.l.b16 %v762
        %v939 = vunpack.c.h.b16 %v762
        %v940 = vunpack.c.l.b16 %v763
        %v941 = vunpack.c.h.b16 %v763
        %v942 = vunpack.c.l.b16 %v764
        %v943 = vunpack.c.h.b16 %v764
        %v944 = vunpack.c.l.b16 %v765
        %v945 = vunpack.c.h.b16 %v765
        %v946 = vunpack.c.l.b16 %v766
        %v947 = vunpack.c.h.b16 %v766
        %v948 = vunpack.c.l.b16 %v767
        %v949 = vunpack.c.h.b16 %v767
        %v950 = vunpack.c.l.b16 %v768
        %v951 = vunpack.c.h.b16 %v768
        %v952 = vunpack.c.l.b16 %v769
        %v953 = vunpack.c.h.b16 %v769
        %v954 = vunpack.c.l.b16 %v770
        %v955 = vunpack.c.h.b16 %v770
        %v956 = vunpack.c.l.b16 %v771
        %v957 = vunpack.c.h.b16 %v771
        %v958 = vunpack.c.l.b16 %v772
        %v959 = vunpack.c.h.b16 %v772
        %v960 = vunpack.c.l.b16 %v773
        %v961 = vunpack.c.h.b16 %v773
        %v962 = vunpack.c.l.b16 %v774
        %v963 = vunpack.c.h.b16 %v774
        %v964 = vunpack.c.l.b16 %v775
        %v965 = vunpack.c.h.b16 %v775
        %v966 = vunpack.c.l.b16 %v776
        %v967 = vunpack.c.h.b16 %v776
        %v968 = vunpack.c.l.b16 %v777
        %v969 = vunpack.c.h.b16 %v777
        %v970 = vunpack.c.l.b16 %v778
        %v971 = vunpack.c.h.b16 %v778
        %v972 = vunpack.c.l.b16 %v779
        %v973 = vunpack.c.h.b16 %v779
        %v974 = vunpack.c.l.b16 %v780
        %v975 = vunpack.c.h.b16 %v780
        %v976 = vunpack.c.l.b16 %v781
        %v977 = vunpack.c.h.b16 %v781
        %v978 = vunpack.c.l.b16 %v782
        %v979 = vunpack.c.h.b16 %v782
        %v980 = vunpack.c.l.b16 %v783
        %v981 = vunpack.c.h.b16 %v783
        %v982 = vunpack.c.l.b16 %v784
        %v983 = vunpack.c.h.b16 %v784
        %v984 = vunpack.c.l.b16 %v785
        %v985 = vunpack.c.h.b16 %v785
        %v986 = vunpack.c.l.b16 %v786
        %v987 = vunpack.c.h.b16 %v786
        %v988 = vunpack.c.l.b16 %v787
        %v989 = vunpack.c.h.b16 %v787
        %v990 = vunpack.c.l.b16 %v788
        %v991 = vunpack.c.h.b16 %v788
        %v992 = vunpack.c.l.b16 %v789
        %v993 = vunpack.c.h.b16 %v789
        %v994 = vunpack.c.l.b16 %v790
        %v995 = vunpack.c.h.b16 %v790
        %v996 = vunpack.c.l.b16 %v791
        %v997 = vunpack.c.h.b16 %v791
        %v998 = vunpack.c.l.b16 %v792
        %v999 = vunpack.c.h.b16 %v792
        %v1000 = vunpack.c.l.b16 %v793
        %v1001 = vunpack.c.h.b16 %v793
        %v1002 = vunpack.c.l.b16 %v794
        %v1003 = vunpack.c.h.b16 %v794
        %v1004 = vunpack.c.l.b16 %v795
        %v1005 = vunpack.c.h.b16 %v795
        %v1006 = vunpack.c.l.b16 %v796
        %v1007 = vunpack.c.h.b16 %v796
        %v1008 = vunpack.c.l.b16 %v797
        %v1009 = vunpack.c.h.b16 %v797
        %v1010 = vunpack.c.l.b16 %v798
        %v1011 = vunpack.c.h.b16 %v798
        %v1012 = vunpack.c.l.b16 %v799
        %v1013 = vunpack.c.h.b16 %v799
        %v1014 = vunpack.c.l.b16 %v800
        %v1015 = vunpack.c.h.b16 %v800
        %v1016 = vunpack.c.l.b16 %v801
        %v1017 = vunpack.c.h.b16 %v801
        %v1018 = vunpack.c.l.b16 %v802
        %v1019 = vunpack.c.h.b16 %v802
        %v1020 = vunpack.c.l.b16 %v803
        %v1021 = vunpack.c.h.b16 %v803
        %v1022 = vunpack.c.l.b16 %v804
        %v1023 = vunpack.c.h.b16 %v804
        %v1024 = vunpack.c.l.b16 %v805
        %v1025 = vunpack.c.h.b16 %v805
        %v1026 = vunpack.c.l.b16 %v806
        %v1027 = vunpack.c.h.b16 %v806
        %v1028 = vunpack.c.l.b16 %v807
        %v1029 = vunpack.c.h.b16 %v807
        %v1030 = vunpack.c.l.b16 %v808
        %v1031 = vunpack.c.h.b16 %v808
        %v1032 = vunpack.c.l.b16 %v809
        %v1033 = vunpack.c.h.b16 %v809
        %v1034 = vunpack.c.l.b16 %v810
        %v1035 = vunpack.c.h.b16 %v810
        %v1036 = vunpack.c.l.b16 %v811
        %v1037 = vunpack.c.h.b16 %v811
        %v1038 = vunpack.c.l.b16 %v812
        %v1039 = vunpack.c.h.b16 %v812
        %v1040 = vunpack.c.l.b16 %v813
        %v1041 = vunpack.c.h.b16 %v813
        %v1042 = vunpack.c.l.b16 %v814
        %v1043 = vunpack.c.h.b16 %v814
        %v1044 = vunpack.c.l.b16 %v815
        %v1045 = vunpack.c.h.b16 %v815
        %v1046 = vunpack.c.l.b16 %v816
        %v1047 = vunpack.c.h.b16 %v816
        %v1048 = vunpack.c.l.b16 %v817
        %v1049 = vunpack.c.h.b16 %v817
        %v1050 = vunpack.c.l.b16 %v818
        %v1051 = vunpack.c.h.b16 %v818
        %v1052 = vunpack.c.l.b16 %v819
        %v1053 = vunpack.c.h.b16 %v819
        %v1054 = vpack.c.b16 %v934, %v926
        %v1055 = vpack.c.b16 %v935, %v927
        %v1056 = vpack.c.b16 %v936, %v928
        %v1057 = vpack.c.b16 %v937, %v929
        %v1058 = vpack.c.b16 %v938, %v930
        %v1059 = vpack.c.b16 %v939, %v931
        %v1060 = vpack.c.b16 %v940, %v932
        %v1061 = vpack.c.b16 %v941, %v933
        %v1062 = vpack.c.b16 %v950, %v942
        %v1063 = vpack.c.b16 %v951, %v943
        %v1064 = vpack.c.b16 %v952, %v944
        %v1065 = vpack.c.b16 %v953, %v945
        %v1066 = vpack.c.b16 %v954, %v946
        %v1067 = vpack.c.b16 %v955, %v947
        %v1068 = vpack.c.b16 %v956, %v948
        %v1069 = vpack.c.b16 %v957, %v949
        %v1070 = vpack.c.b16 %v966, %v958
        %v1071 = vpack.c.b16 %v967, %v959
        %v1072 = vpack.c.b16 %v968, %v960
        %v1073 = vpack.c.b16 %v969, %v961
        %v1074 = vpack.c.b16 %v970, %v962
        %v1075 = vpack.c.b16 %v971, %v963
        %v1076 = vpack.c.b16 %v972, %v964
        %v1077 = vpack.c.b16 %v973, %v965
        %v1078 = vpack.c.b16 %v982, %v974
        %v1079 = vpack.c.b16 %v983, %v975
        %v1080 = vpack.c.b16 %v984, %v976
        %v1081 = vpack.c.b16 %v985, %v977
        %v1082 = vpack.c.b16 %v986, %v978
        %v1083 = vpack.c.b16 %v987, %v979
        %v1084 = vpack.c.b16 %v988, %v980
        %v1085 = vpack.c.b16 %v989, %v981
        %v1086 = vpack.c.b16 %v998, %v990
        %v1087 = vpack.c.b16 %v999, %v991
        %v1088 = vpack.c.b16 %v1000, %v992
        %v1089 = vpack.c.b16 %v1001, %v993
        %v1090 = vpack.c.b16 %v1002, %v994
        %v1091 = vpack.c.b16 %v1003, %v995
        %v1092 = vpack.c.b16 %v1004, %v996
        %v1093 = vpack.c.b16 %v1005, %v997
        %v1094 = vpack.c.b16 %v1014, %v1006
        %v1095 = vpack.c.b16 %v1015, %v1007
        %v1096 = vpack.c.b16 %v1016, %v1008
        %v1097 = vpack.c.b16 %v1017, %v1009
        %v1098 = vpack.c.b16 %v1018, %v1010
        %v1099 = vpack.c.b16 %v1019, %v1011
        %v1100 = vpack.c.b16 %v1020, %v1012
        %v1101 = vpack.c.b16 %v1021, %v1013
        %v1102 = vpack.c.b16 %v1030, %v1022
        %v1103 = vpack.c.b16 %v1031, %v1023
        %v1104 = vpack.c.b16 %v1032, %v1024
        %v1105 = vpack.c.b16 %v1033, %v1025
        %v1106 = vpack.c.b16 %v1034, %v1026
        %v1107 = vpack.c.b16 %v1035, %v1027
        %v1108 = vpack.c.b16 %v1036, %v1028
        %v1109 = vpack.c.b16 %v1037, %v1029
        %v1110 = vpack.c.b16 %v1046, %v1038
        %v1111 = vpack.c.b16 %v1047, %v1039
        %v1112 = vpack.c.b16 %v1048, %v1040
        %v1113 = vpack.c.b16 %v1049, %v1041
        %v1114 = vpack.c.b16 %v1050, %v1042
        %v1115 = vpack.c.b16 %v1051, %v1043
        %v1116 = vpack.c.b16 %v1052, %v1044
        %v1117 = vpack.c.b16 %v1053, %v1045
        %1182 = vmatprep.subr.bf16.mxu0 %v1111
        %1183 = vmatpush1.bf16.msra.mxu0 %v1110
        %1184 = vmatprep.subr.bf16.mxu0 %v1103
        %1185 = vmatpush1.bf16.msra.mxu0 %v1102
        %1186 = vmatprep.subr.bf16.mxu0 %v1095
        %1187 = vmatpush1.bf16.msra.mxu0 %v1094
        %1188 = vmatprep.subr.bf16.mxu0 %v1087
        %1189 = vmatpush1.bf16.msra.mxu0 %v1086
        %1190 = vmatprep.subr.bf16.mxu0 %v1079
        %1191 = vmatpush1.bf16.msra.mxu0 %v1078
        %1192 = vmatprep.subr.bf16.mxu0 %v1071
        %1193 = vmatpush1.bf16.msra.mxu0 %v1070
        %1194 = vmatprep.subr.bf16.mxu0 %v1063
        %1195 = vmatpush1.bf16.msra.mxu0 %v1062
        %1196 = vmatprep.subr.bf16.mxu0 %v1055
        %1197 = vmatpush1.bf16.msra.mxu0 %v1054
        %1198 = vmatprep.subr.bf16.mxu0 0
        %1199 = vmatpush2.bf16.msra.mxu0 0
        %1200 = vmatprep.subr.bf16.mxu0 0
        %1201 = vmatpush2.bf16.msra.mxu0 0
        %1202 = vmatprep.subr.bf16.mxu0 0
        %1203 = vmatpush2.bf16.msra.mxu0 0
        %1204 = vmatprep.subr.bf16.mxu0 0
        %1205 = vmatpush2.bf16.msra.mxu0 0
        %1206 = vmatprep.subr.bf16.mxu0 0
        %1207 = vmatpush2.bf16.msra.mxu0 0
        %1208 = vmatprep.subr.bf16.mxu0 0
        %1209 = vmatpush2.bf16.msra.mxu0 0
        %1210 = vmatprep.subr.bf16.mxu0 0
        %1211 = vmatpush2.bf16.msra.mxu0 0
        %1212 = vmatprep.subr.bf16.mxu0 0
        %1213 = vmatpush2.bf16.msra.mxu0 0
        %1214 = vmatprep.mubr.bf16.mxu0 0
        %1215 = vmatmul.mubr.bf16.gmra.mxu0 %v748
        %v1216 = vpop.f32.mrf.mxu0
        %v1217 = vadd.f32 %v825, %v1216
        %v1218 = vpop.f32.mrf.mxu0
        %v1219 = vadd.f32 %v829, %v1218
        %v1220 = vpop.f32.mrf.mxu0
        %v1221 = vadd.f32 %v825, %v1220
        %v1222 = vpop.f32.mrf.mxu0
        %v1223 = vadd.f32 %v829, %v1222
        %1224 = vmatprep.mubr.bf16.mxu0 0
        %1225 = vmatmul.mubr.bf16.gmra.mxu0 %v749
        %v1226 = vpop.f32.mrf.mxu0
        %v1227 = vadd.f32 %v825, %v1226
        %v1228 = vpop.f32.mrf.mxu0
        %v1229 = vadd.f32 %v829, %v1228
        %v1230 = vpop.f32.mrf.mxu0
        %v1231 = vadd.f32 %v825, %v1230
        %v1232 = vpop.f32.mrf.mxu0
        %v1233 = vadd.f32 %v829, %v1232
        %1234 = vmatprep.mubr.bf16.mxu0 0
        %1235 = vmatmul.mubr.bf16.gmra.mxu0 %v750
        %v1236 = vpop.f32.mrf.mxu0
        %v1237 = vadd.f32 %v825, %v1236
        %v1238 = vpop.f32.mrf.mxu0
        %v1239 = vadd.f32 %v829, %v1238
        %v1240 = vpop.f32.mrf.mxu0
        %v1241 = vadd.f32 %v825, %v1240
        %v1242 = vpop.f32.mrf.mxu0
        %v1243 = vadd.f32 %v829, %v1242
        %1244 = vmatprep.mubr.bf16.mxu0 0
        %1245 = vmatmul.mubr.bf16.gmra.mxu0 %v751
        %v1246 = vpop.f32.mrf.mxu0
        %v1247 = vadd.f32 %v825, %v1246
        %v1248 = vpop.f32.mrf.mxu0
        %v1249 = vadd.f32 %v829, %v1248
        %v1250 = vpop.f32.mrf.mxu0
        %v1251 = vadd.f32 %v825, %v1250
        %v1252 = vpop.f32.mrf.mxu0
        %v1253 = vadd.f32 %v829, %v1252
        %1254 = vmatprep.mubr.bf16.mxu0 0
        %1255 = vmatmul.mubr.bf16.gmra.mxu0 %v752
        %v1256 = vpop.f32.mrf.mxu0
        %v1257 = vadd.f32 %v825, %v1256
        %v1258 = vpop.f32.mrf.mxu0
        %v1259 = vadd.f32 %v829, %v1258
        %v1260 = vpop.f32.mrf.mxu0
        %v1261 = vadd.f32 %v825, %v1260
        %v1262 = vpop.f32.mrf.mxu0
        %v1263 = vadd.f32 %v829, %v1262
        %1264 = vmatprep.mubr.bf16.mxu0 0
        %1265 = vmatmul.mubr.bf16.gmra.mxu0 %v753
        %v1266 = vpop.f32.mrf.mxu0
        %v1267 = vadd.f32 %v825, %v1266
        %v1268 = vpop.f32.mrf.mxu0
        %v1269 = vadd.f32 %v829, %v1268
        %v1270 = vpop.f32.mrf.mxu0
        %v1271 = vadd.f32 %v825, %v1270
        %v1272 = vpop.f32.mrf.mxu0
        %v1273 = vadd.f32 %v829, %v1272
        %1274 = vmatprep.mubr.bf16.mxu0 0
        %1275 = vmatmul.mubr.bf16.gmra.mxu0 %v754
        %v1276 = vpop.f32.mrf.mxu0
        %v1277 = vadd.f32 %v825, %v1276
        %v1278 = vpop.f32.mrf.mxu0
        %v1279 = vadd.f32 %v829, %v1278
        %v1280 = vpop.f32.mrf.mxu0
        %v1281 = vadd.f32 %v825, %v1280
        %v1282 = vpop.f32.mrf.mxu0
        %v1283 = vadd.f32 %v829, %v1282
        %1284 = vmatprep.mubr.bf16.mxu0 0
        %1285 = vmatmul.mubr.bf16.gmra.mxu0 %v755
        %v1286 = vpop.f32.mrf.mxu0
        %v1287 = vadd.f32 %v825, %v1286
        %v1288 = vpop.f32.mrf.mxu0
        %v1289 = vadd.f32 %v829, %v1288
        %v1290 = vpop.f32.mrf.mxu0
        %v1291 = vadd.f32 %v825, %v1290
        %v1292 = vpop.f32.mrf.mxu0
        %v1293 = vadd.f32 %v829, %v1292
        %1294 = vdwg.mxu0
        %1295 = vmatprep.subr.bf16.mxu0 %v1113
        %1296 = vmatpush1.bf16.msra.mxu0 %v1112
        %1297 = vmatprep.subr.bf16.mxu0 %v1105
        %1298 = vmatpush1.bf16.msra.mxu0 %v1104
        %1299 = vmatprep.subr.bf16.mxu0 %v1097
        %1300 = vmatpush1.bf16.msra.mxu0 %v1096
        %1301 = vmatprep.subr.bf16.mxu0 %v1089
        %1302 = vmatpush1.bf16.msra.mxu0 %v1088
        %1303 = vmatprep.subr.bf16.mxu0 %v1081
        %1304 = vmatpush1.bf16.msra.mxu0 %v1080
        %1305 = vmatprep.subr.bf16.mxu0 %v1073
        %1306 = vmatpush1.bf16.msra.mxu0 %v1072
        %1307 = vmatprep.subr.bf16.mxu0 %v1065
        %1308 = vmatpush1.bf16.msra.mxu0 %v1064
        %1309 = vmatprep.subr.bf16.mxu0 %v1057
        %1310 = vmatpush1.bf16.msra.mxu0 %v1056
        %1311 = vmatprep.subr.bf16.mxu0 0
        %1312 = vmatpush2.bf16.msra.mxu0 0
        %1313 = vmatprep.subr.bf16.mxu0 0
        %1314 = vmatpush2.bf16.msra.mxu0 0
        %1315 = vmatprep.subr.bf16.mxu0 0
        %1316 = vmatpush2.bf16.msra.mxu0 0
        %1317 = vmatprep.subr.bf16.mxu0 0
        %1318 = vmatpush2.bf16.msra.mxu0 0
        %1319 = vmatprep.subr.bf16.mxu0 0
        %1320 = vmatpush2.bf16.msra.mxu0 0
        %1321 = vmatprep.subr.bf16.mxu0 0
        %1322 = vmatpush2.bf16.msra.mxu0 0
        %1323 = vmatprep.subr.bf16.mxu0 0
        %1324 = vmatpush2.bf16.msra.mxu0 0
        %1325 = vmatprep.subr.bf16.mxu0 0
        %1326 = vmatpush2.bf16.msra.mxu0 0
        %1327 = vmatprep.mubr.bf16.mxu0 0
        %1328 = vmatmul.mubr.bf16.gmra.mxu0 %v748
        %v1329 = vpop.f32.mrf.mxu0
        %v1330 = vadd.f32 %v833, %v1329
        %v1331 = vpop.f32.mrf.mxu0
        %v1332 = vadd.f32 %v837, %v1331
        %v1333 = vpop.f32.mrf.mxu0
        %v1334 = vadd.f32 %v833, %v1333
        %v1335 = vpop.f32.mrf.mxu0
        %v1336 = vadd.f32 %v837, %v1335
        %1337 = vmatprep.mubr.bf16.mxu0 0
        %1338 = vmatmul.mubr.bf16.gmra.mxu0 %v749
        %v1339 = vpop.f32.mrf.mxu0
        %v1340 = vadd.f32 %v833, %v1339
        %v1341 = vpop.f32.mrf.mxu0
        %v1342 = vadd.f32 %v837, %v1341
        %v1343 = vpop.f32.mrf.mxu0
        %v1344 = vadd.f32 %v833, %v1343
        %v1345 = vpop.f32.mrf.mxu0
        %v1346 = vadd.f32 %v837, %v1345
        %1347 = vmatprep.mubr.bf16.mxu0 0
        %1348 = vmatmul.mubr.bf16.gmra.mxu0 %v750
        %v1349 = vpop.f32.mrf.mxu0
        %v1350 = vadd.f32 %v833, %v1349
        %v1351 = vpop.f32.mrf.mxu0
        %v1352 = vadd.f32 %v837, %v1351
        %v1353 = vpop.f32.mrf.mxu0
        %v1354 = vadd.f32 %v833, %v1353
        %v1355 = vpop.f32.mrf.mxu0
        %v1356 = vadd.f32 %v837, %v1355
        %1357 = vmatprep.mubr.bf16.mxu0 0
        %1358 = vmatmul.mubr.bf16.gmra.mxu0 %v751
        %v1359 = vpop.f32.mrf.mxu0
        %v1360 = vadd.f32 %v833, %v1359
        %v1361 = vpop.f32.mrf.mxu0
        %v1362 = vadd.f32 %v837, %v1361
        %v1363 = vpop.f32.mrf.mxu0
        %v1364 = vadd.f32 %v833, %v1363
        %v1365 = vpop.f32.mrf.mxu0
        %v1366 = vadd.f32 %v837, %v1365
        %1367 = vmatprep.mubr.bf16.mxu0 0
        %1368 = vmatmul.mubr.bf16.gmra.mxu0 %v752
        %v1369 = vpop.f32.mrf.mxu0
        %v1370 = vadd.f32 %v833, %v1369
        %v1371 = vpop.f32.mrf.mxu0
        %v1372 = vadd.f32 %v837, %v1371
        %v1373 = vpop.f32.mrf.mxu0
        %v1374 = vadd.f32 %v833, %v1373
        %v1375 = vpop.f32.mrf.mxu0
        %v1376 = vadd.f32 %v837, %v1375
        %1377 = vmatprep.mubr.bf16.mxu0 0
        %1378 = vmatmul.mubr.bf16.gmra.mxu0 %v753
        %v1379 = vpop.f32.mrf.mxu0
        %v1380 = vadd.f32 %v833, %v1379
        %v1381 = vpop.f32.mrf.mxu0
        %v1382 = vadd.f32 %v837, %v1381
        %v1383 = vpop.f32.mrf.mxu0
        %v1384 = vadd.f32 %v833, %v1383
        %v1385 = vpop.f32.mrf.mxu0
        %v1386 = vadd.f32 %v837, %v1385
        %1387 = vmatprep.mubr.bf16.mxu0 0
        %1388 = vmatmul.mubr.bf16.gmra.mxu0 %v754
        %v1389 = vpop.f32.mrf.mxu0
        %v1390 = vadd.f32 %v833, %v1389
        %v1391 = vpop.f32.mrf.mxu0
        %v1392 = vadd.f32 %v837, %v1391
        %v1393 = vpop.f32.mrf.mxu0
        %v1394 = vadd.f32 %v833, %v1393
        %v1395 = vpop.f32.mrf.mxu0
        %v1396 = vadd.f32 %v837, %v1395
        %1397 = vmatprep.mubr.bf16.mxu0 0
        %1398 = vmatmul.mubr.bf16.gmra.mxu0 %v755
        %v1399 = vpop.f32.mrf.mxu0
        %v1400 = vadd.f32 %v833, %v1399
        %v1401 = vpop.f32.mrf.mxu0
        %v1402 = vadd.f32 %v837, %v1401
        %v1403 = vpop.f32.mrf.mxu0
        %v1404 = vadd.f32 %v833, %v1403
        %v1405 = vpop.f32.mrf.mxu0
        %v1406 = vadd.f32 %v837, %v1405
        %1407 = vdwg.mxu0
        %1408 = vmatprep.subr.bf16.mxu0 %v1115
        %1409 = vmatpush1.bf16.msra.mxu0 %v1114
        %1410 = vmatprep.subr.bf16.mxu0 %v1107
        %1411 = vmatpush1.bf16.msra.mxu0 %v1106
        %1412 = vmatprep.subr.bf16.mxu0 %v1099
        %1413 = vmatpush1.bf16.msra.mxu0 %v1098
        %1414 = vmatprep.subr.bf16.mxu0 %v1091
        %1415 = vmatpush1.bf16.msra.mxu0 %v1090
        %1416 = vmatprep.subr.bf16.mxu0 %v1083
        %1417 = vmatpush1.bf16.msra.mxu0 %v1082
        %1418 = vmatprep.subr.bf16.mxu0 %v1075
        %1419 = vmatpush1.bf16.msra.mxu0 %v1074
        %1420 = vmatprep.subr.bf16.mxu0 %v1067
        %1421 = vmatpush1.bf16.msra.mxu0 %v1066
        %1422 = vmatprep.subr.bf16.mxu0 %v1059
        %1423 = vmatpush1.bf16.msra.mxu0 %v1058
        %1424 = vmatprep.subr.bf16.mxu0 0
        %1425 = vmatpush2.bf16.msra.mxu0 0
        %1426 = vmatprep.subr.bf16.mxu0 0
        %1427 = vmatpush2.bf16.msra.mxu0 0
        %1428 = vmatprep.subr.bf16.mxu0 0
        %1429 = vmatpush2.bf16.msra.mxu0 0
        %1430 = vmatprep.subr.bf16.mxu0 0
        %1431 = vmatpush2.bf16.msra.mxu0 0
        %1432 = vmatprep.subr.bf16.mxu0 0
        %1433 = vmatpush2.bf16.msra.mxu0 0
        %1434 = vmatprep.subr.bf16.mxu0 0
        %1435 = vmatpush2.bf16.msra.mxu0 0
        %1436 = vmatprep.subr.bf16.mxu0 0
        %1437 = vmatpush2.bf16.msra.mxu0 0
        %1438 = vmatprep.subr.bf16.mxu0 0
        %1439 = vmatpush2.bf16.msra.mxu0 0
        %1440 = vmatprep.mubr.bf16.mxu0 0
        %1441 = vmatmul.mubr.bf16.gmra.mxu0 %v748
        %v1442 = vpop.f32.mrf.mxu0
        %v1443 = vadd.f32 %v841, %v1442
        %v1444 = vpop.f32.mrf.mxu0
        %v1445 = vadd.f32 %v845, %v1444
        %v1446 = vpop.f32.mrf.mxu0
        %v1447 = vadd.f32 %v841, %v1446
        %v1448 = vpop.f32.mrf.mxu0
        %v1449 = vadd.f32 %v845, %v1448
        %1450 = vmatprep.mubr.bf16.mxu0 0
        %1451 = vmatmul.mubr.bf16.gmra.mxu0 %v749
        %v1452 = vpop.f32.mrf.mxu0
        %v1453 = vadd.f32 %v841, %v1452
        %v1454 = vpop.f32.mrf.mxu0
        %v1455 = vadd.f32 %v845, %v1454
        %v1456 = vpop.f32.mrf.mxu0
        %v1457 = vadd.f32 %v841, %v1456
        %v1458 = vpop.f32.mrf.mxu0
        %v1459 = vadd.f32 %v845, %v1458
        %1460 = vmatprep.mubr.bf16.mxu0 0
        %1461 = vmatmul.mubr.bf16.gmra.mxu0 %v750
        %v1462 = vpop.f32.mrf.mxu0
        %v1463 = vadd.f32 %v841, %v1462
        %v1464 = vpop.f32.mrf.mxu0
        %v1465 = vadd.f32 %v845, %v1464
        %v1466 = vpop.f32.mrf.mxu0
        %v1467 = vadd.f32 %v841, %v1466
        %v1468 = vpop.f32.mrf.mxu0
        %v1469 = vadd.f32 %v845, %v1468
        %1470 = vmatprep.mubr.bf16.mxu0 0
        %1471 = vmatmul.mubr.bf16.gmra.mxu0 %v751
        %v1472 = vpop.f32.mrf.mxu0
        %v1473 = vadd.f32 %v841, %v1472
        %v1474 = vpop.f32.mrf.mxu0
        %v1475 = vadd.f32 %v845, %v1474
        %v1476 = vpop.f32.mrf.mxu0
        %v1477 = vadd.f32 %v841, %v1476
        %v1478 = vpop.f32.mrf.mxu0
        %v1479 = vadd.f32 %v845, %v1478
        %1480 = vmatprep.mubr.bf16.mxu0 0
        %1481 = vmatmul.mubr.bf16.gmra.mxu0 %v752
        %v1482 = vpop.f32.mrf.mxu0
        %v1483 = vadd.f32 %v841, %v1482
        %v1484 = vpop.f32.mrf.mxu0
        %v1485 = vadd.f32 %v845, %v1484
        %v1486 = vpop.f32.mrf.mxu0
        %v1487 = vadd.f32 %v841, %v1486
        %v1488 = vpop.f32.mrf.mxu0
        %v1489 = vadd.f32 %v845, %v1488
        %1490 = vmatprep.mubr.bf16.mxu0 0
        %1491 = vmatmul.mubr.bf16.gmra.mxu0 %v753
        %v1492 = vpop.f32.mrf.mxu0
        %v1493 = vadd.f32 %v841, %v1492
        %v1494 = vpop.f32.mrf.mxu0
        %v1495 = vadd.f32 %v845, %v1494
        %v1496 = vpop.f32.mrf.mxu0
        %v1497 = vadd.f32 %v841, %v1496
        %v1498 = vpop.f32.mrf.mxu0
        %v1499 = vadd.f32 %v845, %v1498
        %1500 = vmatprep.mubr.bf16.mxu0 0
        %1501 = vmatmul.mubr.bf16.gmra.mxu0 %v754
        %v1502 = vpop.f32.mrf.mxu0
        %v1503 = vadd.f32 %v841, %v1502
        %v1504 = vpop.f32.mrf.mxu0
        %v1505 = vadd.f32 %v845, %v1504
        %v1506 = vpop.f32.mrf.mxu0
        %v1507 = vadd.f32 %v841, %v1506
        %v1508 = vpop.f32.mrf.mxu0
        %v1509 = vadd.f32 %v845, %v1508
        %1510 = vmatprep.mubr.bf16.mxu0 0
        %1511 = vmatmul.mubr.bf16.gmra.mxu0 %v755
        %v1512 = vpop.f32.mrf.mxu0
        %v1513 = vadd.f32 %v841, %v1512
        %v1514 = vpop.f32.mrf.mxu0
        %v1515 = vadd.f32 %v845, %v1514
        %v1516 = vpop.f32.mrf.mxu0
        %v1517 = vadd.f32 %v841, %v1516
        %v1518 = vpop.f32.mrf.mxu0
        %v1519 = vadd.f32 %v845, %v1518
        %1520 = vdwg.mxu0
        %1521 = vmatprep.subr.bf16.mxu0 %v1117
        %1522 = vmatpush1.bf16.msra.mxu0 %v1116
        %1523 = vmatprep.subr.bf16.mxu0 %v1109
        %1524 = vmatpush1.bf16.msra.mxu0 %v1108
        %1525 = vmatprep.subr.bf16.mxu0 %v1101
        %1526 = vmatpush1.bf16.msra.mxu0 %v1100
        %1527 = vmatprep.subr.bf16.mxu0 %v1093
        %1528 = vmatpush1.bf16.msra.mxu0 %v1092
        %1529 = vmatprep.subr.bf16.mxu0 %v1085
        %1530 = vmatpush1.bf16.msra.mxu0 %v1084
        %1531 = vmatprep.subr.bf16.mxu0 %v1077
        %1532 = vmatpush1.bf16.msra.mxu0 %v1076
        %1533 = vmatprep.subr.bf16.mxu0 %v1069
        %1534 = vmatpush1.bf16.msra.mxu0 %v1068
        %1535 = vmatprep.subr.bf16.mxu0 %v1061
        %1536 = vmatpush1.bf16.msra.mxu0 %v1060
        %1537 = vmatprep.subr.bf16.mxu0 0
        %1538 = vmatpush2.bf16.msra.mxu0 0
        %1539 = vmatprep.subr.bf16.mxu0 0
        %1540 = vmatpush2.bf16.msra.mxu0 0
        %1541 = vmatprep.subr.bf16.mxu0 0
        %1542 = vmatpush2.bf16.msra.mxu0 0
        %1543 = vmatprep.subr.bf16.mxu0 0
        %1544 = vmatpush2.bf16.msra.mxu0 0
        %1545 = vmatprep.subr.bf16.mxu0 0
        %1546 = vmatpush2.bf16.msra.mxu0 0
        %1547 = vmatprep.subr.bf16.mxu0 0
        %1548 = vmatpush2.bf16.msra.mxu0 0
        %1549 = vmatprep.subr.bf16.mxu0 0
        %1550 = vmatpush2.bf16.msra.mxu0 0
        %1551 = vmatprep.subr.bf16.mxu0 0
        %1552 = vmatpush2.bf16.msra.mxu0 0
        %1553 = vmatprep.mubr.bf16.mxu0 0
        %1554 = vmatmul.mubr.bf16.gmra.mxu0 %v748
        %v1555 = vpop.f32.mrf.mxu0
        %v1556 = vadd.f32 %v849, %v1555
        %v1557 = vpop.f32.mrf.mxu0
        %v1558 = vadd.f32 %v853, %v1557
        %v1559 = vpop.f32.mrf.mxu0
        %v1560 = vadd.f32 %v849, %v1559
        %v1561 = vpop.f32.mrf.mxu0
        %v1562 = vadd.f32 %v853, %v1561
        %1563 = vmatprep.mubr.bf16.mxu0 0
        %1564 = vmatmul.mubr.bf16.gmra.mxu0 %v749
        %v1565 = vpop.f32.mrf.mxu0
        %v1566 = vadd.f32 %v849, %v1565
        %v1567 = vpop.f32.mrf.mxu0
        %v1568 = vadd.f32 %v853, %v1567
        %v1569 = vpop.f32.mrf.mxu0
        %v1570 = vadd.f32 %v849, %v1569
        %v1571 = vpop.f32.mrf.mxu0
        %v1572 = vadd.f32 %v853, %v1571
        %1573 = vmatprep.mubr.bf16.mxu0 0
        %1574 = vmatmul.mubr.bf16.gmra.mxu0 %v750
        %v1575 = vpop.f32.mrf.mxu0
        %v1576 = vadd.f32 %v849, %v1575
        %v1577 = vpop.f32.mrf.mxu0
        %v1578 = vadd.f32 %v853, %v1577
        %v1579 = vpop.f32.mrf.mxu0
        %v1580 = vadd.f32 %v849, %v1579
        %v1581 = vpop.f32.mrf.mxu0
        %v1582 = vadd.f32 %v853, %v1581
        %1583 = vmatprep.mubr.bf16.mxu0 0
        %1584 = vmatmul.mubr.bf16.gmra.mxu0 %v751
        %v1585 = vpop.f32.mrf.mxu0
        %v1586 = vadd.f32 %v849, %v1585
        %v1587 = vpop.f32.mrf.mxu0
        %v1588 = vadd.f32 %v853, %v1587
        %v1589 = vpop.f32.mrf.mxu0
        %v1590 = vadd.f32 %v849, %v1589
        %v1591 = vpop.f32.mrf.mxu0
        %v1592 = vadd.f32 %v853, %v1591
        %1593 = vmatprep.mubr.bf16.mxu0 0
        %1594 = vmatmul.mubr.bf16.gmra.mxu0 %v752
        %v1595 = vpop.f32.mrf.mxu0
        %v1596 = vadd.f32 %v849, %v1595
        %v1597 = vpop.f32.mrf.mxu0
        %v1598 = vadd.f32 %v853, %v1597
        %v1599 = vpop.f32.mrf.mxu0
        %v1600 = vadd.f32 %v849, %v1599
        %v1601 = vpop.f32.mrf.mxu0
        %v1602 = vadd.f32 %v853, %v1601
        %1603 = vmatprep.mubr.bf16.mxu0 0
        %1604 = vmatmul.mubr.bf16.gmra.mxu0 %v753
        %v1605 = vpop.f32.mrf.mxu0
        %v1606 = vadd.f32 %v849, %v1605
        %v1607 = vpop.f32.mrf.mxu0
        %v1608 = vadd.f32 %v853, %v1607
        %v1609 = vpop.f32.mrf.mxu0
        %v1610 = vadd.f32 %v849, %v1609
        %v1611 = vpop.f32.mrf.mxu0
        %v1612 = vadd.f32 %v853, %v1611
        %1613 = vmatprep.mubr.bf16.mxu0 0
        %1614 = vmatmul.mubr.bf16.gmra.mxu0 %v754
        %v1615 = vpop.f32.mrf.mxu0
        %v1616 = vadd.f32 %v849, %v1615
        %v1617 = vpop.f32.mrf.mxu0
        %v1618 = vadd.f32 %v853, %v1617
        %v1619 = vpop.f32.mrf.mxu0
        %v1620 = vadd.f32 %v849, %v1619
        %v1621 = vpop.f32.mrf.mxu0
        %v1622 = vadd.f32 %v853, %v1621
        %1623 = vmatprep.mubr.bf16.mxu0 0
        %1624 = vmatmul.mubr.bf16.gmra.mxu0 %v755
        %v1625 = vpop.f32.mrf.mxu0
        %v1626 = vadd.f32 %v849, %v1625
        %v1627 = vpop.f32.mrf.mxu0
        %v1628 = vadd.f32 %v853, %v1627
        %v1629 = vpop.f32.mrf.mxu0
        %v1630 = vadd.f32 %v849, %v1629
        %v1631 = vpop.f32.mrf.mxu0
        %v1632 = vadd.f32 %v853, %v1631
        %1633 = vdwg.mxu0
        %v1634 = vmax.f32 %v1217, 0.0
        %v1635 = vmax.f32 %v1219, 0.0
        %v1636 = vmax.f32 %v1330, 0.0
        %v1637 = vmax.f32 %v1332, 0.0
        %v1638 = vmax.f32 %v1443, 0.0
        %v1639 = vmax.f32 %v1445, 0.0
        %v1640 = vmax.f32 %v1556, 0.0
        %v1641 = vmax.f32 %v1558, 0.0
        %v1642 = vmax.f32 %v1221, 0.0
        %v1643 = vmax.f32 %v1223, 0.0
        %v1644 = vmax.f32 %v1334, 0.0
        %v1645 = vmax.f32 %v1336, 0.0
        %v1646 = vmax.f32 %v1447, 0.0
        %v1647 = vmax.f32 %v1449, 0.0
        %v1648 = vmax.f32 %v1560, 0.0
        %v1649 = vmax.f32 %v1562, 0.0
        %v1650 = vmax.f32 %v1227, 0.0
        %v1651 = vmax.f32 %v1229, 0.0
        %v1652 = vmax.f32 %v1340, 0.0
        %v1653 = vmax.f32 %v1342, 0.0
        %v1654 = vmax.f32 %v1453, 0.0
        %v1655 = vmax.f32 %v1455, 0.0
        %v1656 = vmax.f32 %v1566, 0.0
        %v1657 = vmax.f32 %v1568, 0.0
        %v1658 = vmax.f32 %v1231, 0.0
        %v1659 = vmax.f32 %v1233, 0.0
        %v1660 = vmax.f32 %v1344, 0.0
        %v1661 = vmax.f32 %v1346, 0.0
        %v1662 = vmax.f32 %v1457, 0.0
        %v1663 = vmax.f32 %v1459, 0.0
        %v1664 = vmax.f32 %v1570, 0.0
        %v1665 = vmax.f32 %v1572, 0.0
        %v1666 = vmax.f32 %v1237, 0.0
        %v1667 = vmax.f32 %v1239, 0.0
        %v1668 = vmax.f32 %v1350, 0.0
        %v1669 = vmax.f32 %v1352, 0.0
        %v1670 = vmax.f32 %v1463, 0.0
        %v1671 = vmax.f32 %v1465, 0.0
        %v1672 = vmax.f32 %v1576, 0.0
        %v1673 = vmax.f32 %v1578, 0.0
        %v1674 = vmax.f32 %v1241, 0.0
        %v1675 = vmax.f32 %v1243, 0.0
        %v1676 = vmax.f32 %v1354, 0.0
        %v1677 = vmax.f32 %v1356, 0.0
        %v1678 = vmax.f32 %v1467, 0.0
        %v1679 = vmax.f32 %v1469, 0.0
        %v1680 = vmax.f32 %v1580, 0.0
        %v1681 = vmax.f32 %v1582, 0.0
        %v1682 = vmax.f32 %v1247, 0.0
        %v1683 = vmax.f32 %v1249, 0.0
        %v1684 = vmax.f32 %v1360, 0.0
        %v1685 = vmax.f32 %v1362, 0.0
        %v1686 = vmax.f32 %v1473, 0.0
        %v1687 = vmax.f32 %v1475, 0.0
        %v1688 = vmax.f32 %v1586, 0.0
        %v1689 = vmax.f32 %v1588, 0.0
        %v1690 = vmax.f32 %v1251, 0.0
        %v1691 = vmax.f32 %v1253, 0.0
        %v1692 = vmax.f32 %v1364, 0.0
        %v1693 = vmax.f32 %v1366, 0.0
        %v1694 = vmax.f32 %v1477, 0.0
        %v1695 = vmax.f32 %v1479, 0.0
        %v1696 = vmax.f32 %v1590, 0.0
        %v1697 = vmax.f32 %v1592, 0.0
        %v1698 = vmax.f32 %v1257, 0.0
        %v1699 = vmax.f32 %v1259, 0.0
        %v1700 = vmax.f32 %v1370, 0.0
        %v1701 = vmax.f32 %v1372, 0.0
        %v1702 = vmax.f32 %v1483, 0.0
        %v1703 = vmax.f32 %v1485, 0.0
        %v1704 = vmax.f32 %v1596, 0.0
        %v1705 = vmax.f32 %v1598, 0.0
        %v1706 = vmax.f32 %v1261, 0.0
        %v1707 = vmax.f32 %v1263, 0.0
        %v1708 = vmax.f32 %v1374, 0.0
        %v1709 = vmax.f32 %v1376, 0.0
        %v1710 = vmax.f32 %v1487, 0.0
        %v1711 = vmax.f32 %v1489, 0.0
        %v1712 = vmax.f32 %v1600, 0.0
        %v1713 = vmax.f32 %v1602, 0.0
        %v1714 = vmax.f32 %v1267, 0.0
        %v1715 = vmax.f32 %v1269, 0.0
        %v1716 = vmax.f32 %v1380, 0.0
        %v1717 = vmax.f32 %v1382, 0.0
        %v1718 = vmax.f32 %v1493, 0.0
        %v1719 = vmax.f32 %v1495, 0.0
        %v1720 = vmax.f32 %v1606, 0.0
        %v1721 = vmax.f32 %v1608, 0.0
        %v1722 = vmax.f32 %v1271, 0.0
        %v1723 = vmax.f32 %v1273, 0.0
        %v1724 = vmax.f32 %v1384, 0.0
        %v1725 = vmax.f32 %v1386, 0.0
        %v1726 = vmax.f32 %v1497, 0.0
        %v1727 = vmax.f32 %v1499, 0.0
        %v1728 = vmax.f32 %v1610, 0.0
        %v1729 = vmax.f32 %v1612, 0.0
        %v1730 = vmax.f32 %v1277, 0.0
        %v1731 = vmax.f32 %v1279, 0.0
        %v1732 = vmax.f32 %v1390, 0.0
        %v1733 = vmax.f32 %v1392, 0.0
        %v1734 = vmax.f32 %v1503, 0.0
        %v1735 = vmax.f32 %v1505, 0.0
        %v1736 = vmax.f32 %v1616, 0.0
        %v1737 = vmax.f32 %v1618, 0.0
        %v1738 = vmax.f32 %v1281, 0.0
        %v1739 = vmax.f32 %v1283, 0.0
        %v1740 = vmax.f32 %v1394, 0.0
        %v1741 = vmax.f32 %v1396, 0.0
        %v1742 = vmax.f32 %v1507, 0.0
        %v1743 = vmax.f32 %v1509, 0.0
        %v1744 = vmax.f32 %v1620, 0.0
        %v1745 = vmax.f32 %v1622, 0.0
        %v1746 = vmax.f32 %v1287, 0.0
        %v1747 = vmax.f32 %v1289, 0.0
        %v1748 = vmax.f32 %v1400, 0.0
        %v1749 = vmax.f32 %v1402, 0.0
        %v1750 = vmax.f32 %v1513, 0.0
        %v1751 = vmax.f32 %v1515, 0.0
        %v1752 = vmax.f32 %v1626, 0.0
        %v1753 = vmax.f32 %v1628, 0.0
        %v1754 = vmax.f32 %v1291, 0.0
        %v1755 = vmax.f32 %v1293, 0.0
        %v1756 = vmax.f32 %v1404, 0.0
        %v1757 = vmax.f32 %v1406, 0.0
        %v1758 = vmax.f32 %v1517, 0.0
        %v1759 = vmax.f32 %v1519, 0.0
        %v1760 = vmax.f32 %v1630, 0.0
        %v1761 = vmax.f32 %v1632, 0.0
        %v1762 = vmax.f32 %v1634, %v1642
        %v1763 = vmax.f32 %v1762, %v1650
        %v1764 = vmax.f32 %v1763, %v1658
        %v1765 = vmax.f32 %v1764, %v1666
        %v1766 = vmax.f32 %v1765, %v1674
        %v1767 = vmax.f32 %v1766, %v1682
        %v1768 = vmax.f32 %v1767, %v1690
        %v1769 = vmax.f32 %v1768, %v1698
        %v1770 = vmax.f32 %v1769, %v1706
        %v1771 = vmax.f32 %v1770, %v1714
        %v1772 = vmax.f32 %v1771, %v1722
        %v1773 = vmax.f32 %v1772, %v1730
        %v1774 = vmax.f32 %v1773, %v1738
        %v1775 = vmax.f32 %v1774, %v1746
        %v1776 = vmax.f32 %v1775, %v1754
        %v1777 = vrot.slane %v1776, 4
        %v1778 = vmax.f32 %v1776, %v1777
        %v1779 = vrot.slane %v1778, 2
        %v1780 = vmax.f32 %v1778, %v1779
        %v1781 = vrot.slane %v1780, 1
        %v1782 = vmax.f32 %v1780, %v1781
        %v1783 = vmax.f32 %v1635, %v1643
        %v1784 = vmax.f32 %v1783, %v1651
        %v1785 = vmax.f32 %v1784, %v1659
        %v1786 = vmax.f32 %v1785, %v1667
        %v1787 = vmax.f32 %v1786, %v1675
        %v1788 = vmax.f32 %v1787, %v1683
        %v1789 = vmax.f32 %v1788, %v1691
        %v1790 = vmax.f32 %v1789, %v1699
        %v1791 = vmax.f32 %v1790, %v1707
        %v1792 = vmax.f32 %v1791, %v1715
        %v1793 = vmax.f32 %v1792, %v1723
        %v1794 = vmax.f32 %v1793, %v1731
        %v1795 = vmax.f32 %v1794, %v1739
        %v1796 = vmax.f32 %v1795, %v1747
        %v1797 = vmax.f32 %v1796, %v1755
        %v1798 = vrot.slane %v1797, 4
        %v1799 = vmax.f32 %v1797, %v1798
        %v1800 = vrot.slane %v1799, 2
        %v1801 = vmax.f32 %v1799, %v1800
        %v1802 = vrot.slane %v1801, 1
        %v1803 = vmax.f32 %v1801, %v1802
        %v1804 = vmax.f32 %v1636, %v1644
        %v1805 = vmax.f32 %v1804, %v1652
        %v1806 = vmax.f32 %v1805, %v1660
        %v1807 = vmax.f32 %v1806, %v1668
        %v1808 = vmax.f32 %v1807, %v1676
        %v1809 = vmax.f32 %v1808, %v1684
        %v1810 = vmax.f32 %v1809, %v1692
        %v1811 = vmax.f32 %v1810, %v1700
        %v1812 = vmax.f32 %v1811, %v1708
        %v1813 = vmax.f32 %v1812, %v1716
        %v1814 = vmax.f32 %v1813, %v1724
        %v1815 = vmax.f32 %v1814, %v1732
        %v1816 = vmax.f32 %v1815, %v1740
        %v1817 = vmax.f32 %v1816, %v1748
        %v1818 = vmax.f32 %v1817, %v1756
        %v1819 = vrot.slane %v1818, 4
        %v1820 = vmax.f32 %v1818, %v1819
        %v1821 = vrot.slane %v1820, 2
        %v1822 = vmax.f32 %v1820, %v1821
        %v1823 = vrot.slane %v1822, 1
        %v1824 = vmax.f32 %v1822, %v1823
        %v1825 = vmax.f32 %v1637, %v1645
        %v1826 = vmax.f32 %v1825, %v1653
        %v1827 = vmax.f32 %v1826, %v1661
        %v1828 = vmax.f32 %v1827, %v1669
        %v1829 = vmax.f32 %v1828, %v1677
        %v1830 = vmax.f32 %v1829, %v1685
        %v1831 = vmax.f32 %v1830, %v1693
        %v1832 = vmax.f32 %v1831, %v1701
        %v1833 = vmax.f32 %v1832, %v1709
        %v1834 = vmax.f32 %v1833, %v1717
        %v1835 = vmax.f32 %v1834, %v1725
        %v1836 = vmax.f32 %v1835, %v1733
        %v1837 = vmax.f32 %v1836, %v1741
        %v1838 = vmax.f32 %v1837, %v1749
        %v1839 = vmax.f32 %v1838, %v1757
        %v1840 = vrot.slane %v1839, 4
        %v1841 = vmax.f32 %v1839, %v1840
        %v1842 = vrot.slane %v1841, 2
        %v1843 = vmax.f32 %v1841, %v1842
        %v1844 = vrot.slane %v1843, 1
        %v1845 = vmax.f32 %v1843, %v1844
        %v1846 = vmax.f32 %v1638, %v1646
        %v1847 = vmax.f32 %v1846, %v1654
        %v1848 = vmax.f32 %v1847, %v1662
        %v1849 = vmax.f32 %v1848, %v1670
        %v1850 = vmax.f32 %v1849, %v1678
        %v1851 = vmax.f32 %v1850, %v1686
        %v1852 = vmax.f32 %v1851, %v1694
        %v1853 = vmax.f32 %v1852, %v1702
        %v1854 = vmax.f32 %v1853, %v1710
        %v1855 = vmax.f32 %v1854, %v1718
        %v1856 = vmax.f32 %v1855, %v1726
        %v1857 = vmax.f32 %v1856, %v1734
        %v1858 = vmax.f32 %v1857, %v1742
        %v1859 = vmax.f32 %v1858, %v1750
        %v1860 = vmax.f32 %v1859, %v1758
        %v1861 = vrot.slane %v1860, 4
        %v1862 = vmax.f32 %v1860, %v1861
        %v1863 = vrot.slane %v1862, 2
        %v1864 = vmax.f32 %v1862, %v1863
        %v1865 = vrot.slane %v1864, 1
        %v1866 = vmax.f32 %v1864, %v1865
        %v1867 = vmax.f32 %v1639, %v1647
        %v1868 = vmax.f32 %v1867, %v1655
        %v1869 = vmax.f32 %v1868, %v1663
        %v1870 = vmax.f32 %v1869, %v1671
        %v1871 = vmax.f32 %v1870, %v1679
        %v1872 = vmax.f32 %v1871, %v1687
        %v1873 = vmax.f32 %v1872, %v1695
        %v1874 = vmax.f32 %v1873, %v1703
        %v1875 = vmax.f32 %v1874, %v1711
        %v1876 = vmax.f32 %v1875, %v1719
        %v1877 = vmax.f32 %v1876, %v1727
        %v1878 = vmax.f32 %v1877, %v1735
        %v1879 = vmax.f32 %v1878, %v1743
        %v1880 = vmax.f32 %v1879, %v1751
        %v1881 = vmax.f32 %v1880, %v1759
        %v1882 = vrot.slane %v1881, 4
        %v1883 = vmax.f32 %v1881, %v1882
        %v1884 = vrot.slane %v1883, 2
        %v1885 = vmax.f32 %v1883, %v1884
        %v1886 = vrot.slane %v1885, 1
        %v1887 = vmax.f32 %v1885, %v1886
        %v1888 = vmax.f32 %v1640, %v1648
        %v1889 = vmax.f32 %v1888, %v1656
        %v1890 = vmax.f32 %v1889, %v1664
        %v1891 = vmax.f32 %v1890, %v1672
        %v1892 = vmax.f32 %v1891, %v1680
        %v1893 = vmax.f32 %v1892, %v1688
        %v1894 = vmax.f32 %v1893, %v1696
        %v1895 = vmax.f32 %v1894, %v1704
        %v1896 = vmax.f32 %v1895, %v1712
        %v1897 = vmax.f32 %v1896, %v1720
        %v1898 = vmax.f32 %v1897, %v1728
        %v1899 = vmax.f32 %v1898, %v1736
        %v1900 = vmax.f32 %v1899, %v1744
        %v1901 = vmax.f32 %v1900, %v1752
        %v1902 = vmax.f32 %v1901, %v1760
        %v1903 = vrot.slane %v1902, 4
        %v1904 = vmax.f32 %v1902, %v1903
        %v1905 = vrot.slane %v1904, 2
        %v1906 = vmax.f32 %v1904, %v1905
        %v1907 = vrot.slane %v1906, 1
        %v1908 = vmax.f32 %v1906, %v1907
        %v1909 = vmax.f32 %v1641, %v1649
        %v1910 = vmax.f32 %v1909, %v1657
        %v1911 = vmax.f32 %v1910, %v1665
        %v1912 = vmax.f32 %v1911, %v1673
        %v1913 = vmax.f32 %v1912, %v1681
        %v1914 = vmax.f32 %v1913, %v1689
        %v1915 = vmax.f32 %v1914, %v1697
        %v1916 = vmax.f32 %v1915, %v1705
        %v1917 = vmax.f32 %v1916, %v1713
        %v1918 = vmax.f32 %v1917, %v1721
        %v1919 = vmax.f32 %v1918, %v1729
        %v1920 = vmax.f32 %v1919, %v1737
        %v1921 = vmax.f32 %v1920, %v1745
        %v1922 = vmax.f32 %v1921, %v1753
        %v1923 = vmax.f32 %v1922, %v1761
        %v1924 = vrot.slane %v1923, 4
        %v1925 = vmax.f32 %v1923, %v1924
        %v1926 = vrot.slane %v1925, 2
        %v1927 = vmax.f32 %v1925, %v1926
        %v1928 = vrot.slane %v1927, 1
        %v1929 = vmax.f32 %v1927, %v1928
        %p1930 = scmp.eq.s32.totalorder %s27, 0
        // Predicated region
        $region73: #{pointnet_densecls.4} parent=47 // pred_check
          %p1931 = pneg %p1930
        $region74: #{pointnet_densecls.4} parent=47 // pred_check_branch
          %1933 = sbr.rel (%p1931) target = $region76
        $region75: #{pointnet_densecls.4} parent=47 // pred_region
          %v1942 = vcombine.low %v1782, %v1803
          %v1943 = vcombine.low %v1824, %v1845
          %v1944 = vcombine.low %v1866, %v1887
          %v1945 = vcombine.low %v1908, %v1929
          %v1947 = vunpack.c.l.s4 1966171168
          %v1948 = vunpack.c.0.s8 %v1947
          %v1949 = vlaneseq
          %v1950 = vshrl.u32 %v1949, 7
          %v1951 = vsub.s32 %v1948, %v1950
          %v1952 = vrot.slane %v1942, %v1951
          %v1954 = vunpack.c.l.s4 1966171168
          %v1955 = vunpack.c.0.s8 %v1954
          %v1956 = vlaneseq
          %v1957 = vshrl.u32 %v1956, 7
          %v1958 = vsub.s32 %v1955, %v1957
          %v1959 = vrot.slane %v1943, %v1958
          %v1961 = vunpack.c.l.s4 1966171168
          %v1962 = vunpack.c.0.s8 %v1961
          %v1963 = vlaneseq
          %v1964 = vshrl.u32 %v1963, 7
          %v1965 = vsub.s32 %v1962, %v1964
          %v1966 = vrot.slane %v1944, %v1965
          %v1968 = vunpack.c.l.s4 1966171168
          %v1969 = vunpack.c.0.s8 %v1968
          %v1970 = vlaneseq
          %v1971 = vshrl.u32 %v1970, 7
          %v1972 = vsub.s32 %v1969, %v1971
          %v1973 = vrot.slane %v1945, %v1972
          %v1974 = vcombine.low %v1952, %v1959
          %v1975 = vcombine.low %v1966, %v1973
          %v1977 = vunpack.c.l.s4 1966171168
          %v1978 = vunpack.c.0.s8 %v1977
          %v1979 = vlaneseq
          %v1980 = vshrl.u32 %v1979, 7
          %v1981 = vsub.s32 %v1978, %v1980
          %v1982 = vrot.slane %v1974, %v1981
          %v1984 = vunpack.c.l.s4 1966171168
          %v1985 = vunpack.c.0.s8 %v1984
          %v1986 = vlaneseq
          %v1987 = vshrl.u32 %v1986, 7
          %v1988 = vsub.s32 %v1985, %v1987
          %v1989 = vrot.slane %v1975, %v1988
          %v1990 = vcombine.low %v1982, %v1989
          %1992 = vst [vmem:[%s384] sm:$0xff] %v1990
        $region76: #{pointnet_densecls.4} parent=47 // pred_fallthru
          _
        %p1993 = scmp.gt.s32.totalorder %s27, 0
        // Predicated region
        $region77: #{pointnet_densecls.4} parent=47 // pred_check
          %p1994 = pneg %p1993
        $region78: #{pointnet_densecls.4} parent=47 // pred_check_branch
          %1996 = sbr.rel (%p1994) target = $region80
        $region79: #{pointnet_densecls.4} parent=47 // pred_region
          %v1997 = vld [vmem:[%s384] sm:$0xff]
          %v2006 = vcombine.low %v1782, %v1803
          %v2007 = vcombine.low %v1824, %v1845
          %v2008 = vcombine.low %v1866, %v1887
          %v2009 = vcombine.low %v1908, %v1929
          %v2011 = vunpack.c.l.s4 1966171168
          %v2012 = vunpack.c.0.s8 %v2011
          %v2013 = vlaneseq
          %v2014 = vshrl.u32 %v2013, 7
          %v2015 = vsub.s32 %v2012, %v2014
          %v2016 = vrot.slane %v2006, %v2015
          %v2018 = vunpack.c.l.s4 1966171168
          %v2019 = vunpack.c.0.s8 %v2018
          %v2020 = vlaneseq
          %v2021 = vshrl.u32 %v2020, 7
          %v2022 = vsub.s32 %v2019, %v2021
          %v2023 = vrot.slane %v2007, %v2022
          %v2025 = vunpack.c.l.s4 1966171168
          %v2026 = vunpack.c.0.s8 %v2025
          %v2027 = vlaneseq
          %v2028 = vshrl.u32 %v2027, 7
          %v2029 = vsub.s32 %v2026, %v2028
          %v2030 = vrot.slane %v2008, %v2029
          %v2032 = vunpack.c.l.s4 1966171168
          %v2033 = vunpack.c.0.s8 %v2032
          %v2034 = vlaneseq
          %v2035 = vshrl.u32 %v2034, 7
          %v2036 = vsub.s32 %v2033, %v2035
          %v2037 = vrot.slane %v2009, %v2036
          %v2038 = vcombine.low %v2016, %v2023
          %v2039 = vcombine.low %v2030, %v2037
          %v2041 = vunpack.c.l.s4 1966171168
          %v2042 = vunpack.c.0.s8 %v2041
          %v2043 = vlaneseq
          %v2044 = vshrl.u32 %v2043, 7
          %v2045 = vsub.s32 %v2042, %v2044
          %v2046 = vrot.slane %v2038, %v2045
          %v2048 = vunpack.c.l.s4 1966171168
          %v2049 = vunpack.c.0.s8 %v2048
          %v2050 = vlaneseq
          %v2051 = vshrl.u32 %v2050, 7
          %v2052 = vsub.s32 %v2049, %v2051
          %v2053 = vrot.slane %v2039, %v2052
          %v2054 = vcombine.low %v2046, %v2053
          %v2056 = vmax.f32 %v1997, %v2054
          %2057 = vst [vmem:[%s384] sm:$0xff] %v2056
        $region80: #{pointnet_densecls.4} parent=47 // pred_fallthru
          _
        %p2058 = scmp.lt.s32.totalorder %s26, 1
        %s2059 = scalar_select %p2058, %s26, 1
        %s2060 = smul.addr %s2059, 8
        %s2061 = scalar_lea.vmem %s7, %s2060
        // Predicated region
        $region81: #{pointnet_densecls.4} parent=47 // pred_check
          %p2062 = pneg %p206
        $region82: #{pointnet_densecls.4} parent=47 // pred_check_branch
          %2064 = sbr.rel (%p2062) target = $region84
        $region83: #{pointnet_densecls.4} parent=47 // pred_region
          _
        $region84: #{pointnet_densecls.4} parent=47 // pred_fallthru
          _
      $region48: #{pointnet_densecls.4} parent=5 // pred_fallthru
        _
      %p2065 = scmp.le.s32.totalorder 2, %s17
      // Predicated region
      $region85: #{pointnet_densecls.4} parent=5 // pred_check
        %p2066 = pneg %p2065
      $region86: #{pointnet_densecls.4} parent=5 // pred_check_branch
        %2068 = sbr.rel (%p2066) target = $region88
      $region87: #{pointnet_densecls.4} parent=5 // pred_region
        %s2069 = ssub.s32 %s17, 2
        // Predicated region
        $region89: #{pointnet_densecls.4} parent=87 // pred_check
          %p2070 = pneg %p212
        $region90: #{pointnet_densecls.4} parent=87 // pred_check_branch
          %2072 = sbr.rel (%p2070) target = $region92
        $region91: #{pointnet_densecls.4} parent=87 // pred_region
          %p2073 = scmp.lt.s32.totalorder %s28, 1
          %s2074 = scalar_select %p2073, %s28, 1
          %s2075 = smul.addr %s2074, 8
          %s2076 = scalar_lea.vmem %s7, %s2075
        $region92: #{pointnet_densecls.4} parent=87 // pred_fallthru
          _
      $region88: #{pointnet_densecls.4} parent=5 // pred_fallthru
        _
    $region6: #{pointnet_densecls.4} parent=1 // loop_footer
      %s21 = sadd.s32 1, %s17
    $region7: #{pointnet_densecls.4} parent=1 // loop_footer_branch
      %16 = sbr.rel target = $region3
    $region8: #{pointnet_densecls.4} parent=1 // loop_exit
      _
    %2077 = vsyncpa [#allocation3], 1
    %s2078 = scalar_lea.sflag [#allocation3], 1
    %2079 = vsyncpa %s2078, 1
    %2080 = vsyncpa [#allocation5], 1
    %2081 = vsyncpa [#allocation8], 1
    %2082 = vsyncpa [#allocation11], 1

// kernel: pointnet_densecls.6
$region0: #{pointnet_densecls.6}
  #allocation0 [shape = 'u32[]', space=smem, size = 0x4, offset = 0x4, fixed_abs, tag = 'smem constant byte address 0x4 - core index']
  #allocation1 [shape = 'u32[144,128]{1,0:T(1,128)}', space=vmem, size = 0x12000, scoped, tag = 'internal scratch']
  %s0 = inlined_call_operand.vmem [shape: f32[2,256,3], index: 0, kind: input, shape index: {}]
  %s1 = inlined_call_operand.vmem [shape: bf16[2,3,64], index: 1, kind: input, shape index: {}]
  %s2 = inlined_call_operand.vmem [shape: f32[1,64], index: 2, kind: input, shape index: {}]
  %s3 = inlined_call_operand.vmem [shape: bf16[64,128], index: 3, kind: input, shape index: {}]
  %s4 = inlined_call_operand.vmem [shape: f32[1,128], index: 4, kind: input, shape index: {}]
  %s5 = inlined_call_operand.vmem [shape: bf16[128,1024], index: 5, kind: input, shape index: {}]
  %s6 = inlined_call_operand.vmem [shape: f32[1,1024], index: 6, kind: input, shape index: {}]
  %s7 = inlined_call_operand.vmem [shape: bf16[2,256,64], index: 7, kind: output, shape index: {0}]
  %s8 = inlined_call_operand.vmem [shape: f32[2,1,1024], index: 8, kind: output, shape index: {1}]
  %9 = xla_tuple %s7, %s8
  %s10 = sld [smem:[#allocation0]]
  $region77: #{pointnet_densecls.6} parent=0
    _
  %s12 = ssub.s32 1, %s10
  %s13 = scalar_select 0, %s12, %s10
  loop: start=0, step=1, limit=6
  $region2: #{pointnet_densecls.6} parent=0 // loop_pre_header
    _
  $region3: #{pointnet_densecls.6} parent=0 // loop_header
    %s15 = sphi 0, %s19
    %p16 = scmp.ge.s32.totalorder %s15, 6
    %s22 = sphi 0, %s34
    %s23 = sphi 0, %s30
    %s24 = sphi 0, %s22
    %s25 = sphi 0, %s23
    %s26 = sphi 0, %s24
    %s27 = sphi 0, %s25
    %s39 = sphi 0, %s41
    %s42 = sphi 0, %s39
    %s43 = sphi 0, %s42
    %s59 = sphi 0, %s43
    %s65 = sphi 0, %s67
    %s68 = sphi 0, %s65
    %s69 = sphi 0, %s68
    %s85 = sphi 0, %s69
    %s89 = sphi 0, %s89
    %s91 = sphi 0, %s89
    %s92 = sphi 0, %s91
    %s106 = sphi 0, %s92
    %s110 = sphi 0, %s110
    %s112 = sphi 0, %s110
    %s113 = sphi 0, %s112
    %s127 = sphi 0, %s113
    %s131 = sphi 0, %s131
    %s133 = sphi 0, %s131
    %s134 = sphi 0, %s133
    %s148 = sphi 0, %s134
    %s152 = sphi 0, %s152
    %s154 = sphi 0, %s152
    %s155 = sphi 0, %s154
    %s169 = sphi 0, %s155
    %s173 = sphi 0, %s173
    %s175 = sphi 0, %s173
    %s176 = sphi 0, %s175
    %s190 = sphi 0, %s176
    %s198 = sphi 0, %s200
    %s201 = sphi 0, %s198
    %s202 = sphi 0, %s201
    %s218 = sphi 0, %s202
    %s224 = sphi 0, %s226
    %s227 = sphi 0, %s224
    %s228 = sphi 0, %s227
    %s244 = sphi 0, %s228
  $region4: #{pointnet_densecls.6} parent=0 // loop_header_branch
    %18 = sbr.rel (%p16) target = $region8
  $region5: #{pointnet_densecls.6} parent=0 // loop_body
    %s20 = ssub.s32 %s15, 1
    %s21 = ssub.s32 %s15, 2
    %s28 = sadd.s32 1, %s23
    %p29 = scmp.ge.s32.totalorder %s28, 2
    %s30 = scalar_select %p29, 0, %s28
    %s31 = sadd.s32 1, %s22
    %s32 = scalar_select %p29, %s31, %s22
    %p33 = scmp.ge.s32.totalorder %s32, 2
    %s34 = scalar_select %p33, 0, %s32
    %s35 = ssub.s32 %s22, %s34
    %s36 = ssub.s32 %s23, %s30
    %s37 = sor.u32 %s35, %s36
    %p38 = scmp.eq.s32.totalorder %s37, 0
    %s40 = sadd.s32 %s39, 1
    %s41 = scalar_select %p38, %s39, %s40
    %p44 = pneg %p38
    %p45 = scmp.eq.s32.totalorder %s15, 3
    %p46 = por %p44, %p45
    %p47 = scmp.ne.s32.totalorder %s39, %s42
    %p48 = scmp.eq.s32.totalorder %s15, 0
    %p49 = por %p47, %p48
    %p50 = scmp.ne.s32.totalorder %s39, %s42
    %p51 = scmp.eq.s32.totalorder %s20, 3
    %p52 = por %p50, %p51
    %p53 = scmp.ne.s32.totalorder %s42, %s43
    %p54 = scmp.eq.s32.totalorder %s20, 0
    %p55 = por %p53, %p54
    %p56 = scmp.ne.s32.totalorder %s42, %s43
    %p57 = scmp.eq.s32.totalorder %s21, 3
    %p58 = por %p56, %p57
    %p60 = scmp.ne.s32.totalorder %s43, %s59
    %p61 = scmp.eq.s32.totalorder %s21, 0
    %p62 = por %p60, %p61
    %s63 = ssub.s32 %s22, %s34
    %p64 = scmp.eq.s32.totalorder %s63, 0
    %s66 = sadd.s32 %s65, 1
    %s67 = scalar_select %p64, %s65, %s66
    %p70 = pneg %p64
    %p71 = scmp.eq.s32.totalorder %s15, 3
    %p72 = por %p70, %p71
    %p73 = scmp.ne.s32.totalorder %s65, %s68
    %p74 = scmp.eq.s32.totalorder %s15, 0
    %p75 = por %p73, %p74
    %p76 = scmp.ne.s32.totalorder %s65, %s68
    %p77 = scmp.eq.s32.totalorder %s20, 3
    %p78 = por %p76, %p77
    %p79 = scmp.ne.s32.totalorder %s68, %s69
    %p80 = scmp.eq.s32.totalorder %s20, 0
    %p81 = por %p79, %p80
    %p82 = scmp.ne.s32.totalorder %s68, %s69
    %p83 = scmp.eq.s32.totalorder %s21, 3
    %p84 = por %p82, %p83
    %p86 = scmp.ne.s32.totalorder %s69, %s85
    %p87 = scmp.eq.s32.totalorder %s21, 0
    %p88 = por %p86, %p87
    %s90 = sadd.s32 %s89, 1
    %p93 = scmp.eq.s32.totalorder %s15, 3
    %p94 = scmp.ne.s32.totalorder %s89, %s91
    %p95 = scmp.eq.s32.totalorder %s15, 0
    %p96 = por %p94, %p95
    %p97 = scmp.ne.s32.totalorder %s89, %s91
    %p98 = scmp.eq.s32.totalorder %s20, 3
    %p99 = por %p97, %p98
    %p100 = scmp.ne.s32.totalorder %s91, %s92
    %p101 = scmp.eq.s32.totalorder %s20, 0
    %p102 = por %p100, %p101
    %p103 = scmp.ne.s32.totalorder %s91, %s92
    %p104 = scmp.eq.s32.totalorder %s21, 3
    %p105 = por %p103, %p104
    %p107 = scmp.ne.s32.totalorder %s92, %s106
    %p108 = scmp.eq.s32.totalorder %s21, 0
    %p109 = por %p107, %p108
    %s111 = sadd.s32 %s110, 1
    %p114 = scmp.eq.s32.totalorder %s15, 3
    %p115 = scmp.ne.s32.totalorder %s110, %s112
    %p116 = scmp.eq.s32.totalorder %s15, 0
    %p117 = por %p115, %p116
    %p118 = scmp.ne.s32.totalorder %s110, %s112
    %p119 = scmp.eq.s32.totalorder %s20, 3
    %p120 = por %p118, %p119
    %p121 = scmp.ne.s32.totalorder %s112, %s113
    %p122 = scmp.eq.s32.totalorder %s20, 0
    %p123 = por %p121, %p122
    %p124 = scmp.ne.s32.totalorder %s112, %s113
    %p125 = scmp.eq.s32.totalorder %s21, 3
    %p126 = por %p124, %p125
    %p128 = scmp.ne.s32.totalorder %s113, %s127
    %p129 = scmp.eq.s32.totalorder %s21, 0
    %p130 = por %p128, %p129
    %s132 = sadd.s32 %s131, 1
    %p135 = scmp.eq.s32.totalorder %s15, 3
    %p136 = scmp.ne.s32.totalorder %s131, %s133
    %p137 = scmp.eq.s32.totalorder %s15, 0
    %p138 = por %p136, %p137
    %p139 = scmp.ne.s32.totalorder %s131, %s133
    %p140 = scmp.eq.s32.totalorder %s20, 3
    %p141 = por %p139, %p140
    %p142 = scmp.ne.s32.totalorder %s133, %s134
    %p143 = scmp.eq.s32.totalorder %s20, 0
    %p144 = por %p142, %p143
    %p145 = scmp.ne.s32.totalorder %s133, %s134
    %p146 = scmp.eq.s32.totalorder %s21, 3
    %p147 = por %p145, %p146
    %p149 = scmp.ne.s32.totalorder %s134, %s148
    %p150 = scmp.eq.s32.totalorder %s21, 0
    %p151 = por %p149, %p150
    %s153 = sadd.s32 %s152, 1
    %p156 = scmp.eq.s32.totalorder %s15, 3
    %p157 = scmp.ne.s32.totalorder %s152, %s154
    %p158 = scmp.eq.s32.totalorder %s15, 0
    %p159 = por %p157, %p158
    %p160 = scmp.ne.s32.totalorder %s152, %s154
    %p161 = scmp.eq.s32.totalorder %s20, 3
    %p162 = por %p160, %p161
    %p163 = scmp.ne.s32.totalorder %s154, %s155
    %p164 = scmp.eq.s32.totalorder %s20, 0
    %p165 = por %p163, %p164
    %p166 = scmp.ne.s32.totalorder %s154, %s155
    %p167 = scmp.eq.s32.totalorder %s21, 3
    %p168 = por %p166, %p167
    %p170 = scmp.ne.s32.totalorder %s155, %s169
    %p171 = scmp.eq.s32.totalorder %s21, 0
    %p172 = por %p170, %p171
    %s174 = sadd.s32 %s173, 1
    %p177 = scmp.eq.s32.totalorder %s15, 3
    %p178 = scmp.ne.s32.totalorder %s173, %s175
    %p179 = scmp.eq.s32.totalorder %s15, 0
    %p180 = por %p178, %p179
    %p181 = scmp.ne.s32.totalorder %s173, %s175
    %p182 = scmp.eq.s32.totalorder %s20, 3
    %p183 = por %p181, %p182
    %p184 = scmp.ne.s32.totalorder %s175, %s176
    %p185 = scmp.eq.s32.totalorder %s20, 0
    %p186 = por %p184, %p185
    %p187 = scmp.ne.s32.totalorder %s175, %s176
    %p188 = scmp.eq.s32.totalorder %s21, 3
    %p189 = por %p187, %p188
    %p191 = scmp.ne.s32.totalorder %s176, %s190
    %p192 = scmp.eq.s32.totalorder %s21, 0
    %p193 = por %p191, %p192
    %s194 = ssub.s32 %s22, %s34
    %s195 = ssub.s32 %s23, %s30
    %s196 = sor.u32 %s194, %s195
    %p197 = scmp.eq.s32.totalorder %s196, 0
    %s199 = sadd.s32 %s198, 1
    %s200 = scalar_select %p197, %s198, %s199
    %p203 = pneg %p197
    %p204 = scmp.eq.s32.totalorder %s15, 3
    %p205 = por %p203, %p204
    %p206 = scmp.ne.s32.totalorder %s198, %s201
    %p207 = scmp.eq.s32.totalorder %s15, 0
    %p208 = por %p206, %p207
    %p209 = scmp.ne.s32.totalorder %s198, %s201
    %p210 = scmp.eq.s32.totalorder %s20, 3
    %p211 = por %p209, %p210
    %p212 = scmp.ne.s32.totalorder %s201, %s202
    %p213 = scmp.eq.s32.totalorder %s20, 0
    %p214 = por %p212, %p213
    %p215 = scmp.ne.s32.totalorder %s201, %s202
    %p216 = scmp.eq.s32.totalorder %s21, 3
    %p217 = por %p215, %p216
    %p219 = scmp.ne.s32.totalorder %s202, %s218
    %p220 = scmp.eq.s32.totalorder %s21, 0
    %p221 = por %p219, %p220
    %s222 = ssub.s32 %s22, %s34
    %p223 = scmp.eq.s32.totalorder %s222, 0
    %s225 = sadd.s32 %s224, 1
    %s226 = scalar_select %p223, %s224, %s225
    %p229 = pneg %p223
    %p230 = scmp.eq.s32.totalorder %s15, 3
    %p231 = por %p229, %p230
    %p232 = scmp.ne.s32.totalorder %s224, %s227
    %p233 = scmp.eq.s32.totalorder %s15, 0
    %p234 = por %p232, %p233
    %p235 = scmp.ne.s32.totalorder %s224, %s227
    %p236 = scmp.eq.s32.totalorder %s20, 3
    %p237 = por %p235, %p236
    %p238 = scmp.ne.s32.totalorder %s227, %s228
    %p239 = scmp.eq.s32.totalorder %s20, 0
    %p240 = por %p238, %p239
    %p241 = scmp.ne.s32.totalorder %s227, %s228
    %p242 = scmp.eq.s32.totalorder %s21, 3
    %p243 = por %p241, %p242
    %p245 = scmp.ne.s32.totalorder %s228, %s244
    %p246 = scmp.eq.s32.totalorder %s21, 0
    %p247 = por %p245, %p246
    %p248 = scmp.le.s32.totalorder 1, %s15
    %p249 = scmp.lt.s32.totalorder %s15, 5
    %p250 = pnand %p248, %p249
    %p251 = pneg %p250
    // Predicated region
    $region9: #{pointnet_densecls.6} parent=5 // pred_check
      _
    $region10: #{pointnet_densecls.6} parent=5 // pred_check_branch
      %253 = sbr.rel (%p250) target = $region12
    $region11: #{pointnet_densecls.6} parent=5 // pred_region
      %s254 = ssub.s32 %s15, 1
      // Predicated region
      $region13: #{pointnet_densecls.6} parent=11 // pred_check
        %p255 = pneg %p102
      $region14: #{pointnet_densecls.6} parent=11 // pred_check_branch
        %257 = sbr.rel (%p255) target = $region16
      $region15: #{pointnet_densecls.6} parent=11 // pred_region
        _
      $region16: #{pointnet_densecls.6} parent=11 // pred_fallthru
        _
      // Predicated region
      $region17: #{pointnet_densecls.6} parent=11 // pred_check
        %p258 = pneg %p123
      $region18: #{pointnet_densecls.6} parent=11 // pred_check_branch
        %260 = sbr.rel (%p258) target = $region20
      $region19: #{pointnet_densecls.6} parent=11 // pred_region
        _
      $region20: #{pointnet_densecls.6} parent=11 // pred_fallthru
        _
      // Predicated region
      $region21: #{pointnet_densecls.6} parent=11 // pred_check
        %p261 = pneg %p144
      $region22: #{pointnet_densecls.6} parent=11 // pred_check_branch
        %263 = sbr.rel (%p261) target = $region24
      $region23: #{pointnet_densecls.6} parent=11 // pred_region
        _
      $region24: #{pointnet_densecls.6} parent=11 // pred_fallthru
        _
      // Predicated region
      $region25: #{pointnet_densecls.6} parent=11 // pred_check
        %p264 = pneg %p165
      $region26: #{pointnet_densecls.6} parent=11 // pred_check_branch
        %266 = sbr.rel (%p264) target = $region28
      $region27: #{pointnet_densecls.6} parent=11 // pred_region
        _
      $region28: #{pointnet_densecls.6} parent=11 // pred_fallthru
        _
      // Predicated region
      $region29: #{pointnet_densecls.6} parent=11 // pred_check
        %p267 = pneg %p186
      $region30: #{pointnet_densecls.6} parent=11 // pred_check_branch
        %269 = sbr.rel (%p267) target = $region32
      $region31: #{pointnet_densecls.6} parent=11 // pred_region
        _
      $region32: #{pointnet_densecls.6} parent=11 // pred_fallthru
        _
    $region12: #{pointnet_densecls.6} parent=5 // pred_fallthru
      _
    %p270 = scmp.lt.s32.totalorder %s15, 4
    // Predicated region
    $region33: #{pointnet_densecls.6} parent=5 // pred_check
      %p271 = pneg %p270
    $region34: #{pointnet_densecls.6} parent=5 // pred_check_branch
      %273 = sbr.rel (%p271) target = $region36
    $region35: #{pointnet_densecls.6} parent=5 // pred_region
      // Predicated region
      $region37: #{pointnet_densecls.6} parent=35 // pred_check
        %p274 = pneg %p49
      $region38: #{pointnet_densecls.6} parent=35 // pred_check_branch
        %276 = sbr.rel (%p274) target = $region40
      $region39: #{pointnet_densecls.6} parent=35 // pred_region
        %s277 = smul.u32 16, %s23
        %p278 = scmp.lt.s32.totalorder %s22, 1
        %s279 = scalar_select %p278, %s22, 1
        %p280 = scmp.lt.s32.totalorder %s277, 31
        %s281 = scalar_select %p280, %s277, 31
        %s282 = smul.addr %s279, 32
        %s283 = sadd.s32 %s281, %s282
        %s284 = smul.addr %s283, 8
        %s285 = scalar_lea.vmem %s0, %s284
        %s286 = smul.u32 16, %s23
      $region40: #{pointnet_densecls.6} parent=35 // pred_fallthru
        _
      // Predicated region
      $region41: #{pointnet_densecls.6} parent=35 // pred_check
        %p287 = pneg %p75
      $region42: #{pointnet_densecls.6} parent=35 // pred_check_branch
        %289 = sbr.rel (%p287) target = $region44
      $region43: #{pointnet_densecls.6} parent=35 // pred_region
        %p290 = scmp.lt.s32.totalorder %s22, 1
        %s291 = scalar_select %p290, %s22, 1
        %s292 = smul.addr %s291, 2
        %s293 = scalar_lea.vmem %s1, %s292
      $region44: #{pointnet_densecls.6} parent=35 // pred_fallthru
        _
    $region36: #{pointnet_densecls.6} parent=5 // pred_fallthru
      _
    %p294 = scmp.le.s32.totalorder 1, %s15
    %p295 = scmp.lt.s32.totalorder %s15, 5
    %p296 = pnand %p294, %p295
    %p297 = pneg %p296
    // Predicated region
    $region45: #{pointnet_densecls.6} parent=5 // pred_check
      _
    $region46: #{pointnet_densecls.6} parent=5 // pred_check_branch
      %299 = sbr.rel (%p296) target = $region48
    $region47: #{pointnet_densecls.6} parent=5 // pred_region
      %s300 = ssub.s32 %s15, 1
      %s301 = smul.u32 16, %s25
      %p302 = scmp.lt.s32.totalorder %s24, 1
      %s303 = scalar_select %p302, %s24, 1
      %p304 = scmp.lt.s32.totalorder %s301, 31
      %s305 = scalar_select %p304, %s301, 31
      %s306 = smul.addr %s303, 32
      %s307 = sadd.s32 %s305, %s306
      %s308 = smul.addr %s307, 8
      %s309 = scalar_lea.vmem %s0, %s308
      %p310 = pneg %p55
      %p311 = pneg %p52
      %p312 = scmp.lt.s32.totalorder %s24, 1
      %s313 = scalar_select %p312, %s24, 1
      %s314 = smul.addr %s313, 2
      %s315 = scalar_lea.vmem %s1, %s314
      %p316 = pneg %p81
      %p317 = pneg %p78
      %p318 = pneg %p102
      %p319 = pneg %p99
      %p320 = pneg %p123
      %p321 = pneg %p120
      %p322 = pneg %p144
      %p323 = pneg %p141
      %p324 = pneg %p165
      %p325 = pneg %p162
      %p326 = pneg %p186
      %p327 = pneg %p183
      %p328 = pneg %p214
      %p329 = pneg %p211
      %s330 = smul.u32 16, %s25
      %p331 = scmp.lt.s32.totalorder %s24, 1
      %s332 = scalar_select %p331, %s24, 1
      %p333 = scmp.lt.s32.totalorder %s330, 31
      %s334 = scalar_select %p333, %s330, 31
      %s335 = smul.addr %s332, 32
      %s336 = sadd.s32 %s334, %s335
      %s337 = smul.addr %s336, 4
      %s338 = scalar_lea.vmem %s7, %s337
      %p339 = pneg %p240
      %p340 = pneg %p237
      %p341 = scmp.lt.s32.totalorder %s24, 1
      %s342 = scalar_select %p341, %s24, 1
      %s343 = smul.addr %s342, 8
      %s344 = scalar_lea.vmem %s8, %s343
      %s345 = smul.u32 16, %s25
      %p346 = scmp.lt.s32.totalorder %s24, 1
      %s347 = scalar_select %p346, %s24, 1
      %p348 = scmp.lt.s32.totalorder %s345, 31
      %s349 = scalar_select %p348, %s345, 31
      %s350 = smul.addr %s347, 32
      %s351 = sadd.s32 %s349, %s350
      %s352 = smul.addr %s351, 8
      %s353 = scalar_lea.vmem %s0, %s352
      %s354 = smul.u32 16, %s25
      %p355 = scmp.lt.s32.totalorder %s24, 1
      %s356 = scalar_select %p355, %s24, 1
      %s357 = smul.addr %s356, 2
      %s358 = scalar_lea.vmem %s1, %s357
      %s359 = smul.u32 16, %s25
      %p360 = scmp.lt.s32.totalorder %s24, 1
      %s361 = scalar_select %p360, %s24, 1
      %p362 = scmp.lt.s32.totalorder %s359, 31
      %s363 = scalar_select %p362, %s359, 31
      %s364 = smul.addr %s361, 32
      %s365 = sadd.s32 %s363, %s364
      %s366 = smul.addr %s365, 4
      %s367 = scalar_lea.vmem %s7, %s366
      %s368 = smul.u32 16, %s25
      %p369 = scmp.lt.s32.totalorder %s24, 1
      %s370 = scalar_select %p369, %s24, 1
      %s371 = smul.addr %s370, 8
      %s372 = scalar_lea.vmem %s8, %s371
      %v374 = vld [vmem:[%s353] sm:$0xff]
      %v375 = vld [vmem:[%s353 + $0x8] sm:$0xff]
      %v376 = vld [vmem:[%s353 + $0x10] sm:$0xff]
      %v377 = vld [vmem:[%s353 + $0x18] sm:$0xff]
      %v378 = vld [vmem:[%s353 + $0x20] sm:$0xff]
      %v379 = vld [vmem:[%s353 + $0x28] sm:$0xff]
      %v380 = vld [vmem:[%s353 + $0x30] sm:$0xff]
      %v381 = vld [vmem:[%s353 + $0x38] sm:$0xff]
      %v382 = vld [vmem:[%s353 + $0x40] sm:$0xff]
      %v383 = vld [vmem:[%s353 + $0x48] sm:$0xff]
      %v384 = vld [vmem:[%s353 + $0x50] sm:$0xff]
      %v385 = vld [vmem:[%s353 + $0x58] sm:$0xff]
      %v386 = vld [vmem:[%s353 + $0x60] sm:$0xff]
      %v387 = vld [vmem:[%s353 + $0x68] sm:$0xff]
      %v388 = vld [vmem:[%s353 + $0x70] sm:$0xff]
      %v389 = vld [vmem:[%s353 + $0x78] sm:$0xff]
      %v390 = vpack.c.bf16 %v375, %v374
      %v391 = vpack.c.bf16 %v377, %v376
      %v392 = vpack.c.bf16 %v379, %v378
      %v393 = vpack.c.bf16 %v381, %v380
      %v394 = vpack.c.bf16 %v383, %v382
      %v395 = vpack.c.bf16 %v385, %v384
      %v396 = vpack.c.bf16 %v387, %v386
      %v397 = vpack.c.bf16 %v389, %v388
      %v398 = vld [vmem:[%s358] sm:$0x3]
      %v399 = vld [vmem:[%s2] sm:$0x1]
      %v401 = vlaneseq
      %v402 = vshrl.u32 %v401, 7
      %v403 = vsub.s32 0, %v402
      %v404 = vrot.slane %v399, %v403
      %vm406 = vcmask 23552
      %v408 = vsel %vm406, %v390, 0
      %v411 = vsel %vm406, %v391, 0
      %v414 = vsel %vm406, %v392, 0
      %v417 = vsel %vm406, %v393, 0
      %v420 = vsel %vm406, %v394, 0
      %v423 = vsel %vm406, %v395, 0
      %v426 = vsel %vm406, %v396, 0
      %v429 = vsel %vm406, %v397, 0
      %vm431 = vcmask 1040384
      %vm432 = vcmask 1041408
      %v433 = vsel %vm431, 4294967295, 65535
      %v434 = vsel %vm432, %v433, 0
      %v436 = vand.u32 %v398, %v434
      %438 = vmatprep.subr.bf16.mxu0 0
      %439 = vmatpush1.bf16.msra.mxu0 0
      %440 = vmatprep.subr.bf16.mxu0 0
      %441 = vmatpush1.bf16.msra.mxu0 0
      %442 = vmatprep.subr.bf16.mxu0 0
      %443 = vmatpush1.bf16.msra.mxu0 0
      %444 = vmatprep.subr.bf16.mxu0 0
      %445 = vmatpush1.bf16.msra.mxu0 0
      %446 = vmatprep.subr.bf16.mxu0 0
      %447 = vmatpush1.bf16.msra.mxu0 0
      %448 = vmatprep.subr.bf16.mxu0 0
      %449 = vmatpush1.bf16.msra.mxu0 0
      %450 = vmatprep.subr.bf16.mxu0 0
      %451 = vmatpush1.bf16.msra.mxu0 0
      %452 = vmatprep.subr.bf16.mxu0 0
      %453 = vmatpush1.bf16.msra.mxu0 %v436
      %454 = vmatprep.subr.bf16.mxu0 0
      %455 = vmatpush2.bf16.msra.mxu0 0
      %456 = vmatprep.subr.bf16.mxu0 0
      %457 = vmatpush2.bf16.msra.mxu0 0
      %458 = vmatprep.subr.bf16.mxu0 0
      %459 = vmatpush2.bf16.msra.mxu0 0
      %460 = vmatprep.subr.bf16.mxu0 0
      %461 = vmatpush2.bf16.msra.mxu0 0
      %462 = vmatprep.subr.bf16.mxu0 0
      %463 = vmatpush2.bf16.msra.mxu0 0
      %464 = vmatprep.subr.bf16.mxu0 0
      %465 = vmatpush2.bf16.msra.mxu0 0
      %466 = vmatprep.subr.bf16.mxu0 0
      %467 = vmatpush2.bf16.msra.mxu0 0
      %468 = vmatprep.subr.bf16.mxu0 0
      %469 = vmatpush2.bf16.msra.mxu0 0
      %470 = vmatprep.mubr.bf16.mxu0 0
      %471 = vmatmul.mubr.bf16.gmra.mxu0 %v408
      %v472 = vpop.f32.mrf.mxu0
      %v473 = vadd.f32 %v404, %v472
      %v474 = vpop.f32.mrf.mxu0
      %v475 = vpop.f32.mrf.mxu0
      %v476 = vadd.f32 %v404, %v475
      %v477 = vpop.f32.mrf.mxu0
      %478 = vmatprep.mubr.bf16.mxu0 0
      %479 = vmatmul.mubr.bf16.gmra.mxu0 %v411
      %v480 = vpop.f32.mrf.mxu0
      %v481 = vadd.f32 %v404, %v480
      %v482 = vpop.f32.mrf.mxu0
      %v483 = vpop.f32.mrf.mxu0
      %v484 = vadd.f32 %v404, %v483
      %v485 = vpop.f32.mrf.mxu0
      %486 = vmatprep.mubr.bf16.mxu0 0
      %487 = vmatmul.mubr.bf16.gmra.mxu0 %v414
      %v488 = vpop.f32.mrf.mxu0
      %v489 = vadd.f32 %v404, %v488
      %v490 = vpop.f32.mrf.mxu0
      %v491 = vpop.f32.mrf.mxu0
      %v492 = vadd.f32 %v404, %v491
      %v493 = vpop.f32.mrf.mxu0
      %494 = vmatprep.mubr.bf16.mxu0 0
      %495 = vmatmul.mubr.bf16.gmra.mxu0 %v417
      %v496 = vpop.f32.mrf.mxu0
      %v497 = vadd.f32 %v404, %v496
      %v498 = vpop.f32.mrf.mxu0
      %v499 = vpop.f32.mrf.mxu0
      %v500 = vadd.f32 %v404, %v499
      %v501 = vpop.f32.mrf.mxu0
      %502 = vmatprep.mubr.bf16.mxu0 0
      %503 = vmatmul.mubr.bf16.gmra.mxu0 %v420
      %v504 = vpop.f32.mrf.mxu0
      %v505 = vadd.f32 %v404, %v504
      %v506 = vpop.f32.mrf.mxu0
      %v507 = vpop.f32.mrf.mxu0
      %v508 = vadd.f32 %v404, %v507
      %v509 = vpop.f32.mrf.mxu0
      %510 = vmatprep.mubr.bf16.mxu0 0
      %511 = vmatmul.mubr.bf16.gmra.mxu0 %v423
      %v512 = vpop.f32.mrf.mxu0
      %v513 = vadd.f32 %v404, %v512
      %v514 = vpop.f32.mrf.mxu0
      %v515 = vpop.f32.mrf.mxu0
      %v516 = vadd.f32 %v404, %v515
      %v517 = vpop.f32.mrf.mxu0
      %518 = vmatprep.mubr.bf16.mxu0 0
      %519 = vmatmul.mubr.bf16.gmra.mxu0 %v426
      %v520 = vpop.f32.mrf.mxu0
      %v521 = vadd.f32 %v404, %v520
      %v522 = vpop.f32.mrf.mxu0
      %v523 = vpop.f32.mrf.mxu0
      %v524 = vadd.f32 %v404, %v523
      %v525 = vpop.f32.mrf.mxu0
      %526 = vmatprep.mubr.bf16.mxu0 0
      %527 = vmatmul.mubr.bf16.gmra.mxu0 %v429
      %v528 = vpop.f32.mrf.mxu0
      %v529 = vadd.f32 %v404, %v528
      %v530 = vpop.f32.mrf.mxu0
      %v531 = vpop.f32.mrf.mxu0
      %v532 = vadd.f32 %v404, %v531
      %v533 = vpop.f32.mrf.mxu0
      %534 = vdwg.mxu0
      %v535 = vmax.f32 %v473, 0.0
      %v536 = vmax.f32 %v476, 0.0
      %v537 = vmax.f32 %v481, 0.0
      %v538 = vmax.f32 %v484, 0.0
      %v539 = vmax.f32 %v489, 0.0
      %v540 = vmax.f32 %v492, 0.0
      %v541 = vmax.f32 %v497, 0.0
      %v542 = vmax.f32 %v500, 0.0
      %v543 = vmax.f32 %v505, 0.0
      %v544 = vmax.f32 %v508, 0.0
      %v545 = vmax.f32 %v513, 0.0
      %v546 = vmax.f32 %v516, 0.0
      %v547 = vmax.f32 %v521, 0.0
      %v548 = vmax.f32 %v524, 0.0
      %v549 = vmax.f32 %v529, 0.0
      %v550 = vmax.f32 %v532, 0.0
      %v551 = vpack.c.bf16 %v536, %v535
      %v552 = vpack.c.bf16 %v538, %v537
      %v553 = vpack.c.bf16 %v540, %v539
      %v554 = vpack.c.bf16 %v542, %v541
      %v555 = vpack.c.bf16 %v544, %v543
      %v556 = vpack.c.bf16 %v546, %v545
      %v557 = vpack.c.bf16 %v548, %v547
      %v558 = vpack.c.bf16 %v550, %v549
      %v567 = vunpack.c.l.b16 %v551
      %v568 = vunpack.c.h.b16 %v551
      %v569 = vunpack.c.l.b16 %v552
      %v570 = vunpack.c.h.b16 %v552
      %v571 = vunpack.c.l.b16 %v553
      %v572 = vunpack.c.h.b16 %v553
      %v573 = vunpack.c.l.b16 %v554
      %v574 = vunpack.c.h.b16 %v554
      %v575 = vunpack.c.l.b16 %v555
      %v576 = vunpack.c.h.b16 %v555
      %v577 = vunpack.c.l.b16 %v556
      %v578 = vunpack.c.h.b16 %v556
      %v579 = vunpack.c.l.b16 %v557
      %v580 = vunpack.c.h.b16 %v557
      %v581 = vunpack.c.l.b16 %v558
      %v582 = vunpack.c.h.b16 %v558
      %v583 = vpack.c.b16 %v567, %v567
      %v584 = vpack.c.b16 %v568, %v568
      %v585 = vpack.c.b16 %v569, %v569
      %v586 = vpack.c.b16 %v570, %v570
      %v587 = vpack.c.b16 %v571, %v571
      %v588 = vpack.c.b16 %v572, %v572
      %v589 = vpack.c.b16 %v573, %v573
      %v590 = vpack.c.b16 %v574, %v574
      %v591 = vpack.c.b16 %v575, %v575
      %v592 = vpack.c.b16 %v576, %v576
      %v593 = vpack.c.b16 %v577, %v577
      %v594 = vpack.c.b16 %v578, %v578
      %v595 = vpack.c.b16 %v579, %v579
      %v596 = vpack.c.b16 %v580, %v580
      %v597 = vpack.c.b16 %v581, %v581
      %v598 = vpack.c.b16 %v582, %v582
      %vm615 = vcmask 519168
      %616 = vst.msk [vmem:[%s367] sm:$0xf] %vm615, %v583
      %617 = vst.msk [vmem:[%s367 + $0x4] sm:$0xf] %vm615, %v584
      %618 = vst.msk [vmem:[%s367 + $0x8] sm:$0xf] %vm615, %v585
      %619 = vst.msk [vmem:[%s367 + $0xc] sm:$0xf] %vm615, %v586
      %620 = vst.msk [vmem:[%s367 + $0x10] sm:$0xf] %vm615, %v587
      %621 = vst.msk [vmem:[%s367 + $0x14] sm:$0xf] %vm615, %v588
      %622 = vst.msk [vmem:[%s367 + $0x18] sm:$0xf] %vm615, %v589
      %623 = vst.msk [vmem:[%s367 + $0x1c] sm:$0xf] %vm615, %v590
      %624 = vst.msk [vmem:[%s367 + $0x20] sm:$0xf] %vm615, %v591
      %625 = vst.msk [vmem:[%s367 + $0x24] sm:$0xf] %vm615, %v592
      %626 = vst.msk [vmem:[%s367 + $0x28] sm:$0xf] %vm615, %v593
      %627 = vst.msk [vmem:[%s367 + $0x2c] sm:$0xf] %vm615, %v594
      %628 = vst.msk [vmem:[%s367 + $0x30] sm:$0xf] %vm615, %v595
      %629 = vst.msk [vmem:[%s367 + $0x34] sm:$0xf] %vm615, %v596
      %630 = vst.msk [vmem:[%s367 + $0x38] sm:$0xf] %vm615, %v597
      %631 = vst.msk [vmem:[%s367 + $0x3c] sm:$0xf] %vm615, %v598
      %v632 = vld [vmem:[%s3] sm:$0xf]
      %v633 = vld [vmem:[%s3 + $0x4] sm:$0xf]
      %v634 = vld [vmem:[%s3 + $0x8] sm:$0xf]
      %v635 = vld [vmem:[%s3 + $0xc] sm:$0xf]
      %v636 = vld [vmem:[%s3 + $0x10] sm:$0xf]
      %v637 = vld [vmem:[%s3 + $0x14] sm:$0xf]
      %v638 = vld [vmem:[%s3 + $0x18] sm:$0xf]
      %v639 = vld [vmem:[%s3 + $0x1c] sm:$0xf]
      %v640 = vld [vmem:[%s4] sm:$0x1]
      %v642 = vlaneseq
      %v643 = vshrl.u32 %v642, 7
      %v644 = vsub.s32 0, %v643
      %v645 = vrot.slane %v640, %v644
      %v655 = vunpack.c.l.b16 %v632
      %v656 = vunpack.c.l.b16 %v633
      %v657 = vunpack.c.l.b16 %v634
      %v658 = vunpack.c.l.b16 %v635
      %v659 = vunpack.c.l.b16 %v636
      %v660 = vunpack.c.l.b16 %v637
      %v661 = vunpack.c.l.b16 %v638
      %v662 = vunpack.c.l.b16 %v639
      %v663 = vpack.c.b16 %v656, %v655
      %v664 = vpack.c.b16 %v658, %v657
      %v665 = vpack.c.b16 %v660, %v659
      %v666 = vpack.c.b16 %v662, %v661
      %vm671 = vcmask 523264
      %v673 = vsel %vm671, %v551, 0
      %v676 = vsel %vm671, %v552, 0
      %v679 = vsel %vm671, %v553, 0
      %v682 = vsel %vm671, %v554, 0
      %v685 = vsel %vm671, %v555, 0
      %v688 = vsel %vm671, %v556, 0
      %v691 = vsel %vm671, %v557, 0
      %v694 = vsel %vm671, %v558, 0
      %696 = vmatprep.subr.bf16.mxu0 0
      %697 = vmatpush1.bf16.msra.mxu0 0
      %698 = vmatprep.subr.bf16.mxu0 0
      %699 = vmatpush1.bf16.msra.mxu0 0
      %700 = vmatprep.subr.bf16.mxu0 0
      %701 = vmatpush1.bf16.msra.mxu0 0
      %702 = vmatprep.subr.bf16.mxu0 0
      %703 = vmatpush1.bf16.msra.mxu0 0
      %704 = vmatprep.subr.bf16.mxu0 0
      %705 = vmatpush1.bf16.msra.mxu0 %v666
      %706 = vmatprep.subr.bf16.mxu0 0
      %707 = vmatpush1.bf16.msra.mxu0 %v665
      %708 = vmatprep.subr.bf16.mxu0 0
      %709 = vmatpush1.bf16.msra.mxu0 %v664
      %710 = vmatprep.subr.bf16.mxu0 0
      %711 = vmatpush1.bf16.msra.mxu0 %v663
      %712 = vmatprep.subr.bf16.mxu0 0
      %713 = vmatpush2.bf16.msra.mxu0 0
      %714 = vmatprep.subr.bf16.mxu0 0
      %715 = vmatpush2.bf16.msra.mxu0 0
      %716 = vmatprep.subr.bf16.mxu0 0
      %717 = vmatpush2.bf16.msra.mxu0 0
      %718 = vmatprep.subr.bf16.mxu0 0
      %719 = vmatpush2.bf16.msra.mxu0 0
      %720 = vmatprep.subr.bf16.mxu0 0
      %721 = vmatpush2.bf16.msra.mxu0 0
      %722 = vmatprep.subr.bf16.mxu0 0
      %723 = vmatpush2.bf16.msra.mxu0 0
      %724 = vmatprep.subr.bf16.mxu0 0
      %725 = vmatpush2.bf16.msra.mxu0 0
      %726 = vmatprep.subr.bf16.mxu0 0
      %727 = vmatpush2.bf16.msra.mxu0 0
      %728 = vmatprep.mubr.bf16.mxu0 0
      %729 = vmatmul.mubr.bf16.gmra.mxu0 %v673
      %v730 = vpop.f32.mrf.mxu0
      %v731 = vadd.f32 %v645, %v730
      %v732 = vpop.f32.mrf.mxu0
      %v733 = vpop.f32.mrf.mxu0
      %v734 = vadd.f32 %v645, %v733
      %v735 = vpop.f32.mrf.mxu0
      %736 = vmatprep.mubr.bf16.mxu0 0
      %737 = vmatmul.mubr.bf16.gmra.mxu0 %v676
      %v738 = vpop.f32.mrf.mxu0
      %v739 = vadd.f32 %v645, %v738
      %v740 = vpop.f32.mrf.mxu0
      %v741 = vpop.f32.mrf.mxu0
      %v742 = vadd.f32 %v645, %v741
      %v743 = vpop.f32.mrf.mxu0
      %744 = vmatprep.mubr.bf16.mxu0 0
      %745 = vmatmul.mubr.bf16.gmra.mxu0 %v679
      %v746 = vpop.f32.mrf.mxu0
      %v747 = vadd.f32 %v645, %v746
      %v748 = vpop.f32.mrf.mxu0
      %v749 = vpop.f32.mrf.mxu0
      %v750 = vadd.f32 %v645, %v749
      %v751 = vpop.f32.mrf.mxu0
      %752 = vmatprep.mubr.bf16.mxu0 0
      %753 = vmatmul.mubr.bf16.gmra.mxu0 %v682
      %v754 = vpop.f32.mrf.mxu0
      %v755 = vadd.f32 %v645, %v754
      %v756 = vpop.f32.mrf.mxu0
      %v757 = vpop.f32.mrf.mxu0
      %v758 = vadd.f32 %v645, %v757
      %v759 = vpop.f32.mrf.mxu0
      %760 = vmatprep.mubr.bf16.mxu0 0
      %761 = vmatmul.mubr.bf16.gmra.mxu0 %v685
      %v762 = vpop.f32.mrf.mxu0
      %v763 = vadd.f32 %v645, %v762
      %v764 = vpop.f32.mrf.mxu0
      %v765 = vpop.f32.mrf.mxu0
      %v766 = vadd.f32 %v645, %v765
      %v767 = vpop.f32.mrf.mxu0
      %768 = vmatprep.mubr.bf16.mxu0 0
      %769 = vmatmul.mubr.bf16.gmra.mxu0 %v688
      %v770 = vpop.f32.mrf.mxu0
      %v771 = vadd.f32 %v645, %v770
      %v772 = vpop.f32.mrf.mxu0
      %v773 = vpop.f32.mrf.mxu0
      %v774 = vadd.f32 %v645, %v773
      %v775 = vpop.f32.mrf.mxu0
      %776 = vmatprep.mubr.bf16.mxu0 0
      %777 = vmatmul.mubr.bf16.gmra.mxu0 %v691
      %v778 = vpop.f32.mrf.mxu0
      %v779 = vadd.f32 %v645, %v778
      %v780 = vpop.f32.mrf.mxu0
      %v781 = vpop.f32.mrf.mxu0
      %v782 = vadd.f32 %v645, %v781
      %v783 = vpop.f32.mrf.mxu0
      %784 = vmatprep.mubr.bf16.mxu0 0
      %785 = vmatmul.mubr.bf16.gmra.mxu0 %v694
      %v786 = vpop.f32.mrf.mxu0
      %v787 = vadd.f32 %v645, %v786
      %v788 = vpop.f32.mrf.mxu0
      %v789 = vpop.f32.mrf.mxu0
      %v790 = vadd.f32 %v645, %v789
      %v791 = vpop.f32.mrf.mxu0
      %792 = vdwg.mxu0
      %v793 = vmax.f32 %v731, 0.0
      %v794 = vmax.f32 %v734, 0.0
      %v795 = vmax.f32 %v739, 0.0
      %v796 = vmax.f32 %v742, 0.0
      %v797 = vmax.f32 %v747, 0.0
      %v798 = vmax.f32 %v750, 0.0
      %v799 = vmax.f32 %v755, 0.0
      %v800 = vmax.f32 %v758, 0.0
      %v801 = vmax.f32 %v763, 0.0
      %v802 = vmax.f32 %v766, 0.0
      %v803 = vmax.f32 %v771, 0.0
      %v804 = vmax.f32 %v774, 0.0
      %v805 = vmax.f32 %v779, 0.0
      %v806 = vmax.f32 %v782, 0.0
      %v807 = vmax.f32 %v787, 0.0
      %v808 = vmax.f32 %v790, 0.0
      %v809 = vpack.c.bf16 %v794, %v793
      %v810 = vpack.c.bf16 %v796, %v795
      %v811 = vpack.c.bf16 %v798, %v797
      %v812 = vpack.c.bf16 %v800, %v799
      %v813 = vpack.c.bf16 %v802, %v801
      %v814 = vpack.c.bf16 %v804, %v803
      %v815 = vpack.c.bf16 %v806, %v805
      %v816 = vpack.c.bf16 %v808, %v807
      %v817 = vld [vmem:[%s5] sm:$0xff]
      %v818 = vld [vmem:[%s5 + $0x8] sm:$0xff]
      %v819 = vld [vmem:[%s5 + $0x10] sm:$0xff]
      %v820 = vld [vmem:[%s5 + $0x18] sm:$0xff]
      %v821 = vld [vmem:[%s5 + $0x20] sm:$0xff]
      %v822 = vld [vmem:[%s5 + $0x28] sm:$0xff]
      %v823 = vld [vmem:[%s5 + $0x30] sm:$0xff]
      %v824 = vld [vmem:[%s5 + $0x38] sm:$0xff]
      %v825 = vld [vmem:[%s5 + $0x40] sm:$0xff]
      %v826 = vld [vmem:[%s5 + $0x48] sm:$0xff]
      %v827 = vld [vmem:[%s5 + $0x50] sm:$0xff]
      %v828 = vld [vmem:[%s5 + $0x58] sm:$0xff]
      %v829 = vld [vmem:[%s5 + $0x60] sm:$0xff]
      %v830 = vld [vmem:[%s5 + $0x68] sm:$0xff]
      %v831 = vld [vmem:[%s5 + $0x70] sm:$0xff]
      %v832 = vld [vmem:[%s5 + $0x78] sm:$0xff]
      %v833 = vld [vmem:[%s5 + $0x80] sm:$0xff]
      %v834 = vld [vmem:[%s5 + $0x88] sm:$0xff]
      %v835 = vld [vmem:[%s5 + $0x90] sm:$0xff]
      %v836 = vld [vmem:[%s5 + $0x98] sm:$0xff]
      %v837 = vld [vmem:[%s5 + $0xa0] sm:$0xff]
      %v838 = vld [vmem:[%s5 + $0xa8] sm:$0xff]
      %v839 = vld [vmem:[%s5 + $0xb0] sm:$0xff]
      %v840 = vld [vmem:[%s5 + $0xb8] sm:$0xff]
      %v841 = vld [vmem:[%s5 + $0xc0] sm:$0xff]
      %v842 = vld [vmem:[%s5 + $0xc8] sm:$0xff]
      %v843 = vld [vmem:[%s5 + $0xd0] sm:$0xff]
      %v844 = vld [vmem:[%s5 + $0xd8] sm:$0xff]
      %v845 = vld [vmem:[%s5 + $0xe0] sm:$0xff]
      %v846 = vld [vmem:[%s5 + $0xe8] sm:$0xff]
      %v847 = vld [vmem:[%s5 + $0xf0] sm:$0xff]
      %v848 = vld [vmem:[%s5 + $0xf8] sm:$0xff]
      %v849 = vld [vmem:[%s5 + $0x100] sm:$0xff]
      %v850 = vld [vmem:[%s5 + $0x108] sm:$0xff]
      %v851 = vld [vmem:[%s5 + $0x110] sm:$0xff]
      %v852 = vld [vmem:[%s5 + $0x118] sm:$0xff]
      %v853 = vld [vmem:[%s5 + $0x120] sm:$0xff]
      %v854 = vld [vmem:[%s5 + $0x128] sm:$0xff]
      %v855 = vld [vmem:[%s5 + $0x130] sm:$0xff]
      %v856 = vld [vmem:[%s5 + $0x138] sm:$0xff]
      %v857 = vld [vmem:[%s5 + $0x140] sm:$0xff]
      %v858 = vld [vmem:[%s5 + $0x148] sm:$0xff]
      %v859 = vld [vmem:[%s5 + $0x150] sm:$0xff]
      %v860 = vld [vmem:[%s5 + $0x158] sm:$0xff]
      %v861 = vld [vmem:[%s5 + $0x160] sm:$0xff]
      %v862 = vld [vmem:[%s5 + $0x168] sm:$0xff]
      %v863 = vld [vmem:[%s5 + $0x170] sm:$0xff]
      %v864 = vld [vmem:[%s5 + $0x178] sm:$0xff]
      %v865 = vld [vmem:[%s5 + $0x180] sm:$0xff]
      %v866 = vld [vmem:[%s5 + $0x188] sm:$0xff]
      %v867 = vld [vmem:[%s5 + $0x190] sm:$0xff]
      %v868 = vld [vmem:[%s5 + $0x198] sm:$0xff]
      %v869 = vld [vmem:[%s5 + $0x1a0] sm:$0xff]
      %v870 = vld [vmem:[%s5 + $0x1a8] sm:$0xff]
      %v871 = vld [vmem:[%s5 + $0x1b0] sm:$0xff]
      %v872 = vld [vmem:[%s5 + $0x1b8] sm:$0xff]
      %v873 = vld [vmem:[%s5 + $0x1c0] sm:$0xff]
      %v874 = vld [vmem:[%s5 + $0x1c8] sm:$0xff]
      %v875 = vld [vmem:[%s5 + $0x1d0] sm:$0xff]
      %v876 = vld [vmem:[%s5 + $0x1d8] sm:$0xff]
      %v877 = vld [vmem:[%s5 + $0x1e0] sm:$0xff]
      %v878 = vld [vmem:[%s5 + $0x1e8] sm:$0xff]
      %v879 = vld [vmem:[%s5 + $0x1f0] sm:$0xff]
      %v880 = vld [vmem:[%s5 + $0x1f8] sm:$0xff]
      %v881 = vld [vmem:[%s6] sm:$0xff]
      %v883 = vlaneseq
      %v884 = vshrl.u32 %v883, 7
      %v885 = vsub.s32 0, %v884
      %v886 = vrot.slane %v881, %v885
      %v887 = vlaneseq
      %v888 = vshrl.u32 %v887, 7
      %v889 = vsub.s32 1, %v888
      %v890 = vrot.slane %v881, %v889
      %v891 = vlaneseq
      %v892 = vshrl.u32 %v891, 7
      %v893 = vsub.s32 2, %v892
      %v894 = vrot.slane %v881, %v893
      %v895 = vlaneseq
      %v896 = vshrl.u32 %v895, 7
      %v897 = vsub.s32 3, %v896
      %v898 = vrot.slane %v881, %v897
      %v899 = vlaneseq
      %v900 = vshrl.u32 %v899, 7
      %v901 = vsub.s32 4, %v900
      %v902 = vrot.slane %v881, %v901
      %v903 = vlaneseq
      %v904 = vshrl.u32 %v903, 7
      %v905 = vsub.s32 5, %v904
      %v906 = vrot.slane %v881, %v905
      %v907 = vlaneseq
      %v908 = vshrl.u32 %v907, 7
      %v909 = vsub.s32 6, %v908
      %v910 = vrot.slane %v881, %v909
      %v911 = vlaneseq
      %v912 = vshrl.u32 %v911, 7
      %v913 = vsub.s32 7, %v912
      %v914 = vrot.slane %v881, %v913
      %v987 = vunpack.c.l.b16 %v817
      %v988 = vunpack.c.h.b16 %v817
      %v989 = vunpack.c.l.b16 %v818
      %v990 = vunpack.c.h.b16 %v818
      %v991 = vunpack.c.l.b16 %v819
      %v992 = vunpack.c.h.b16 %v819
      %v993 = vunpack.c.l.b16 %v820
      %v994 = vunpack.c.h.b16 %v820
      %v995 = vunpack.c.l.b16 %v821
      %v996 = vunpack.c.h.b16 %v821
      %v997 = vunpack.c.l.b16 %v822
      %v998 = vunpack.c.h.b16 %v822
      %v999 = vunpack.c.l.b16 %v823
      %v1000 = vunpack.c.h.b16 %v823
      %v1001 = vunpack.c.l.b16 %v824
      %v1002 = vunpack.c.h.b16 %v824
      %v1003 = vunpack.c.l.b16 %v825
      %v1004 = vunpack.c.h.b16 %v825
      %v1005 = vunpack.c.l.b16 %v826
      %v1006 = vunpack.c.h.b16 %v826
      %v1007 = vunpack.c.l.b16 %v827
      %v1008 = vunpack.c.h.b16 %v827
      %v1009 = vunpack.c.l.b16 %v828
      %v1010 = vunpack.c.h.b16 %v828
      %v1011 = vunpack.c.l.b16 %v829
      %v1012 = vunpack.c.h.b16 %v829
      %v1013 = vunpack.c.l.b16 %v830
      %v1014 = vunpack.c.h.b16 %v830
      %v1015 = vunpack.c.l.b16 %v831
      %v1016 = vunpack.c.h.b16 %v831
      %v1017 = vunpack.c.l.b16 %v832
      %v1018 = vunpack.c.h.b16 %v832
      %v1019 = vunpack.c.l.b16 %v833
      %v1020 = vunpack.c.h.b16 %v833
      %v1021 = vunpack.c.l.b16 %v834
      %v1022 = vunpack.c.h.b16 %v834
      %v1023 = vunpack.c.l.b16 %v835
      %v1024 = vunpack.c.h.b16 %v835
      %v1025 = vunpack.c.l.b16 %v836
      %v1026 = vunpack.c.h.b16 %v836
      %v1027 = vunpack.c.l.b16 %v837
      %v1028 = vunpack.c.h.b16 %v837
      %v1029 = vunpack.c.l.b16 %v838
      %v1030 = vunpack.c.h.b16 %v838
      %v1031 = vunpack.c.l.b16 %v839
      %v1032 = vunpack.c.h.b16 %v839
      %v1033 = vunpack.c.l.b16 %v840
      %v1034 = vunpack.c.h.b16 %v840
      %v1035 = vunpack.c.l.b16 %v841
      %v1036 = vunpack.c.h.b16 %v841
      %v1037 = vunpack.c.l.b16 %v842
      %v1038 = vunpack.c.h.b16 %v842
      %v1039 = vunpack.c.l.b16 %v843
      %v1040 = vunpack.c.h.b16 %v843
      %v1041 = vunpack.c.l.b16 %v844
      %v1042 = vunpack.c.h.b16 %v844
      %v1043 = vunpack.c.l.b16 %v845
      %v1044 = vunpack.c.h.b16 %v845
      %v1045 = vunpack.c.l.b16 %v846
      %v1046 = vunpack.c.h.b16 %v846
      %v1047 = vunpack.c.l.b16 %v847
      %v1048 = vunpack.c.h.b16 %v847
      %v1049 = vunpack.c.l.b16 %v848
      %v1050 = vunpack.c.h.b16 %v848
      %v1051 = vunpack.c.l.b16 %v849
      %v1052 = vunpack.c.h.b16 %v849
      %v1053 = vunpack.c.l.b16 %v850
      %v1054 = vunpack.c.h.b16 %v850
      %v1055 = vunpack.c.l.b16 %v851
      %v1056 = vunpack.c.h.b16 %v851
      %v1057 = vunpack.c.l.b16 %v852
      %v1058 = vunpack.c.h.b16 %v852
      %v1059 = vunpack.c.l.b16 %v853
      %v1060 = vunpack.c.h.b16 %v853
      %v1061 = vunpack.c.l.b16 %v854
      %v1062 = vunpack.c.h.b16 %v854
      %v1063 = vunpack.c.l.b16 %v855
      %v1064 = vunpack.c.h.b16 %v855
      %v1065 = vunpack.c.l.b16 %v856
      %v1066 = vunpack.c.h.b16 %v856
      %v1067 = vunpack.c.l.b16 %v857
      %v1068 = vunpack.c.h.b16 %v857
      %v1069 = vunpack.c.l.b16 %v858
      %v1070 = vunpack.c.h.b16 %v858
      %v1071 = vunpack.c.l.b16 %v859
      %v1072 = vunpack.c.h.b16 %v859
      %v1073 = vunpack.c.l.b16 %v860
      %v1074 = vunpack.c.h.b16 %v860
      %v1075 = vunpack.c.l.b16 %v861
      %v1076 = vunpack.c.h.b16 %v861
      %v1077 = vunpack.c.l.b16 %v862
      %v1078 = vunpack.c.h.b16 %v862
      %v1079 = vunpack.c.l.b16 %v863
      %v1080 = vunpack.c.h.b16 %v863
      %v1081 = vunpack.c.l.b16 %v864
      %v1082 = vunpack.c.h.b16 %v864
      %v1083 = vunpack.c.l.b16 %v865
      %v1084 = vunpack.c.h.b16 %v865
      %v1085 = vunpack.c.l.b16 %v866
      %v1086 = vunpack.c.h.b16 %v866
      %v1087 = vunpack.c.l.b16 %v867
      %v1088 = vunpack.c.h.b16 %v867
      %v1089 = vunpack.c.l.b16 %v868
      %v1090 = vunpack.c.h.b16 %v868
      %v1091 = vunpack.c.l.b16 %v869
      %v1092 = vunpack.c.h.b16 %v869
      %v1093 = vunpack.c.l.b16 %v870
      %v1094 = vunpack.c.h.b16 %v870
      %v1095 = vunpack.c.l.b16 %v871
      %v1096 = vunpack.c.h.b16 %v871
      %v1097 = vunpack.c.l.b16 %v872
      %v1098 = vunpack.c.h.b16 %v872
      %v1099 = vunpack.c.l.b16 %v873
      %v1100 = vunpack.c.h.b16 %v873
      %v1101 = vunpack.c.l.b16 %v874
      %v1102 = vunpack.c.h.b16 %v874
      %v1103 = vunpack.c.l.b16 %v875
      %v1104 = vunpack.c.h.b16 %v875
      %v1105 = vunpack.c.l.b16 %v876
      %v1106 = vunpack.c.h.b16 %v876
      %v1107 = vunpack.c.l.b16 %v877
      %v1108 = vunpack.c.h.b16 %v877
      %v1109 = vunpack.c.l.b16 %v878
      %v1110 = vunpack.c.h.b16 %v878
      %v1111 = vunpack.c.l.b16 %v879
      %v1112 = vunpack.c.h.b16 %v879
      %v1113 = vunpack.c.l.b16 %v880
      %v1114 = vunpack.c.h.b16 %v880
      %v1115 = vpack.c.b16 %v995, %v987
      %v1116 = vpack.c.b16 %v996, %v988
      %v1117 = vpack.c.b16 %v997, %v989
      %v1118 = vpack.c.b16 %v998, %v990
      %v1119 = vpack.c.b16 %v999, %v991
      %v1120 = vpack.c.b16 %v1000, %v992
      %v1121 = vpack.c.b16 %v1001, %v993
      %v1122 = vpack.c.b16 %v1002, %v994
      %v1123 = vpack.c.b16 %v1011, %v1003
      %v1124 = vpack.c.b16 %v1012, %v1004
      %v1125 = vpack.c.b16 %v1013, %v1005
      %v1126 = vpack.c.b16 %v1014, %v1006
      %v1127 = vpack.c.b16 %v1015, %v1007
      %v1128 = vpack.c.b16 %v1016, %v1008
      %v1129 = vpack.c.b16 %v1017, %v1009
      %v1130 = vpack.c.b16 %v1018, %v1010
      %v1131 = vpack.c.b16 %v1027, %v1019
      %v1132 = vpack.c.b16 %v1028, %v1020
      %v1133 = vpack.c.b16 %v1029, %v1021
      %v1134 = vpack.c.b16 %v1030, %v1022
      %v1135 = vpack.c.b16 %v1031, %v1023
      %v1136 = vpack.c.b16 %v1032, %v1024
      %v1137 = vpack.c.b16 %v1033, %v1025
      %v1138 = vpack.c.b16 %v1034, %v1026
      %v1139 = vpack.c.b16 %v1043, %v1035
      %v1140 = vpack.c.b16 %v1044, %v1036
      %v1141 = vpack.c.b16 %v1045, %v1037
      %v1142 = vpack.c.b16 %v1046, %v1038
      %v1143 = vpack.c.b16 %v1047, %v1039
      %v1144 = vpack.c.b16 %v1048, %v1040
      %v1145 = vpack.c.b16 %v1049, %v1041
      %v1146 = vpack.c.b16 %v1050, %v1042
      %v1147 = vpack.c.b16 %v1059, %v1051
      %v1148 = vpack.c.b16 %v1060, %v1052
      %v1149 = vpack.c.b16 %v1061, %v1053
      %v1150 = vpack.c.b16 %v1062, %v1054
      %v1151 = vpack.c.b16 %v1063, %v1055
      %v1152 = vpack.c.b16 %v1064, %v1056
      %v1153 = vpack.c.b16 %v1065, %v1057
      %v1154 = vpack.c.b16 %v1066, %v1058
      %v1155 = vpack.c.b16 %v1075, %v1067
      %v1156 = vpack.c.b16 %v1076, %v1068
      %v1157 = vpack.c.b16 %v1077, %v1069
      %v1158 = vpack.c.b16 %v1078, %v1070
      %v1159 = vpack.c.b16 %v1079, %v1071
      %v1160 = vpack.c.b16 %v1080, %v1072
      %v1161 = vpack.c.b16 %v1081, %v1073
      %v1162 = vpack.c.b16 %v1082, %v1074
      %v1163 = vpack.c.b16 %v1091, %v1083
      %v1164 = vpack.c.b16 %v1092, %v1084
      %v1165 = vpack.c.b16 %v1093, %v1085
      %v1166 = vpack.c.b16 %v1094, %v1086
      %v1167 = vpack.c.b16 %v1095, %v1087
      %v1168 = vpack.c.b16 %v1096, %v1088
      %v1169 = vpack.c.b16 %v1097, %v1089
      %v1170 = vpack.c.b16 %v1098, %v1090
      %v1171 = vpack.c.b16 %v1107, %v1099
      %v1172 = vpack.c.b16 %v1108, %v1100
      %v1173 = vpack.c.b16 %v1109, %v1101
      %v1174 = vpack.c.b16 %v1110, %v1102
      %v1175 = vpack.c.b16 %v1111, %v1103
      %v1176 = vpack.c.b16 %v1112, %v1104
      %v1177 = vpack.c.b16 %v1113, %v1105
      %v1178 = vpack.c.b16 %v1114, %v1106
      %1243 = vmatprep.subr.bf16.mxu0 %v1172
      %1244 = vmatpush1.bf16.msra.mxu0 %v1171
      %1245 = vmatprep.subr.bf16.mxu0 %v1164
      %1246 = vmatpush1.bf16.msra.mxu0 %v1163
      %1247 = vmatprep.subr.bf16.mxu0 %v1156
      %1248 = vmatpush1.bf16.msra.mxu0 %v1155
      %1249 = vmatprep.subr.bf16.mxu0 %v1148
      %1250 = vmatpush1.bf16.msra.mxu0 %v1147
      %1251 = vmatprep.subr.bf16.mxu0 %v1140
      %1252 = vmatpush1.bf16.msra.mxu0 %v1139
      %1253 = vmatprep.subr.bf16.mxu0 %v1132
      %1254 = vmatpush1.bf16.msra.mxu0 %v1131
      %1255 = vmatprep.subr.bf16.mxu0 %v1124
      %1256 = vmatpush1.bf16.msra.mxu0 %v1123
      %1257 = vmatprep.subr.bf16.mxu0 %v1116
      %1258 = vmatpush1.bf16.msra.mxu0 %v1115
      %1259 = vmatprep.subr.bf16.mxu0 0
      %1260 = vmatpush2.bf16.msra.mxu0 0
      %1261 = vmatprep.subr.bf16.mxu0 0
      %1262 = vmatpush2.bf16.msra.mxu0 0
      %1263 = vmatprep.subr.bf16.mxu0 0
      %1264 = vmatpush2.bf16.msra.mxu0 0
      %1265 = vmatprep.subr.bf16.mxu0 0
      %1266 = vmatpush2.bf16.msra.mxu0 0
      %1267 = vmatprep.subr.bf16.mxu0 0
      %1268 = vmatpush2.bf16.msra.mxu0 0
      %1269 = vmatprep.subr.bf16.mxu0 0
      %1270 = vmatpush2.bf16.msra.mxu0 0
      %1271 = vmatprep.subr.bf16.mxu0 0
      %1272 = vmatpush2.bf16.msra.mxu0 0
      %1273 = vmatprep.subr.bf16.mxu0 0
      %1274 = vmatpush2.bf16.msra.mxu0 0
      %1275 = vmatprep.mubr.bf16.mxu0 0
      %1276 = vmatmul.mubr.bf16.gmra.mxu0 %v809
      %v1277 = vpop.f32.mrf.mxu0
      %v1278 = vadd.f32 %v886, %v1277
      %v1279 = vpop.f32.mrf.mxu0
      %v1280 = vadd.f32 %v890, %v1279
      %v1281 = vpop.f32.mrf.mxu0
      %v1282 = vadd.f32 %v886, %v1281
      %v1283 = vpop.f32.mrf.mxu0
      %v1284 = vadd.f32 %v890, %v1283
      %1285 = vmatprep.mubr.bf16.mxu0 0
      %1286 = vmatmul.mubr.bf16.gmra.mxu0 %v810
      %v1287 = vpop.f32.mrf.mxu0
      %v1288 = vadd.f32 %v886, %v1287
      %v1289 = vpop.f32.mrf.mxu0
      %v1290 = vadd.f32 %v890, %v1289
      %v1291 = vpop.f32.mrf.mxu0
      %v1292 = vadd.f32 %v886, %v1291
      %v1293 = vpop.f32.mrf.mxu0
      %v1294 = vadd.f32 %v890, %v1293
      %1295 = vmatprep.mubr.bf16.mxu0 0
      %1296 = vmatmul.mubr.bf16.gmra.mxu0 %v811
      %v1297 = vpop.f32.mrf.mxu0
      %v1298 = vadd.f32 %v886, %v1297
      %v1299 = vpop.f32.mrf.mxu0
      %v1300 = vadd.f32 %v890, %v1299
      %v1301 = vpop.f32.mrf.mxu0
      %v1302 = vadd.f32 %v886, %v1301
      %v1303 = vpop.f32.mrf.mxu0
      %v1304 = vadd.f32 %v890, %v1303
      %1305 = vmatprep.mubr.bf16.mxu0 0
      %1306 = vmatmul.mubr.bf16.gmra.mxu0 %v812
      %v1307 = vpop.f32.mrf.mxu0
      %v1308 = vadd.f32 %v886, %v1307
      %v1309 = vpop.f32.mrf.mxu0
      %v1310 = vadd.f32 %v890, %v1309
      %v1311 = vpop.f32.mrf.mxu0
      %v1312 = vadd.f32 %v886, %v1311
      %v1313 = vpop.f32.mrf.mxu0
      %v1314 = vadd.f32 %v890, %v1313
      %1315 = vmatprep.mubr.bf16.mxu0 0
      %1316 = vmatmul.mubr.bf16.gmra.mxu0 %v813
      %v1317 = vpop.f32.mrf.mxu0
      %v1318 = vadd.f32 %v886, %v1317
      %v1319 = vpop.f32.mrf.mxu0
      %v1320 = vadd.f32 %v890, %v1319
      %v1321 = vpop.f32.mrf.mxu0
      %v1322 = vadd.f32 %v886, %v1321
      %v1323 = vpop.f32.mrf.mxu0
      %v1324 = vadd.f32 %v890, %v1323
      %1325 = vmatprep.mubr.bf16.mxu0 0
      %1326 = vmatmul.mubr.bf16.gmra.mxu0 %v814
      %v1327 = vpop.f32.mrf.mxu0
      %v1328 = vadd.f32 %v886, %v1327
      %v1329 = vpop.f32.mrf.mxu0
      %v1330 = vadd.f32 %v890, %v1329
      %v1331 = vpop.f32.mrf.mxu0
      %v1332 = vadd.f32 %v886, %v1331
      %v1333 = vpop.f32.mrf.mxu0
      %v1334 = vadd.f32 %v890, %v1333
      %1335 = vmatprep.mubr.bf16.mxu0 0
      %1336 = vmatmul.mubr.bf16.gmra.mxu0 %v815
      %v1337 = vpop.f32.mrf.mxu0
      %v1338 = vadd.f32 %v886, %v1337
      %v1339 = vpop.f32.mrf.mxu0
      %v1340 = vadd.f32 %v890, %v1339
      %v1341 = vpop.f32.mrf.mxu0
      %v1342 = vadd.f32 %v886, %v1341
      %v1343 = vpop.f32.mrf.mxu0
      %v1344 = vadd.f32 %v890, %v1343
      %1345 = vmatprep.mubr.bf16.mxu0 0
      %1346 = vmatmul.mubr.bf16.gmra.mxu0 %v816
      %v1347 = vpop.f32.mrf.mxu0
      %v1348 = vadd.f32 %v886, %v1347
      %v1349 = vpop.f32.mrf.mxu0
      %v1350 = vadd.f32 %v890, %v1349
      %v1351 = vpop.f32.mrf.mxu0
      %v1352 = vadd.f32 %v886, %v1351
      %v1353 = vpop.f32.mrf.mxu0
      %v1354 = vadd.f32 %v890, %v1353
      %1355 = vdwg.mxu0
      %1356 = vmatprep.subr.bf16.mxu0 %v1174
      %1357 = vmatpush1.bf16.msra.mxu0 %v1173
      %1358 = vmatprep.subr.bf16.mxu0 %v1166
      %1359 = vmatpush1.bf16.msra.mxu0 %v1165
      %1360 = vmatprep.subr.bf16.mxu0 %v1158
      %1361 = vmatpush1.bf16.msra.mxu0 %v1157
      %1362 = vmatprep.subr.bf16.mxu0 %v1150
      %1363 = vmatpush1.bf16.msra.mxu0 %v1149
      %1364 = vmatprep.subr.bf16.mxu0 %v1142
      %1365 = vmatpush1.bf16.msra.mxu0 %v1141
      %1366 = vmatprep.subr.bf16.mxu0 %v1134
      %1367 = vmatpush1.bf16.msra.mxu0 %v1133
      %1368 = vmatprep.subr.bf16.mxu0 %v1126
      %1369 = vmatpush1.bf16.msra.mxu0 %v1125
      %1370 = vmatprep.subr.bf16.mxu0 %v1118
      %1371 = vmatpush1.bf16.msra.mxu0 %v1117
      %1372 = vmatprep.subr.bf16.mxu0 0
      %1373 = vmatpush2.bf16.msra.mxu0 0
      %1374 = vmatprep.subr.bf16.mxu0 0
      %1375 = vmatpush2.bf16.msra.mxu0 0
      %1376 = vmatprep.subr.bf16.mxu0 0
      %1377 = vmatpush2.bf16.msra.mxu0 0
      %1378 = vmatprep.subr.bf16.mxu0 0
      %1379 = vmatpush2.bf16.msra.mxu0 0
      %1380 = vmatprep.subr.bf16.mxu0 0
      %1381 = vmatpush2.bf16.msra.mxu0 0
      %1382 = vmatprep.subr.bf16.mxu0 0
      %1383 = vmatpush2.bf16.msra.mxu0 0
      %1384 = vmatprep.subr.bf16.mxu0 0
      %1385 = vmatpush2.bf16.msra.mxu0 0
      %1386 = vmatprep.subr.bf16.mxu0 0
      %1387 = vmatpush2.bf16.msra.mxu0 0
      %1388 = vmatprep.mubr.bf16.mxu0 0
      %1389 = vmatmul.mubr.bf16.gmra.mxu0 %v809
      %v1390 = vpop.f32.mrf.mxu0
      %v1391 = vadd.f32 %v894, %v1390
      %v1392 = vpop.f32.mrf.mxu0
      %v1393 = vadd.f32 %v898, %v1392
      %v1394 = vpop.f32.mrf.mxu0
      %v1395 = vadd.f32 %v894, %v1394
      %v1396 = vpop.f32.mrf.mxu0
      %v1397 = vadd.f32 %v898, %v1396
      %1398 = vmatprep.mubr.bf16.mxu0 0
      %1399 = vmatmul.mubr.bf16.gmra.mxu0 %v810
      %v1400 = vpop.f32.mrf.mxu0
      %v1401 = vadd.f32 %v894, %v1400
      %v1402 = vpop.f32.mrf.mxu0
      %v1403 = vadd.f32 %v898, %v1402
      %v1404 = vpop.f32.mrf.mxu0
      %v1405 = vadd.f32 %v894, %v1404
      %v1406 = vpop.f32.mrf.mxu0
      %v1407 = vadd.f32 %v898, %v1406
      %1408 = vmatprep.mubr.bf16.mxu0 0
      %1409 = vmatmul.mubr.bf16.gmra.mxu0 %v811
      %v1410 = vpop.f32.mrf.mxu0
      %v1411 = vadd.f32 %v894, %v1410
      %v1412 = vpop.f32.mrf.mxu0
      %v1413 = vadd.f32 %v898, %v1412
      %v1414 = vpop.f32.mrf.mxu0
      %v1415 = vadd.f32 %v894, %v1414
      %v1416 = vpop.f32.mrf.mxu0
      %v1417 = vadd.f32 %v898, %v1416
      %1418 = vmatprep.mubr.bf16.mxu0 0
      %1419 = vmatmul.mubr.bf16.gmra.mxu0 %v812
      %v1420 = vpop.f32.mrf.mxu0
      %v1421 = vadd.f32 %v894, %v1420
      %v1422 = vpop.f32.mrf.mxu0
      %v1423 = vadd.f32 %v898, %v1422
      %v1424 = vpop.f32.mrf.mxu0
      %v1425 = vadd.f32 %v894, %v1424
      %v1426 = vpop.f32.mrf.mxu0
      %v1427 = vadd.f32 %v898, %v1426
      %1428 = vmatprep.mubr.bf16.mxu0 0
      %1429 = vmatmul.mubr.bf16.gmra.mxu0 %v813
      %v1430 = vpop.f32.mrf.mxu0
      %v1431 = vadd.f32 %v894, %v1430
      %v1432 = vpop.f32.mrf.mxu0
      %v1433 = vadd.f32 %v898, %v1432
      %v1434 = vpop.f32.mrf.mxu0
      %v1435 = vadd.f32 %v894, %v1434
      %v1436 = vpop.f32.mrf.mxu0
      %v1437 = vadd.f32 %v898, %v1436
      %1438 = vmatprep.mubr.bf16.mxu0 0
      %1439 = vmatmul.mubr.bf16.gmra.mxu0 %v814
      %v1440 = vpop.f32.mrf.mxu0
      %v1441 = vadd.f32 %v894, %v1440
      %v1442 = vpop.f32.mrf.mxu0
      %v1443 = vadd.f32 %v898, %v1442
      %v1444 = vpop.f32.mrf.mxu0
      %v1445 = vadd.f32 %v894, %v1444
      %v1446 = vpop.f32.mrf.mxu0
      %v1447 = vadd.f32 %v898, %v1446
      %1448 = vmatprep.mubr.bf16.mxu0 0
      %1449 = vmatmul.mubr.bf16.gmra.mxu0 %v815
      %v1450 = vpop.f32.mrf.mxu0
      %v1451 = vadd.f32 %v894, %v1450
      %v1452 = vpop.f32.mrf.mxu0
      %v1453 = vadd.f32 %v898, %v1452
      %v1454 = vpop.f32.mrf.mxu0
      %v1455 = vadd.f32 %v894, %v1454
      %v1456 = vpop.f32.mrf.mxu0
      %v1457 = vadd.f32 %v898, %v1456
      %1458 = vmatprep.mubr.bf16.mxu0 0
      %1459 = vmatmul.mubr.bf16.gmra.mxu0 %v816
      %v1460 = vpop.f32.mrf.mxu0
      %v1461 = vadd.f32 %v894, %v1460
      %v1462 = vpop.f32.mrf.mxu0
      %v1463 = vadd.f32 %v898, %v1462
      %v1464 = vpop.f32.mrf.mxu0
      %v1465 = vadd.f32 %v894, %v1464
      %v1466 = vpop.f32.mrf.mxu0
      %v1467 = vadd.f32 %v898, %v1466
      %1468 = vdwg.mxu0
      %1469 = vmatprep.subr.bf16.mxu0 %v1176
      %1470 = vmatpush1.bf16.msra.mxu0 %v1175
      %1471 = vmatprep.subr.bf16.mxu0 %v1168
      %1472 = vmatpush1.bf16.msra.mxu0 %v1167
      %1473 = vmatprep.subr.bf16.mxu0 %v1160
      %1474 = vmatpush1.bf16.msra.mxu0 %v1159
      %1475 = vmatprep.subr.bf16.mxu0 %v1152
      %1476 = vmatpush1.bf16.msra.mxu0 %v1151
      %1477 = vmatprep.subr.bf16.mxu0 %v1144
      %1478 = vmatpush1.bf16.msra.mxu0 %v1143
      %1479 = vmatprep.subr.bf16.mxu0 %v1136
      %1480 = vmatpush1.bf16.msra.mxu0 %v1135
      %1481 = vmatprep.subr.bf16.mxu0 %v1128
      %1482 = vmatpush1.bf16.msra.mxu0 %v1127
      %1483 = vmatprep.subr.bf16.mxu0 %v1120
      %1484 = vmatpush1.bf16.msra.mxu0 %v1119
      %1485 = vmatprep.subr.bf16.mxu0 0
      %1486 = vmatpush2.bf16.msra.mxu0 0
      %1487 = vmatprep.subr.bf16.mxu0 0
      %1488 = vmatpush2.bf16.msra.mxu0 0
      %1489 = vmatprep.subr.bf16.mxu0 0
      %1490 = vmatpush2.bf16.msra.mxu0 0
      %1491 = vmatprep.subr.bf16.mxu0 0
      %1492 = vmatpush2.bf16.msra.mxu0 0
      %1493 = vmatprep.subr.bf16.mxu0 0
      %1494 = vmatpush2.bf16.msra.mxu0 0
      %1495 = vmatprep.subr.bf16.mxu0 0
      %1496 = vmatpush2.bf16.msra.mxu0 0
      %1497 = vmatprep.subr.bf16.mxu0 0
      %1498 = vmatpush2.bf16.msra.mxu0 0
      %1499 = vmatprep.subr.bf16.mxu0 0
      %1500 = vmatpush2.bf16.msra.mxu0 0
      %1501 = vmatprep.mubr.bf16.mxu0 0
      %1502 = vmatmul.mubr.bf16.gmra.mxu0 %v809
      %v1503 = vpop.f32.mrf.mxu0
      %v1504 = vadd.f32 %v902, %v1503
      %v1505 = vpop.f32.mrf.mxu0
      %v1506 = vadd.f32 %v906, %v1505
      %v1507 = vpop.f32.mrf.mxu0
      %v1508 = vadd.f32 %v902, %v1507
      %v1509 = vpop.f32.mrf.mxu0
      %v1510 = vadd.f32 %v906, %v1509
      %1511 = vmatprep.mubr.bf16.mxu0 0
      %1512 = vmatmul.mubr.bf16.gmra.mxu0 %v810
      %v1513 = vpop.f32.mrf.mxu0
      %v1514 = vadd.f32 %v902, %v1513
      %v1515 = vpop.f32.mrf.mxu0
      %v1516 = vadd.f32 %v906, %v1515
      %v1517 = vpop.f32.mrf.mxu0
      %v1518 = vadd.f32 %v902, %v1517
      %v1519 = vpop.f32.mrf.mxu0
      %v1520 = vadd.f32 %v906, %v1519
      %1521 = vmatprep.mubr.bf16.mxu0 0
      %1522 = vmatmul.mubr.bf16.gmra.mxu0 %v811
      %v1523 = vpop.f32.mrf.mxu0
      %v1524 = vadd.f32 %v902, %v1523
      %v1525 = vpop.f32.mrf.mxu0
      %v1526 = vadd.f32 %v906, %v1525
      %v1527 = vpop.f32.mrf.mxu0
      %v1528 = vadd.f32 %v902, %v1527
      %v1529 = vpop.f32.mrf.mxu0
      %v1530 = vadd.f32 %v906, %v1529
      %1531 = vmatprep.mubr.bf16.mxu0 0
      %1532 = vmatmul.mubr.bf16.gmra.mxu0 %v812
      %v1533 = vpop.f32.mrf.mxu0
      %v1534 = vadd.f32 %v902, %v1533
      %v1535 = vpop.f32.mrf.mxu0
      %v1536 = vadd.f32 %v906, %v1535
      %v1537 = vpop.f32.mrf.mxu0
      %v1538 = vadd.f32 %v902, %v1537
      %v1539 = vpop.f32.mrf.mxu0
      %v1540 = vadd.f32 %v906, %v1539
      %1541 = vmatprep.mubr.bf16.mxu0 0
      %1542 = vmatmul.mubr.bf16.gmra.mxu0 %v813
      %v1543 = vpop.f32.mrf.mxu0
      %v1544 = vadd.f32 %v902, %v1543
      %v1545 = vpop.f32.mrf.mxu0
      %v1546 = vadd.f32 %v906, %v1545
      %v1547 = vpop.f32.mrf.mxu0
      %v1548 = vadd.f32 %v902, %v1547
      %v1549 = vpop.f32.mrf.mxu0
      %v1550 = vadd.f32 %v906, %v1549
      %1551 = vmatprep.mubr.bf16.mxu0 0
      %1552 = vmatmul.mubr.bf16.gmra.mxu0 %v814
      %v1553 = vpop.f32.mrf.mxu0
      %v1554 = vadd.f32 %v902, %v1553
      %v1555 = vpop.f32.mrf.mxu0
      %v1556 = vadd.f32 %v906, %v1555
      %v1557 = vpop.f32.mrf.mxu0
      %v1558 = vadd.f32 %v902, %v1557
      %v1559 = vpop.f32.mrf.mxu0
      %v1560 = vadd.f32 %v906, %v1559
      %1561 = vmatprep.mubr.bf16.mxu0 0
      %1562 = vmatmul.mubr.bf16.gmra.mxu0 %v815
      %v1563 = vpop.f32.mrf.mxu0
      %v1564 = vadd.f32 %v902, %v1563
      %v1565 = vpop.f32.mrf.mxu0
      %v1566 = vadd.f32 %v906, %v1565
      %v1567 = vpop.f32.mrf.mxu0
      %v1568 = vadd.f32 %v902, %v1567
      %v1569 = vpop.f32.mrf.mxu0
      %v1570 = vadd.f32 %v906, %v1569
      %1571 = vmatprep.mubr.bf16.mxu0 0
      %1572 = vmatmul.mubr.bf16.gmra.mxu0 %v816
      %v1573 = vpop.f32.mrf.mxu0
      %v1574 = vadd.f32 %v902, %v1573
      %v1575 = vpop.f32.mrf.mxu0
      %v1576 = vadd.f32 %v906, %v1575
      %v1577 = vpop.f32.mrf.mxu0
      %v1578 = vadd.f32 %v902, %v1577
      %v1579 = vpop.f32.mrf.mxu0
      %v1580 = vadd.f32 %v906, %v1579
      %1581 = vdwg.mxu0
      %1582 = vmatprep.subr.bf16.mxu0 %v1178
      %1583 = vmatpush1.bf16.msra.mxu0 %v1177
      %1584 = vmatprep.subr.bf16.mxu0 %v1170
      %1585 = vmatpush1.bf16.msra.mxu0 %v1169
      %1586 = vmatprep.subr.bf16.mxu0 %v1162
      %1587 = vmatpush1.bf16.msra.mxu0 %v1161
      %1588 = vmatprep.subr.bf16.mxu0 %v1154
      %1589 = vmatpush1.bf16.msra.mxu0 %v1153
      %1590 = vmatprep.subr.bf16.mxu0 %v1146
      %1591 = vmatpush1.bf16.msra.mxu0 %v1145
      %1592 = vmatprep.subr.bf16.mxu0 %v1138
      %1593 = vmatpush1.bf16.msra.mxu0 %v1137
      %1594 = vmatprep.subr.bf16.mxu0 %v1130
      %1595 = vmatpush1.bf16.msra.mxu0 %v1129
      %1596 = vmatprep.subr.bf16.mxu0 %v1122
      %1597 = vmatpush1.bf16.msra.mxu0 %v1121
      %1598 = vmatprep.subr.bf16.mxu0 0
      %1599 = vmatpush2.bf16.msra.mxu0 0
      %1600 = vmatprep.subr.bf16.mxu0 0
      %1601 = vmatpush2.bf16.msra.mxu0 0
      %1602 = vmatprep.subr.bf16.mxu0 0
      %1603 = vmatpush2.bf16.msra.mxu0 0
      %1604 = vmatprep.subr.bf16.mxu0 0
      %1605 = vmatpush2.bf16.msra.mxu0 0
      %1606 = vmatprep.subr.bf16.mxu0 0
      %1607 = vmatpush2.bf16.msra.mxu0 0
      %1608 = vmatprep.subr.bf16.mxu0 0
      %1609 = vmatpush2.bf16.msra.mxu0 0
      %1610 = vmatprep.subr.bf16.mxu0 0
      %1611 = vmatpush2.bf16.msra.mxu0 0
      %1612 = vmatprep.subr.bf16.mxu0 0
      %1613 = vmatpush2.bf16.msra.mxu0 0
      %1614 = vmatprep.mubr.bf16.mxu0 0
      %1615 = vmatmul.mubr.bf16.gmra.mxu0 %v809
      %v1616 = vpop.f32.mrf.mxu0
      %v1617 = vadd.f32 %v910, %v1616
      %v1618 = vpop.f32.mrf.mxu0
      %v1619 = vadd.f32 %v914, %v1618
      %v1620 = vpop.f32.mrf.mxu0
      %v1621 = vadd.f32 %v910, %v1620
      %v1622 = vpop.f32.mrf.mxu0
      %v1623 = vadd.f32 %v914, %v1622
      %1624 = vmatprep.mubr.bf16.mxu0 0
      %1625 = vmatmul.mubr.bf16.gmra.mxu0 %v810
      %v1626 = vpop.f32.mrf.mxu0
      %v1627 = vadd.f32 %v910, %v1626
      %v1628 = vpop.f32.mrf.mxu0
      %v1629 = vadd.f32 %v914, %v1628
      %v1630 = vpop.f32.mrf.mxu0
      %v1631 = vadd.f32 %v910, %v1630
      %v1632 = vpop.f32.mrf.mxu0
      %v1633 = vadd.f32 %v914, %v1632
      %1634 = vmatprep.mubr.bf16.mxu0 0
      %1635 = vmatmul.mubr.bf16.gmra.mxu0 %v811
      %v1636 = vpop.f32.mrf.mxu0
      %v1637 = vadd.f32 %v910, %v1636
      %v1638 = vpop.f32.mrf.mxu0
      %v1639 = vadd.f32 %v914, %v1638
      %v1640 = vpop.f32.mrf.mxu0
      %v1641 = vadd.f32 %v910, %v1640
      %v1642 = vpop.f32.mrf.mxu0
      %v1643 = vadd.f32 %v914, %v1642
      %1644 = vmatprep.mubr.bf16.mxu0 0
      %1645 = vmatmul.mubr.bf16.gmra.mxu0 %v812
      %v1646 = vpop.f32.mrf.mxu0
      %v1647 = vadd.f32 %v910, %v1646
      %v1648 = vpop.f32.mrf.mxu0
      %v1649 = vadd.f32 %v914, %v1648
      %v1650 = vpop.f32.mrf.mxu0
      %v1651 = vadd.f32 %v910, %v1650
      %v1652 = vpop.f32.mrf.mxu0
      %v1653 = vadd.f32 %v914, %v1652
      %1654 = vmatprep.mubr.bf16.mxu0 0
      %1655 = vmatmul.mubr.bf16.gmra.mxu0 %v813
      %v1656 = vpop.f32.mrf.mxu0
      %v1657 = vadd.f32 %v910, %v1656
      %v1658 = vpop.f32.mrf.mxu0
      %v1659 = vadd.f32 %v914, %v1658
      %v1660 = vpop.f32.mrf.mxu0
      %v1661 = vadd.f32 %v910, %v1660
      %v1662 = vpop.f32.mrf.mxu0
      %v1663 = vadd.f32 %v914, %v1662
      %1664 = vmatprep.mubr.bf16.mxu0 0
      %1665 = vmatmul.mubr.bf16.gmra.mxu0 %v814
      %v1666 = vpop.f32.mrf.mxu0
      %v1667 = vadd.f32 %v910, %v1666
      %v1668 = vpop.f32.mrf.mxu0
      %v1669 = vadd.f32 %v914, %v1668
      %v1670 = vpop.f32.mrf.mxu0
      %v1671 = vadd.f32 %v910, %v1670
      %v1672 = vpop.f32.mrf.mxu0
      %v1673 = vadd.f32 %v914, %v1672
      %1674 = vmatprep.mubr.bf16.mxu0 0
      %1675 = vmatmul.mubr.bf16.gmra.mxu0 %v815
      %v1676 = vpop.f32.mrf.mxu0
      %v1677 = vadd.f32 %v910, %v1676
      %v1678 = vpop.f32.mrf.mxu0
      %v1679 = vadd.f32 %v914, %v1678
      %v1680 = vpop.f32.mrf.mxu0
      %v1681 = vadd.f32 %v910, %v1680
      %v1682 = vpop.f32.mrf.mxu0
      %v1683 = vadd.f32 %v914, %v1682
      %1684 = vmatprep.mubr.bf16.mxu0 0
      %1685 = vmatmul.mubr.bf16.gmra.mxu0 %v816
      %v1686 = vpop.f32.mrf.mxu0
      %v1687 = vadd.f32 %v910, %v1686
      %v1688 = vpop.f32.mrf.mxu0
      %v1689 = vadd.f32 %v914, %v1688
      %v1690 = vpop.f32.mrf.mxu0
      %v1691 = vadd.f32 %v910, %v1690
      %v1692 = vpop.f32.mrf.mxu0
      %v1693 = vadd.f32 %v914, %v1692
      %1694 = vdwg.mxu0
      %v1695 = vmax.f32 %v1278, %v1282
      %v1696 = vmax.f32 %v1695, %v1288
      %v1697 = vmax.f32 %v1696, %v1292
      %v1698 = vmax.f32 %v1697, %v1298
      %v1699 = vmax.f32 %v1698, %v1302
      %v1700 = vmax.f32 %v1699, %v1308
      %v1701 = vmax.f32 %v1700, %v1312
      %v1702 = vmax.f32 %v1701, %v1318
      %v1703 = vmax.f32 %v1702, %v1322
      %v1704 = vmax.f32 %v1703, %v1328
      %v1705 = vmax.f32 %v1704, %v1332
      %v1706 = vmax.f32 %v1705, %v1338
      %v1707 = vmax.f32 %v1706, %v1342
      %v1708 = vmax.f32 %v1707, %v1348
      %v1709 = vmax.f32 %v1708, %v1352
      %v1710 = vrot.slane %v1709, 4
      %v1711 = vmax.f32 %v1709, %v1710
      %v1712 = vrot.slane %v1711, 2
      %v1713 = vmax.f32 %v1711, %v1712
      %v1714 = vrot.slane %v1713, 1
      %v1715 = vmax.f32 %v1713, %v1714
      %v1716 = vmax.f32 %v1280, %v1284
      %v1717 = vmax.f32 %v1716, %v1290
      %v1718 = vmax.f32 %v1717, %v1294
      %v1719 = vmax.f32 %v1718, %v1300
      %v1720 = vmax.f32 %v1719, %v1304
      %v1721 = vmax.f32 %v1720, %v1310
      %v1722 = vmax.f32 %v1721, %v1314
      %v1723 = vmax.f32 %v1722, %v1320
      %v1724 = vmax.f32 %v1723, %v1324
      %v1725 = vmax.f32 %v1724, %v1330
      %v1726 = vmax.f32 %v1725, %v1334
      %v1727 = vmax.f32 %v1726, %v1340
      %v1728 = vmax.f32 %v1727, %v1344
      %v1729 = vmax.f32 %v1728, %v1350
      %v1730 = vmax.f32 %v1729, %v1354
      %v1731 = vrot.slane %v1730, 4
      %v1732 = vmax.f32 %v1730, %v1731
      %v1733 = vrot.slane %v1732, 2
      %v1734 = vmax.f32 %v1732, %v1733
      %v1735 = vrot.slane %v1734, 1
      %v1736 = vmax.f32 %v1734, %v1735
      %v1737 = vmax.f32 %v1391, %v1395
      %v1738 = vmax.f32 %v1737, %v1401
      %v1739 = vmax.f32 %v1738, %v1405
      %v1740 = vmax.f32 %v1739, %v1411
      %v1741 = vmax.f32 %v1740, %v1415
      %v1742 = vmax.f32 %v1741, %v1421
      %v1743 = vmax.f32 %v1742, %v1425
      %v1744 = vmax.f32 %v1743, %v1431
      %v1745 = vmax.f32 %v1744, %v1435
      %v1746 = vmax.f32 %v1745, %v1441
      %v1747 = vmax.f32 %v1746, %v1445
      %v1748 = vmax.f32 %v1747, %v1451
      %v1749 = vmax.f32 %v1748, %v1455
      %v1750 = vmax.f32 %v1749, %v1461
      %v1751 = vmax.f32 %v1750, %v1465
      %v1752 = vrot.slane %v1751, 4
      %v1753 = vmax.f32 %v1751, %v1752
      %v1754 = vrot.slane %v1753, 2
      %v1755 = vmax.f32 %v1753, %v1754
      %v1756 = vrot.slane %v1755, 1
      %v1757 = vmax.f32 %v1755, %v1756
      %v1758 = vmax.f32 %v1393, %v1397
      %v1759 = vmax.f32 %v1758, %v1403
      %v1760 = vmax.f32 %v1759, %v1407
      %v1761 = vmax.f32 %v1760, %v1413
      %v1762 = vmax.f32 %v1761, %v1417
      %v1763 = vmax.f32 %v1762, %v1423
      %v1764 = vmax.f32 %v1763, %v1427
      %v1765 = vmax.f32 %v1764, %v1433
      %v1766 = vmax.f32 %v1765, %v1437
      %v1767 = vmax.f32 %v1766, %v1443
      %v1768 = vmax.f32 %v1767, %v1447
      %v1769 = vmax.f32 %v1768, %v1453
      %v1770 = vmax.f32 %v1769, %v1457
      %v1771 = vmax.f32 %v1770, %v1463
      %v1772 = vmax.f32 %v1771, %v1467
      %v1773 = vrot.slane %v1772, 4
      %v1774 = vmax.f32 %v1772, %v1773
      %v1775 = vrot.slane %v1774, 2
      %v1776 = vmax.f32 %v1774, %v1775
      %v1777 = vrot.slane %v1776, 1
      %v1778 = vmax.f32 %v1776, %v1777
      %v1779 = vmax.f32 %v1504, %v1508
      %v1780 = vmax.f32 %v1779, %v1514
      %v1781 = vmax.f32 %v1780, %v1518
      %v1782 = vmax.f32 %v1781, %v1524
      %v1783 = vmax.f32 %v1782, %v1528
      %v1784 = vmax.f32 %v1783, %v1534
      %v1785 = vmax.f32 %v1784, %v1538
      %v1786 = vmax.f32 %v1785, %v1544
      %v1787 = vmax.f32 %v1786, %v1548
      %v1788 = vmax.f32 %v1787, %v1554
      %v1789 = vmax.f32 %v1788, %v1558
      %v1790 = vmax.f32 %v1789, %v1564
      %v1791 = vmax.f32 %v1790, %v1568
      %v1792 = vmax.f32 %v1791, %v1574
      %v1793 = vmax.f32 %v1792, %v1578
      %v1794 = vrot.slane %v1793, 4
      %v1795 = vmax.f32 %v1793, %v1794
      %v1796 = vrot.slane %v1795, 2
      %v1797 = vmax.f32 %v1795, %v1796
      %v1798 = vrot.slane %v1797, 1
      %v1799 = vmax.f32 %v1797, %v1798
      %v1800 = vmax.f32 %v1506, %v1510
      %v1801 = vmax.f32 %v1800, %v1516
      %v1802 = vmax.f32 %v1801, %v1520
      %v1803 = vmax.f32 %v1802, %v1526
      %v1804 = vmax.f32 %v1803, %v1530
      %v1805 = vmax.f32 %v1804, %v1536
      %v1806 = vmax.f32 %v1805, %v1540
      %v1807 = vmax.f32 %v1806, %v1546
      %v1808 = vmax.f32 %v1807, %v1550
      %v1809 = vmax.f32 %v1808, %v1556
      %v1810 = vmax.f32 %v1809, %v1560
      %v1811 = vmax.f32 %v1810, %v1566
      %v1812 = vmax.f32 %v1811, %v1570
      %v1813 = vmax.f32 %v1812, %v1576
      %v1814 = vmax.f32 %v1813, %v1580
      %v1815 = vrot.slane %v1814, 4
      %v1816 = vmax.f32 %v1814, %v1815
      %v1817 = vrot.slane %v1816, 2
      %v1818 = vmax.f32 %v1816, %v1817
      %v1819 = vrot.slane %v1818, 1
      %v1820 = vmax.f32 %v1818, %v1819
      %v1821 = vmax.f32 %v1617, %v1621
      %v1822 = vmax.f32 %v1821, %v1627
      %v1823 = vmax.f32 %v1822, %v1631
      %v1824 = vmax.f32 %v1823, %v1637
      %v1825 = vmax.f32 %v1824, %v1641
      %v1826 = vmax.f32 %v1825, %v1647
      %v1827 = vmax.f32 %v1826, %v1651
      %v1828 = vmax.f32 %v1827, %v1657
      %v1829 = vmax.f32 %v1828, %v1661
      %v1830 = vmax.f32 %v1829, %v1667
      %v1831 = vmax.f32 %v1830, %v1671
      %v1832 = vmax.f32 %v1831, %v1677
      %v1833 = vmax.f32 %v1832, %v1681
      %v1834 = vmax.f32 %v1833, %v1687
      %v1835 = vmax.f32 %v1834, %v1691
      %v1836 = vrot.slane %v1835, 4
      %v1837 = vmax.f32 %v1835, %v1836
      %v1838 = vrot.slane %v1837, 2
      %v1839 = vmax.f32 %v1837, %v1838
      %v1840 = vrot.slane %v1839, 1
      %v1841 = vmax.f32 %v1839, %v1840
      %v1842 = vmax.f32 %v1619, %v1623
      %v1843 = vmax.f32 %v1842, %v1629
      %v1844 = vmax.f32 %v1843, %v1633
      %v1845 = vmax.f32 %v1844, %v1639
      %v1846 = vmax.f32 %v1845, %v1643
      %v1847 = vmax.f32 %v1846, %v1649
      %v1848 = vmax.f32 %v1847, %v1653
      %v1849 = vmax.f32 %v1848, %v1659
      %v1850 = vmax.f32 %v1849, %v1663
      %v1851 = vmax.f32 %v1850, %v1669
      %v1852 = vmax.f32 %v1851, %v1673
      %v1853 = vmax.f32 %v1852, %v1679
      %v1854 = vmax.f32 %v1853, %v1683
      %v1855 = vmax.f32 %v1854, %v1689
      %v1856 = vmax.f32 %v1855, %v1693
      %v1857 = vrot.slane %v1856, 4
      %v1858 = vmax.f32 %v1856, %v1857
      %v1859 = vrot.slane %v1858, 2
      %v1860 = vmax.f32 %v1858, %v1859
      %v1861 = vrot.slane %v1860, 1
      %v1862 = vmax.f32 %v1860, %v1861
      %p1863 = scmp.eq.s32.totalorder %s25, 0
      // Predicated region
      $region49: #{pointnet_densecls.6} parent=47 // pred_check
        %p1864 = pneg %p1863
      $region50: #{pointnet_densecls.6} parent=47 // pred_check_branch
        %1866 = sbr.rel (%p1864) target = $region52
      $region51: #{pointnet_densecls.6} parent=47 // pred_region
        %v1875 = vcombine.low %v1715, %v1736
        %v1876 = vcombine.low %v1757, %v1778
        %v1877 = vcombine.low %v1799, %v1820
        %v1878 = vcombine.low %v1841, %v1862
        %v1880 = vunpack.c.l.s4 1966171168
        %v1881 = vunpack.c.0.s8 %v1880
        %v1882 = vlaneseq
        %v1883 = vshrl.u32 %v1882, 7
        %v1884 = vsub.s32 %v1881, %v1883
        %v1885 = vrot.slane %v1875, %v1884
        %v1887 = vunpack.c.l.s4 1966171168
        %v1888 = vunpack.c.0.s8 %v1887
        %v1889 = vlaneseq
        %v1890 = vshrl.u32 %v1889, 7
        %v1891 = vsub.s32 %v1888, %v1890
        %v1892 = vrot.slane %v1876, %v1891
        %v1894 = vunpack.c.l.s4 1966171168
        %v1895 = vunpack.c.0.s8 %v1894
        %v1896 = vlaneseq
        %v1897 = vshrl.u32 %v1896, 7
        %v1898 = vsub.s32 %v1895, %v1897
        %v1899 = vrot.slane %v1877, %v1898
        %v1901 = vunpack.c.l.s4 1966171168
        %v1902 = vunpack.c.0.s8 %v1901
        %v1903 = vlaneseq
        %v1904 = vshrl.u32 %v1903, 7
        %v1905 = vsub.s32 %v1902, %v1904
        %v1906 = vrot.slane %v1878, %v1905
        %v1907 = vcombine.low %v1885, %v1892
        %v1908 = vcombine.low %v1899, %v1906
        %v1910 = vunpack.c.l.s4 1966171168
        %v1911 = vunpack.c.0.s8 %v1910
        %v1912 = vlaneseq
        %v1913 = vshrl.u32 %v1912, 7
        %v1914 = vsub.s32 %v1911, %v1913
        %v1915 = vrot.slane %v1907, %v1914
        %v1917 = vunpack.c.l.s4 1966171168
        %v1918 = vunpack.c.0.s8 %v1917
        %v1919 = vlaneseq
        %v1920 = vshrl.u32 %v1919, 7
        %v1921 = vsub.s32 %v1918, %v1920
        %v1922 = vrot.slane %v1908, %v1921
        %v1923 = vcombine.low %v1915, %v1922
        %1925 = vst [vmem:[%s372] sm:$0xff] %v1923
      $region52: #{pointnet_densecls.6} parent=47 // pred_fallthru
        _
      %p1926 = scmp.gt.s32.totalorder %s25, 0
      // Predicated region
      $region53: #{pointnet_densecls.6} parent=47 // pred_check
        %p1927 = pneg %p1926
      $region54: #{pointnet_densecls.6} parent=47 // pred_check_branch
        %1929 = sbr.rel (%p1927) target = $region56
      $region55: #{pointnet_densecls.6} parent=47 // pred_region
        %v1930 = vld [vmem:[%s372] sm:$0xff]
        %v1939 = vcombine.low %v1715, %v1736
        %v1940 = vcombine.low %v1757, %v1778
        %v1941 = vcombine.low %v1799, %v1820
        %v1942 = vcombine.low %v1841, %v1862
        %v1944 = vunpack.c.l.s4 1966171168
        %v1945 = vunpack.c.0.s8 %v1944
        %v1946 = vlaneseq
        %v1947 = vshrl.u32 %v1946, 7
        %v1948 = vsub.s32 %v1945, %v1947
        %v1949 = vrot.slane %v1939, %v1948
        %v1951 = vunpack.c.l.s4 1966171168
        %v1952 = vunpack.c.0.s8 %v1951
        %v1953 = vlaneseq
        %v1954 = vshrl.u32 %v1953, 7
        %v1955 = vsub.s32 %v1952, %v1954
        %v1956 = vrot.slane %v1940, %v1955
        %v1958 = vunpack.c.l.s4 1966171168
        %v1959 = vunpack.c.0.s8 %v1958
        %v1960 = vlaneseq
        %v1961 = vshrl.u32 %v1960, 7
        %v1962 = vsub.s32 %v1959, %v1961
        %v1963 = vrot.slane %v1941, %v1962
        %v1965 = vunpack.c.l.s4 1966171168
        %v1966 = vunpack.c.0.s8 %v1965
        %v1967 = vlaneseq
        %v1968 = vshrl.u32 %v1967, 7
        %v1969 = vsub.s32 %v1966, %v1968
        %v1970 = vrot.slane %v1942, %v1969
        %v1971 = vcombine.low %v1949, %v1956
        %v1972 = vcombine.low %v1963, %v1970
        %v1974 = vunpack.c.l.s4 1966171168
        %v1975 = vunpack.c.0.s8 %v1974
        %v1976 = vlaneseq
        %v1977 = vshrl.u32 %v1976, 7
        %v1978 = vsub.s32 %v1975, %v1977
        %v1979 = vrot.slane %v1971, %v1978
        %v1981 = vunpack.c.l.s4 1966171168
        %v1982 = vunpack.c.0.s8 %v1981
        %v1983 = vlaneseq
        %v1984 = vshrl.u32 %v1983, 7
        %v1985 = vsub.s32 %v1982, %v1984
        %v1986 = vrot.slane %v1972, %v1985
        %v1987 = vcombine.low %v1979, %v1986
        %v1989 = vmax.f32 %v1930, %v1987
        %1990 = vst [vmem:[%s372] sm:$0xff] %v1989
      $region56: #{pointnet_densecls.6} parent=47 // pred_fallthru
        _
      %s1991 = smul.u32 16, %s25
      %p1992 = scmp.lt.s32.totalorder %s24, 1
      %s1993 = scalar_select %p1992, %s24, 1
      %p1994 = scmp.lt.s32.totalorder %s1991, 31
      %s1995 = scalar_select %p1994, %s1991, 31
      %s1996 = smul.addr %s1993, 32
      %s1997 = sadd.s32 %s1995, %s1996
      %s1998 = smul.addr %s1997, 4
      %s1999 = scalar_lea.vmem %s7, %s1998
      %p2000 = scmp.lt.s32.totalorder %s24, 1
      %s2001 = scalar_select %p2000, %s24, 1
      %s2002 = smul.addr %s2001, 8
      %s2003 = scalar_lea.vmem %s8, %s2002
      // Predicated region
      $region57: #{pointnet_densecls.6} parent=47 // pred_check
        %p2004 = pneg %p211
      $region58: #{pointnet_densecls.6} parent=47 // pred_check_branch
        %2006 = sbr.rel (%p2004) target = $region60
      $region59: #{pointnet_densecls.6} parent=47 // pred_region
        %s2007 = smul.u32 16, %s25
      $region60: #{pointnet_densecls.6} parent=47 // pred_fallthru
        _
      // Predicated region
      $region61: #{pointnet_densecls.6} parent=47 // pred_check
        %p2008 = pneg %p237
      $region62: #{pointnet_densecls.6} parent=47 // pred_check_branch
        %2010 = sbr.rel (%p2008) target = $region64
      $region63: #{pointnet_densecls.6} parent=47 // pred_region
        _
      $region64: #{pointnet_densecls.6} parent=47 // pred_fallthru
        _
    $region48: #{pointnet_densecls.6} parent=5 // pred_fallthru
      _
    %p2011 = scmp.le.s32.totalorder 2, %s15
    // Predicated region
    $region65: #{pointnet_densecls.6} parent=5 // pred_check
      %p2012 = pneg %p2011
    $region66: #{pointnet_densecls.6} parent=5 // pred_check_branch
      %2014 = sbr.rel (%p2012) target = $region68
    $region67: #{pointnet_densecls.6} parent=5 // pred_region
      %s2015 = ssub.s32 %s15, 2
      // Predicated region
      $region69: #{pointnet_densecls.6} parent=67 // pred_check
        %p2016 = pneg %p217
      $region70: #{pointnet_densecls.6} parent=67 // pred_check_branch
        %2018 = sbr.rel (%p2016) target = $region72
      $region71: #{pointnet_densecls.6} parent=67 // pred_region
        %s2019 = smul.u32 16, %s27
        %p2020 = scmp.lt.s32.totalorder %s26, 1
        %s2021 = scalar_select %p2020, %s26, 1
        %p2022 = scmp.lt.s32.totalorder %s2019, 31
        %s2023 = scalar_select %p2022, %s2019, 31
        %s2024 = smul.addr %s2021, 32
        %s2025 = sadd.s32 %s2023, %s2024
        %s2026 = smul.addr %s2025, 4
        %s2027 = scalar_lea.vmem %s7, %s2026
      $region72: #{pointnet_densecls.6} parent=67 // pred_fallthru
        _
      // Predicated region
      $region73: #{pointnet_densecls.6} parent=67 // pred_check
        %p2028 = pneg %p243
      $region74: #{pointnet_densecls.6} parent=67 // pred_check_branch
        %2030 = sbr.rel (%p2028) target = $region76
      $region75: #{pointnet_densecls.6} parent=67 // pred_region
        %p2031 = scmp.lt.s32.totalorder %s26, 1
        %s2032 = scalar_select %p2031, %s26, 1
        %s2033 = smul.addr %s2032, 8
        %s2034 = scalar_lea.vmem %s8, %s2033
      $region76: #{pointnet_densecls.6} parent=67 // pred_fallthru
        _
    $region68: #{pointnet_densecls.6} parent=5 // pred_fallthru
      _
  $region6: #{pointnet_densecls.6} parent=0 // loop_footer
    %s19 = sadd.s32 1, %s15
  $region7: #{pointnet_densecls.6} parent=0 // loop_footer_branch
    %14 = sbr.rel target = $region3
  $region8: #{pointnet_densecls.6} parent=0 // loop_exit
    _

// kernel: pointnet_densecls.5
$region0: #{pointnet_densecls.5}
  #allocation0 [shape = 'u32[]', space=smem, size = 0x4, offset = 0x4, fixed_abs, tag = 'smem constant byte address 0x4 - core index']
  #allocation1 [shape = 'u32[144,128]{1,0:T(1,128)}', space=vmem, size = 0x12000, scoped, tag = 'internal scratch']
  %s0 = inlined_call_operand.vmem [shape: f32[2,1024], index: 0, kind: input, shape index: {}]
  %s1 = inlined_call_operand.hbm [shape: bf16[1024,512], index: 1, kind: input, shape index: {}]
  %s2 = inlined_call_operand.hbm [shape: f32[1,512], index: 2, kind: input, shape index: {}]
  %s3 = inlined_call_operand.hbm [shape: bf16[512,256], index: 3, kind: input, shape index: {}]
  %s4 = inlined_call_operand.hbm [shape: f32[1,256], index: 4, kind: input, shape index: {}]
  %s5 = inlined_call_operand.vmem [shape: bf16[256,9], index: 5, kind: input, shape index: {}]
  %s6 = inlined_call_operand.hbm [shape: f32[1,9], index: 6, kind: input, shape index: {}]
  %s7 = inlined_call_operand.vmem [shape: f32[2,9], index: 7, kind: output, shape index: {}]
  %s8 = sld [smem:[#allocation0]]
  $region58: #{pointnet_densecls.5} parent=0
    _
  %s10 = ssub.s32 1, %s8
  %s11 = scalar_select 0, %s10, %s8
  $region1: #{pointnet_densecls.5} parent=0
    #allocation2 [shape = 'u8[1048576]{0}', space=vmem, size = 0x100000, scoped, tag = 'input window, operand 1, single buffered']
    #allocation3 [shape = 's32[1]{0}', space=sflag, size = 0x4, scoped, tag = 'scoped memory for pointnet_densecls.5']
    #allocation4 [shape = 'u8[2048]{0}', space=vmem, size = 0x800, scoped, tag = 'input window, operand 2, single buffered']
    #allocation5 [shape = 's32[1]{0}', space=sflag, size = 0x4, scoped, tag = 'scoped memory for pointnet_densecls.5']
    #allocation6 [shape = 'u8[262144]{0}', space=vmem, size = 0x40000, scoped, tag = 'input window, operand 3, single buffered']
    #allocation7 [shape = 'u8[1024]{0}', space=vmem, size = 0x400, scoped, tag = 'input window, operand 4, single buffered']
    #allocation8 [shape = 's32[1]{0}', space=sflag, size = 0x4, scoped, tag = 'scoped memory for pointnet_densecls.5']
    #allocation9 [shape = 'u8[512]{0}', space=vmem, size = 0x400, scoped, tag = 'input window, operand 6, single buffered']
    %12 = vsyncpa [#allocation3], 0
    %13 = vsyncpa [#allocation5], 0
    %14 = vsyncpa [#allocation8], 0
    // Predicated region
    $region2: #{pointnet_densecls.5} parent=1 // pred_check
      _
    $region3: #{pointnet_densecls.5} parent=1 // pred_check_branch
      %16 = sbr.rel (0) target = $region5
    $region4: #{pointnet_densecls.5} parent=1 // pred_region
      _
    $region5: #{pointnet_densecls.5} parent=1 // pred_fallthru
      _
    // Predicated region
    $region6: #{pointnet_densecls.5} parent=1 // pred_check
      _
    $region7: #{pointnet_densecls.5} parent=1 // pred_check_branch
      %18 = sbr.rel (0) target = $region9
    $region8: #{pointnet_densecls.5} parent=1 // pred_region
      %s20 = ssub.s32 32768, 32768
      %21 = vsyncadd [#allocation3], %s20
      %s22 = sshll.u32 [#allocation2], 4
      %s23 = int_to_ptr.vmem [resolvable:$true] %s22
      %28 = dma.hbm_to_vmem [thread:$0]  %s1, 32768, %s23, [#allocation3], 256, 256, 16
    $region9: #{pointnet_densecls.5} parent=1 // pred_fallthru
      _
    // Predicated region
    $region10: #{pointnet_densecls.5} parent=1 // pred_check
      _
    $region11: #{pointnet_densecls.5} parent=1 // pred_check_branch
      %30 = sbr.rel (0) target = $region13
    $region12: #{pointnet_densecls.5} parent=1 // pred_region
      %s32 = ssub.s32 64, 64
      %33 = vsyncadd [#allocation5], %s32
      %s35 = sshll.u32 [#allocation4], 4
      %s36 = int_to_ptr.vmem [resolvable:$true] %s35
      %38 = dma.hbm_to_vmem [thread:$0]  %s2, 64, %s36, [#allocation5]
    $region13: #{pointnet_densecls.5} parent=1 // pred_fallthru
      _
    // Predicated region
    $region14: #{pointnet_densecls.5} parent=1 // pred_check
      _
    $region15: #{pointnet_densecls.5} parent=1 // pred_check_branch
      %40 = sbr.rel (0) target = $region17
    $region16: #{pointnet_densecls.5} parent=1 // pred_region
      %s42 = ssub.s32 8192, 8192
      %43 = vsyncadd [#allocation5], %s42
      %s44 = sshll.u32 [#allocation6], 4
      %s45 = int_to_ptr.vmem [resolvable:$true] %s44
      %50 = dma.hbm_to_vmem [thread:$0]  %s3, 8192, %s45, [#allocation5], 128, 128, 8
    $region17: #{pointnet_densecls.5} parent=1 // pred_fallthru
      _
    // Predicated region
    $region18: #{pointnet_densecls.5} parent=1 // pred_check
      _
    $region19: #{pointnet_densecls.5} parent=1 // pred_check_branch
      %52 = sbr.rel (0) target = $region21
    $region20: #{pointnet_densecls.5} parent=1 // pred_region
      %s54 = ssub.s32 32, 32
      %55 = vsyncadd [#allocation8], %s54
      %s57 = sshll.u32 [#allocation7], 4
      %s58 = int_to_ptr.vmem [resolvable:$true] %s57
      %60 = dma.hbm_to_vmem [thread:$0]  %s4, 32, %s58, [#allocation8]
    $region21: #{pointnet_densecls.5} parent=1 // pred_fallthru
      _
    // Predicated region
    $region22: #{pointnet_densecls.5} parent=1 // pred_check
      _
    $region23: #{pointnet_densecls.5} parent=1 // pred_check_branch
      %62 = sbr.rel (0) target = $region25
    $region24: #{pointnet_densecls.5} parent=1 // pred_region
      _
    $region25: #{pointnet_densecls.5} parent=1 // pred_fallthru
      _
    // Predicated region
    $region26: #{pointnet_densecls.5} parent=1 // pred_check
      _
    $region27: #{pointnet_densecls.5} parent=1 // pred_check_branch
      %64 = sbr.rel (0) target = $region29
    $region28: #{pointnet_densecls.5} parent=1 // pred_region
      %s66 = ssub.s32 16, 16
      %67 = vsyncadd [#allocation8], %s66
      %s69 = sshll.u32 [#allocation9], 4
      %s70 = int_to_ptr.vmem [resolvable:$true] %s69
      %72 = dma.hbm_to_vmem [thread:$0]  %s6, 16, %s70, [#allocation8]
    $region29: #{pointnet_densecls.5} parent=1 // pred_fallthru
      _
    // Predicated region
    $region30: #{pointnet_densecls.5} parent=1 // pred_check
      _
    $region31: #{pointnet_densecls.5} parent=1 // pred_check_branch
      %74 = sbr.rel (0) target = $region33
    $region32: #{pointnet_densecls.5} parent=1 // pred_region
      %75 = dma.done [#allocation3], 32768
    $region33: #{pointnet_densecls.5} parent=1 // pred_fallthru
      _
    // Predicated region
    $region34: #{pointnet_densecls.5} parent=1 // pred_check
      _
    $region35: #{pointnet_densecls.5} parent=1 // pred_check_branch
      %77 = sbr.rel (0) target = $region37
    $region36: #{pointnet_densecls.5} parent=1 // pred_region
      %78 = dma.done [#allocation5], 64
    $region37: #{pointnet_densecls.5} parent=1 // pred_fallthru
      _
    // Predicated region
    $region38: #{pointnet_densecls.5} parent=1 // pred_check
      _
    $region39: #{pointnet_densecls.5} parent=1 // pred_check_branch
      %80 = sbr.rel (0) target = $region41
    $region40: #{pointnet_densecls.5} parent=1 // pred_region
      %81 = dma.done [#allocation5], 8192
    $region41: #{pointnet_densecls.5} parent=1 // pred_fallthru
      _
    // Predicated region
    $region42: #{pointnet_densecls.5} parent=1 // pred_check
      _
    $region43: #{pointnet_densecls.5} parent=1 // pred_check_branch
      %83 = sbr.rel (0) target = $region45
    $region44: #{pointnet_densecls.5} parent=1 // pred_region
      %84 = dma.done [#allocation8], 32
    $region45: #{pointnet_densecls.5} parent=1 // pred_fallthru
      _
    // Predicated region
    $region46: #{pointnet_densecls.5} parent=1 // pred_check
      _
    $region47: #{pointnet_densecls.5} parent=1 // pred_check_branch
      %86 = sbr.rel (0) target = $region49
    $region48: #{pointnet_densecls.5} parent=1 // pred_region
      %87 = dma.done [#allocation8], 16
    $region49: #{pointnet_densecls.5} parent=1 // pred_fallthru
      _
    %v89 = vld [vmem:[%s0] sm:$0xff]
    %v90 = vld [vmem:[%s0 + $0x8] sm:$0xff]
    %v93 = vcombine.high %v89, %v89
    %v95 = vunpack.c.l.s4 1983009808
    %v96 = vunpack.c.0.s8 %v95
    %v97 = vlaneseq
    %v98 = vshrl.u32 %v97, 7
    %v99 = vsub.s32 %v96, %v98
    %v100 = vrot.slane %v89, %v99
    %v102 = vunpack.c.l.s4 1983009808
    %v103 = vunpack.c.0.s8 %v102
    %v104 = vlaneseq
    %v105 = vshrl.u32 %v104, 7
    %v106 = vsub.s32 %v103, %v105
    %v107 = vrot.slane %v93, %v106
    %v108 = vcombine.high %v100, %v100
    %v109 = vcombine.high %v107, %v107
    %v110 = vcombine.high %v90, %v90
    %v112 = vunpack.c.l.s4 1983009808
    %v113 = vunpack.c.0.s8 %v112
    %v114 = vlaneseq
    %v115 = vshrl.u32 %v114, 7
    %v116 = vsub.s32 %v113, %v115
    %v117 = vrot.slane %v90, %v116
    %v119 = vunpack.c.l.s4 1983009808
    %v120 = vunpack.c.0.s8 %v119
    %v121 = vlaneseq
    %v122 = vshrl.u32 %v121, 7
    %v123 = vsub.s32 %v120, %v122
    %v124 = vrot.slane %v110, %v123
    %v125 = vcombine.high %v117, %v117
    %v126 = vcombine.high %v124, %v124
    %v135 = vpack.c.bf16 %v100, %v100
    %v136 = vpack.c.bf16 %v108, %v108
    %v137 = vpack.c.bf16 %v107, %v107
    %v138 = vpack.c.bf16 %v109, %v109
    %v139 = vpack.c.bf16 %v117, %v117
    %v140 = vpack.c.bf16 %v125, %v125
    %v141 = vpack.c.bf16 %v124, %v124
    %v142 = vpack.c.bf16 %v126, %v126
    %v143 = vld [vmem:[#allocation2] sm:$0xff]
    %v144 = vld [vmem:[#allocation2 + $0x8] sm:$0xff]
    %v145 = vld [vmem:[#allocation2 + $0x10] sm:$0xff]
    %v146 = vld [vmem:[#allocation2 + $0x18] sm:$0xff]
    %v147 = vld [vmem:[#allocation2 + $0x20] sm:$0xff]
    %v148 = vld [vmem:[#allocation2 + $0x28] sm:$0xff]
    %v149 = vld [vmem:[#allocation2 + $0x30] sm:$0xff]
    %v150 = vld [vmem:[#allocation2 + $0x38] sm:$0xff]
    %v151 = vld [vmem:[#allocation2 + $0x40] sm:$0xff]
    %v152 = vld [vmem:[#allocation2 + $0x48] sm:$0xff]
    %v153 = vld [vmem:[#allocation2 + $0x50] sm:$0xff]
    %v154 = vld [vmem:[#allocation2 + $0x58] sm:$0xff]
    %v155 = vld [vmem:[#allocation2 + $0x60] sm:$0xff]
    %v156 = vld [vmem:[#allocation2 + $0x68] sm:$0xff]
    %v157 = vld [vmem:[#allocation2 + $0x70] sm:$0xff]
    %v158 = vld [vmem:[#allocation2 + $0x78] sm:$0xff]
    %v159 = vld [vmem:[#allocation2 + $0x80] sm:$0xff]
    %v160 = vld [vmem:[#allocation2 + $0x88] sm:$0xff]
    %v161 = vld [vmem:[#allocation2 + $0x90] sm:$0xff]
    %v162 = vld [vmem:[#allocation2 + $0x98] sm:$0xff]
    %v163 = vld [vmem:[#allocation2 + $0xa0] sm:$0xff]
    %v164 = vld [vmem:[#allocation2 + $0xa8] sm:$0xff]
    %v165 = vld [vmem:[#allocation2 + $0xb0] sm:$0xff]
    %v166 = vld [vmem:[#allocation2 + $0xb8] sm:$0xff]
    %v167 = vld [vmem:[#allocation2 + $0xc0] sm:$0xff]
    %v168 = vld [vmem:[#allocation2 + $0xc8] sm:$0xff]
    %v169 = vld [vmem:[#allocation2 + $0xd0] sm:$0xff]
    %v170 = vld [vmem:[#allocation2 + $0xd8] sm:$0xff]
    %v171 = vld [vmem:[#allocation2 + $0xe0] sm:$0xff]
    %v172 = vld [vmem:[#allocation2 + $0xe8] sm:$0xff]
    %v173 = vld [vmem:[#allocation2 + $0xf0] sm:$0xff]
    %v174 = vld [vmem:[#allocation2 + $0xf8] sm:$0xff]
    %v175 = vld [vmem:[#allocation2 + $0x100] sm:$0xff]
    %v176 = vld [vmem:[#allocation2 + $0x108] sm:$0xff]
    %v177 = vld [vmem:[#allocation2 + $0x110] sm:$0xff]
    %v178 = vld [vmem:[#allocation2 + $0x118] sm:$0xff]
    %v179 = vld [vmem:[#allocation2 + $0x120] sm:$0xff]
    %v180 = vld [vmem:[#allocation2 + $0x128] sm:$0xff]
    %v181 = vld [vmem:[#allocation2 + $0x130] sm:$0xff]
    %v182 = vld [vmem:[#allocation2 + $0x138] sm:$0xff]
    %v183 = vld [vmem:[#allocation2 + $0x140] sm:$0xff]
    %v184 = vld [vmem:[#allocation2 + $0x148] sm:$0xff]
    %v185 = vld [vmem:[#allocation2 + $0x150] sm:$0xff]
    %v186 = vld [vmem:[#allocation2 + $0x158] sm:$0xff]
    %v187 = vld [vmem:[#allocation2 + $0x160] sm:$0xff]
    %v188 = vld [vmem:[#allocation2 + $0x168] sm:$0xff]
    %v189 = vld [vmem:[#allocation2 + $0x170] sm:$0xff]
    %v190 = vld [vmem:[#allocation2 + $0x178] sm:$0xff]
    %v191 = vld [vmem:[#allocation2 + $0x180] sm:$0xff]
    %v192 = vld [vmem:[#allocation2 + $0x188] sm:$0xff]
    %v193 = vld [vmem:[#allocation2 + $0x190] sm:$0xff]
    %v194 = vld [vmem:[#allocation2 + $0x198] sm:$0xff]
    %v195 = vld [vmem:[#allocation2 + $0x1a0] sm:$0xff]
    %v196 = vld [vmem:[#allocation2 + $0x1a8] sm:$0xff]
    %v197 = vld [vmem:[#allocation2 + $0x1b0] sm:$0xff]
    %v198 = vld [vmem:[#allocation2 + $0x1b8] sm:$0xff]
    %v199 = vld [vmem:[#allocation2 + $0x1c0] sm:$0xff]
    %v200 = vld [vmem:[#allocation2 + $0x1c8] sm:$0xff]
    %v201 = vld [vmem:[#allocation2 + $0x1d0] sm:$0xff]
    %v202 = vld [vmem:[#allocation2 + $0x1d8] sm:$0xff]
    %v203 = vld [vmem:[#allocation2 + $0x1e0] sm:$0xff]
    %v204 = vld [vmem:[#allocation2 + $0x1e8] sm:$0xff]
    %v205 = vld [vmem:[#allocation2 + $0x1f0] sm:$0xff]
    %v206 = vld [vmem:[#allocation2 + $0x1f8] sm:$0xff]
    %v207 = vld [vmem:[#allocation2 + $0x200] sm:$0xff]
    %v208 = vld [vmem:[#allocation2 + $0x208] sm:$0xff]
    %v209 = vld [vmem:[#allocation2 + $0x210] sm:$0xff]
    %v210 = vld [vmem:[#allocation2 + $0x218] sm:$0xff]
    %v211 = vld [vmem:[#allocation2 + $0x220] sm:$0xff]
    %v212 = vld [vmem:[#allocation2 + $0x228] sm:$0xff]
    %v213 = vld [vmem:[#allocation2 + $0x230] sm:$0xff]
    %v214 = vld [vmem:[#allocation2 + $0x238] sm:$0xff]
    %v215 = vld [vmem:[#allocation2 + $0x240] sm:$0xff]
    %v216 = vld [vmem:[#allocation2 + $0x248] sm:$0xff]
    %v217 = vld [vmem:[#allocation2 + $0x250] sm:$0xff]
    %v218 = vld [vmem:[#allocation2 + $0x258] sm:$0xff]
    %v219 = vld [vmem:[#allocation2 + $0x260] sm:$0xff]
    %v220 = vld [vmem:[#allocation2 + $0x268] sm:$0xff]
    %v221 = vld [vmem:[#allocation2 + $0x270] sm:$0xff]
    %v222 = vld [vmem:[#allocation2 + $0x278] sm:$0xff]
    %v223 = vld [vmem:[#allocation2 + $0x280] sm:$0xff]
    %v224 = vld [vmem:[#allocation2 + $0x288] sm:$0xff]
    %v225 = vld [vmem:[#allocation2 + $0x290] sm:$0xff]
    %v226 = vld [vmem:[#allocation2 + $0x298] sm:$0xff]
    %v227 = vld [vmem:[#allocation2 + $0x2a0] sm:$0xff]
    %v228 = vld [vmem:[#allocation2 + $0x2a8] sm:$0xff]
    %v229 = vld [vmem:[#allocation2 + $0x2b0] sm:$0xff]
    %v230 = vld [vmem:[#allocation2 + $0x2b8] sm:$0xff]
    %v231 = vld [vmem:[#allocation2 + $0x2c0] sm:$0xff]
    %v232 = vld [vmem:[#allocation2 + $0x2c8] sm:$0xff]
    %v233 = vld [vmem:[#allocation2 + $0x2d0] sm:$0xff]
    %v234 = vld [vmem:[#allocation2 + $0x2d8] sm:$0xff]
    %v235 = vld [vmem:[#allocation2 + $0x2e0] sm:$0xff]
    %v236 = vld [vmem:[#allocation2 + $0x2e8] sm:$0xff]
    %v237 = vld [vmem:[#allocation2 + $0x2f0] sm:$0xff]
    %v238 = vld [vmem:[#allocation2 + $0x2f8] sm:$0xff]
    %v239 = vld [vmem:[#allocation2 + $0x300] sm:$0xff]
    %v240 = vld [vmem:[#allocation2 + $0x308] sm:$0xff]
    %v241 = vld [vmem:[#allocation2 + $0x310] sm:$0xff]
    %v242 = vld [vmem:[#allocation2 + $0x318] sm:$0xff]
    %v243 = vld [vmem:[#allocation2 + $0x320] sm:$0xff]
    %v244 = vld [vmem:[#allocation2 + $0x328] sm:$0xff]
    %v245 = vld [vmem:[#allocation2 + $0x330] sm:$0xff]
    %v246 = vld [vmem:[#allocation2 + $0x338] sm:$0xff]
    %v247 = vld [vmem:[#allocation2 + $0x340] sm:$0xff]
    %v248 = vld [vmem:[#allocation2 + $0x348] sm:$0xff]
    %v249 = vld [vmem:[#allocation2 + $0x350] sm:$0xff]
    %v250 = vld [vmem:[#allocation2 + $0x358] sm:$0xff]
    %v251 = vld [vmem:[#allocation2 + $0x360] sm:$0xff]
    %v252 = vld [vmem:[#allocation2 + $0x368] sm:$0xff]
    %v253 = vld [vmem:[#allocation2 + $0x370] sm:$0xff]
    %v254 = vld [vmem:[#allocation2 + $0x378] sm:$0xff]
    %v255 = vld [vmem:[#allocation2 + $0x380] sm:$0xff]
    %v256 = vld [vmem:[#allocation2 + $0x388] sm:$0xff]
    %v257 = vld [vmem:[#allocation2 + $0x390] sm:$0xff]
    %v258 = vld [vmem:[#allocation2 + $0x398] sm:$0xff]
    %v259 = vld [vmem:[#allocation2 + $0x3a0] sm:$0xff]
    %v260 = vld [vmem:[#allocation2 + $0x3a8] sm:$0xff]
    %v261 = vld [vmem:[#allocation2 + $0x3b0] sm:$0xff]
    %v262 = vld [vmem:[#allocation2 + $0x3b8] sm:$0xff]
    %v263 = vld [vmem:[#allocation2 + $0x3c0] sm:$0xff]
    %v264 = vld [vmem:[#allocation2 + $0x3c8] sm:$0xff]
    %v265 = vld [vmem:[#allocation2 + $0x3d0] sm:$0xff]
    %v266 = vld [vmem:[#allocation2 + $0x3d8] sm:$0xff]
    %v267 = vld [vmem:[#allocation2 + $0x3e0] sm:$0xff]
    %v268 = vld [vmem:[#allocation2 + $0x3e8] sm:$0xff]
    %v269 = vld [vmem:[#allocation2 + $0x3f0] sm:$0xff]
    %v270 = vld [vmem:[#allocation2 + $0x3f8] sm:$0xff]
    %v271 = vld [vmem:[#allocation2 + $0x400] sm:$0xff]
    %v272 = vld [vmem:[#allocation2 + $0x408] sm:$0xff]
    %v273 = vld [vmem:[#allocation2 + $0x410] sm:$0xff]
    %v274 = vld [vmem:[#allocation2 + $0x418] sm:$0xff]
    %v275 = vld [vmem:[#allocation2 + $0x420] sm:$0xff]
    %v276 = vld [vmem:[#allocation2 + $0x428] sm:$0xff]
    %v277 = vld [vmem:[#allocation2 + $0x430] sm:$0xff]
    %v278 = vld [vmem:[#allocation2 + $0x438] sm:$0xff]
    %v279 = vld [vmem:[#allocation2 + $0x440] sm:$0xff]
    %v280 = vld [vmem:[#allocation2 + $0x448] sm:$0xff]
    %v281 = vld [vmem:[#allocation2 + $0x450] sm:$0xff]
    %v282 = vld [vmem:[#allocation2 + $0x458] sm:$0xff]
    %v283 = vld [vmem:[#allocation2 + $0x460] sm:$0xff]
    %v284 = vld [vmem:[#allocation2 + $0x468] sm:$0xff]
    %v285 = vld [vmem:[#allocation2 + $0x470] sm:$0xff]
    %v286 = vld [vmem:[#allocation2 + $0x478] sm:$0xff]
    %v287 = vld [vmem:[#allocation2 + $0x480] sm:$0xff]
    %v288 = vld [vmem:[#allocation2 + $0x488] sm:$0xff]
    %v289 = vld [vmem:[#allocation2 + $0x490] sm:$0xff]
    %v290 = vld [vmem:[#allocation2 + $0x498] sm:$0xff]
    %v291 = vld [vmem:[#allocation2 + $0x4a0] sm:$0xff]
    %v292 = vld [vmem:[#allocation2 + $0x4a8] sm:$0xff]
    %v293 = vld [vmem:[#allocation2 + $0x4b0] sm:$0xff]
    %v294 = vld [vmem:[#allocation2 + $0x4b8] sm:$0xff]
    %v295 = vld [vmem:[#allocation2 + $0x4c0] sm:$0xff]
    %v296 = vld [vmem:[#allocation2 + $0x4c8] sm:$0xff]
    %v297 = vld [vmem:[#allocation2 + $0x4d0] sm:$0xff]
    %v298 = vld [vmem:[#allocation2 + $0x4d8] sm:$0xff]
    %v299 = vld [vmem:[#allocation2 + $0x4e0] sm:$0xff]
    %v300 = vld [vmem:[#allocation2 + $0x4e8] sm:$0xff]
    %v301 = vld [vmem:[#allocation2 + $0x4f0] sm:$0xff]
    %v302 = vld [vmem:[#allocation2 + $0x4f8] sm:$0xff]
    %v303 = vld [vmem:[#allocation2 + $0x500] sm:$0xff]
    %v304 = vld [vmem:[#allocation2 + $0x508] sm:$0xff]
    %v305 = vld [vmem:[#allocation2 + $0x510] sm:$0xff]
    %v306 = vld [vmem:[#allocation2 + $0x518] sm:$0xff]
    %v307 = vld [vmem:[#allocation2 + $0x520] sm:$0xff]
    %v308 = vld [vmem:[#allocation2 + $0x528] sm:$0xff]
    %v309 = vld [vmem:[#allocation2 + $0x530] sm:$0xff]
    %v310 = vld [vmem:[#allocation2 + $0x538] sm:$0xff]
    %v311 = vld [vmem:[#allocation2 + $0x540] sm:$0xff]
    %v312 = vld [vmem:[#allocation2 + $0x548] sm:$0xff]
    %v313 = vld [vmem:[#allocation2 + $0x550] sm:$0xff]
    %v314 = vld [vmem:[#allocation2 + $0x558] sm:$0xff]
    %v315 = vld [vmem:[#allocation2 + $0x560] sm:$0xff]
    %v316 = vld [vmem:[#allocation2 + $0x568] sm:$0xff]
    %v317 = vld [vmem:[#allocation2 + $0x570] sm:$0xff]
    %v318 = vld [vmem:[#allocation2 + $0x578] sm:$0xff]
    %v319 = vld [vmem:[#allocation2 + $0x580] sm:$0xff]
    %v320 = vld [vmem:[#allocation2 + $0x588] sm:$0xff]
    %v321 = vld [vmem:[#allocation2 + $0x590] sm:$0xff]
    %v322 = vld [vmem:[#allocation2 + $0x598] sm:$0xff]
    %v323 = vld [vmem:[#allocation2 + $0x5a0] sm:$0xff]
    %v324 = vld [vmem:[#allocation2 + $0x5a8] sm:$0xff]
    %v325 = vld [vmem:[#allocation2 + $0x5b0] sm:$0xff]
    %v326 = vld [vmem:[#allocation2 + $0x5b8] sm:$0xff]
    %v327 = vld [vmem:[#allocation2 + $0x5c0] sm:$0xff]
    %v328 = vld [vmem:[#allocation2 + $0x5c8] sm:$0xff]
    %v329 = vld [vmem:[#allocation2 + $0x5d0] sm:$0xff]
    %v330 = vld [vmem:[#allocation2 + $0x5d8] sm:$0xff]
    %v331 = vld [vmem:[#allocation2 + $0x5e0] sm:$0xff]
    %v332 = vld [vmem:[#allocation2 + $0x5e8] sm:$0xff]
    %v333 = vld [vmem:[#allocation2 + $0x5f0] sm:$0xff]
    %v334 = vld [vmem:[#allocation2 + $0x5f8] sm:$0xff]
    %v335 = vld [vmem:[#allocation2 + $0x600] sm:$0xff]
    %v336 = vld [vmem:[#allocation2 + $0x608] sm:$0xff]
    %v337 = vld [vmem:[#allocation2 + $0x610] sm:$0xff]
    %v338 = vld [vmem:[#allocation2 + $0x618] sm:$0xff]
    %v339 = vld [vmem:[#allocation2 + $0x620] sm:$0xff]
    %v340 = vld [vmem:[#allocation2 + $0x628] sm:$0xff]
    %v341 = vld [vmem:[#allocation2 + $0x630] sm:$0xff]
    %v342 = vld [vmem:[#allocation2 + $0x638] sm:$0xff]
    %v343 = vld [vmem:[#allocation2 + $0x640] sm:$0xff]
    %v344 = vld [vmem:[#allocation2 + $0x648] sm:$0xff]
    %v345 = vld [vmem:[#allocation2 + $0x650] sm:$0xff]
    %v346 = vld [vmem:[#allocation2 + $0x658] sm:$0xff]
    %v347 = vld [vmem:[#allocation2 + $0x660] sm:$0xff]
    %v348 = vld [vmem:[#allocation2 + $0x668] sm:$0xff]
    %v349 = vld [vmem:[#allocation2 + $0x670] sm:$0xff]
    %v350 = vld [vmem:[#allocation2 + $0x678] sm:$0xff]
    %v351 = vld [vmem:[#allocation2 + $0x680] sm:$0xff]
    %v352 = vld [vmem:[#allocation2 + $0x688] sm:$0xff]
    %v353 = vld [vmem:[#allocation2 + $0x690] sm:$0xff]
    %v354 = vld [vmem:[#allocation2 + $0x698] sm:$0xff]
    %v355 = vld [vmem:[#allocation2 + $0x6a0] sm:$0xff]
    %v356 = vld [vmem:[#allocation2 + $0x6a8] sm:$0xff]
    %v357 = vld [vmem:[#allocation2 + $0x6b0] sm:$0xff]
    %v358 = vld [vmem:[#allocation2 + $0x6b8] sm:$0xff]
    %v359 = vld [vmem:[#allocation2 + $0x6c0] sm:$0xff]
    %v360 = vld [vmem:[#allocation2 + $0x6c8] sm:$0xff]
    %v361 = vld [vmem:[#allocation2 + $0x6d0] sm:$0xff]
    %v362 = vld [vmem:[#allocation2 + $0x6d8] sm:$0xff]
    %v363 = vld [vmem:[#allocation2 + $0x6e0] sm:$0xff]
    %v364 = vld [vmem:[#allocation2 + $0x6e8] sm:$0xff]
    %v365 = vld [vmem:[#allocation2 + $0x6f0] sm:$0xff]
    %v366 = vld [vmem:[#allocation2 + $0x6f8] sm:$0xff]
    %v367 = vld [vmem:[#allocation2 + $0x700] sm:$0xff]
    %v368 = vld [vmem:[#allocation2 + $0x708] sm:$0xff]
    %v369 = vld [vmem:[#allocation2 + $0x710] sm:$0xff]
    %v370 = vld [vmem:[#allocation2 + $0x718] sm:$0xff]
    %v371 = vld [vmem:[#allocation2 + $0x720] sm:$0xff]
    %v372 = vld [vmem:[#allocation2 + $0x728] sm:$0xff]
    %v373 = vld [vmem:[#allocation2 + $0x730] sm:$0xff]
    %v374 = vld [vmem:[#allocation2 + $0x738] sm:$0xff]
    %v375 = vld [vmem:[#allocation2 + $0x740] sm:$0xff]
    %v376 = vld [vmem:[#allocation2 + $0x748] sm:$0xff]
    %v377 = vld [vmem:[#allocation2 + $0x750] sm:$0xff]
    %v378 = vld [vmem:[#allocation2 + $0x758] sm:$0xff]
    %v379 = vld [vmem:[#allocation2 + $0x760] sm:$0xff]
    %v380 = vld [vmem:[#allocation2 + $0x768] sm:$0xff]
    %v381 = vld [vmem:[#allocation2 + $0x770] sm:$0xff]
    %v382 = vld [vmem:[#allocation2 + $0x778] sm:$0xff]
    %v383 = vld [vmem:[#allocation2 + $0x780] sm:$0xff]
    %v384 = vld [vmem:[#allocation2 + $0x788] sm:$0xff]
    %v385 = vld [vmem:[#allocation2 + $0x790] sm:$0xff]
    %v386 = vld [vmem:[#allocation2 + $0x798] sm:$0xff]
    %v387 = vld [vmem:[#allocation2 + $0x7a0] sm:$0xff]
    %v388 = vld [vmem:[#allocation2 + $0x7a8] sm:$0xff]
    %v389 = vld [vmem:[#allocation2 + $0x7b0] sm:$0xff]
    %v390 = vld [vmem:[#allocation2 + $0x7b8] sm:$0xff]
    %v391 = vld [vmem:[#allocation2 + $0x7c0] sm:$0xff]
    %v392 = vld [vmem:[#allocation2 + $0x7c8] sm:$0xff]
    %v393 = vld [vmem:[#allocation2 + $0x7d0] sm:$0xff]
    %v394 = vld [vmem:[#allocation2 + $0x7d8] sm:$0xff]
    %v395 = vld [vmem:[#allocation2 + $0x7e0] sm:$0xff]
    %v396 = vld [vmem:[#allocation2 + $0x7e8] sm:$0xff]
    %v397 = vld [vmem:[#allocation2 + $0x7f0] sm:$0xff]
    %v398 = vld [vmem:[#allocation2 + $0x7f8] sm:$0xff]
    %v399 = vld [vmem:[#allocation4] sm:$0xf]
    %v401 = vlaneseq
    %v402 = vshrl.u32 %v401, 7
    %v403 = vsub.s32 0, %v402
    %v404 = vrot.slane %v399, %v403
    %v405 = vlaneseq
    %v406 = vshrl.u32 %v405, 7
    %v407 = vsub.s32 1, %v406
    %v408 = vrot.slane %v399, %v407
    %v409 = vlaneseq
    %v410 = vshrl.u32 %v409, 7
    %v411 = vsub.s32 2, %v410
    %v412 = vrot.slane %v399, %v411
    %v413 = vlaneseq
    %v414 = vshrl.u32 %v413, 7
    %v415 = vsub.s32 3, %v414
    %v416 = vrot.slane %v399, %v415
    %v677 = vunpack.c.l.b16 %v143
    %v678 = vunpack.c.h.b16 %v143
    %v679 = vunpack.c.l.b16 %v144
    %v680 = vunpack.c.h.b16 %v144
    %v681 = vunpack.c.l.b16 %v145
    %v682 = vunpack.c.h.b16 %v145
    %v683 = vunpack.c.l.b16 %v146
    %v684 = vunpack.c.h.b16 %v146
    %v685 = vunpack.c.l.b16 %v147
    %v686 = vunpack.c.h.b16 %v147
    %v687 = vunpack.c.l.b16 %v148
    %v688 = vunpack.c.h.b16 %v148
    %v689 = vunpack.c.l.b16 %v149
    %v690 = vunpack.c.h.b16 %v149
    %v691 = vunpack.c.l.b16 %v150
    %v692 = vunpack.c.h.b16 %v150
    %v693 = vunpack.c.l.b16 %v151
    %v694 = vunpack.c.h.b16 %v151
    %v695 = vunpack.c.l.b16 %v152
    %v696 = vunpack.c.h.b16 %v152
    %v697 = vunpack.c.l.b16 %v153
    %v698 = vunpack.c.h.b16 %v153
    %v699 = vunpack.c.l.b16 %v154
    %v700 = vunpack.c.h.b16 %v154
    %v701 = vunpack.c.l.b16 %v155
    %v702 = vunpack.c.h.b16 %v155
    %v703 = vunpack.c.l.b16 %v156
    %v704 = vunpack.c.h.b16 %v156
    %v705 = vunpack.c.l.b16 %v157
    %v706 = vunpack.c.h.b16 %v157
    %v707 = vunpack.c.l.b16 %v158
    %v708 = vunpack.c.h.b16 %v158
    %v709 = vunpack.c.l.b16 %v159
    %v710 = vunpack.c.h.b16 %v159
    %v711 = vunpack.c.l.b16 %v160
    %v712 = vunpack.c.h.b16 %v160
    %v713 = vunpack.c.l.b16 %v161
    %v714 = vunpack.c.h.b16 %v161
    %v715 = vunpack.c.l.b16 %v162
    %v716 = vunpack.c.h.b16 %v162
    %v717 = vunpack.c.l.b16 %v163
    %v718 = vunpack.c.h.b16 %v163
    %v719 = vunpack.c.l.b16 %v164
    %v720 = vunpack.c.h.b16 %v164
    %v721 = vunpack.c.l.b16 %v165
    %v722 = vunpack.c.h.b16 %v165
    %v723 = vunpack.c.l.b16 %v166
    %v724 = vunpack.c.h.b16 %v166
    %v725 = vunpack.c.l.b16 %v167
    %v726 = vunpack.c.h.b16 %v167
    %v727 = vunpack.c.l.b16 %v168
    %v728 = vunpack.c.h.b16 %v168
    %v729 = vunpack.c.l.b16 %v169
    %v730 = vunpack.c.h.b16 %v169
    %v731 = vunpack.c.l.b16 %v170
    %v732 = vunpack.c.h.b16 %v170
    %v733 = vunpack.c.l.b16 %v171
    %v734 = vunpack.c.h.b16 %v171
    %v735 = vunpack.c.l.b16 %v172
    %v736 = vunpack.c.h.b16 %v172
    %v737 = vunpack.c.l.b16 %v173
    %v738 = vunpack.c.h.b16 %v173
    %v739 = vunpack.c.l.b16 %v174
    %v740 = vunpack.c.h.b16 %v174
    %v741 = vunpack.c.l.b16 %v175
    %v742 = vunpack.c.h.b16 %v175
    %v743 = vunpack.c.l.b16 %v176
    %v744 = vunpack.c.h.b16 %v176
    %v745 = vunpack.c.l.b16 %v177
    %v746 = vunpack.c.h.b16 %v177
    %v747 = vunpack.c.l.b16 %v178
    %v748 = vunpack.c.h.b16 %v178
    %v749 = vunpack.c.l.b16 %v179
    %v750 = vunpack.c.h.b16 %v179
    %v751 = vunpack.c.l.b16 %v180
    %v752 = vunpack.c.h.b16 %v180
    %v753 = vunpack.c.l.b16 %v181
    %v754 = vunpack.c.h.b16 %v181
    %v755 = vunpack.c.l.b16 %v182
    %v756 = vunpack.c.h.b16 %v182
    %v757 = vunpack.c.l.b16 %v183
    %v758 = vunpack.c.h.b16 %v183
    %v759 = vunpack.c.l.b16 %v184
    %v760 = vunpack.c.h.b16 %v184
    %v761 = vunpack.c.l.b16 %v185
    %v762 = vunpack.c.h.b16 %v185
    %v763 = vunpack.c.l.b16 %v186
    %v764 = vunpack.c.h.b16 %v186
    %v765 = vunpack.c.l.b16 %v187
    %v766 = vunpack.c.h.b16 %v187
    %v767 = vunpack.c.l.b16 %v188
    %v768 = vunpack.c.h.b16 %v188
    %v769 = vunpack.c.l.b16 %v189
    %v770 = vunpack.c.h.b16 %v189
    %v771 = vunpack.c.l.b16 %v190
    %v772 = vunpack.c.h.b16 %v190
    %v773 = vunpack.c.l.b16 %v191
    %v774 = vunpack.c.h.b16 %v191
    %v775 = vunpack.c.l.b16 %v192
    %v776 = vunpack.c.h.b16 %v192
    %v777 = vunpack.c.l.b16 %v193
    %v778 = vunpack.c.h.b16 %v193
    %v779 = vunpack.c.l.b16 %v194
    %v780 = vunpack.c.h.b16 %v194
    %v781 = vunpack.c.l.b16 %v195
    %v782 = vunpack.c.h.b16 %v195
    %v783 = vunpack.c.l.b16 %v196
    %v784 = vunpack.c.h.b16 %v196
    %v785 = vunpack.c.l.b16 %v197
    %v786 = vunpack.c.h.b16 %v197
    %v787 = vunpack.c.l.b16 %v198
    %v788 = vunpack.c.h.b16 %v198
    %v789 = vunpack.c.l.b16 %v199
    %v790 = vunpack.c.h.b16 %v199
    %v791 = vunpack.c.l.b16 %v200
    %v792 = vunpack.c.h.b16 %v200
    %v793 = vunpack.c.l.b16 %v201
    %v794 = vunpack.c.h.b16 %v201
    %v795 = vunpack.c.l.b16 %v202
    %v796 = vunpack.c.h.b16 %v202
    %v797 = vunpack.c.l.b16 %v203
    %v798 = vunpack.c.h.b16 %v203
    %v799 = vunpack.c.l.b16 %v204
    %v800 = vunpack.c.h.b16 %v204
    %v801 = vunpack.c.l.b16 %v205
    %v802 = vunpack.c.h.b16 %v205
    %v803 = vunpack.c.l.b16 %v206
    %v804 = vunpack.c.h.b16 %v206
    %v805 = vunpack.c.l.b16 %v207
    %v806 = vunpack.c.h.b16 %v207
    %v807 = vunpack.c.l.b16 %v208
    %v808 = vunpack.c.h.b16 %v208
    %v809 = vunpack.c.l.b16 %v209
    %v810 = vunpack.c.h.b16 %v209
    %v811 = vunpack.c.l.b16 %v210
    %v812 = vunpack.c.h.b16 %v210
    %v813 = vunpack.c.l.b16 %v211
    %v814 = vunpack.c.h.b16 %v211
    %v815 = vunpack.c.l.b16 %v212
    %v816 = vunpack.c.h.b16 %v212
    %v817 = vunpack.c.l.b16 %v213
    %v818 = vunpack.c.h.b16 %v213
    %v819 = vunpack.c.l.b16 %v214
    %v820 = vunpack.c.h.b16 %v214
    %v821 = vunpack.c.l.b16 %v215
    %v822 = vunpack.c.h.b16 %v215
    %v823 = vunpack.c.l.b16 %v216
    %v824 = vunpack.c.h.b16 %v216
    %v825 = vunpack.c.l.b16 %v217
    %v826 = vunpack.c.h.b16 %v217
    %v827 = vunpack.c.l.b16 %v218
    %v828 = vunpack.c.h.b16 %v218
    %v829 = vunpack.c.l.b16 %v219
    %v830 = vunpack.c.h.b16 %v219
    %v831 = vunpack.c.l.b16 %v220
    %v832 = vunpack.c.h.b16 %v220
    %v833 = vunpack.c.l.b16 %v221
    %v834 = vunpack.c.h.b16 %v221
    %v835 = vunpack.c.l.b16 %v222
    %v836 = vunpack.c.h.b16 %v222
    %v837 = vunpack.c.l.b16 %v223
    %v838 = vunpack.c.h.b16 %v223
    %v839 = vunpack.c.l.b16 %v224
    %v840 = vunpack.c.h.b16 %v224
    %v841 = vunpack.c.l.b16 %v225
    %v842 = vunpack.c.h.b16 %v225
    %v843 = vunpack.c.l.b16 %v226
    %v844 = vunpack.c.h.b16 %v226
    %v845 = vunpack.c.l.b16 %v227
    %v846 = vunpack.c.h.b16 %v227
    %v847 = vunpack.c.l.b16 %v228
    %v848 = vunpack.c.h.b16 %v228
    %v849 = vunpack.c.l.b16 %v229
    %v850 = vunpack.c.h.b16 %v229
    %v851 = vunpack.c.l.b16 %v230
    %v852 = vunpack.c.h.b16 %v230
    %v853 = vunpack.c.l.b16 %v231
    %v854 = vunpack.c.h.b16 %v231
    %v855 = vunpack.c.l.b16 %v232
    %v856 = vunpack.c.h.b16 %v232
    %v857 = vunpack.c.l.b16 %v233
    %v858 = vunpack.c.h.b16 %v233
    %v859 = vunpack.c.l.b16 %v234
    %v860 = vunpack.c.h.b16 %v234
    %v861 = vunpack.c.l.b16 %v235
    %v862 = vunpack.c.h.b16 %v235
    %v863 = vunpack.c.l.b16 %v236
    %v864 = vunpack.c.h.b16 %v236
    %v865 = vunpack.c.l.b16 %v237
    %v866 = vunpack.c.h.b16 %v237
    %v867 = vunpack.c.l.b16 %v238
    %v868 = vunpack.c.h.b16 %v238
    %v869 = vunpack.c.l.b16 %v239
    %v870 = vunpack.c.h.b16 %v239
    %v871 = vunpack.c.l.b16 %v240
    %v872 = vunpack.c.h.b16 %v240
    %v873 = vunpack.c.l.b16 %v241
    %v874 = vunpack.c.h.b16 %v241
    %v875 = vunpack.c.l.b16 %v242
    %v876 = vunpack.c.h.b16 %v242
    %v877 = vunpack.c.l.b16 %v243
    %v878 = vunpack.c.h.b16 %v243
    %v879 = vunpack.c.l.b16 %v244
    %v880 = vunpack.c.h.b16 %v244
    %v881 = vunpack.c.l.b16 %v245
    %v882 = vunpack.c.h.b16 %v245
    %v883 = vunpack.c.l.b16 %v246
    %v884 = vunpack.c.h.b16 %v246
    %v885 = vunpack.c.l.b16 %v247
    %v886 = vunpack.c.h.b16 %v247
    %v887 = vunpack.c.l.b16 %v248
    %v888 = vunpack.c.h.b16 %v248
    %v889 = vunpack.c.l.b16 %v249
    %v890 = vunpack.c.h.b16 %v249
    %v891 = vunpack.c.l.b16 %v250
    %v892 = vunpack.c.h.b16 %v250
    %v893 = vunpack.c.l.b16 %v251
    %v894 = vunpack.c.h.b16 %v251
    %v895 = vunpack.c.l.b16 %v252
    %v896 = vunpack.c.h.b16 %v252
    %v897 = vunpack.c.l.b16 %v253
    %v898 = vunpack.c.h.b16 %v253
    %v899 = vunpack.c.l.b16 %v254
    %v900 = vunpack.c.h.b16 %v254
    %v901 = vunpack.c.l.b16 %v255
    %v902 = vunpack.c.h.b16 %v255
    %v903 = vunpack.c.l.b16 %v256
    %v904 = vunpack.c.h.b16 %v256
    %v905 = vunpack.c.l.b16 %v257
    %v906 = vunpack.c.h.b16 %v257
    %v907 = vunpack.c.l.b16 %v258
    %v908 = vunpack.c.h.b16 %v258
    %v909 = vunpack.c.l.b16 %v259
    %v910 = vunpack.c.h.b16 %v259
    %v911 = vunpack.c.l.b16 %v260
    %v912 = vunpack.c.h.b16 %v260
    %v913 = vunpack.c.l.b16 %v261
    %v914 = vunpack.c.h.b16 %v261
    %v915 = vunpack.c.l.b16 %v262
    %v916 = vunpack.c.h.b16 %v262
    %v917 = vunpack.c.l.b16 %v263
    %v918 = vunpack.c.h.b16 %v263
    %v919 = vunpack.c.l.b16 %v264
    %v920 = vunpack.c.h.b16 %v264
    %v921 = vunpack.c.l.b16 %v265
    %v922 = vunpack.c.h.b16 %v265
    %v923 = vunpack.c.l.b16 %v266
    %v924 = vunpack.c.h.b16 %v266
    %v925 = vunpack.c.l.b16 %v267
    %v926 = vunpack.c.h.b16 %v267
    %v927 = vunpack.c.l.b16 %v268
    %v928 = vunpack.c.h.b16 %v268
    %v929 = vunpack.c.l.b16 %v269
    %v930 = vunpack.c.h.b16 %v269
    %v931 = vunpack.c.l.b16 %v270
    %v932 = vunpack.c.h.b16 %v270
    %v933 = vunpack.c.l.b16 %v271
    %v934 = vunpack.c.h.b16 %v271
    %v935 = vunpack.c.l.b16 %v272
    %v936 = vunpack.c.h.b16 %v272
    %v937 = vunpack.c.l.b16 %v273
    %v938 = vunpack.c.h.b16 %v273
    %v939 = vunpack.c.l.b16 %v274
    %v940 = vunpack.c.h.b16 %v274
    %v941 = vunpack.c.l.b16 %v275
    %v942 = vunpack.c.h.b16 %v275
    %v943 = vunpack.c.l.b16 %v276
    %v944 = vunpack.c.h.b16 %v276
    %v945 = vunpack.c.l.b16 %v277
    %v946 = vunpack.c.h.b16 %v277
    %v947 = vunpack.c.l.b16 %v278
    %v948 = vunpack.c.h.b16 %v278
    %v949 = vunpack.c.l.b16 %v279
    %v950 = vunpack.c.h.b16 %v279
    %v951 = vunpack.c.l.b16 %v280
    %v952 = vunpack.c.h.b16 %v280
    %v953 = vunpack.c.l.b16 %v281
    %v954 = vunpack.c.h.b16 %v281
    %v955 = vunpack.c.l.b16 %v282
    %v956 = vunpack.c.h.b16 %v282
    %v957 = vunpack.c.l.b16 %v283
    %v958 = vunpack.c.h.b16 %v283
    %v959 = vunpack.c.l.b16 %v284
    %v960 = vunpack.c.h.b16 %v284
    %v961 = vunpack.c.l.b16 %v285
    %v962 = vunpack.c.h.b16 %v285
    %v963 = vunpack.c.l.b16 %v286
    %v964 = vunpack.c.h.b16 %v286
    %v965 = vunpack.c.l.b16 %v287
    %v966 = vunpack.c.h.b16 %v287
    %v967 = vunpack.c.l.b16 %v288
    %v968 = vunpack.c.h.b16 %v288
    %v969 = vunpack.c.l.b16 %v289
    %v970 = vunpack.c.h.b16 %v289
    %v971 = vunpack.c.l.b16 %v290
    %v972 = vunpack.c.h.b16 %v290
    %v973 = vunpack.c.l.b16 %v291
    %v974 = vunpack.c.h.b16 %v291
    %v975 = vunpack.c.l.b16 %v292
    %v976 = vunpack.c.h.b16 %v292
    %v977 = vunpack.c.l.b16 %v293
    %v978 = vunpack.c.h.b16 %v293
    %v979 = vunpack.c.l.b16 %v294
    %v980 = vunpack.c.h.b16 %v294
    %v981 = vunpack.c.l.b16 %v295
    %v982 = vunpack.c.h.b16 %v295
    %v983 = vunpack.c.l.b16 %v296
    %v984 = vunpack.c.h.b16 %v296
    %v985 = vunpack.c.l.b16 %v297
    %v986 = vunpack.c.h.b16 %v297
    %v987 = vunpack.c.l.b16 %v298
    %v988 = vunpack.c.h.b16 %v298
    %v989 = vunpack.c.l.b16 %v299
    %v990 = vunpack.c.h.b16 %v299
    %v991 = vunpack.c.l.b16 %v300
    %v992 = vunpack.c.h.b16 %v300
    %v993 = vunpack.c.l.b16 %v301
    %v994 = vunpack.c.h.b16 %v301
    %v995 = vunpack.c.l.b16 %v302
    %v996 = vunpack.c.h.b16 %v302
    %v997 = vunpack.c.l.b16 %v303
    %v998 = vunpack.c.h.b16 %v303
    %v999 = vunpack.c.l.b16 %v304
    %v1000 = vunpack.c.h.b16 %v304
    %v1001 = vunpack.c.l.b16 %v305
    %v1002 = vunpack.c.h.b16 %v305
    %v1003 = vunpack.c.l.b16 %v306
    %v1004 = vunpack.c.h.b16 %v306
    %v1005 = vunpack.c.l.b16 %v307
    %v1006 = vunpack.c.h.b16 %v307
    %v1007 = vunpack.c.l.b16 %v308
    %v1008 = vunpack.c.h.b16 %v308
    %v1009 = vunpack.c.l.b16 %v309
    %v1010 = vunpack.c.h.b16 %v309
    %v1011 = vunpack.c.l.b16 %v310
    %v1012 = vunpack.c.h.b16 %v310
    %v1013 = vunpack.c.l.b16 %v311
    %v1014 = vunpack.c.h.b16 %v311
    %v1015 = vunpack.c.l.b16 %v312
    %v1016 = vunpack.c.h.b16 %v312
    %v1017 = vunpack.c.l.b16 %v313
    %v1018 = vunpack.c.h.b16 %v313
    %v1019 = vunpack.c.l.b16 %v314
    %v1020 = vunpack.c.h.b16 %v314
    %v1021 = vunpack.c.l.b16 %v315
    %v1022 = vunpack.c.h.b16 %v315
    %v1023 = vunpack.c.l.b16 %v316
    %v1024 = vunpack.c.h.b16 %v316
    %v1025 = vunpack.c.l.b16 %v317
    %v1026 = vunpack.c.h.b16 %v317
    %v1027 = vunpack.c.l.b16 %v318
    %v1028 = vunpack.c.h.b16 %v318
    %v1029 = vunpack.c.l.b16 %v319
    %v1030 = vunpack.c.h.b16 %v319
    %v1031 = vunpack.c.l.b16 %v320
    %v1032 = vunpack.c.h.b16 %v320
    %v1033 = vunpack.c.l.b16 %v321
    %v1034 = vunpack.c.h.b16 %v321
    %v1035 = vunpack.c.l.b16 %v322
    %v1036 = vunpack.c.h.b16 %v322
    %v1037 = vunpack.c.l.b16 %v323
    %v1038 = vunpack.c.h.b16 %v323
    %v1039 = vunpack.c.l.b16 %v324
    %v1040 = vunpack.c.h.b16 %v324
    %v1041 = vunpack.c.l.b16 %v325
    %v1042 = vunpack.c.h.b16 %v325
    %v1043 = vunpack.c.l.b16 %v326
    %v1044 = vunpack.c.h.b16 %v326
    %v1045 = vunpack.c.l.b16 %v327
    %v1046 = vunpack.c.h.b16 %v327
    %v1047 = vunpack.c.l.b16 %v328
    %v1048 = vunpack.c.h.b16 %v328
    %v1049 = vunpack.c.l.b16 %v329
    %v1050 = vunpack.c.h.b16 %v329
    %v1051 = vunpack.c.l.b16 %v330
    %v1052 = vunpack.c.h.b16 %v330
    %v1053 = vunpack.c.l.b16 %v331
    %v1054 = vunpack.c.h.b16 %v331
    %v1055 = vunpack.c.l.b16 %v332
    %v1056 = vunpack.c.h.b16 %v332
    %v1057 = vunpack.c.l.b16 %v333
    %v1058 = vunpack.c.h.b16 %v333
    %v1059 = vunpack.c.l.b16 %v334
    %v1060 = vunpack.c.h.b16 %v334
    %v1061 = vunpack.c.l.b16 %v335
    %v1062 = vunpack.c.h.b16 %v335
    %v1063 = vunpack.c.l.b16 %v336
    %v1064 = vunpack.c.h.b16 %v336
    %v1065 = vunpack.c.l.b16 %v337
    %v1066 = vunpack.c.h.b16 %v337
    %v1067 = vunpack.c.l.b16 %v338
    %v1068 = vunpack.c.h.b16 %v338
    %v1069 = vunpack.c.l.b16 %v339
    %v1070 = vunpack.c.h.b16 %v339
    %v1071 = vunpack.c.l.b16 %v340
    %v1072 = vunpack.c.h.b16 %v340
    %v1073 = vunpack.c.l.b16 %v341
    %v1074 = vunpack.c.h.b16 %v341
    %v1075 = vunpack.c.l.b16 %v342
    %v1076 = vunpack.c.h.b16 %v342
    %v1077 = vunpack.c.l.b16 %v343
    %v1078 = vunpack.c.h.b16 %v343
    %v1079 = vunpack.c.l.b16 %v344
    %v1080 = vunpack.c.h.b16 %v344
    %v1081 = vunpack.c.l.b16 %v345
    %v1082 = vunpack.c.h.b16 %v345
    %v1083 = vunpack.c.l.b16 %v346
    %v1084 = vunpack.c.h.b16 %v346
    %v1085 = vunpack.c.l.b16 %v347
    %v1086 = vunpack.c.h.b16 %v347
    %v1087 = vunpack.c.l.b16 %v348
    %v1088 = vunpack.c.h.b16 %v348
    %v1089 = vunpack.c.l.b16 %v349
    %v1090 = vunpack.c.h.b16 %v349
    %v1091 = vunpack.c.l.b16 %v350
    %v1092 = vunpack.c.h.b16 %v350
    %v1093 = vunpack.c.l.b16 %v351
    %v1094 = vunpack.c.h.b16 %v351
    %v1095 = vunpack.c.l.b16 %v352
    %v1096 = vunpack.c.h.b16 %v352
    %v1097 = vunpack.c.l.b16 %v353
    %v1098 = vunpack.c.h.b16 %v353
    %v1099 = vunpack.c.l.b16 %v354
    %v1100 = vunpack.c.h.b16 %v354
    %v1101 = vunpack.c.l.b16 %v355
    %v1102 = vunpack.c.h.b16 %v355
    %v1103 = vunpack.c.l.b16 %v356
    %v1104 = vunpack.c.h.b16 %v356
    %v1105 = vunpack.c.l.b16 %v357
    %v1106 = vunpack.c.h.b16 %v357
    %v1107 = vunpack.c.l.b16 %v358
    %v1108 = vunpack.c.h.b16 %v358
    %v1109 = vunpack.c.l.b16 %v359
    %v1110 = vunpack.c.h.b16 %v359
    %v1111 = vunpack.c.l.b16 %v360
    %v1112 = vunpack.c.h.b16 %v360
    %v1113 = vunpack.c.l.b16 %v361
    %v1114 = vunpack.c.h.b16 %v361
    %v1115 = vunpack.c.l.b16 %v362
    %v1116 = vunpack.c.h.b16 %v362
    %v1117 = vunpack.c.l.b16 %v363
    %v1118 = vunpack.c.h.b16 %v363
    %v1119 = vunpack.c.l.b16 %v364
    %v1120 = vunpack.c.h.b16 %v364
    %v1121 = vunpack.c.l.b16 %v365
    %v1122 = vunpack.c.h.b16 %v365
    %v1123 = vunpack.c.l.b16 %v366
    %v1124 = vunpack.c.h.b16 %v366
    %v1125 = vunpack.c.l.b16 %v367
    %v1126 = vunpack.c.h.b16 %v367
    %v1127 = vunpack.c.l.b16 %v368
    %v1128 = vunpack.c.h.b16 %v368
    %v1129 = vunpack.c.l.b16 %v369
    %v1130 = vunpack.c.h.b16 %v369
    %v1131 = vunpack.c.l.b16 %v370
    %v1132 = vunpack.c.h.b16 %v370
    %v1133 = vunpack.c.l.b16 %v371
    %v1134 = vunpack.c.h.b16 %v371
    %v1135 = vunpack.c.l.b16 %v372
    %v1136 = vunpack.c.h.b16 %v372
    %v1137 = vunpack.c.l.b16 %v373
    %v1138 = vunpack.c.h.b16 %v373
    %v1139 = vunpack.c.l.b16 %v374
    %v1140 = vunpack.c.h.b16 %v374
    %v1141 = vunpack.c.l.b16 %v375
    %v1142 = vunpack.c.h.b16 %v375
    %v1143 = vunpack.c.l.b16 %v376
    %v1144 = vunpack.c.h.b16 %v376
    %v1145 = vunpack.c.l.b16 %v377
    %v1146 = vunpack.c.h.b16 %v377
    %v1147 = vunpack.c.l.b16 %v378
    %v1148 = vunpack.c.h.b16 %v378
    %v1149 = vunpack.c.l.b16 %v379
    %v1150 = vunpack.c.h.b16 %v379
    %v1151 = vunpack.c.l.b16 %v380
    %v1152 = vunpack.c.h.b16 %v380
    %v1153 = vunpack.c.l.b16 %v381
    %v1154 = vunpack.c.h.b16 %v381
    %v1155 = vunpack.c.l.b16 %v382
    %v1156 = vunpack.c.h.b16 %v382
    %v1157 = vunpack.c.l.b16 %v383
    %v1158 = vunpack.c.h.b16 %v383
    %v1159 = vunpack.c.l.b16 %v384
    %v1160 = vunpack.c.h.b16 %v384
    %v1161 = vunpack.c.l.b16 %v385
    %v1162 = vunpack.c.h.b16 %v385
    %v1163 = vunpack.c.l.b16 %v386
    %v1164 = vunpack.c.h.b16 %v386
    %v1165 = vunpack.c.l.b16 %v387
    %v1166 = vunpack.c.h.b16 %v387
    %v1167 = vunpack.c.l.b16 %v388
    %v1168 = vunpack.c.h.b16 %v388
    %v1169 = vunpack.c.l.b16 %v389
    %v1170 = vunpack.c.h.b16 %v389
    %v1171 = vunpack.c.l.b16 %v390
    %v1172 = vunpack.c.h.b16 %v390
    %v1173 = vunpack.c.l.b16 %v391
    %v1174 = vunpack.c.h.b16 %v391
    %v1175 = vunpack.c.l.b16 %v392
    %v1176 = vunpack.c.h.b16 %v392
    %v1177 = vunpack.c.l.b16 %v393
    %v1178 = vunpack.c.h.b16 %v393
    %v1179 = vunpack.c.l.b16 %v394
    %v1180 = vunpack.c.h.b16 %v394
    %v1181 = vunpack.c.l.b16 %v395
    %v1182 = vunpack.c.h.b16 %v395
    %v1183 = vunpack.c.l.b16 %v396
    %v1184 = vunpack.c.h.b16 %v396
    %v1185 = vunpack.c.l.b16 %v397
    %v1186 = vunpack.c.h.b16 %v397
    %v1187 = vunpack.c.l.b16 %v398
    %v1188 = vunpack.c.h.b16 %v398
    %v1189 = vpack.c.b16 %v681, %v677
    %v1190 = vpack.c.b16 %v682, %v678
    %v1191 = vpack.c.b16 %v683, %v679
    %v1192 = vpack.c.b16 %v684, %v680
    %v1193 = vpack.c.b16 %v689, %v685
    %v1194 = vpack.c.b16 %v690, %v686
    %v1195 = vpack.c.b16 %v691, %v687
    %v1196 = vpack.c.b16 %v692, %v688
    %v1197 = vpack.c.b16 %v697, %v693
    %v1198 = vpack.c.b16 %v698, %v694
    %v1199 = vpack.c.b16 %v699, %v695
    %v1200 = vpack.c.b16 %v700, %v696
    %v1201 = vpack.c.b16 %v705, %v701
    %v1202 = vpack.c.b16 %v706, %v702
    %v1203 = vpack.c.b16 %v707, %v703
    %v1204 = vpack.c.b16 %v708, %v704
    %v1205 = vpack.c.b16 %v713, %v709
    %v1206 = vpack.c.b16 %v714, %v710
    %v1207 = vpack.c.b16 %v715, %v711
    %v1208 = vpack.c.b16 %v716, %v712
    %v1209 = vpack.c.b16 %v721, %v717
    %v1210 = vpack.c.b16 %v722, %v718
    %v1211 = vpack.c.b16 %v723, %v719
    %v1212 = vpack.c.b16 %v724, %v720
    %v1213 = vpack.c.b16 %v729, %v725
    %v1214 = vpack.c.b16 %v730, %v726
    %v1215 = vpack.c.b16 %v731, %v727
    %v1216 = vpack.c.b16 %v732, %v728
    %v1217 = vpack.c.b16 %v737, %v733
    %v1218 = vpack.c.b16 %v738, %v734
    %v1219 = vpack.c.b16 %v739, %v735
    %v1220 = vpack.c.b16 %v740, %v736
    %v1221 = vpack.c.b16 %v745, %v741
    %v1222 = vpack.c.b16 %v746, %v742
    %v1223 = vpack.c.b16 %v747, %v743
    %v1224 = vpack.c.b16 %v748, %v744
    %v1225 = vpack.c.b16 %v753, %v749
    %v1226 = vpack.c.b16 %v754, %v750
    %v1227 = vpack.c.b16 %v755, %v751
    %v1228 = vpack.c.b16 %v756, %v752
    %v1229 = vpack.c.b16 %v761, %v757
    %v1230 = vpack.c.b16 %v762, %v758
    %v1231 = vpack.c.b16 %v763, %v759
    %v1232 = vpack.c.b16 %v764, %v760
    %v1233 = vpack.c.b16 %v769, %v765
    %v1234 = vpack.c.b16 %v770, %v766
    %v1235 = vpack.c.b16 %v771, %v767
    %v1236 = vpack.c.b16 %v772, %v768
    %v1237 = vpack.c.b16 %v777, %v773
    %v1238 = vpack.c.b16 %v778, %v774
    %v1239 = vpack.c.b16 %v779, %v775
    %v1240 = vpack.c.b16 %v780, %v776
    %v1241 = vpack.c.b16 %v785, %v781
    %v1242 = vpack.c.b16 %v786, %v782
    %v1243 = vpack.c.b16 %v787, %v783
    %v1244 = vpack.c.b16 %v788, %v784
    %v1245 = vpack.c.b16 %v793, %v789
    %v1246 = vpack.c.b16 %v794, %v790
    %v1247 = vpack.c.b16 %v795, %v791
    %v1248 = vpack.c.b16 %v796, %v792
    %v1249 = vpack.c.b16 %v801, %v797
    %v1250 = vpack.c.b16 %v802, %v798
    %v1251 = vpack.c.b16 %v803, %v799
    %v1252 = vpack.c.b16 %v804, %v800
    %v1253 = vpack.c.b16 %v809, %v805
    %v1254 = vpack.c.b16 %v810, %v806
    %v1255 = vpack.c.b16 %v811, %v807
    %v1256 = vpack.c.b16 %v812, %v808
    %v1257 = vpack.c.b16 %v817, %v813
    %v1258 = vpack.c.b16 %v818, %v814
    %v1259 = vpack.c.b16 %v819, %v815
    %v1260 = vpack.c.b16 %v820, %v816
    %v1261 = vpack.c.b16 %v825, %v821
    %v1262 = vpack.c.b16 %v826, %v822
    %v1263 = vpack.c.b16 %v827, %v823
    %v1264 = vpack.c.b16 %v828, %v824
    %v1265 = vpack.c.b16 %v833, %v829
    %v1266 = vpack.c.b16 %v834, %v830
    %v1267 = vpack.c.b16 %v835, %v831
    %v1268 = vpack.c.b16 %v836, %v832
    %v1269 = vpack.c.b16 %v841, %v837
    %v1270 = vpack.c.b16 %v842, %v838
    %v1271 = vpack.c.b16 %v843, %v839
    %v1272 = vpack.c.b16 %v844, %v840
    %v1273 = vpack.c.b16 %v849, %v845
    %v1274 = vpack.c.b16 %v850, %v846
    %v1275 = vpack.c.b16 %v851, %v847
    %v1276 = vpack.c.b16 %v852, %v848
    %v1277 = vpack.c.b16 %v857, %v853
    %v1278 = vpack.c.b16 %v858, %v854
    %v1279 = vpack.c.b16 %v859, %v855
    %v1280 = vpack.c.b16 %v860, %v856
    %v1281 = vpack.c.b16 %v865, %v861
    %v1282 = vpack.c.b16 %v866, %v862
    %v1283 = vpack.c.b16 %v867, %v863
    %v1284 = vpack.c.b16 %v868, %v864
    %v1285 = vpack.c.b16 %v873, %v869
    %v1286 = vpack.c.b16 %v874, %v870
    %v1287 = vpack.c.b16 %v875, %v871
    %v1288 = vpack.c.b16 %v876, %v872
    %v1289 = vpack.c.b16 %v881, %v877
    %v1290 = vpack.c.b16 %v882, %v878
    %v1291 = vpack.c.b16 %v883, %v879
    %v1292 = vpack.c.b16 %v884, %v880
    %v1293 = vpack.c.b16 %v889, %v885
    %v1294 = vpack.c.b16 %v890, %v886
    %v1295 = vpack.c.b16 %v891, %v887
    %v1296 = vpack.c.b16 %v892, %v888
    %v1297 = vpack.c.b16 %v897, %v893
    %v1298 = vpack.c.b16 %v898, %v894
    %v1299 = vpack.c.b16 %v899, %v895
    %v1300 = vpack.c.b16 %v900, %v896
    %v1301 = vpack.c.b16 %v905, %v901
    %v1302 = vpack.c.b16 %v906, %v902
    %v1303 = vpack.c.b16 %v907, %v903
    %v1304 = vpack.c.b16 %v908, %v904
    %v1305 = vpack.c.b16 %v913, %v909
    %v1306 = vpack.c.b16 %v914, %v910
    %v1307 = vpack.c.b16 %v915, %v911
    %v1308 = vpack.c.b16 %v916, %v912
    %v1309 = vpack.c.b16 %v921, %v917
    %v1310 = vpack.c.b16 %v922, %v918
    %v1311 = vpack.c.b16 %v923, %v919
    %v1312 = vpack.c.b16 %v924, %v920
    %v1313 = vpack.c.b16 %v929, %v925
    %v1314 = vpack.c.b16 %v930, %v926
    %v1315 = vpack.c.b16 %v931, %v927
    %v1316 = vpack.c.b16 %v932, %v928
    %v1317 = vpack.c.b16 %v937, %v933
    %v1318 = vpack.c.b16 %v938, %v934
    %v1319 = vpack.c.b16 %v939, %v935
    %v1320 = vpack.c.b16 %v940, %v936
    %v1321 = vpack.c.b16 %v945, %v941
    %v1322 = vpack.c.b16 %v946, %v942
    %v1323 = vpack.c.b16 %v947, %v943
    %v1324 = vpack.c.b16 %v948, %v944
    %v1325 = vpack.c.b16 %v953, %v949
    %v1326 = vpack.c.b16 %v954, %v950
    %v1327 = vpack.c.b16 %v955, %v951
    %v1328 = vpack.c.b16 %v956, %v952
    %v1329 = vpack.c.b16 %v961, %v957
    %v1330 = vpack.c.b16 %v962, %v958
    %v1331 = vpack.c.b16 %v963, %v959
    %v1332 = vpack.c.b16 %v964, %v960
    %v1333 = vpack.c.b16 %v969, %v965
    %v1334 = vpack.c.b16 %v970, %v966
    %v1335 = vpack.c.b16 %v971, %v967
    %v1336 = vpack.c.b16 %v972, %v968
    %v1337 = vpack.c.b16 %v977, %v973
    %v1338 = vpack.c.b16 %v978, %v974
    %v1339 = vpack.c.b16 %v979, %v975
    %v1340 = vpack.c.b16 %v980, %v976
    %v1341 = vpack.c.b16 %v985, %v981
    %v1342 = vpack.c.b16 %v986, %v982
    %v1343 = vpack.c.b16 %v987, %v983
    %v1344 = vpack.c.b16 %v988, %v984
    %v1345 = vpack.c.b16 %v993, %v989
    %v1346 = vpack.c.b16 %v994, %v990
    %v1347 = vpack.c.b16 %v995, %v991
    %v1348 = vpack.c.b16 %v996, %v992
    %v1349 = vpack.c.b16 %v1001, %v997
    %v1350 = vpack.c.b16 %v1002, %v998
    %v1351 = vpack.c.b16 %v1003, %v999
    %v1352 = vpack.c.b16 %v1004, %v1000
    %v1353 = vpack.c.b16 %v1009, %v1005
    %v1354 = vpack.c.b16 %v1010, %v1006
    %v1355 = vpack.c.b16 %v1011, %v1007
    %v1356 = vpack.c.b16 %v1012, %v1008
    %v1357 = vpack.c.b16 %v1017, %v1013
    %v1358 = vpack.c.b16 %v1018, %v1014
    %v1359 = vpack.c.b16 %v1019, %v1015
    %v1360 = vpack.c.b16 %v1020, %v1016
    %v1361 = vpack.c.b16 %v1025, %v1021
    %v1362 = vpack.c.b16 %v1026, %v1022
    %v1363 = vpack.c.b16 %v1027, %v1023
    %v1364 = vpack.c.b16 %v1028, %v1024
    %v1365 = vpack.c.b16 %v1033, %v1029
    %v1366 = vpack.c.b16 %v1034, %v1030
    %v1367 = vpack.c.b16 %v1035, %v1031
    %v1368 = vpack.c.b16 %v1036, %v1032
    %v1369 = vpack.c.b16 %v1041, %v1037
    %v1370 = vpack.c.b16 %v1042, %v1038
    %v1371 = vpack.c.b16 %v1043, %v1039
    %v1372 = vpack.c.b16 %v1044, %v1040
    %v1373 = vpack.c.b16 %v1049, %v1045
    %v1374 = vpack.c.b16 %v1050, %v1046
    %v1375 = vpack.c.b16 %v1051, %v1047
    %v1376 = vpack.c.b16 %v1052, %v1048
    %v1377 = vpack.c.b16 %v1057, %v1053
    %v1378 = vpack.c.b16 %v1058, %v1054
    %v1379 = vpack.c.b16 %v1059, %v1055
    %v1380 = vpack.c.b16 %v1060, %v1056
    %v1381 = vpack.c.b16 %v1065, %v1061
    %v1382 = vpack.c.b16 %v1066, %v1062
    %v1383 = vpack.c.b16 %v1067, %v1063
    %v1384 = vpack.c.b16 %v1068, %v1064
    %v1385 = vpack.c.b16 %v1073, %v1069
    %v1386 = vpack.c.b16 %v1074, %v1070
    %v1387 = vpack.c.b16 %v1075, %v1071
    %v1388 = vpack.c.b16 %v1076, %v1072
    %v1389 = vpack.c.b16 %v1081, %v1077
    %v1390 = vpack.c.b16 %v1082, %v1078
    %v1391 = vpack.c.b16 %v1083, %v1079
    %v1392 = vpack.c.b16 %v1084, %v1080
    %v1393 = vpack.c.b16 %v1089, %v1085
    %v1394 = vpack.c.b16 %v1090, %v1086
    %v1395 = vpack.c.b16 %v1091, %v1087
    %v1396 = vpack.c.b16 %v1092, %v1088
    %v1397 = vpack.c.b16 %v1097, %v1093
    %v1398 = vpack.c.b16 %v1098, %v1094
    %v1399 = vpack.c.b16 %v1099, %v1095
    %v1400 = vpack.c.b16 %v1100, %v1096
    %v1401 = vpack.c.b16 %v1105, %v1101
    %v1402 = vpack.c.b16 %v1106, %v1102
    %v1403 = vpack.c.b16 %v1107, %v1103
    %v1404 = vpack.c.b16 %v1108, %v1104
    %v1405 = vpack.c.b16 %v1113, %v1109
    %v1406 = vpack.c.b16 %v1114, %v1110
    %v1407 = vpack.c.b16 %v1115, %v1111
    %v1408 = vpack.c.b16 %v1116, %v1112
    %v1409 = vpack.c.b16 %v1121, %v1117
    %v1410 = vpack.c.b16 %v1122, %v1118
    %v1411 = vpack.c.b16 %v1123, %v1119
    %v1412 = vpack.c.b16 %v1124, %v1120
    %v1413 = vpack.c.b16 %v1129, %v1125
    %v1414 = vpack.c.b16 %v1130, %v1126
    %v1415 = vpack.c.b16 %v1131, %v1127
    %v1416 = vpack.c.b16 %v1132, %v1128
    %v1417 = vpack.c.b16 %v1137, %v1133
    %v1418 = vpack.c.b16 %v1138, %v1134
    %v1419 = vpack.c.b16 %v1139, %v1135
    %v1420 = vpack.c.b16 %v1140, %v1136
    %v1421 = vpack.c.b16 %v1145, %v1141
    %v1422 = vpack.c.b16 %v1146, %v1142
    %v1423 = vpack.c.b16 %v1147, %v1143
    %v1424 = vpack.c.b16 %v1148, %v1144
    %v1425 = vpack.c.b16 %v1153, %v1149
    %v1426 = vpack.c.b16 %v1154, %v1150
    %v1427 = vpack.c.b16 %v1155, %v1151
    %v1428 = vpack.c.b16 %v1156, %v1152
    %v1429 = vpack.c.b16 %v1161, %v1157
    %v1430 = vpack.c.b16 %v1162, %v1158
    %v1431 = vpack.c.b16 %v1163, %v1159
    %v1432 = vpack.c.b16 %v1164, %v1160
    %v1433 = vpack.c.b16 %v1169, %v1165
    %v1434 = vpack.c.b16 %v1170, %v1166
    %v1435 = vpack.c.b16 %v1171, %v1167
    %v1436 = vpack.c.b16 %v1172, %v1168
    %v1437 = vpack.c.b16 %v1177, %v1173
    %v1438 = vpack.c.b16 %v1178, %v1174
    %v1439 = vpack.c.b16 %v1179, %v1175
    %v1440 = vpack.c.b16 %v1180, %v1176
    %v1441 = vpack.c.b16 %v1185, %v1181
    %v1442 = vpack.c.b16 %v1186, %v1182
    %v1443 = vpack.c.b16 %v1187, %v1183
    %v1444 = vpack.c.b16 %v1188, %v1184
    %1701 = vmatprep.subr.bf16.mxu0 %v1218
    %1702 = vmatpush1.bf16.msra.mxu0 %v1217
    %1703 = vmatprep.subr.bf16.mxu0 %v1214
    %1704 = vmatpush1.bf16.msra.mxu0 %v1213
    %1705 = vmatprep.subr.bf16.mxu0 %v1210
    %1706 = vmatpush1.bf16.msra.mxu0 %v1209
    %1707 = vmatprep.subr.bf16.mxu0 %v1206
    %1708 = vmatpush1.bf16.msra.mxu0 %v1205
    %1709 = vmatprep.subr.bf16.mxu0 %v1202
    %1710 = vmatpush1.bf16.msra.mxu0 %v1201
    %1711 = vmatprep.subr.bf16.mxu0 %v1198
    %1712 = vmatpush1.bf16.msra.mxu0 %v1197
    %1713 = vmatprep.subr.bf16.mxu0 %v1194
    %1714 = vmatpush1.bf16.msra.mxu0 %v1193
    %1715 = vmatprep.subr.bf16.mxu0 %v1190
    %1716 = vmatpush1.bf16.msra.mxu0 %v1189
    %1717 = vmatprep.subr.bf16.mxu0 %v1250
    %1718 = vmatpush2.bf16.msra.mxu0 %v1249
    %1719 = vmatprep.subr.bf16.mxu0 %v1246
    %1720 = vmatpush2.bf16.msra.mxu0 %v1245
    %1721 = vmatprep.subr.bf16.mxu0 %v1242
    %1722 = vmatpush2.bf16.msra.mxu0 %v1241
    %1723 = vmatprep.subr.bf16.mxu0 %v1238
    %1724 = vmatpush2.bf16.msra.mxu0 %v1237
    %1725 = vmatprep.subr.bf16.mxu0 %v1234
    %1726 = vmatpush2.bf16.msra.mxu0 %v1233
    %1727 = vmatprep.subr.bf16.mxu0 %v1230
    %1728 = vmatpush2.bf16.msra.mxu0 %v1229
    %1729 = vmatprep.subr.bf16.mxu0 %v1226
    %1730 = vmatpush2.bf16.msra.mxu0 %v1225
    %1731 = vmatprep.subr.bf16.mxu0 %v1222
    %1732 = vmatpush2.bf16.msra.mxu0 %v1221
    %1733 = vmatprep.mubr.bf16.mxu0 %v136
    %1734 = vmatmul.mubr.bf16.gmra.mxu0 %v135
    %v1735 = vpop.f32.mrf.mxu0
    %v1736 = vadd.f32 %v404, %v1735
    %v1737 = vpop.f32.mrf.mxu0
    %v1738 = vadd.f32 %v408, %v1737
    %v1739 = vpop.f32.mrf.mxu0
    %v1740 = vpop.f32.mrf.mxu0
    %1741 = vdwg.mxu0
    %1742 = vmatprep.subr.bf16.mxu0 %v1282
    %1743 = vmatpush1.bf16.msra.mxu0 %v1281
    %1744 = vmatprep.subr.bf16.mxu0 %v1278
    %1745 = vmatpush1.bf16.msra.mxu0 %v1277
    %1746 = vmatprep.subr.bf16.mxu0 %v1274
    %1747 = vmatpush1.bf16.msra.mxu0 %v1273
    %1748 = vmatprep.subr.bf16.mxu0 %v1270
    %1749 = vmatpush1.bf16.msra.mxu0 %v1269
    %1750 = vmatprep.subr.bf16.mxu0 %v1266
    %1751 = vmatpush1.bf16.msra.mxu0 %v1265
    %1752 = vmatprep.subr.bf16.mxu0 %v1262
    %1753 = vmatpush1.bf16.msra.mxu0 %v1261
    %1754 = vmatprep.subr.bf16.mxu0 %v1258
    %1755 = vmatpush1.bf16.msra.mxu0 %v1257
    %1756 = vmatprep.subr.bf16.mxu0 %v1254
    %1757 = vmatpush1.bf16.msra.mxu0 %v1253
    %1758 = vmatprep.subr.bf16.mxu0 %v1314
    %1759 = vmatpush2.bf16.msra.mxu0 %v1313
    %1760 = vmatprep.subr.bf16.mxu0 %v1310
    %1761 = vmatpush2.bf16.msra.mxu0 %v1309
    %1762 = vmatprep.subr.bf16.mxu0 %v1306
    %1763 = vmatpush2.bf16.msra.mxu0 %v1305
    %1764 = vmatprep.subr.bf16.mxu0 %v1302
    %1765 = vmatpush2.bf16.msra.mxu0 %v1301
    %1766 = vmatprep.subr.bf16.mxu0 %v1298
    %1767 = vmatpush2.bf16.msra.mxu0 %v1297
    %1768 = vmatprep.subr.bf16.mxu0 %v1294
    %1769 = vmatpush2.bf16.msra.mxu0 %v1293
    %1770 = vmatprep.subr.bf16.mxu0 %v1290
    %1771 = vmatpush2.bf16.msra.mxu0 %v1289
    %1772 = vmatprep.subr.bf16.mxu0 %v1286
    %1773 = vmatpush2.bf16.msra.mxu0 %v1285
    %1774 = vmatprep.mubr.bf16.mxu0 %v138
    %1775 = vmatmul.mubr.bf16.gmra.mxu0 %v137
    %v1776 = vpop.f32.mrf.mxu0
    %v1777 = vadd.f32 %v1736, %v1776
    %v1778 = vpop.f32.mrf.mxu0
    %v1779 = vadd.f32 %v1738, %v1778
    %v1780 = vpop.f32.mrf.mxu0
    %v1781 = vpop.f32.mrf.mxu0
    %1782 = vdwg.mxu0
    %1783 = vmatprep.subr.bf16.mxu0 %v1346
    %1784 = vmatpush1.bf16.msra.mxu0 %v1345
    %1785 = vmatprep.subr.bf16.mxu0 %v1342
    %1786 = vmatpush1.bf16.msra.mxu0 %v1341
    %1787 = vmatprep.subr.bf16.mxu0 %v1338
    %1788 = vmatpush1.bf16.msra.mxu0 %v1337
    %1789 = vmatprep.subr.bf16.mxu0 %v1334
    %1790 = vmatpush1.bf16.msra.mxu0 %v1333
    %1791 = vmatprep.subr.bf16.mxu0 %v1330
    %1792 = vmatpush1.bf16.msra.mxu0 %v1329
    %1793 = vmatprep.subr.bf16.mxu0 %v1326
    %1794 = vmatpush1.bf16.msra.mxu0 %v1325
    %1795 = vmatprep.subr.bf16.mxu0 %v1322
    %1796 = vmatpush1.bf16.msra.mxu0 %v1321
    %1797 = vmatprep.subr.bf16.mxu0 %v1318
    %1798 = vmatpush1.bf16.msra.mxu0 %v1317
    %1799 = vmatprep.subr.bf16.mxu0 %v1378
    %1800 = vmatpush2.bf16.msra.mxu0 %v1377
    %1801 = vmatprep.subr.bf16.mxu0 %v1374
    %1802 = vmatpush2.bf16.msra.mxu0 %v1373
    %1803 = vmatprep.subr.bf16.mxu0 %v1370
    %1804 = vmatpush2.bf16.msra.mxu0 %v1369
    %1805 = vmatprep.subr.bf16.mxu0 %v1366
    %1806 = vmatpush2.bf16.msra.mxu0 %v1365
    %1807 = vmatprep.subr.bf16.mxu0 %v1362
    %1808 = vmatpush2.bf16.msra.mxu0 %v1361
    %1809 = vmatprep.subr.bf16.mxu0 %v1358
    %1810 = vmatpush2.bf16.msra.mxu0 %v1357
    %1811 = vmatprep.subr.bf16.mxu0 %v1354
    %1812 = vmatpush2.bf16.msra.mxu0 %v1353
    %1813 = vmatprep.subr.bf16.mxu0 %v1350
    %1814 = vmatpush2.bf16.msra.mxu0 %v1349
    %1815 = vmatprep.mubr.bf16.mxu0 %v140
    %1816 = vmatmul.mubr.bf16.gmra.mxu0 %v139
    %v1817 = vpop.f32.mrf.mxu0
    %v1818 = vadd.f32 %v1777, %v1817
    %v1819 = vpop.f32.mrf.mxu0
    %v1820 = vadd.f32 %v1779, %v1819
    %v1821 = vpop.f32.mrf.mxu0
    %v1822 = vpop.f32.mrf.mxu0
    %1823 = vdwg.mxu0
    %1824 = vmatprep.subr.bf16.mxu0 %v1410
    %1825 = vmatpush1.bf16.msra.mxu0 %v1409
    %1826 = vmatprep.subr.bf16.mxu0 %v1406
    %1827 = vmatpush1.bf16.msra.mxu0 %v1405
    %1828 = vmatprep.subr.bf16.mxu0 %v1402
    %1829 = vmatpush1.bf16.msra.mxu0 %v1401
    %1830 = vmatprep.subr.bf16.mxu0 %v1398
    %1831 = vmatpush1.bf16.msra.mxu0 %v1397
    %1832 = vmatprep.subr.bf16.mxu0 %v1394
    %1833 = vmatpush1.bf16.msra.mxu0 %v1393
    %1834 = vmatprep.subr.bf16.mxu0 %v1390
    %1835 = vmatpush1.bf16.msra.mxu0 %v1389
    %1836 = vmatprep.subr.bf16.mxu0 %v1386
    %1837 = vmatpush1.bf16.msra.mxu0 %v1385
    %1838 = vmatprep.subr.bf16.mxu0 %v1382
    %1839 = vmatpush1.bf16.msra.mxu0 %v1381
    %1840 = vmatprep.subr.bf16.mxu0 %v1442
    %1841 = vmatpush2.bf16.msra.mxu0 %v1441
    %1842 = vmatprep.subr.bf16.mxu0 %v1438
    %1843 = vmatpush2.bf16.msra.mxu0 %v1437
    %1844 = vmatprep.subr.bf16.mxu0 %v1434
    %1845 = vmatpush2.bf16.msra.mxu0 %v1433
    %1846 = vmatprep.subr.bf16.mxu0 %v1430
    %1847 = vmatpush2.bf16.msra.mxu0 %v1429
    %1848 = vmatprep.subr.bf16.mxu0 %v1426
    %1849 = vmatpush2.bf16.msra.mxu0 %v1425
    %1850 = vmatprep.subr.bf16.mxu0 %v1422
    %1851 = vmatpush2.bf16.msra.mxu0 %v1421
    %1852 = vmatprep.subr.bf16.mxu0 %v1418
    %1853 = vmatpush2.bf16.msra.mxu0 %v1417
    %1854 = vmatprep.subr.bf16.mxu0 %v1414
    %1855 = vmatpush2.bf16.msra.mxu0 %v1413
    %1856 = vmatprep.mubr.bf16.mxu0 %v142
    %1857 = vmatmul.mubr.bf16.gmra.mxu0 %v141
    %v1858 = vpop.f32.mrf.mxu0
    %v1859 = vadd.f32 %v1818, %v1858
    %v1860 = vpop.f32.mrf.mxu0
    %v1861 = vadd.f32 %v1820, %v1860
    %v1862 = vpop.f32.mrf.mxu0
    %v1863 = vpop.f32.mrf.mxu0
    %1864 = vdwg.mxu0
    %1865 = vmatprep.subr.bf16.mxu0 %v1220
    %1866 = vmatpush1.bf16.msra.mxu0 %v1219
    %1867 = vmatprep.subr.bf16.mxu0 %v1216
    %1868 = vmatpush1.bf16.msra.mxu0 %v1215
    %1869 = vmatprep.subr.bf16.mxu0 %v1212
    %1870 = vmatpush1.bf16.msra.mxu0 %v1211
    %1871 = vmatprep.subr.bf16.mxu0 %v1208
    %1872 = vmatpush1.bf16.msra.mxu0 %v1207
    %1873 = vmatprep.subr.bf16.mxu0 %v1204
    %1874 = vmatpush1.bf16.msra.mxu0 %v1203
    %1875 = vmatprep.subr.bf16.mxu0 %v1200
    %1876 = vmatpush1.bf16.msra.mxu0 %v1199
    %1877 = vmatprep.subr.bf16.mxu0 %v1196
    %1878 = vmatpush1.bf16.msra.mxu0 %v1195
    %1879 = vmatprep.subr.bf16.mxu0 %v1192
    %1880 = vmatpush1.bf16.msra.mxu0 %v1191
    %1881 = vmatprep.subr.bf16.mxu0 %v1252
    %1882 = vmatpush2.bf16.msra.mxu0 %v1251
    %1883 = vmatprep.subr.bf16.mxu0 %v1248
    %1884 = vmatpush2.bf16.msra.mxu0 %v1247
    %1885 = vmatprep.subr.bf16.mxu0 %v1244
    %1886 = vmatpush2.bf16.msra.mxu0 %v1243
    %1887 = vmatprep.subr.bf16.mxu0 %v1240
    %1888 = vmatpush2.bf16.msra.mxu0 %v1239
    %1889 = vmatprep.subr.bf16.mxu0 %v1236
    %1890 = vmatpush2.bf16.msra.mxu0 %v1235
    %1891 = vmatprep.subr.bf16.mxu0 %v1232
    %1892 = vmatpush2.bf16.msra.mxu0 %v1231
    %1893 = vmatprep.subr.bf16.mxu0 %v1228
    %1894 = vmatpush2.bf16.msra.mxu0 %v1227
    %1895 = vmatprep.subr.bf16.mxu0 %v1224
    %1896 = vmatpush2.bf16.msra.mxu0 %v1223
    %1897 = vmatprep.mubr.bf16.mxu0 %v136
    %1898 = vmatmul.mubr.bf16.gmra.mxu0 %v135
    %v1899 = vpop.f32.mrf.mxu0
    %v1900 = vadd.f32 %v412, %v1899
    %v1901 = vpop.f32.mrf.mxu0
    %v1902 = vadd.f32 %v416, %v1901
    %v1903 = vpop.f32.mrf.mxu0
    %v1904 = vpop.f32.mrf.mxu0
    %1905 = vdwg.mxu0
    %1906 = vmatprep.subr.bf16.mxu0 %v1284
    %1907 = vmatpush1.bf16.msra.mxu0 %v1283
    %1908 = vmatprep.subr.bf16.mxu0 %v1280
    %1909 = vmatpush1.bf16.msra.mxu0 %v1279
    %1910 = vmatprep.subr.bf16.mxu0 %v1276
    %1911 = vmatpush1.bf16.msra.mxu0 %v1275
    %1912 = vmatprep.subr.bf16.mxu0 %v1272
    %1913 = vmatpush1.bf16.msra.mxu0 %v1271
    %1914 = vmatprep.subr.bf16.mxu0 %v1268
    %1915 = vmatpush1.bf16.msra.mxu0 %v1267
    %1916 = vmatprep.subr.bf16.mxu0 %v1264
    %1917 = vmatpush1.bf16.msra.mxu0 %v1263
    %1918 = vmatprep.subr.bf16.mxu0 %v1260
    %1919 = vmatpush1.bf16.msra.mxu0 %v1259
    %1920 = vmatprep.subr.bf16.mxu0 %v1256
    %1921 = vmatpush1.bf16.msra.mxu0 %v1255
    %1922 = vmatprep.subr.bf16.mxu0 %v1316
    %1923 = vmatpush2.bf16.msra.mxu0 %v1315
    %1924 = vmatprep.subr.bf16.mxu0 %v1312
    %1925 = vmatpush2.bf16.msra.mxu0 %v1311
    %1926 = vmatprep.subr.bf16.mxu0 %v1308
    %1927 = vmatpush2.bf16.msra.mxu0 %v1307
    %1928 = vmatprep.subr.bf16.mxu0 %v1304
    %1929 = vmatpush2.bf16.msra.mxu0 %v1303
    %1930 = vmatprep.subr.bf16.mxu0 %v1300
    %1931 = vmatpush2.bf16.msra.mxu0 %v1299
    %1932 = vmatprep.subr.bf16.mxu0 %v1296
    %1933 = vmatpush2.bf16.msra.mxu0 %v1295
    %1934 = vmatprep.subr.bf16.mxu0 %v1292
    %1935 = vmatpush2.bf16.msra.mxu0 %v1291
    %1936 = vmatprep.subr.bf16.mxu0 %v1288
    %1937 = vmatpush2.bf16.msra.mxu0 %v1287
    %1938 = vmatprep.mubr.bf16.mxu0 %v138
    %1939 = vmatmul.mubr.bf16.gmra.mxu0 %v137
    %v1940 = vpop.f32.mrf.mxu0
    %v1941 = vadd.f32 %v1900, %v1940
    %v1942 = vpop.f32.mrf.mxu0
    %v1943 = vadd.f32 %v1902, %v1942
    %v1944 = vpop.f32.mrf.mxu0
    %v1945 = vpop.f32.mrf.mxu0
    %1946 = vdwg.mxu0
    %1947 = vmatprep.subr.bf16.mxu0 %v1348
    %1948 = vmatpush1.bf16.msra.mxu0 %v1347
    %1949 = vmatprep.subr.bf16.mxu0 %v1344
    %1950 = vmatpush1.bf16.msra.mxu0 %v1343
    %1951 = vmatprep.subr.bf16.mxu0 %v1340
    %1952 = vmatpush1.bf16.msra.mxu0 %v1339
    %1953 = vmatprep.subr.bf16.mxu0 %v1336
    %1954 = vmatpush1.bf16.msra.mxu0 %v1335
    %1955 = vmatprep.subr.bf16.mxu0 %v1332
    %1956 = vmatpush1.bf16.msra.mxu0 %v1331
    %1957 = vmatprep.subr.bf16.mxu0 %v1328
    %1958 = vmatpush1.bf16.msra.mxu0 %v1327
    %1959 = vmatprep.subr.bf16.mxu0 %v1324
    %1960 = vmatpush1.bf16.msra.mxu0 %v1323
    %1961 = vmatprep.subr.bf16.mxu0 %v1320
    %1962 = vmatpush1.bf16.msra.mxu0 %v1319
    %1963 = vmatprep.subr.bf16.mxu0 %v1380
    %1964 = vmatpush2.bf16.msra.mxu0 %v1379
    %1965 = vmatprep.subr.bf16.mxu0 %v1376
    %1966 = vmatpush2.bf16.msra.mxu0 %v1375
    %1967 = vmatprep.subr.bf16.mxu0 %v1372
    %1968 = vmatpush2.bf16.msra.mxu0 %v1371
    %1969 = vmatprep.subr.bf16.mxu0 %v1368
    %1970 = vmatpush2.bf16.msra.mxu0 %v1367
    %1971 = vmatprep.subr.bf16.mxu0 %v1364
    %1972 = vmatpush2.bf16.msra.mxu0 %v1363
    %1973 = vmatprep.subr.bf16.mxu0 %v1360
    %1974 = vmatpush2.bf16.msra.mxu0 %v1359
    %1975 = vmatprep.subr.bf16.mxu0 %v1356
    %1976 = vmatpush2.bf16.msra.mxu0 %v1355
    %1977 = vmatprep.subr.bf16.mxu0 %v1352
    %1978 = vmatpush2.bf16.msra.mxu0 %v1351
    %1979 = vmatprep.mubr.bf16.mxu0 %v140
    %1980 = vmatmul.mubr.bf16.gmra.mxu0 %v139
    %v1981 = vpop.f32.mrf.mxu0
    %v1982 = vadd.f32 %v1941, %v1981
    %v1983 = vpop.f32.mrf.mxu0
    %v1984 = vadd.f32 %v1943, %v1983
    %v1985 = vpop.f32.mrf.mxu0
    %v1986 = vpop.f32.mrf.mxu0
    %1987 = vdwg.mxu0
    %1988 = vmatprep.subr.bf16.mxu0 %v1412
    %1989 = vmatpush1.bf16.msra.mxu0 %v1411
    %1990 = vmatprep.subr.bf16.mxu0 %v1408
    %1991 = vmatpush1.bf16.msra.mxu0 %v1407
    %1992 = vmatprep.subr.bf16.mxu0 %v1404
    %1993 = vmatpush1.bf16.msra.mxu0 %v1403
    %1994 = vmatprep.subr.bf16.mxu0 %v1400
    %1995 = vmatpush1.bf16.msra.mxu0 %v1399
    %1996 = vmatprep.subr.bf16.mxu0 %v1396
    %1997 = vmatpush1.bf16.msra.mxu0 %v1395
    %1998 = vmatprep.subr.bf16.mxu0 %v1392
    %1999 = vmatpush1.bf16.msra.mxu0 %v1391
    %2000 = vmatprep.subr.bf16.mxu0 %v1388
    %2001 = vmatpush1.bf16.msra.mxu0 %v1387
    %2002 = vmatprep.subr.bf16.mxu0 %v1384
    %2003 = vmatpush1.bf16.msra.mxu0 %v1383
    %2004 = vmatprep.subr.bf16.mxu0 %v1444
    %2005 = vmatpush2.bf16.msra.mxu0 %v1443
    %2006 = vmatprep.subr.bf16.mxu0 %v1440
    %2007 = vmatpush2.bf16.msra.mxu0 %v1439
    %2008 = vmatprep.subr.bf16.mxu0 %v1436
    %2009 = vmatpush2.bf16.msra.mxu0 %v1435
    %2010 = vmatprep.subr.bf16.mxu0 %v1432
    %2011 = vmatpush2.bf16.msra.mxu0 %v1431
    %2012 = vmatprep.subr.bf16.mxu0 %v1428
    %2013 = vmatpush2.bf16.msra.mxu0 %v1427
    %2014 = vmatprep.subr.bf16.mxu0 %v1424
    %2015 = vmatpush2.bf16.msra.mxu0 %v1423
    %2016 = vmatprep.subr.bf16.mxu0 %v1420
    %2017 = vmatpush2.bf16.msra.mxu0 %v1419
    %2018 = vmatprep.subr.bf16.mxu0 %v1416
    %2019 = vmatpush2.bf16.msra.mxu0 %v1415
    %2020 = vmatprep.mubr.bf16.mxu0 %v142
    %2021 = vmatmul.mubr.bf16.gmra.mxu0 %v141
    %v2022 = vpop.f32.mrf.mxu0
    %v2023 = vadd.f32 %v1982, %v2022
    %v2024 = vpop.f32.mrf.mxu0
    %v2025 = vadd.f32 %v1984, %v2024
    %v2026 = vpop.f32.mrf.mxu0
    %v2027 = vpop.f32.mrf.mxu0
    %2028 = vdwg.mxu0
    %v2029 = vmax.f32 %v1859, 0.0
    %v2030 = vmax.f32 %v1861, 0.0
    %v2031 = vmax.f32 %v2023, 0.0
    %v2032 = vmax.f32 %v2025, 0.0
    %v2033 = vpack.c.bf16 %v2029, %v2029
    %v2034 = vpack.c.bf16 %v2030, %v2030
    %v2035 = vpack.c.bf16 %v2031, %v2031
    %v2036 = vpack.c.bf16 %v2032, %v2032
    %v2037 = vld [vmem:[#allocation6] sm:$0xff]
    %v2038 = vld [vmem:[#allocation6 + $0x8] sm:$0xff]
    %v2039 = vld [vmem:[#allocation6 + $0x10] sm:$0xff]
    %v2040 = vld [vmem:[#allocation6 + $0x18] sm:$0xff]
    %v2041 = vld [vmem:[#allocation6 + $0x20] sm:$0xff]
    %v2042 = vld [vmem:[#allocation6 + $0x28] sm:$0xff]
    %v2043 = vld [vmem:[#allocation6 + $0x30] sm:$0xff]
    %v2044 = vld [vmem:[#allocation6 + $0x38] sm:$0xff]
    %v2045 = vld [vmem:[#allocation6 + $0x40] sm:$0xff]
    %v2046 = vld [vmem:[#allocation6 + $0x48] sm:$0xff]
    %v2047 = vld [vmem:[#allocation6 + $0x50] sm:$0xff]
    %v2048 = vld [vmem:[#allocation6 + $0x58] sm:$0xff]
    %v2049 = vld [vmem:[#allocation6 + $0x60] sm:$0xff]
    %v2050 = vld [vmem:[#allocation6 + $0x68] sm:$0xff]
    %v2051 = vld [vmem:[#allocation6 + $0x70] sm:$0xff]
    %v2052 = vld [vmem:[#allocation6 + $0x78] sm:$0xff]
    %v2053 = vld [vmem:[#allocation6 + $0x80] sm:$0xff]
    %v2054 = vld [vmem:[#allocation6 + $0x88] sm:$0xff]
    %v2055 = vld [vmem:[#allocation6 + $0x90] sm:$0xff]
    %v2056 = vld [vmem:[#allocation6 + $0x98] sm:$0xff]
    %v2057 = vld [vmem:[#allocation6 + $0xa0] sm:$0xff]
    %v2058 = vld [vmem:[#allocation6 + $0xa8] sm:$0xff]
    %v2059 = vld [vmem:[#allocation6 + $0xb0] sm:$0xff]
    %v2060 = vld [vmem:[#allocation6 + $0xb8] sm:$0xff]
    %v2061 = vld [vmem:[#allocation6 + $0xc0] sm:$0xff]
    %v2062 = vld [vmem:[#allocation6 + $0xc8] sm:$0xff]
    %v2063 = vld [vmem:[#allocation6 + $0xd0] sm:$0xff]
    %v2064 = vld [vmem:[#allocation6 + $0xd8] sm:$0xff]
    %v2065 = vld [vmem:[#allocation6 + $0xe0] sm:$0xff]
    %v2066 = vld [vmem:[#allocation6 + $0xe8] sm:$0xff]
    %v2067 = vld [vmem:[#allocation6 + $0xf0] sm:$0xff]
    %v2068 = vld [vmem:[#allocation6 + $0xf8] sm:$0xff]
    %v2069 = vld [vmem:[#allocation6 + $0x100] sm:$0xff]
    %v2070 = vld [vmem:[#allocation6 + $0x108] sm:$0xff]
    %v2071 = vld [vmem:[#allocation6 + $0x110] sm:$0xff]
    %v2072 = vld [vmem:[#allocation6 + $0x118] sm:$0xff]
    %v2073 = vld [vmem:[#allocation6 + $0x120] sm:$0xff]
    %v2074 = vld [vmem:[#allocation6 + $0x128] sm:$0xff]
    %v2075 = vld [vmem:[#allocation6 + $0x130] sm:$0xff]
    %v2076 = vld [vmem:[#allocation6 + $0x138] sm:$0xff]
    %v2077 = vld [vmem:[#allocation6 + $0x140] sm:$0xff]
    %v2078 = vld [vmem:[#allocation6 + $0x148] sm:$0xff]
    %v2079 = vld [vmem:[#allocation6 + $0x150] sm:$0xff]
    %v2080 = vld [vmem:[#allocation6 + $0x158] sm:$0xff]
    %v2081 = vld [vmem:[#allocation6 + $0x160] sm:$0xff]
    %v2082 = vld [vmem:[#allocation6 + $0x168] sm:$0xff]
    %v2083 = vld [vmem:[#allocation6 + $0x170] sm:$0xff]
    %v2084 = vld [vmem:[#allocation6 + $0x178] sm:$0xff]
    %v2085 = vld [vmem:[#allocation6 + $0x180] sm:$0xff]
    %v2086 = vld [vmem:[#allocation6 + $0x188] sm:$0xff]
    %v2087 = vld [vmem:[#allocation6 + $0x190] sm:$0xff]
    %v2088 = vld [vmem:[#allocation6 + $0x198] sm:$0xff]
    %v2089 = vld [vmem:[#allocation6 + $0x1a0] sm:$0xff]
    %v2090 = vld [vmem:[#allocation6 + $0x1a8] sm:$0xff]
    %v2091 = vld [vmem:[#allocation6 + $0x1b0] sm:$0xff]
    %v2092 = vld [vmem:[#allocation6 + $0x1b8] sm:$0xff]
    %v2093 = vld [vmem:[#allocation6 + $0x1c0] sm:$0xff]
    %v2094 = vld [vmem:[#allocation6 + $0x1c8] sm:$0xff]
    %v2095 = vld [vmem:[#allocation6 + $0x1d0] sm:$0xff]
    %v2096 = vld [vmem:[#allocation6 + $0x1d8] sm:$0xff]
    %v2097 = vld [vmem:[#allocation6 + $0x1e0] sm:$0xff]
    %v2098 = vld [vmem:[#allocation6 + $0x1e8] sm:$0xff]
    %v2099 = vld [vmem:[#allocation6 + $0x1f0] sm:$0xff]
    %v2100 = vld [vmem:[#allocation6 + $0x1f8] sm:$0xff]
    %v2101 = vld [vmem:[#allocation7] sm:$0x3]
    %v2103 = vlaneseq
    %v2104 = vshrl.u32 %v2103, 7
    %v2105 = vsub.s32 0, %v2104
    %v2106 = vrot.slane %v2101, %v2105
    %v2107 = vlaneseq
    %v2108 = vshrl.u32 %v2107, 7
    %v2109 = vsub.s32 1, %v2108
    %v2110 = vrot.slane %v2101, %v2109
    %v2177 = vunpack.c.l.b16 %v2037
    %v2178 = vunpack.c.h.b16 %v2037
    %v2179 = vunpack.c.l.b16 %v2038
    %v2180 = vunpack.c.h.b16 %v2038
    %v2181 = vunpack.c.l.b16 %v2039
    %v2182 = vunpack.c.h.b16 %v2039
    %v2183 = vunpack.c.l.b16 %v2040
    %v2184 = vunpack.c.h.b16 %v2040
    %v2185 = vunpack.c.l.b16 %v2041
    %v2186 = vunpack.c.h.b16 %v2041
    %v2187 = vunpack.c.l.b16 %v2042
    %v2188 = vunpack.c.h.b16 %v2042
    %v2189 = vunpack.c.l.b16 %v2043
    %v2190 = vunpack.c.h.b16 %v2043
    %v2191 = vunpack.c.l.b16 %v2044
    %v2192 = vunpack.c.h.b16 %v2044
    %v2193 = vunpack.c.l.b16 %v2045
    %v2194 = vunpack.c.h.b16 %v2045
    %v2195 = vunpack.c.l.b16 %v2046
    %v2196 = vunpack.c.h.b16 %v2046
    %v2197 = vunpack.c.l.b16 %v2047
    %v2198 = vunpack.c.h.b16 %v2047
    %v2199 = vunpack.c.l.b16 %v2048
    %v2200 = vunpack.c.h.b16 %v2048
    %v2201 = vunpack.c.l.b16 %v2049
    %v2202 = vunpack.c.h.b16 %v2049
    %v2203 = vunpack.c.l.b16 %v2050
    %v2204 = vunpack.c.h.b16 %v2050
    %v2205 = vunpack.c.l.b16 %v2051
    %v2206 = vunpack.c.h.b16 %v2051
    %v2207 = vunpack.c.l.b16 %v2052
    %v2208 = vunpack.c.h.b16 %v2052
    %v2209 = vunpack.c.l.b16 %v2053
    %v2210 = vunpack.c.h.b16 %v2053
    %v2211 = vunpack.c.l.b16 %v2054
    %v2212 = vunpack.c.h.b16 %v2054
    %v2213 = vunpack.c.l.b16 %v2055
    %v2214 = vunpack.c.h.b16 %v2055
    %v2215 = vunpack.c.l.b16 %v2056
    %v2216 = vunpack.c.h.b16 %v2056
    %v2217 = vunpack.c.l.b16 %v2057
    %v2218 = vunpack.c.h.b16 %v2057
    %v2219 = vunpack.c.l.b16 %v2058
    %v2220 = vunpack.c.h.b16 %v2058
    %v2221 = vunpack.c.l.b16 %v2059
    %v2222 = vunpack.c.h.b16 %v2059
    %v2223 = vunpack.c.l.b16 %v2060
    %v2224 = vunpack.c.h.b16 %v2060
    %v2225 = vunpack.c.l.b16 %v2061
    %v2226 = vunpack.c.h.b16 %v2061
    %v2227 = vunpack.c.l.b16 %v2062
    %v2228 = vunpack.c.h.b16 %v2062
    %v2229 = vunpack.c.l.b16 %v2063
    %v2230 = vunpack.c.h.b16 %v2063
    %v2231 = vunpack.c.l.b16 %v2064
    %v2232 = vunpack.c.h.b16 %v2064
    %v2233 = vunpack.c.l.b16 %v2065
    %v2234 = vunpack.c.h.b16 %v2065
    %v2235 = vunpack.c.l.b16 %v2066
    %v2236 = vunpack.c.h.b16 %v2066
    %v2237 = vunpack.c.l.b16 %v2067
    %v2238 = vunpack.c.h.b16 %v2067
    %v2239 = vunpack.c.l.b16 %v2068
    %v2240 = vunpack.c.h.b16 %v2068
    %v2241 = vunpack.c.l.b16 %v2069
    %v2242 = vunpack.c.h.b16 %v2069
    %v2243 = vunpack.c.l.b16 %v2070
    %v2244 = vunpack.c.h.b16 %v2070
    %v2245 = vunpack.c.l.b16 %v2071
    %v2246 = vunpack.c.h.b16 %v2071
    %v2247 = vunpack.c.l.b16 %v2072
    %v2248 = vunpack.c.h.b16 %v2072
    %v2249 = vunpack.c.l.b16 %v2073
    %v2250 = vunpack.c.h.b16 %v2073
    %v2251 = vunpack.c.l.b16 %v2074
    %v2252 = vunpack.c.h.b16 %v2074
    %v2253 = vunpack.c.l.b16 %v2075
    %v2254 = vunpack.c.h.b16 %v2075
    %v2255 = vunpack.c.l.b16 %v2076
    %v2256 = vunpack.c.h.b16 %v2076
    %v2257 = vunpack.c.l.b16 %v2077
    %v2258 = vunpack.c.h.b16 %v2077
    %v2259 = vunpack.c.l.b16 %v2078
    %v2260 = vunpack.c.h.b16 %v2078
    %v2261 = vunpack.c.l.b16 %v2079
    %v2262 = vunpack.c.h.b16 %v2079
    %v2263 = vunpack.c.l.b16 %v2080
    %v2264 = vunpack.c.h.b16 %v2080
    %v2265 = vunpack.c.l.b16 %v2081
    %v2266 = vunpack.c.h.b16 %v2081
    %v2267 = vunpack.c.l.b16 %v2082
    %v2268 = vunpack.c.h.b16 %v2082
    %v2269 = vunpack.c.l.b16 %v2083
    %v2270 = vunpack.c.h.b16 %v2083
    %v2271 = vunpack.c.l.b16 %v2084
    %v2272 = vunpack.c.h.b16 %v2084
    %v2273 = vunpack.c.l.b16 %v2085
    %v2274 = vunpack.c.h.b16 %v2085
    %v2275 = vunpack.c.l.b16 %v2086
    %v2276 = vunpack.c.h.b16 %v2086
    %v2277 = vunpack.c.l.b16 %v2087
    %v2278 = vunpack.c.h.b16 %v2087
    %v2279 = vunpack.c.l.b16 %v2088
    %v2280 = vunpack.c.h.b16 %v2088
    %v2281 = vunpack.c.l.b16 %v2089
    %v2282 = vunpack.c.h.b16 %v2089
    %v2283 = vunpack.c.l.b16 %v2090
    %v2284 = vunpack.c.h.b16 %v2090
    %v2285 = vunpack.c.l.b16 %v2091
    %v2286 = vunpack.c.h.b16 %v2091
    %v2287 = vunpack.c.l.b16 %v2092
    %v2288 = vunpack.c.h.b16 %v2092
    %v2289 = vunpack.c.l.b16 %v2093
    %v2290 = vunpack.c.h.b16 %v2093
    %v2291 = vunpack.c.l.b16 %v2094
    %v2292 = vunpack.c.h.b16 %v2094
    %v2293 = vunpack.c.l.b16 %v2095
    %v2294 = vunpack.c.h.b16 %v2095
    %v2295 = vunpack.c.l.b16 %v2096
    %v2296 = vunpack.c.h.b16 %v2096
    %v2297 = vunpack.c.l.b16 %v2097
    %v2298 = vunpack.c.h.b16 %v2097
    %v2299 = vunpack.c.l.b16 %v2098
    %v2300 = vunpack.c.h.b16 %v2098
    %v2301 = vunpack.c.l.b16 %v2099
    %v2302 = vunpack.c.h.b16 %v2099
    %v2303 = vunpack.c.l.b16 %v2100
    %v2304 = vunpack.c.h.b16 %v2100
    %v2305 = vpack.c.b16 %v2179, %v2177
    %v2306 = vpack.c.b16 %v2180, %v2178
    %v2307 = vpack.c.b16 %v2183, %v2181
    %v2308 = vpack.c.b16 %v2184, %v2182
    %v2309 = vpack.c.b16 %v2187, %v2185
    %v2310 = vpack.c.b16 %v2188, %v2186
    %v2311 = vpack.c.b16 %v2191, %v2189
    %v2312 = vpack.c.b16 %v2192, %v2190
    %v2313 = vpack.c.b16 %v2195, %v2193
    %v2314 = vpack.c.b16 %v2196, %v2194
    %v2315 = vpack.c.b16 %v2199, %v2197
    %v2316 = vpack.c.b16 %v2200, %v2198
    %v2317 = vpack.c.b16 %v2203, %v2201
    %v2318 = vpack.c.b16 %v2204, %v2202
    %v2319 = vpack.c.b16 %v2207, %v2205
    %v2320 = vpack.c.b16 %v2208, %v2206
    %v2321 = vpack.c.b16 %v2211, %v2209
    %v2322 = vpack.c.b16 %v2212, %v2210
    %v2323 = vpack.c.b16 %v2215, %v2213
    %v2324 = vpack.c.b16 %v2216, %v2214
    %v2325 = vpack.c.b16 %v2219, %v2217
    %v2326 = vpack.c.b16 %v2220, %v2218
    %v2327 = vpack.c.b16 %v2223, %v2221
    %v2328 = vpack.c.b16 %v2224, %v2222
    %v2329 = vpack.c.b16 %v2227, %v2225
    %v2330 = vpack.c.b16 %v2228, %v2226
    %v2331 = vpack.c.b16 %v2231, %v2229
    %v2332 = vpack.c.b16 %v2232, %v2230
    %v2333 = vpack.c.b16 %v2235, %v2233
    %v2334 = vpack.c.b16 %v2236, %v2234
    %v2335 = vpack.c.b16 %v2239, %v2237
    %v2336 = vpack.c.b16 %v2240, %v2238
    %v2337 = vpack.c.b16 %v2243, %v2241
    %v2338 = vpack.c.b16 %v2244, %v2242
    %v2339 = vpack.c.b16 %v2247, %v2245
    %v2340 = vpack.c.b16 %v2248, %v2246
    %v2341 = vpack.c.b16 %v2251, %v2249
    %v2342 = vpack.c.b16 %v2252, %v2250
    %v2343 = vpack.c.b16 %v2255, %v2253
    %v2344 = vpack.c.b16 %v2256, %v2254
    %v2345 = vpack.c.b16 %v2259, %v2257
    %v2346 = vpack.c.b16 %v2260, %v2258
    %v2347 = vpack.c.b16 %v2263, %v2261
    %v2348 = vpack.c.b16 %v2264, %v2262
    %v2349 = vpack.c.b16 %v2267, %v2265
    %v2350 = vpack.c.b16 %v2268, %v2266
    %v2351 = vpack.c.b16 %v2271, %v2269
    %v2352 = vpack.c.b16 %v2272, %v2270
    %v2353 = vpack.c.b16 %v2275, %v2273
    %v2354 = vpack.c.b16 %v2276, %v2274
    %v2355 = vpack.c.b16 %v2279, %v2277
    %v2356 = vpack.c.b16 %v2280, %v2278
    %v2357 = vpack.c.b16 %v2283, %v2281
    %v2358 = vpack.c.b16 %v2284, %v2282
    %v2359 = vpack.c.b16 %v2287, %v2285
    %v2360 = vpack.c.b16 %v2288, %v2286
    %v2361 = vpack.c.b16 %v2291, %v2289
    %v2362 = vpack.c.b16 %v2292, %v2290
    %v2363 = vpack.c.b16 %v2295, %v2293
    %v2364 = vpack.c.b16 %v2296, %v2294
    %v2365 = vpack.c.b16 %v2299, %v2297
    %v2366 = vpack.c.b16 %v2300, %v2298
    %v2367 = vpack.c.b16 %v2303, %v2301
    %v2368 = vpack.c.b16 %v2304, %v2302
    %2433 = vmatprep.subr.bf16.mxu0 %v2320
    %2434 = vmatpush1.bf16.msra.mxu0 %v2319
    %2435 = vmatprep.subr.bf16.mxu0 %v2318
    %2436 = vmatpush1.bf16.msra.mxu0 %v2317
    %2437 = vmatprep.subr.bf16.mxu0 %v2316
    %2438 = vmatpush1.bf16.msra.mxu0 %v2315
    %2439 = vmatprep.subr.bf16.mxu0 %v2314
    %2440 = vmatpush1.bf16.msra.mxu0 %v2313
    %2441 = vmatprep.subr.bf16.mxu0 %v2312
    %2442 = vmatpush1.bf16.msra.mxu0 %v2311
    %2443 = vmatprep.subr.bf16.mxu0 %v2310
    %2444 = vmatpush1.bf16.msra.mxu0 %v2309
    %2445 = vmatprep.subr.bf16.mxu0 %v2308
    %2446 = vmatpush1.bf16.msra.mxu0 %v2307
    %2447 = vmatprep.subr.bf16.mxu0 %v2306
    %2448 = vmatpush1.bf16.msra.mxu0 %v2305
    %2449 = vmatprep.subr.bf16.mxu0 %v2336
    %2450 = vmatpush2.bf16.msra.mxu0 %v2335
    %2451 = vmatprep.subr.bf16.mxu0 %v2334
    %2452 = vmatpush2.bf16.msra.mxu0 %v2333
    %2453 = vmatprep.subr.bf16.mxu0 %v2332
    %2454 = vmatpush2.bf16.msra.mxu0 %v2331
    %2455 = vmatprep.subr.bf16.mxu0 %v2330
    %2456 = vmatpush2.bf16.msra.mxu0 %v2329
    %2457 = vmatprep.subr.bf16.mxu0 %v2328
    %2458 = vmatpush2.bf16.msra.mxu0 %v2327
    %2459 = vmatprep.subr.bf16.mxu0 %v2326
    %2460 = vmatpush2.bf16.msra.mxu0 %v2325
    %2461 = vmatprep.subr.bf16.mxu0 %v2324
    %2462 = vmatpush2.bf16.msra.mxu0 %v2323
    %2463 = vmatprep.subr.bf16.mxu0 %v2322
    %2464 = vmatpush2.bf16.msra.mxu0 %v2321
    %2465 = vmatprep.mubr.bf16.mxu0 %v2034
    %2466 = vmatmul.mubr.bf16.gmra.mxu0 %v2033
    %v2467 = vpop.f32.mrf.mxu0
    %v2468 = vadd.f32 %v2106, %v2467
    %v2469 = vpop.f32.mrf.mxu0
    %v2470 = vadd.f32 %v2110, %v2469
    %v2471 = vpop.f32.mrf.mxu0
    %v2472 = vpop.f32.mrf.mxu0
    %2473 = vdwg.mxu0
    %2474 = vmatprep.subr.bf16.mxu0 %v2352
    %2475 = vmatpush1.bf16.msra.mxu0 %v2351
    %2476 = vmatprep.subr.bf16.mxu0 %v2350
    %2477 = vmatpush1.bf16.msra.mxu0 %v2349
    %2478 = vmatprep.subr.bf16.mxu0 %v2348
    %2479 = vmatpush1.bf16.msra.mxu0 %v2347
    %2480 = vmatprep.subr.bf16.mxu0 %v2346
    %2481 = vmatpush1.bf16.msra.mxu0 %v2345
    %2482 = vmatprep.subr.bf16.mxu0 %v2344
    %2483 = vmatpush1.bf16.msra.mxu0 %v2343
    %2484 = vmatprep.subr.bf16.mxu0 %v2342
    %2485 = vmatpush1.bf16.msra.mxu0 %v2341
    %2486 = vmatprep.subr.bf16.mxu0 %v2340
    %2487 = vmatpush1.bf16.msra.mxu0 %v2339
    %2488 = vmatprep.subr.bf16.mxu0 %v2338
    %2489 = vmatpush1.bf16.msra.mxu0 %v2337
    %2490 = vmatprep.subr.bf16.mxu0 %v2368
    %2491 = vmatpush2.bf16.msra.mxu0 %v2367
    %2492 = vmatprep.subr.bf16.mxu0 %v2366
    %2493 = vmatpush2.bf16.msra.mxu0 %v2365
    %2494 = vmatprep.subr.bf16.mxu0 %v2364
    %2495 = vmatpush2.bf16.msra.mxu0 %v2363
    %2496 = vmatprep.subr.bf16.mxu0 %v2362
    %2497 = vmatpush2.bf16.msra.mxu0 %v2361
    %2498 = vmatprep.subr.bf16.mxu0 %v2360
    %2499 = vmatpush2.bf16.msra.mxu0 %v2359
    %2500 = vmatprep.subr.bf16.mxu0 %v2358
    %2501 = vmatpush2.bf16.msra.mxu0 %v2357
    %2502 = vmatprep.subr.bf16.mxu0 %v2356
    %2503 = vmatpush2.bf16.msra.mxu0 %v2355
    %2504 = vmatprep.subr.bf16.mxu0 %v2354
    %2505 = vmatpush2.bf16.msra.mxu0 %v2353
    %2506 = vmatprep.mubr.bf16.mxu0 %v2036
    %2507 = vmatmul.mubr.bf16.gmra.mxu0 %v2035
    %v2508 = vpop.f32.mrf.mxu0
    %v2509 = vadd.f32 %v2468, %v2508
    %v2510 = vpop.f32.mrf.mxu0
    %v2511 = vadd.f32 %v2470, %v2510
    %v2512 = vpop.f32.mrf.mxu0
    %v2513 = vpop.f32.mrf.mxu0
    %2514 = vdwg.mxu0
    %v2515 = vmax.f32 %v2509, 0.0
    %v2516 = vmax.f32 %v2511, 0.0
    %v2517 = vpack.c.bf16 %v2515, %v2515
    %v2518 = vpack.c.bf16 %v2516, %v2516
    %v2519 = vld [vmem:[%s5] sm:$0xf]
    %v2520 = vld [vmem:[%s5 + $0x4] sm:$0xf]
    %v2521 = vld [vmem:[%s5 + $0x8] sm:$0xf]
    %v2522 = vld [vmem:[%s5 + $0xc] sm:$0xf]
    %v2523 = vld [vmem:[%s5 + $0x10] sm:$0xf]
    %v2524 = vld [vmem:[%s5 + $0x14] sm:$0xf]
    %v2525 = vld [vmem:[%s5 + $0x18] sm:$0xf]
    %v2526 = vld [vmem:[%s5 + $0x1c] sm:$0xf]
    %v2527 = vld [vmem:[%s5 + $0x20] sm:$0xf]
    %v2528 = vld [vmem:[%s5 + $0x24] sm:$0xf]
    %v2529 = vld [vmem:[%s5 + $0x28] sm:$0xf]
    %v2530 = vld [vmem:[%s5 + $0x2c] sm:$0xf]
    %v2531 = vld [vmem:[%s5 + $0x30] sm:$0xf]
    %v2532 = vld [vmem:[%s5 + $0x34] sm:$0xf]
    %v2533 = vld [vmem:[%s5 + $0x38] sm:$0xf]
    %v2534 = vld [vmem:[%s5 + $0x3c] sm:$0xf]
    %v2535 = vld [vmem:[%s5 + $0x40] sm:$0xf]
    %v2536 = vld [vmem:[%s5 + $0x44] sm:$0xf]
    %v2537 = vld [vmem:[%s5 + $0x48] sm:$0xf]
    %v2538 = vld [vmem:[%s5 + $0x4c] sm:$0xf]
    %v2539 = vld [vmem:[%s5 + $0x50] sm:$0xf]
    %v2540 = vld [vmem:[%s5 + $0x54] sm:$0xf]
    %v2541 = vld [vmem:[%s5 + $0x58] sm:$0xf]
    %v2542 = vld [vmem:[%s5 + $0x5c] sm:$0xf]
    %v2543 = vld [vmem:[%s5 + $0x60] sm:$0xf]
    %v2544 = vld [vmem:[%s5 + $0x64] sm:$0xf]
    %v2545 = vld [vmem:[%s5 + $0x68] sm:$0xf]
    %v2546 = vld [vmem:[%s5 + $0x6c] sm:$0xf]
    %v2547 = vld [vmem:[%s5 + $0x70] sm:$0xf]
    %v2548 = vld [vmem:[%s5 + $0x74] sm:$0xf]
    %v2549 = vld [vmem:[%s5 + $0x78] sm:$0xf]
    %v2550 = vld [vmem:[%s5 + $0x7c] sm:$0xf]
    %v2551 = vld [vmem:[#allocation9] sm:$0x1]
    %v2553 = vlaneseq
    %v2554 = vshrl.u32 %v2553, 7
    %v2555 = vsub.s32 0, %v2554
    %v2556 = vrot.slane %v2551, %v2555
    %v2590 = vunpack.c.l.b16 %v2519
    %v2591 = vunpack.c.l.b16 %v2520
    %v2592 = vunpack.c.l.b16 %v2521
    %v2593 = vunpack.c.l.b16 %v2522
    %v2594 = vunpack.c.l.b16 %v2523
    %v2595 = vunpack.c.l.b16 %v2524
    %v2596 = vunpack.c.l.b16 %v2525
    %v2597 = vunpack.c.l.b16 %v2526
    %v2598 = vunpack.c.l.b16 %v2527
    %v2599 = vunpack.c.l.b16 %v2528
    %v2600 = vunpack.c.l.b16 %v2529
    %v2601 = vunpack.c.l.b16 %v2530
    %v2602 = vunpack.c.l.b16 %v2531
    %v2603 = vunpack.c.l.b16 %v2532
    %v2604 = vunpack.c.l.b16 %v2533
    %v2605 = vunpack.c.l.b16 %v2534
    %v2606 = vunpack.c.l.b16 %v2535
    %v2607 = vunpack.c.l.b16 %v2536
    %v2608 = vunpack.c.l.b16 %v2537
    %v2609 = vunpack.c.l.b16 %v2538
    %v2610 = vunpack.c.l.b16 %v2539
    %v2611 = vunpack.c.l.b16 %v2540
    %v2612 = vunpack.c.l.b16 %v2541
    %v2613 = vunpack.c.l.b16 %v2542
    %v2614 = vunpack.c.l.b16 %v2543
    %v2615 = vunpack.c.l.b16 %v2544
    %v2616 = vunpack.c.l.b16 %v2545
    %v2617 = vunpack.c.l.b16 %v2546
    %v2618 = vunpack.c.l.b16 %v2547
    %v2619 = vunpack.c.l.b16 %v2548
    %v2620 = vunpack.c.l.b16 %v2549
    %v2621 = vunpack.c.l.b16 %v2550
    %v2622 = vpack.c.b16 %v2591, %v2590
    %v2623 = vpack.c.b16 %v2593, %v2592
    %v2624 = vpack.c.b16 %v2595, %v2594
    %v2625 = vpack.c.b16 %v2597, %v2596
    %v2626 = vpack.c.b16 %v2599, %v2598
    %v2627 = vpack.c.b16 %v2601, %v2600
    %v2628 = vpack.c.b16 %v2603, %v2602
    %v2629 = vpack.c.b16 %v2605, %v2604
    %v2630 = vpack.c.b16 %v2607, %v2606
    %v2631 = vpack.c.b16 %v2609, %v2608
    %v2632 = vpack.c.b16 %v2611, %v2610
    %v2633 = vpack.c.b16 %v2613, %v2612
    %v2634 = vpack.c.b16 %v2615, %v2614
    %v2635 = vpack.c.b16 %v2617, %v2616
    %v2636 = vpack.c.b16 %v2619, %v2618
    %v2637 = vpack.c.b16 %v2621, %v2620
    %2654 = vmatprep.subr.bf16.mxu0 0
    %2655 = vmatpush1.bf16.msra.mxu0 %v2629
    %2656 = vmatprep.subr.bf16.mxu0 0
    %2657 = vmatpush1.bf16.msra.mxu0 %v2628
    %2658 = vmatprep.subr.bf16.mxu0 0
    %2659 = vmatpush1.bf16.msra.mxu0 %v2627
    %2660 = vmatprep.subr.bf16.mxu0 0
    %2661 = vmatpush1.bf16.msra.mxu0 %v2626
    %2662 = vmatprep.subr.bf16.mxu0 0
    %2663 = vmatpush1.bf16.msra.mxu0 %v2625
    %2664 = vmatprep.subr.bf16.mxu0 0
    %2665 = vmatpush1.bf16.msra.mxu0 %v2624
    %2666 = vmatprep.subr.bf16.mxu0 0
    %2667 = vmatpush1.bf16.msra.mxu0 %v2623
    %2668 = vmatprep.subr.bf16.mxu0 0
    %2669 = vmatpush1.bf16.msra.mxu0 %v2622
    %2670 = vmatprep.subr.bf16.mxu0 0
    %2671 = vmatpush2.bf16.msra.mxu0 %v2637
    %2672 = vmatprep.subr.bf16.mxu0 0
    %2673 = vmatpush2.bf16.msra.mxu0 %v2636
    %2674 = vmatprep.subr.bf16.mxu0 0
    %2675 = vmatpush2.bf16.msra.mxu0 %v2635
    %2676 = vmatprep.subr.bf16.mxu0 0
    %2677 = vmatpush2.bf16.msra.mxu0 %v2634
    %2678 = vmatprep.subr.bf16.mxu0 0
    %2679 = vmatpush2.bf16.msra.mxu0 %v2633
    %2680 = vmatprep.subr.bf16.mxu0 0
    %2681 = vmatpush2.bf16.msra.mxu0 %v2632
    %2682 = vmatprep.subr.bf16.mxu0 0
    %2683 = vmatpush2.bf16.msra.mxu0 %v2631
    %2684 = vmatprep.subr.bf16.mxu0 0
    %2685 = vmatpush2.bf16.msra.mxu0 %v2630
    %2686 = vmatprep.mubr.bf16.mxu0 %v2518
    %2687 = vmatmul.mubr.bf16.gmra.mxu0 %v2517
    %v2688 = vpop.f32.mrf.mxu0
    %v2689 = vadd.f32 %v2556, %v2688
    %v2690 = vpop.f32.mrf.mxu0
    %v2691 = vpop.f32.mrf.mxu0
    %v2692 = vpop.f32.mrf.mxu0
    %2693 = vdwg.mxu0
    %vm2694 = vcmask 66560
    %2695 = vst.msk [vmem:[%s7] sm:$0x3] %vm2694, %v2689
    // Predicated region
    $region50: #{pointnet_densecls.5} parent=1 // pred_check
      _
    $region51: #{pointnet_densecls.5} parent=1 // pred_check_branch
      %2697 = sbr.rel (0) target = $region53
    $region52: #{pointnet_densecls.5} parent=1 // pred_region
      _
    $region53: #{pointnet_densecls.5} parent=1 // pred_fallthru
      _
    // Predicated region
    $region54: #{pointnet_densecls.5} parent=1 // pred_check
      _
    $region55: #{pointnet_densecls.5} parent=1 // pred_check_branch
      %2699 = sbr.rel (0) target = $region57
    $region56: #{pointnet_densecls.5} parent=1 // pred_region
      _
    $region57: #{pointnet_densecls.5} parent=1 // pred_fallthru
      _
    %2700 = vsyncpa [#allocation3], 1
    %2701 = vsyncpa [#allocation5], 1
    %2702 = vsyncpa [#allocation8], 1

// kernel: pointnet_densecls.7
$region0: #{pointnet_densecls.7}
  #allocation0 [shape = 'u32[]', space=smem, size = 0x4, offset = 0x4, fixed_abs, tag = 'smem constant byte address 0x4 - core index']
  #allocation1 [shape = 'u32[144,128]{1,0:T(1,128)}', space=vmem, size = 0x12000, scoped, tag = 'internal scratch']
  %s0 = inlined_call_operand.vmem [shape: bf16[2,256,64], index: 0, kind: input, shape index: {}]
  %s1 = inlined_call_operand.vmem [shape: f32[2,1,512], index: 1, kind: input, shape index: {}]
  %s2 = inlined_call_operand.vmem [shape: bf16[64,512], index: 2, kind: input, shape index: {}]
  %s3 = inlined_call_operand.vmem [shape: bf16[512,256], index: 3, kind: input, shape index: {}]
  %s4 = inlined_call_operand.vmem [shape: f32[1,256], index: 4, kind: input, shape index: {}]
  %s5 = inlined_call_operand.vmem [shape: bf16[256,128], index: 5, kind: input, shape index: {}]
  %s6 = inlined_call_operand.vmem [shape: f32[1,128], index: 6, kind: input, shape index: {}]
  %s7 = inlined_call_operand.vmem [shape: bf16[128,2], index: 7, kind: input, shape index: {}]
  %s8 = inlined_call_operand.vmem [shape: f32[1,2], index: 8, kind: input, shape index: {}]
  %s9 = inlined_call_operand.vmem [shape: f32[2,256,2], index: 9, kind: output, shape index: {}]
  %s10 = sld [smem:[#allocation0]]
  $region69: #{pointnet_densecls.7} parent=0
    _
  %s12 = ssub.s32 1, %s10
  %s13 = scalar_select 0, %s12, %s10
  loop: start=0, step=1, limit=6
  $region2: #{pointnet_densecls.7} parent=0 // loop_pre_header
    _
  $region3: #{pointnet_densecls.7} parent=0 // loop_header
    %s15 = sphi 0, %s19
    %p16 = scmp.ge.s32.totalorder %s15, 6
    %s22 = sphi 0, %s34
    %s23 = sphi 0, %s30
    %s24 = sphi 0, %s22
    %s25 = sphi 0, %s23
    %s26 = sphi 0, %s24
    %s27 = sphi 0, %s25
    %s39 = sphi 0, %s41
    %s42 = sphi 0, %s39
    %s43 = sphi 0, %s42
    %s59 = sphi 0, %s43
    %s65 = sphi 0, %s67
    %s68 = sphi 0, %s65
    %s69 = sphi 0, %s68
    %s85 = sphi 0, %s69
    %s89 = sphi 0, %s89
    %s91 = sphi 0, %s89
    %s92 = sphi 0, %s91
    %s106 = sphi 0, %s92
    %s110 = sphi 0, %s110
    %s112 = sphi 0, %s110
    %s113 = sphi 0, %s112
    %s127 = sphi 0, %s113
    %s131 = sphi 0, %s131
    %s133 = sphi 0, %s131
    %s134 = sphi 0, %s133
    %s148 = sphi 0, %s134
    %s152 = sphi 0, %s152
    %s154 = sphi 0, %s152
    %s155 = sphi 0, %s154
    %s169 = sphi 0, %s155
    %s173 = sphi 0, %s173
    %s175 = sphi 0, %s173
    %s176 = sphi 0, %s175
    %s190 = sphi 0, %s176
    %s194 = sphi 0, %s194
    %s196 = sphi 0, %s194
    %s197 = sphi 0, %s196
    %s211 = sphi 0, %s197
    %s215 = sphi 0, %s215
    %s217 = sphi 0, %s215
    %s218 = sphi 0, %s217
    %s232 = sphi 0, %s218
    %s240 = sphi 0, %s242
    %s243 = sphi 0, %s240
    %s244 = sphi 0, %s243
    %s260 = sphi 0, %s244
  $region4: #{pointnet_densecls.7} parent=0 // loop_header_branch
    %18 = sbr.rel (%p16) target = $region8
  $region5: #{pointnet_densecls.7} parent=0 // loop_body
    %s20 = ssub.s32 %s15, 1
    %s21 = ssub.s32 %s15, 2
    %s28 = sadd.s32 1, %s23
    %p29 = scmp.ge.s32.totalorder %s28, 2
    %s30 = scalar_select %p29, 0, %s28
    %s31 = sadd.s32 1, %s22
    %s32 = scalar_select %p29, %s31, %s22
    %p33 = scmp.ge.s32.totalorder %s32, 2
    %s34 = scalar_select %p33, 0, %s32
    %s35 = ssub.s32 %s22, %s34
    %s36 = ssub.s32 %s23, %s30
    %s37 = sor.u32 %s35, %s36
    %p38 = scmp.eq.s32.totalorder %s37, 0
    %s40 = sadd.s32 %s39, 1
    %s41 = scalar_select %p38, %s39, %s40
    %p44 = pneg %p38
    %p45 = scmp.eq.s32.totalorder %s15, 3
    %p46 = por %p44, %p45
    %p47 = scmp.ne.s32.totalorder %s39, %s42
    %p48 = scmp.eq.s32.totalorder %s15, 0
    %p49 = por %p47, %p48
    %p50 = scmp.ne.s32.totalorder %s39, %s42
    %p51 = scmp.eq.s32.totalorder %s20, 3
    %p52 = por %p50, %p51
    %p53 = scmp.ne.s32.totalorder %s42, %s43
    %p54 = scmp.eq.s32.totalorder %s20, 0
    %p55 = por %p53, %p54
    %p56 = scmp.ne.s32.totalorder %s42, %s43
    %p57 = scmp.eq.s32.totalorder %s21, 3
    %p58 = por %p56, %p57
    %p60 = scmp.ne.s32.totalorder %s43, %s59
    %p61 = scmp.eq.s32.totalorder %s21, 0
    %p62 = por %p60, %p61
    %s63 = ssub.s32 %s22, %s34
    %p64 = scmp.eq.s32.totalorder %s63, 0
    %s66 = sadd.s32 %s65, 1
    %s67 = scalar_select %p64, %s65, %s66
    %p70 = pneg %p64
    %p71 = scmp.eq.s32.totalorder %s15, 3
    %p72 = por %p70, %p71
    %p73 = scmp.ne.s32.totalorder %s65, %s68
    %p74 = scmp.eq.s32.totalorder %s15, 0
    %p75 = por %p73, %p74
    %p76 = scmp.ne.s32.totalorder %s65, %s68
    %p77 = scmp.eq.s32.totalorder %s20, 3
    %p78 = por %p76, %p77
    %p79 = scmp.ne.s32.totalorder %s68, %s69
    %p80 = scmp.eq.s32.totalorder %s20, 0
    %p81 = por %p79, %p80
    %p82 = scmp.ne.s32.totalorder %s68, %s69
    %p83 = scmp.eq.s32.totalorder %s21, 3
    %p84 = por %p82, %p83
    %p86 = scmp.ne.s32.totalorder %s69, %s85
    %p87 = scmp.eq.s32.totalorder %s21, 0
    %p88 = por %p86, %p87
    %s90 = sadd.s32 %s89, 1
    %p93 = scmp.eq.s32.totalorder %s15, 3
    %p94 = scmp.ne.s32.totalorder %s89, %s91
    %p95 = scmp.eq.s32.totalorder %s15, 0
    %p96 = por %p94, %p95
    %p97 = scmp.ne.s32.totalorder %s89, %s91
    %p98 = scmp.eq.s32.totalorder %s20, 3
    %p99 = por %p97, %p98
    %p100 = scmp.ne.s32.totalorder %s91, %s92
    %p101 = scmp.eq.s32.totalorder %s20, 0
    %p102 = por %p100, %p101
    %p103 = scmp.ne.s32.totalorder %s91, %s92
    %p104 = scmp.eq.s32.totalorder %s21, 3
    %p105 = por %p103, %p104
    %p107 = scmp.ne.s32.totalorder %s92, %s106
    %p108 = scmp.eq.s32.totalorder %s21, 0
    %p109 = por %p107, %p108
    %s111 = sadd.s32 %s110, 1
    %p114 = scmp.eq.s32.totalorder %s15, 3
    %p115 = scmp.ne.s32.totalorder %s110, %s112
    %p116 = scmp.eq.s32.totalorder %s15, 0
    %p117 = por %p115, %p116
    %p118 = scmp.ne.s32.totalorder %s110, %s112
    %p119 = scmp.eq.s32.totalorder %s20, 3
    %p120 = por %p118, %p119
    %p121 = scmp.ne.s32.totalorder %s112, %s113
    %p122 = scmp.eq.s32.totalorder %s20, 0
    %p123 = por %p121, %p122
    %p124 = scmp.ne.s32.totalorder %s112, %s113
    %p125 = scmp.eq.s32.totalorder %s21, 3
    %p126 = por %p124, %p125
    %p128 = scmp.ne.s32.totalorder %s113, %s127
    %p129 = scmp.eq.s32.totalorder %s21, 0
    %p130 = por %p128, %p129
    %s132 = sadd.s32 %s131, 1
    %p135 = scmp.eq.s32.totalorder %s15, 3
    %p136 = scmp.ne.s32.totalorder %s131, %s133
    %p137 = scmp.eq.s32.totalorder %s15, 0
    %p138 = por %p136, %p137
    %p139 = scmp.ne.s32.totalorder %s131, %s133
    %p140 = scmp.eq.s32.totalorder %s20, 3
    %p141 = por %p139, %p140
    %p142 = scmp.ne.s32.totalorder %s133, %s134
    %p143 = scmp.eq.s32.totalorder %s20, 0
    %p144 = por %p142, %p143
    %p145 = scmp.ne.s32.totalorder %s133, %s134
    %p146 = scmp.eq.s32.totalorder %s21, 3
    %p147 = por %p145, %p146
    %p149 = scmp.ne.s32.totalorder %s134, %s148
    %p150 = scmp.eq.s32.totalorder %s21, 0
    %p151 = por %p149, %p150
    %s153 = sadd.s32 %s152, 1
    %p156 = scmp.eq.s32.totalorder %s15, 3
    %p157 = scmp.ne.s32.totalorder %s152, %s154
    %p158 = scmp.eq.s32.totalorder %s15, 0
    %p159 = por %p157, %p158
    %p160 = scmp.ne.s32.totalorder %s152, %s154
    %p161 = scmp.eq.s32.totalorder %s20, 3
    %p162 = por %p160, %p161
    %p163 = scmp.ne.s32.totalorder %s154, %s155
    %p164 = scmp.eq.s32.totalorder %s20, 0
    %p165 = por %p163, %p164
    %p166 = scmp.ne.s32.totalorder %s154, %s155
    %p167 = scmp.eq.s32.totalorder %s21, 3
    %p168 = por %p166, %p167
    %p170 = scmp.ne.s32.totalorder %s155, %s169
    %p171 = scmp.eq.s32.totalorder %s21, 0
    %p172 = por %p170, %p171
    %s174 = sadd.s32 %s173, 1
    %p177 = scmp.eq.s32.totalorder %s15, 3
    %p178 = scmp.ne.s32.totalorder %s173, %s175
    %p179 = scmp.eq.s32.totalorder %s15, 0
    %p180 = por %p178, %p179
    %p181 = scmp.ne.s32.totalorder %s173, %s175
    %p182 = scmp.eq.s32.totalorder %s20, 3
    %p183 = por %p181, %p182
    %p184 = scmp.ne.s32.totalorder %s175, %s176
    %p185 = scmp.eq.s32.totalorder %s20, 0
    %p186 = por %p184, %p185
    %p187 = scmp.ne.s32.totalorder %s175, %s176
    %p188 = scmp.eq.s32.totalorder %s21, 3
    %p189 = por %p187, %p188
    %p191 = scmp.ne.s32.totalorder %s176, %s190
    %p192 = scmp.eq.s32.totalorder %s21, 0
    %p193 = por %p191, %p192
    %s195 = sadd.s32 %s194, 1
    %p198 = scmp.eq.s32.totalorder %s15, 3
    %p199 = scmp.ne.s32.totalorder %s194, %s196
    %p200 = scmp.eq.s32.totalorder %s15, 0
    %p201 = por %p199, %p200
    %p202 = scmp.ne.s32.totalorder %s194, %s196
    %p203 = scmp.eq.s32.totalorder %s20, 3
    %p204 = por %p202, %p203
    %p205 = scmp.ne.s32.totalorder %s196, %s197
    %p206 = scmp.eq.s32.totalorder %s20, 0
    %p207 = por %p205, %p206
    %p208 = scmp.ne.s32.totalorder %s196, %s197
    %p209 = scmp.eq.s32.totalorder %s21, 3
    %p210 = por %p208, %p209
    %p212 = scmp.ne.s32.totalorder %s197, %s211
    %p213 = scmp.eq.s32.totalorder %s21, 0
    %p214 = por %p212, %p213
    %s216 = sadd.s32 %s215, 1
    %p219 = scmp.eq.s32.totalorder %s15, 3
    %p220 = scmp.ne.s32.totalorder %s215, %s217
    %p221 = scmp.eq.s32.totalorder %s15, 0
    %p222 = por %p220, %p221
    %p223 = scmp.ne.s32.totalorder %s215, %s217
    %p224 = scmp.eq.s32.totalorder %s20, 3
    %p225 = por %p223, %p224
    %p226 = scmp.ne.s32.totalorder %s217, %s218
    %p227 = scmp.eq.s32.totalorder %s20, 0
    %p228 = por %p226, %p227
    %p229 = scmp.ne.s32.totalorder %s217, %s218
    %p230 = scmp.eq.s32.totalorder %s21, 3
    %p231 = por %p229, %p230
    %p233 = scmp.ne.s32.totalorder %s218, %s232
    %p234 = scmp.eq.s32.totalorder %s21, 0
    %p235 = por %p233, %p234
    %s236 = ssub.s32 %s22, %s34
    %s237 = ssub.s32 %s23, %s30
    %s238 = sor.u32 %s236, %s237
    %p239 = scmp.eq.s32.totalorder %s238, 0
    %s241 = sadd.s32 %s240, 1
    %s242 = scalar_select %p239, %s240, %s241
    %p245 = pneg %p239
    %p246 = scmp.eq.s32.totalorder %s15, 3
    %p247 = por %p245, %p246
    %p248 = scmp.ne.s32.totalorder %s240, %s243
    %p249 = scmp.eq.s32.totalorder %s15, 0
    %p250 = por %p248, %p249
    %p251 = scmp.ne.s32.totalorder %s240, %s243
    %p252 = scmp.eq.s32.totalorder %s20, 3
    %p253 = por %p251, %p252
    %p254 = scmp.ne.s32.totalorder %s243, %s244
    %p255 = scmp.eq.s32.totalorder %s20, 0
    %p256 = por %p254, %p255
    %p257 = scmp.ne.s32.totalorder %s243, %s244
    %p258 = scmp.eq.s32.totalorder %s21, 3
    %p259 = por %p257, %p258
    %p261 = scmp.ne.s32.totalorder %s244, %s260
    %p262 = scmp.eq.s32.totalorder %s21, 0
    %p263 = por %p261, %p262
    %p264 = scmp.le.s32.totalorder 1, %s15
    %p265 = scmp.lt.s32.totalorder %s15, 5
    %p266 = pnand %p264, %p265
    %p267 = pneg %p266
    // Predicated region
    $region9: #{pointnet_densecls.7} parent=5 // pred_check
      _
    $region10: #{pointnet_densecls.7} parent=5 // pred_check_branch
      %269 = sbr.rel (%p266) target = $region12
    $region11: #{pointnet_densecls.7} parent=5 // pred_region
      %s270 = ssub.s32 %s15, 1
      // Predicated region
      $region13: #{pointnet_densecls.7} parent=11 // pred_check
        %p271 = pneg %p102
      $region14: #{pointnet_densecls.7} parent=11 // pred_check_branch
        %273 = sbr.rel (%p271) target = $region16
      $region15: #{pointnet_densecls.7} parent=11 // pred_region
        _
      $region16: #{pointnet_densecls.7} parent=11 // pred_fallthru
        _
      // Predicated region
      $region17: #{pointnet_densecls.7} parent=11 // pred_check
        %p274 = pneg %p123
      $region18: #{pointnet_densecls.7} parent=11 // pred_check_branch
        %276 = sbr.rel (%p274) target = $region20
      $region19: #{pointnet_densecls.7} parent=11 // pred_region
        _
      $region20: #{pointnet_densecls.7} parent=11 // pred_fallthru
        _
      // Predicated region
      $region21: #{pointnet_densecls.7} parent=11 // pred_check
        %p277 = pneg %p144
      $region22: #{pointnet_densecls.7} parent=11 // pred_check_branch
        %279 = sbr.rel (%p277) target = $region24
      $region23: #{pointnet_densecls.7} parent=11 // pred_region
        _
      $region24: #{pointnet_densecls.7} parent=11 // pred_fallthru
        _
      // Predicated region
      $region25: #{pointnet_densecls.7} parent=11 // pred_check
        %p280 = pneg %p165
      $region26: #{pointnet_densecls.7} parent=11 // pred_check_branch
        %282 = sbr.rel (%p280) target = $region28
      $region27: #{pointnet_densecls.7} parent=11 // pred_region
        _
      $region28: #{pointnet_densecls.7} parent=11 // pred_fallthru
        _
      // Predicated region
      $region29: #{pointnet_densecls.7} parent=11 // pred_check
        %p283 = pneg %p186
      $region30: #{pointnet_densecls.7} parent=11 // pred_check_branch
        %285 = sbr.rel (%p283) target = $region32
      $region31: #{pointnet_densecls.7} parent=11 // pred_region
        _
      $region32: #{pointnet_densecls.7} parent=11 // pred_fallthru
        _
      // Predicated region
      $region33: #{pointnet_densecls.7} parent=11 // pred_check
        %p286 = pneg %p207
      $region34: #{pointnet_densecls.7} parent=11 // pred_check_branch
        %288 = sbr.rel (%p286) target = $region36
      $region35: #{pointnet_densecls.7} parent=11 // pred_region
        _
      $region36: #{pointnet_densecls.7} parent=11 // pred_fallthru
        _
      // Predicated region
      $region37: #{pointnet_densecls.7} parent=11 // pred_check
        %p289 = pneg %p228
      $region38: #{pointnet_densecls.7} parent=11 // pred_check_branch
        %291 = sbr.rel (%p289) target = $region40
      $region39: #{pointnet_densecls.7} parent=11 // pred_region
        _
      $region40: #{pointnet_densecls.7} parent=11 // pred_fallthru
        _
    $region12: #{pointnet_densecls.7} parent=5 // pred_fallthru
      _
    %p292 = scmp.lt.s32.totalorder %s15, 4
    // Predicated region
    $region41: #{pointnet_densecls.7} parent=5 // pred_check
      %p293 = pneg %p292
    $region42: #{pointnet_densecls.7} parent=5 // pred_check_branch
      %295 = sbr.rel (%p293) target = $region44
    $region43: #{pointnet_densecls.7} parent=5 // pred_region
      // Predicated region
      $region45: #{pointnet_densecls.7} parent=43 // pred_check
        %p296 = pneg %p49
      $region46: #{pointnet_densecls.7} parent=43 // pred_check_branch
        %298 = sbr.rel (%p296) target = $region48
      $region47: #{pointnet_densecls.7} parent=43 // pred_region
        %s299 = smul.u32 16, %s23
        %p300 = scmp.lt.s32.totalorder %s22, 1
        %s301 = scalar_select %p300, %s22, 1
        %p302 = scmp.lt.s32.totalorder %s299, 31
        %s303 = scalar_select %p302, %s299, 31
        %s304 = smul.addr %s301, 32
        %s305 = sadd.s32 %s303, %s304
        %s306 = smul.addr %s305, 4
        %s307 = scalar_lea.vmem %s0, %s306
        %s308 = smul.u32 16, %s23
      $region48: #{pointnet_densecls.7} parent=43 // pred_fallthru
        _
      // Predicated region
      $region49: #{pointnet_densecls.7} parent=43 // pred_check
        %p309 = pneg %p75
      $region50: #{pointnet_densecls.7} parent=43 // pred_check_branch
        %311 = sbr.rel (%p309) target = $region52
      $region51: #{pointnet_densecls.7} parent=43 // pred_region
        %p312 = scmp.lt.s32.totalorder %s22, 1
        %s313 = scalar_select %p312, %s22, 1
        %s314 = smul.addr %s313, 4
        %s315 = scalar_lea.vmem %s1, %s314
      $region52: #{pointnet_densecls.7} parent=43 // pred_fallthru
        _
    $region44: #{pointnet_densecls.7} parent=5 // pred_fallthru
      _
    %p316 = scmp.le.s32.totalorder 1, %s15
    %p317 = scmp.lt.s32.totalorder %s15, 5
    %p318 = pnand %p316, %p317
    %p319 = pneg %p318
    // Predicated region
    $region53: #{pointnet_densecls.7} parent=5 // pred_check
      _
    $region54: #{pointnet_densecls.7} parent=5 // pred_check_branch
      %321 = sbr.rel (%p318) target = $region56
    $region55: #{pointnet_densecls.7} parent=5 // pred_region
      %s322 = ssub.s32 %s15, 1
      %s323 = smul.u32 16, %s25
      %p324 = scmp.lt.s32.totalorder %s24, 1
      %s325 = scalar_select %p324, %s24, 1
      %p326 = scmp.lt.s32.totalorder %s323, 31
      %s327 = scalar_select %p326, %s323, 31
      %s328 = smul.addr %s325, 32
      %s329 = sadd.s32 %s327, %s328
      %s330 = smul.addr %s329, 4
      %s331 = scalar_lea.vmem %s0, %s330
      %p332 = pneg %p55
      %p333 = pneg %p52
      %p334 = scmp.lt.s32.totalorder %s24, 1
      %s335 = scalar_select %p334, %s24, 1
      %s336 = smul.addr %s335, 4
      %s337 = scalar_lea.vmem %s1, %s336
      %p338 = pneg %p81
      %p339 = pneg %p78
      %p340 = pneg %p102
      %p341 = pneg %p99
      %p342 = pneg %p123
      %p343 = pneg %p120
      %p344 = pneg %p144
      %p345 = pneg %p141
      %p346 = pneg %p165
      %p347 = pneg %p162
      %p348 = pneg %p186
      %p349 = pneg %p183
      %p350 = pneg %p207
      %p351 = pneg %p204
      %p352 = pneg %p228
      %p353 = pneg %p225
      %p354 = pneg %p256
      %p355 = pneg %p253
      %s356 = smul.u32 16, %s25
      %p357 = scmp.lt.s32.totalorder %s24, 1
      %s358 = scalar_select %p357, %s24, 1
      %p359 = scmp.lt.s32.totalorder %s356, 31
      %s360 = scalar_select %p359, %s356, 31
      %s361 = smul.addr %s358, 32
      %s362 = sadd.s32 %s360, %s361
      %s363 = smul.addr %s362, 8
      %s364 = scalar_lea.vmem %s9, %s363
      %s365 = smul.u32 16, %s25
      %p366 = scmp.lt.s32.totalorder %s24, 1
      %s367 = scalar_select %p366, %s24, 1
      %p368 = scmp.lt.s32.totalorder %s365, 31
      %s369 = scalar_select %p368, %s365, 31
      %s370 = smul.addr %s367, 32
      %s371 = sadd.s32 %s369, %s370
      %s372 = smul.addr %s371, 4
      %s373 = scalar_lea.vmem %s0, %s372
      %s374 = smul.u32 16, %s25
      %p375 = scmp.lt.s32.totalorder %s24, 1
      %s376 = scalar_select %p375, %s24, 1
      %s377 = smul.addr %s376, 4
      %s378 = scalar_lea.vmem %s1, %s377
      %s379 = smul.u32 16, %s25
      %p380 = scmp.lt.s32.totalorder %s24, 1
      %s381 = scalar_select %p380, %s24, 1
      %p382 = scmp.lt.s32.totalorder %s379, 31
      %s383 = scalar_select %p382, %s379, 31
      %s384 = smul.addr %s381, 32
      %s385 = sadd.s32 %s383, %s384
      %s386 = smul.addr %s385, 8
      %s387 = scalar_lea.vmem %s9, %s386
      %s388 = smul.u32 16, %s25
      %v390 = vld [vmem:[%s373] sm:$0xf]
      %v391 = vld [vmem:[%s373 + $0x4] sm:$0xf]
      %v392 = vld [vmem:[%s373 + $0x8] sm:$0xf]
      %v393 = vld [vmem:[%s373 + $0xc] sm:$0xf]
      %v394 = vld [vmem:[%s373 + $0x10] sm:$0xf]
      %v395 = vld [vmem:[%s373 + $0x14] sm:$0xf]
      %v396 = vld [vmem:[%s373 + $0x18] sm:$0xf]
      %v397 = vld [vmem:[%s373 + $0x1c] sm:$0xf]
      %v398 = vld [vmem:[%s373 + $0x20] sm:$0xf]
      %v399 = vld [vmem:[%s373 + $0x24] sm:$0xf]
      %v400 = vld [vmem:[%s373 + $0x28] sm:$0xf]
      %v401 = vld [vmem:[%s373 + $0x2c] sm:$0xf]
      %v402 = vld [vmem:[%s373 + $0x30] sm:$0xf]
      %v403 = vld [vmem:[%s373 + $0x34] sm:$0xf]
      %v404 = vld [vmem:[%s373 + $0x38] sm:$0xf]
      %v405 = vld [vmem:[%s373 + $0x3c] sm:$0xf]
      %v406 = vld [vmem:[%s2] sm:$0xff]
      %v407 = vld [vmem:[%s2 + $0x8] sm:$0xff]
      %v408 = vld [vmem:[%s2 + $0x10] sm:$0xff]
      %v409 = vld [vmem:[%s2 + $0x18] sm:$0xff]
      %v410 = vld [vmem:[%s2 + $0x20] sm:$0xff]
      %v411 = vld [vmem:[%s2 + $0x28] sm:$0xff]
      %v412 = vld [vmem:[%s2 + $0x30] sm:$0xff]
      %v413 = vld [vmem:[%s2 + $0x38] sm:$0xff]
      %v414 = vld [vmem:[%s2 + $0x40] sm:$0xff]
      %v415 = vld [vmem:[%s2 + $0x48] sm:$0xff]
      %v416 = vld [vmem:[%s2 + $0x50] sm:$0xff]
      %v417 = vld [vmem:[%s2 + $0x58] sm:$0xff]
      %v418 = vld [vmem:[%s2 + $0x60] sm:$0xff]
      %v419 = vld [vmem:[%s2 + $0x68] sm:$0xff]
      %v420 = vld [vmem:[%s2 + $0x70] sm:$0xff]
      %v421 = vld [vmem:[%s2 + $0x78] sm:$0xff]
      %v422 = vld [vmem:[%s378] sm:$0xf]
      %v424 = vlaneseq
      %v425 = vshrl.u32 %v424, 7
      %v426 = vsub.s32 0, %v425
      %v427 = vrot.slane %v422, %v426
      %v428 = vlaneseq
      %v429 = vshrl.u32 %v428, 7
      %v430 = vsub.s32 1, %v429
      %v431 = vrot.slane %v422, %v430
      %v432 = vlaneseq
      %v433 = vshrl.u32 %v432, 7
      %v434 = vsub.s32 2, %v433
      %v435 = vrot.slane %v422, %v434
      %v436 = vlaneseq
      %v437 = vshrl.u32 %v436, 7
      %v438 = vsub.s32 3, %v437
      %v439 = vrot.slane %v422, %v438
      %v460 = vunpack.c.l.b16 %v390
      %v461 = vunpack.c.l.b16 %v391
      %v462 = vunpack.c.l.b16 %v392
      %v463 = vunpack.c.l.b16 %v393
      %v464 = vunpack.c.l.b16 %v394
      %v465 = vunpack.c.l.b16 %v395
      %v466 = vunpack.c.l.b16 %v396
      %v467 = vunpack.c.l.b16 %v397
      %v468 = vunpack.c.l.b16 %v398
      %v469 = vunpack.c.l.b16 %v399
      %v470 = vunpack.c.l.b16 %v400
      %v471 = vunpack.c.l.b16 %v401
      %v472 = vunpack.c.l.b16 %v402
      %v473 = vunpack.c.l.b16 %v403
      %v474 = vunpack.c.l.b16 %v404
      %v475 = vunpack.c.l.b16 %v405
      %v476 = vpack.c.b16 %v461, %v460
      %v477 = vpack.c.b16 %v463, %v462
      %v478 = vpack.c.b16 %v465, %v464
      %v479 = vpack.c.b16 %v467, %v466
      %v480 = vpack.c.b16 %v469, %v468
      %v481 = vpack.c.b16 %v471, %v470
      %v482 = vpack.c.b16 %v473, %v472
      %v483 = vpack.c.b16 %v475, %v474
      %v500 = vunpack.c.l.b16 %v406
      %v501 = vunpack.c.h.b16 %v406
      %v502 = vunpack.c.l.b16 %v407
      %v503 = vunpack.c.h.b16 %v407
      %v504 = vunpack.c.l.b16 %v408
      %v505 = vunpack.c.h.b16 %v408
      %v506 = vunpack.c.l.b16 %v409
      %v507 = vunpack.c.h.b16 %v409
      %v508 = vunpack.c.l.b16 %v410
      %v509 = vunpack.c.h.b16 %v410
      %v510 = vunpack.c.l.b16 %v411
      %v511 = vunpack.c.h.b16 %v411
      %v512 = vunpack.c.l.b16 %v412
      %v513 = vunpack.c.h.b16 %v412
      %v514 = vunpack.c.l.b16 %v413
      %v515 = vunpack.c.h.b16 %v413
      %v516 = vunpack.c.l.b16 %v414
      %v517 = vunpack.c.h.b16 %v414
      %v518 = vunpack.c.l.b16 %v415
      %v519 = vunpack.c.h.b16 %v415
      %v520 = vunpack.c.l.b16 %v416
      %v521 = vunpack.c.h.b16 %v416
      %v522 = vunpack.c.l.b16 %v417
      %v523 = vunpack.c.h.b16 %v417
      %v524 = vunpack.c.l.b16 %v418
      %v525 = vunpack.c.h.b16 %v418
      %v526 = vunpack.c.l.b16 %v419
      %v527 = vunpack.c.h.b16 %v419
      %v528 = vunpack.c.l.b16 %v420
      %v529 = vunpack.c.h.b16 %v420
      %v530 = vunpack.c.l.b16 %v421
      %v531 = vunpack.c.h.b16 %v421
      %v532 = vpack.c.b16 %v504, %v500
      %v533 = vpack.c.b16 %v505, %v501
      %v534 = vpack.c.b16 %v506, %v502
      %v535 = vpack.c.b16 %v507, %v503
      %v536 = vpack.c.b16 %v512, %v508
      %v537 = vpack.c.b16 %v513, %v509
      %v538 = vpack.c.b16 %v514, %v510
      %v539 = vpack.c.b16 %v515, %v511
      %v540 = vpack.c.b16 %v520, %v516
      %v541 = vpack.c.b16 %v521, %v517
      %v542 = vpack.c.b16 %v522, %v518
      %v543 = vpack.c.b16 %v523, %v519
      %v544 = vpack.c.b16 %v528, %v524
      %v545 = vpack.c.b16 %v529, %v525
      %v546 = vpack.c.b16 %v530, %v526
      %v547 = vpack.c.b16 %v531, %v527
      %vm564 = vcmask 523264
      %v566 = vsel %vm564, %v476, 0
      %v569 = vsel %vm564, %v477, 0
      %v572 = vsel %vm564, %v478, 0
      %v575 = vsel %vm564, %v479, 0
      %v578 = vsel %vm564, %v480, 0
      %v581 = vsel %vm564, %v481, 0
      %v584 = vsel %vm564, %v482, 0
      %v587 = vsel %vm564, %v483, 0
      %589 = vmatprep.subr.bf16.mxu0 0
      %590 = vmatpush1.bf16.msra.mxu0 0
      %591 = vmatprep.subr.bf16.mxu0 0
      %592 = vmatpush1.bf16.msra.mxu0 0
      %593 = vmatprep.subr.bf16.mxu0 0
      %594 = vmatpush1.bf16.msra.mxu0 0
      %595 = vmatprep.subr.bf16.mxu0 0
      %596 = vmatpush1.bf16.msra.mxu0 0
      %597 = vmatprep.subr.bf16.mxu0 %v545
      %598 = vmatpush1.bf16.msra.mxu0 %v544
      %599 = vmatprep.subr.bf16.mxu0 %v541
      %600 = vmatpush1.bf16.msra.mxu0 %v540
      %601 = vmatprep.subr.bf16.mxu0 %v537
      %602 = vmatpush1.bf16.msra.mxu0 %v536
      %603 = vmatprep.subr.bf16.mxu0 %v533
      %604 = vmatpush1.bf16.msra.mxu0 %v532
      %605 = vmatprep.subr.bf16.mxu0 0
      %606 = vmatpush2.bf16.msra.mxu0 0
      %607 = vmatprep.subr.bf16.mxu0 0
      %608 = vmatpush2.bf16.msra.mxu0 0
      %609 = vmatprep.subr.bf16.mxu0 0
      %610 = vmatpush2.bf16.msra.mxu0 0
      %611 = vmatprep.subr.bf16.mxu0 0
      %612 = vmatpush2.bf16.msra.mxu0 0
      %613 = vmatprep.subr.bf16.mxu0 0
      %614 = vmatpush2.bf16.msra.mxu0 0
      %615 = vmatprep.subr.bf16.mxu0 0
      %616 = vmatpush2.bf16.msra.mxu0 0
      %617 = vmatprep.subr.bf16.mxu0 0
      %618 = vmatpush2.bf16.msra.mxu0 0
      %619 = vmatprep.subr.bf16.mxu0 0
      %620 = vmatpush2.bf16.msra.mxu0 0
      %621 = vmatprep.mubr.bf16.mxu0 0
      %622 = vmatmul.mubr.bf16.gmra.mxu0 %v566
      %v623 = vpop.f32.mrf.mxu0
      %v624 = vadd.f32 %v427, %v623
      %v625 = vpop.f32.mrf.mxu0
      %v626 = vadd.f32 %v431, %v625
      %v627 = vpop.f32.mrf.mxu0
      %v628 = vadd.f32 %v427, %v627
      %v629 = vpop.f32.mrf.mxu0
      %v630 = vadd.f32 %v431, %v629
      %631 = vmatprep.mubr.bf16.mxu0 0
      %632 = vmatmul.mubr.bf16.gmra.mxu0 %v569
      %v633 = vpop.f32.mrf.mxu0
      %v634 = vadd.f32 %v427, %v633
      %v635 = vpop.f32.mrf.mxu0
      %v636 = vadd.f32 %v431, %v635
      %v637 = vpop.f32.mrf.mxu0
      %v638 = vadd.f32 %v427, %v637
      %v639 = vpop.f32.mrf.mxu0
      %v640 = vadd.f32 %v431, %v639
      %641 = vmatprep.mubr.bf16.mxu0 0
      %642 = vmatmul.mubr.bf16.gmra.mxu0 %v572
      %v643 = vpop.f32.mrf.mxu0
      %v644 = vadd.f32 %v427, %v643
      %v645 = vpop.f32.mrf.mxu0
      %v646 = vadd.f32 %v431, %v645
      %v647 = vpop.f32.mrf.mxu0
      %v648 = vadd.f32 %v427, %v647
      %v649 = vpop.f32.mrf.mxu0
      %v650 = vadd.f32 %v431, %v649
      %651 = vmatprep.mubr.bf16.mxu0 0
      %652 = vmatmul.mubr.bf16.gmra.mxu0 %v575
      %v653 = vpop.f32.mrf.mxu0
      %v654 = vadd.f32 %v427, %v653
      %v655 = vpop.f32.mrf.mxu0
      %v656 = vadd.f32 %v431, %v655
      %v657 = vpop.f32.mrf.mxu0
      %v658 = vadd.f32 %v427, %v657
      %v659 = vpop.f32.mrf.mxu0
      %v660 = vadd.f32 %v431, %v659
      %661 = vmatprep.mubr.bf16.mxu0 0
      %662 = vmatmul.mubr.bf16.gmra.mxu0 %v578
      %v663 = vpop.f32.mrf.mxu0
      %v664 = vadd.f32 %v427, %v663
      %v665 = vpop.f32.mrf.mxu0
      %v666 = vadd.f32 %v431, %v665
      %v667 = vpop.f32.mrf.mxu0
      %v668 = vadd.f32 %v427, %v667
      %v669 = vpop.f32.mrf.mxu0
      %v670 = vadd.f32 %v431, %v669
      %671 = vmatprep.mubr.bf16.mxu0 0
      %672 = vmatmul.mubr.bf16.gmra.mxu0 %v581
      %v673 = vpop.f32.mrf.mxu0
      %v674 = vadd.f32 %v427, %v673
      %v675 = vpop.f32.mrf.mxu0
      %v676 = vadd.f32 %v431, %v675
      %v677 = vpop.f32.mrf.mxu0
      %v678 = vadd.f32 %v427, %v677
      %v679 = vpop.f32.mrf.mxu0
      %v680 = vadd.f32 %v431, %v679
      %681 = vmatprep.mubr.bf16.mxu0 0
      %682 = vmatmul.mubr.bf16.gmra.mxu0 %v584
      %v683 = vpop.f32.mrf.mxu0
      %v684 = vadd.f32 %v427, %v683
      %v685 = vpop.f32.mrf.mxu0
      %v686 = vadd.f32 %v431, %v685
      %v687 = vpop.f32.mrf.mxu0
      %v688 = vadd.f32 %v427, %v687
      %v689 = vpop.f32.mrf.mxu0
      %v690 = vadd.f32 %v431, %v689
      %691 = vmatprep.mubr.bf16.mxu0 0
      %692 = vmatmul.mubr.bf16.gmra.mxu0 %v587
      %v693 = vpop.f32.mrf.mxu0
      %v694 = vadd.f32 %v427, %v693
      %v695 = vpop.f32.mrf.mxu0
      %v696 = vadd.f32 %v431, %v695
      %v697 = vpop.f32.mrf.mxu0
      %v698 = vadd.f32 %v427, %v697
      %v699 = vpop.f32.mrf.mxu0
      %v700 = vadd.f32 %v431, %v699
      %701 = vdwg.mxu0
      %702 = vmatprep.subr.bf16.mxu0 0
      %703 = vmatpush1.bf16.msra.mxu0 0
      %704 = vmatprep.subr.bf16.mxu0 0
      %705 = vmatpush1.bf16.msra.mxu0 0
      %706 = vmatprep.subr.bf16.mxu0 0
      %707 = vmatpush1.bf16.msra.mxu0 0
      %708 = vmatprep.subr.bf16.mxu0 0
      %709 = vmatpush1.bf16.msra.mxu0 0
      %710 = vmatprep.subr.bf16.mxu0 %v547
      %711 = vmatpush1.bf16.msra.mxu0 %v546
      %712 = vmatprep.subr.bf16.mxu0 %v543
      %713 = vmatpush1.bf16.msra.mxu0 %v542
      %714 = vmatprep.subr.bf16.mxu0 %v539
      %715 = vmatpush1.bf16.msra.mxu0 %v538
      %716 = vmatprep.subr.bf16.mxu0 %v535
      %717 = vmatpush1.bf16.msra.mxu0 %v534
      %718 = vmatprep.subr.bf16.mxu0 0
      %719 = vmatpush2.bf16.msra.mxu0 0
      %720 = vmatprep.subr.bf16.mxu0 0
      %721 = vmatpush2.bf16.msra.mxu0 0
      %722 = vmatprep.subr.bf16.mxu0 0
      %723 = vmatpush2.bf16.msra.mxu0 0
      %724 = vmatprep.subr.bf16.mxu0 0
      %725 = vmatpush2.bf16.msra.mxu0 0
      %726 = vmatprep.subr.bf16.mxu0 0
      %727 = vmatpush2.bf16.msra.mxu0 0
      %728 = vmatprep.subr.bf16.mxu0 0
      %729 = vmatpush2.bf16.msra.mxu0 0
      %730 = vmatprep.subr.bf16.mxu0 0
      %731 = vmatpush2.bf16.msra.mxu0 0
      %732 = vmatprep.subr.bf16.mxu0 0
      %733 = vmatpush2.bf16.msra.mxu0 0
      %734 = vmatprep.mubr.bf16.mxu0 0
      %735 = vmatmul.mubr.bf16.gmra.mxu0 %v566
      %v736 = vpop.f32.mrf.mxu0
      %v737 = vadd.f32 %v435, %v736
      %v738 = vpop.f32.mrf.mxu0
      %v739 = vadd.f32 %v439, %v738
      %v740 = vpop.f32.mrf.mxu0
      %v741 = vadd.f32 %v435, %v740
      %v742 = vpop.f32.mrf.mxu0
      %v743 = vadd.f32 %v439, %v742
      %744 = vmatprep.mubr.bf16.mxu0 0
      %745 = vmatmul.mubr.bf16.gmra.mxu0 %v569
      %v746 = vpop.f32.mrf.mxu0
      %v747 = vadd.f32 %v435, %v746
      %v748 = vpop.f32.mrf.mxu0
      %v749 = vadd.f32 %v439, %v748
      %v750 = vpop.f32.mrf.mxu0
      %v751 = vadd.f32 %v435, %v750
      %v752 = vpop.f32.mrf.mxu0
      %v753 = vadd.f32 %v439, %v752
      %754 = vmatprep.mubr.bf16.mxu0 0
      %755 = vmatmul.mubr.bf16.gmra.mxu0 %v572
      %v756 = vpop.f32.mrf.mxu0
      %v757 = vadd.f32 %v435, %v756
      %v758 = vpop.f32.mrf.mxu0
      %v759 = vadd.f32 %v439, %v758
      %v760 = vpop.f32.mrf.mxu0
      %v761 = vadd.f32 %v435, %v760
      %v762 = vpop.f32.mrf.mxu0
      %v763 = vadd.f32 %v439, %v762
      %764 = vmatprep.mubr.bf16.mxu0 0
      %765 = vmatmul.mubr.bf16.gmra.mxu0 %v575
      %v766 = vpop.f32.mrf.mxu0
      %v767 = vadd.f32 %v435, %v766
      %v768 = vpop.f32.mrf.mxu0
      %v769 = vadd.f32 %v439, %v768
      %v770 = vpop.f32.mrf.mxu0
      %v771 = vadd.f32 %v435, %v770
      %v772 = vpop.f32.mrf.mxu0
      %v773 = vadd.f32 %v439, %v772
      %774 = vmatprep.mubr.bf16.mxu0 0
      %775 = vmatmul.mubr.bf16.gmra.mxu0 %v578
      %v776 = vpop.f32.mrf.mxu0
      %v777 = vadd.f32 %v435, %v776
      %v778 = vpop.f32.mrf.mxu0
      %v779 = vadd.f32 %v439, %v778
      %v780 = vpop.f32.mrf.mxu0
      %v781 = vadd.f32 %v435, %v780
      %v782 = vpop.f32.mrf.mxu0
      %v783 = vadd.f32 %v439, %v782
      %784 = vmatprep.mubr.bf16.mxu0 0
      %785 = vmatmul.mubr.bf16.gmra.mxu0 %v581
      %v786 = vpop.f32.mrf.mxu0
      %v787 = vadd.f32 %v435, %v786
      %v788 = vpop.f32.mrf.mxu0
      %v789 = vadd.f32 %v439, %v788
      %v790 = vpop.f32.mrf.mxu0
      %v791 = vadd.f32 %v435, %v790
      %v792 = vpop.f32.mrf.mxu0
      %v793 = vadd.f32 %v439, %v792
      %794 = vmatprep.mubr.bf16.mxu0 0
      %795 = vmatmul.mubr.bf16.gmra.mxu0 %v584
      %v796 = vpop.f32.mrf.mxu0
      %v797 = vadd.f32 %v435, %v796
      %v798 = vpop.f32.mrf.mxu0
      %v799 = vadd.f32 %v439, %v798
      %v800 = vpop.f32.mrf.mxu0
      %v801 = vadd.f32 %v435, %v800
      %v802 = vpop.f32.mrf.mxu0
      %v803 = vadd.f32 %v439, %v802
      %804 = vmatprep.mubr.bf16.mxu0 0
      %805 = vmatmul.mubr.bf16.gmra.mxu0 %v587
      %v806 = vpop.f32.mrf.mxu0
      %v807 = vadd.f32 %v435, %v806
      %v808 = vpop.f32.mrf.mxu0
      %v809 = vadd.f32 %v439, %v808
      %v810 = vpop.f32.mrf.mxu0
      %v811 = vadd.f32 %v435, %v810
      %v812 = vpop.f32.mrf.mxu0
      %v813 = vadd.f32 %v439, %v812
      %814 = vdwg.mxu0
      %v815 = vmax.f32 %v624, 0.0
      %v816 = vmax.f32 %v626, 0.0
      %v817 = vmax.f32 %v737, 0.0
      %v818 = vmax.f32 %v739, 0.0
      %v819 = vmax.f32 %v628, 0.0
      %v820 = vmax.f32 %v630, 0.0
      %v821 = vmax.f32 %v741, 0.0
      %v822 = vmax.f32 %v743, 0.0
      %v823 = vmax.f32 %v634, 0.0
      %v824 = vmax.f32 %v636, 0.0
      %v825 = vmax.f32 %v747, 0.0
      %v826 = vmax.f32 %v749, 0.0
      %v827 = vmax.f32 %v638, 0.0
      %v828 = vmax.f32 %v640, 0.0
      %v829 = vmax.f32 %v751, 0.0
      %v830 = vmax.f32 %v753, 0.0
      %v831 = vmax.f32 %v644, 0.0
      %v832 = vmax.f32 %v646, 0.0
      %v833 = vmax.f32 %v757, 0.0
      %v834 = vmax.f32 %v759, 0.0
      %v835 = vmax.f32 %v648, 0.0
      %v836 = vmax.f32 %v650, 0.0
      %v837 = vmax.f32 %v761, 0.0
      %v838 = vmax.f32 %v763, 0.0
      %v839 = vmax.f32 %v654, 0.0
      %v840 = vmax.f32 %v656, 0.0
      %v841 = vmax.f32 %v767, 0.0
      %v842 = vmax.f32 %v769, 0.0
      %v843 = vmax.f32 %v658, 0.0
      %v844 = vmax.f32 %v660, 0.0
      %v845 = vmax.f32 %v771, 0.0
      %v846 = vmax.f32 %v773, 0.0
      %v847 = vmax.f32 %v664, 0.0
      %v848 = vmax.f32 %v666, 0.0
      %v849 = vmax.f32 %v777, 0.0
      %v850 = vmax.f32 %v779, 0.0
      %v851 = vmax.f32 %v668, 0.0
      %v852 = vmax.f32 %v670, 0.0
      %v853 = vmax.f32 %v781, 0.0
      %v854 = vmax.f32 %v783, 0.0
      %v855 = vmax.f32 %v674, 0.0
      %v856 = vmax.f32 %v676, 0.0
      %v857 = vmax.f32 %v787, 0.0
      %v858 = vmax.f32 %v789, 0.0
      %v859 = vmax.f32 %v678, 0.0
      %v860 = vmax.f32 %v680, 0.0
      %v861 = vmax.f32 %v791, 0.0
      %v862 = vmax.f32 %v793, 0.0
      %v863 = vmax.f32 %v684, 0.0
      %v864 = vmax.f32 %v686, 0.0
      %v865 = vmax.f32 %v797, 0.0
      %v866 = vmax.f32 %v799, 0.0
      %v867 = vmax.f32 %v688, 0.0
      %v868 = vmax.f32 %v690, 0.0
      %v869 = vmax.f32 %v801, 0.0
      %v870 = vmax.f32 %v803, 0.0
      %v871 = vmax.f32 %v694, 0.0
      %v872 = vmax.f32 %v696, 0.0
      %v873 = vmax.f32 %v807, 0.0
      %v874 = vmax.f32 %v809, 0.0
      %v875 = vmax.f32 %v698, 0.0
      %v876 = vmax.f32 %v700, 0.0
      %v877 = vmax.f32 %v811, 0.0
      %v878 = vmax.f32 %v813, 0.0
      %v879 = vpack.c.bf16 %v819, %v815
      %v880 = vpack.c.bf16 %v820, %v816
      %v881 = vpack.c.bf16 %v821, %v817
      %v882 = vpack.c.bf16 %v822, %v818
      %v883 = vpack.c.bf16 %v827, %v823
      %v884 = vpack.c.bf16 %v828, %v824
      %v885 = vpack.c.bf16 %v829, %v825
      %v886 = vpack.c.bf16 %v830, %v826
      %v887 = vpack.c.bf16 %v835, %v831
      %v888 = vpack.c.bf16 %v836, %v832
      %v889 = vpack.c.bf16 %v837, %v833
      %v890 = vpack.c.bf16 %v838, %v834
      %v891 = vpack.c.bf16 %v843, %v839
      %v892 = vpack.c.bf16 %v844, %v840
      %v893 = vpack.c.bf16 %v845, %v841
      %v894 = vpack.c.bf16 %v846, %v842
      %v895 = vpack.c.bf16 %v851, %v847
      %v896 = vpack.c.bf16 %v852, %v848
      %v897 = vpack.c.bf16 %v853, %v849
      %v898 = vpack.c.bf16 %v854, %v850
      %v899 = vpack.c.bf16 %v859, %v855
      %v900 = vpack.c.bf16 %v860, %v856
      %v901 = vpack.c.bf16 %v861, %v857
      %v902 = vpack.c.bf16 %v862, %v858
      %v903 = vpack.c.bf16 %v867, %v863
      %v904 = vpack.c.bf16 %v868, %v864
      %v905 = vpack.c.bf16 %v869, %v865
      %v906 = vpack.c.bf16 %v870, %v866
      %v907 = vpack.c.bf16 %v875, %v871
      %v908 = vpack.c.bf16 %v876, %v872
      %v909 = vpack.c.bf16 %v877, %v873
      %v910 = vpack.c.bf16 %v878, %v874
      %v911 = vld [vmem:[%s3] sm:$0xff]
      %v912 = vld [vmem:[%s3 + $0x8] sm:$0xff]
      %v913 = vld [vmem:[%s3 + $0x10] sm:$0xff]
      %v914 = vld [vmem:[%s3 + $0x18] sm:$0xff]
      %v915 = vld [vmem:[%s3 + $0x20] sm:$0xff]
      %v916 = vld [vmem:[%s3 + $0x28] sm:$0xff]
      %v917 = vld [vmem:[%s3 + $0x30] sm:$0xff]
      %v918 = vld [vmem:[%s3 + $0x38] sm:$0xff]
      %v919 = vld [vmem:[%s3 + $0x40] sm:$0xff]
      %v920 = vld [vmem:[%s3 + $0x48] sm:$0xff]
      %v921 = vld [vmem:[%s3 + $0x50] sm:$0xff]
      %v922 = vld [vmem:[%s3 + $0x58] sm:$0xff]
      %v923 = vld [vmem:[%s3 + $0x60] sm:$0xff]
      %v924 = vld [vmem:[%s3 + $0x68] sm:$0xff]
      %v925 = vld [vmem:[%s3 + $0x70] sm:$0xff]
      %v926 = vld [vmem:[%s3 + $0x78] sm:$0xff]
      %v927 = vld [vmem:[%s3 + $0x80] sm:$0xff]
      %v928 = vld [vmem:[%s3 + $0x88] sm:$0xff]
      %v929 = vld [vmem:[%s3 + $0x90] sm:$0xff]
      %v930 = vld [vmem:[%s3 + $0x98] sm:$0xff]
      %v931 = vld [vmem:[%s3 + $0xa0] sm:$0xff]
      %v932 = vld [vmem:[%s3 + $0xa8] sm:$0xff]
      %v933 = vld [vmem:[%s3 + $0xb0] sm:$0xff]
      %v934 = vld [vmem:[%s3 + $0xb8] sm:$0xff]
      %v935 = vld [vmem:[%s3 + $0xc0] sm:$0xff]
      %v936 = vld [vmem:[%s3 + $0xc8] sm:$0xff]
      %v937 = vld [vmem:[%s3 + $0xd0] sm:$0xff]
      %v938 = vld [vmem:[%s3 + $0xd8] sm:$0xff]
      %v939 = vld [vmem:[%s3 + $0xe0] sm:$0xff]
      %v940 = vld [vmem:[%s3 + $0xe8] sm:$0xff]
      %v941 = vld [vmem:[%s3 + $0xf0] sm:$0xff]
      %v942 = vld [vmem:[%s3 + $0xf8] sm:$0xff]
      %v943 = vld [vmem:[%s3 + $0x100] sm:$0xff]
      %v944 = vld [vmem:[%s3 + $0x108] sm:$0xff]
      %v945 = vld [vmem:[%s3 + $0x110] sm:$0xff]
      %v946 = vld [vmem:[%s3 + $0x118] sm:$0xff]
      %v947 = vld [vmem:[%s3 + $0x120] sm:$0xff]
      %v948 = vld [vmem:[%s3 + $0x128] sm:$0xff]
      %v949 = vld [vmem:[%s3 + $0x130] sm:$0xff]
      %v950 = vld [vmem:[%s3 + $0x138] sm:$0xff]
      %v951 = vld [vmem:[%s3 + $0x140] sm:$0xff]
      %v952 = vld [vmem:[%s3 + $0x148] sm:$0xff]
      %v953 = vld [vmem:[%s3 + $0x150] sm:$0xff]
      %v954 = vld [vmem:[%s3 + $0x158] sm:$0xff]
      %v955 = vld [vmem:[%s3 + $0x160] sm:$0xff]
      %v956 = vld [vmem:[%s3 + $0x168] sm:$0xff]
      %v957 = vld [vmem:[%s3 + $0x170] sm:$0xff]
      %v958 = vld [vmem:[%s3 + $0x178] sm:$0xff]
      %v959 = vld [vmem:[%s3 + $0x180] sm:$0xff]
      %v960 = vld [vmem:[%s3 + $0x188] sm:$0xff]
      %v961 = vld [vmem:[%s3 + $0x190] sm:$0xff]
      %v962 = vld [vmem:[%s3 + $0x198] sm:$0xff]
      %v963 = vld [vmem:[%s3 + $0x1a0] sm:$0xff]
      %v964 = vld [vmem:[%s3 + $0x1a8] sm:$0xff]
      %v965 = vld [vmem:[%s3 + $0x1b0] sm:$0xff]
      %v966 = vld [vmem:[%s3 + $0x1b8] sm:$0xff]
      %v967 = vld [vmem:[%s3 + $0x1c0] sm:$0xff]
      %v968 = vld [vmem:[%s3 + $0x1c8] sm:$0xff]
      %v969 = vld [vmem:[%s3 + $0x1d0] sm:$0xff]
      %v970 = vld [vmem:[%s3 + $0x1d8] sm:$0xff]
      %v971 = vld [vmem:[%s3 + $0x1e0] sm:$0xff]
      %v972 = vld [vmem:[%s3 + $0x1e8] sm:$0xff]
      %v973 = vld [vmem:[%s3 + $0x1f0] sm:$0xff]
      %v974 = vld [vmem:[%s3 + $0x1f8] sm:$0xff]
      %v975 = vld [vmem:[%s4] sm:$0x3]
      %v977 = vlaneseq
      %v978 = vshrl.u32 %v977, 7
      %v979 = vsub.s32 0, %v978
      %v980 = vrot.slane %v975, %v979
      %v981 = vlaneseq
      %v982 = vshrl.u32 %v981, 7
      %v983 = vsub.s32 1, %v982
      %v984 = vrot.slane %v975, %v983
      %v1051 = vunpack.c.l.b16 %v911
      %v1052 = vunpack.c.h.b16 %v911
      %v1053 = vunpack.c.l.b16 %v912
      %v1054 = vunpack.c.h.b16 %v912
      %v1055 = vunpack.c.l.b16 %v913
      %v1056 = vunpack.c.h.b16 %v913
      %v1057 = vunpack.c.l.b16 %v914
      %v1058 = vunpack.c.h.b16 %v914
      %v1059 = vunpack.c.l.b16 %v915
      %v1060 = vunpack.c.h.b16 %v915
      %v1061 = vunpack.c.l.b16 %v916
      %v1062 = vunpack.c.h.b16 %v916
      %v1063 = vunpack.c.l.b16 %v917
      %v1064 = vunpack.c.h.b16 %v917
      %v1065 = vunpack.c.l.b16 %v918
      %v1066 = vunpack.c.h.b16 %v918
      %v1067 = vunpack.c.l.b16 %v919
      %v1068 = vunpack.c.h.b16 %v919
      %v1069 = vunpack.c.l.b16 %v920
      %v1070 = vunpack.c.h.b16 %v920
      %v1071 = vunpack.c.l.b16 %v921
      %v1072 = vunpack.c.h.b16 %v921
      %v1073 = vunpack.c.l.b16 %v922
      %v1074 = vunpack.c.h.b16 %v922
      %v1075 = vunpack.c.l.b16 %v923
      %v1076 = vunpack.c.h.b16 %v923
      %v1077 = vunpack.c.l.b16 %v924
      %v1078 = vunpack.c.h.b16 %v924
      %v1079 = vunpack.c.l.b16 %v925
      %v1080 = vunpack.c.h.b16 %v925
      %v1081 = vunpack.c.l.b16 %v926
      %v1082 = vunpack.c.h.b16 %v926
      %v1083 = vunpack.c.l.b16 %v927
      %v1084 = vunpack.c.h.b16 %v927
      %v1085 = vunpack.c.l.b16 %v928
      %v1086 = vunpack.c.h.b16 %v928
      %v1087 = vunpack.c.l.b16 %v929
      %v1088 = vunpack.c.h.b16 %v929
      %v1089 = vunpack.c.l.b16 %v930
      %v1090 = vunpack.c.h.b16 %v930
      %v1091 = vunpack.c.l.b16 %v931
      %v1092 = vunpack.c.h.b16 %v931
      %v1093 = vunpack.c.l.b16 %v932
      %v1094 = vunpack.c.h.b16 %v932
      %v1095 = vunpack.c.l.b16 %v933
      %v1096 = vunpack.c.h.b16 %v933
      %v1097 = vunpack.c.l.b16 %v934
      %v1098 = vunpack.c.h.b16 %v934
      %v1099 = vunpack.c.l.b16 %v935
      %v1100 = vunpack.c.h.b16 %v935
      %v1101 = vunpack.c.l.b16 %v936
      %v1102 = vunpack.c.h.b16 %v936
      %v1103 = vunpack.c.l.b16 %v937
      %v1104 = vunpack.c.h.b16 %v937
      %v1105 = vunpack.c.l.b16 %v938
      %v1106 = vunpack.c.h.b16 %v938
      %v1107 = vunpack.c.l.b16 %v939
      %v1108 = vunpack.c.h.b16 %v939
      %v1109 = vunpack.c.l.b16 %v940
      %v1110 = vunpack.c.h.b16 %v940
      %v1111 = vunpack.c.l.b16 %v941
      %v1112 = vunpack.c.h.b16 %v941
      %v1113 = vunpack.c.l.b16 %v942
      %v1114 = vunpack.c.h.b16 %v942
      %v1115 = vunpack.c.l.b16 %v943
      %v1116 = vunpack.c.h.b16 %v943
      %v1117 = vunpack.c.l.b16 %v944
      %v1118 = vunpack.c.h.b16 %v944
      %v1119 = vunpack.c.l.b16 %v945
      %v1120 = vunpack.c.h.b16 %v945
      %v1121 = vunpack.c.l.b16 %v946
      %v1122 = vunpack.c.h.b16 %v946
      %v1123 = vunpack.c.l.b16 %v947
      %v1124 = vunpack.c.h.b16 %v947
      %v1125 = vunpack.c.l.b16 %v948
      %v1126 = vunpack.c.h.b16 %v948
      %v1127 = vunpack.c.l.b16 %v949
      %v1128 = vunpack.c.h.b16 %v949
      %v1129 = vunpack.c.l.b16 %v950
      %v1130 = vunpack.c.h.b16 %v950
      %v1131 = vunpack.c.l.b16 %v951
      %v1132 = vunpack.c.h.b16 %v951
      %v1133 = vunpack.c.l.b16 %v952
      %v1134 = vunpack.c.h.b16 %v952
      %v1135 = vunpack.c.l.b16 %v953
      %v1136 = vunpack.c.h.b16 %v953
      %v1137 = vunpack.c.l.b16 %v954
      %v1138 = vunpack.c.h.b16 %v954
      %v1139 = vunpack.c.l.b16 %v955
      %v1140 = vunpack.c.h.b16 %v955
      %v1141 = vunpack.c.l.b16 %v956
      %v1142 = vunpack.c.h.b16 %v956
      %v1143 = vunpack.c.l.b16 %v957
      %v1144 = vunpack.c.h.b16 %v957
      %v1145 = vunpack.c.l.b16 %v958
      %v1146 = vunpack.c.h.b16 %v958
      %v1147 = vunpack.c.l.b16 %v959
      %v1148 = vunpack.c.h.b16 %v959
      %v1149 = vunpack.c.l.b16 %v960
      %v1150 = vunpack.c.h.b16 %v960
      %v1151 = vunpack.c.l.b16 %v961
      %v1152 = vunpack.c.h.b16 %v961
      %v1153 = vunpack.c.l.b16 %v962
      %v1154 = vunpack.c.h.b16 %v962
      %v1155 = vunpack.c.l.b16 %v963
      %v1156 = vunpack.c.h.b16 %v963
      %v1157 = vunpack.c.l.b16 %v964
      %v1158 = vunpack.c.h.b16 %v964
      %v1159 = vunpack.c.l.b16 %v965
      %v1160 = vunpack.c.h.b16 %v965
      %v1161 = vunpack.c.l.b16 %v966
      %v1162 = vunpack.c.h.b16 %v966
      %v1163 = vunpack.c.l.b16 %v967
      %v1164 = vunpack.c.h.b16 %v967
      %v1165 = vunpack.c.l.b16 %v968
      %v1166 = vunpack.c.h.b16 %v968
      %v1167 = vunpack.c.l.b16 %v969
      %v1168 = vunpack.c.h.b16 %v969
      %v1169 = vunpack.c.l.b16 %v970
      %v1170 = vunpack.c.h.b16 %v970
      %v1171 = vunpack.c.l.b16 %v971
      %v1172 = vunpack.c.h.b16 %v971
      %v1173 = vunpack.c.l.b16 %v972
      %v1174 = vunpack.c.h.b16 %v972
      %v1175 = vunpack.c.l.b16 %v973
      %v1176 = vunpack.c.h.b16 %v973
      %v1177 = vunpack.c.l.b16 %v974
      %v1178 = vunpack.c.h.b16 %v974
      %v1179 = vpack.c.b16 %v1053, %v1051
      %v1180 = vpack.c.b16 %v1054, %v1052
      %v1181 = vpack.c.b16 %v1057, %v1055
      %v1182 = vpack.c.b16 %v1058, %v1056
      %v1183 = vpack.c.b16 %v1061, %v1059
      %v1184 = vpack.c.b16 %v1062, %v1060
      %v1185 = vpack.c.b16 %v1065, %v1063
      %v1186 = vpack.c.b16 %v1066, %v1064
      %v1187 = vpack.c.b16 %v1069, %v1067
      %v1188 = vpack.c.b16 %v1070, %v1068
      %v1189 = vpack.c.b16 %v1073, %v1071
      %v1190 = vpack.c.b16 %v1074, %v1072
      %v1191 = vpack.c.b16 %v1077, %v1075
      %v1192 = vpack.c.b16 %v1078, %v1076
      %v1193 = vpack.c.b16 %v1081, %v1079
      %v1194 = vpack.c.b16 %v1082, %v1080
      %v1195 = vpack.c.b16 %v1085, %v1083
      %v1196 = vpack.c.b16 %v1086, %v1084
      %v1197 = vpack.c.b16 %v1089, %v1087
      %v1198 = vpack.c.b16 %v1090, %v1088
      %v1199 = vpack.c.b16 %v1093, %v1091
      %v1200 = vpack.c.b16 %v1094, %v1092
      %v1201 = vpack.c.b16 %v1097, %v1095
      %v1202 = vpack.c.b16 %v1098, %v1096
      %v1203 = vpack.c.b16 %v1101, %v1099
      %v1204 = vpack.c.b16 %v1102, %v1100
      %v1205 = vpack.c.b16 %v1105, %v1103
      %v1206 = vpack.c.b16 %v1106, %v1104
      %v1207 = vpack.c.b16 %v1109, %v1107
      %v1208 = vpack.c.b16 %v1110, %v1108
      %v1209 = vpack.c.b16 %v1113, %v1111
      %v1210 = vpack.c.b16 %v1114, %v1112
      %v1211 = vpack.c.b16 %v1117, %v1115
      %v1212 = vpack.c.b16 %v1118, %v1116
      %v1213 = vpack.c.b16 %v1121, %v1119
      %v1214 = vpack.c.b16 %v1122, %v1120
      %v1215 = vpack.c.b16 %v1125, %v1123
      %v1216 = vpack.c.b16 %v1126, %v1124
      %v1217 = vpack.c.b16 %v1129, %v1127
      %v1218 = vpack.c.b16 %v1130, %v1128
      %v1219 = vpack.c.b16 %v1133, %v1131
      %v1220 = vpack.c.b16 %v1134, %v1132
      %v1221 = vpack.c.b16 %v1137, %v1135
      %v1222 = vpack.c.b16 %v1138, %v1136
      %v1223 = vpack.c.b16 %v1141, %v1139
      %v1224 = vpack.c.b16 %v1142, %v1140
      %v1225 = vpack.c.b16 %v1145, %v1143
      %v1226 = vpack.c.b16 %v1146, %v1144
      %v1227 = vpack.c.b16 %v1149, %v1147
      %v1228 = vpack.c.b16 %v1150, %v1148
      %v1229 = vpack.c.b16 %v1153, %v1151
      %v1230 = vpack.c.b16 %v1154, %v1152
      %v1231 = vpack.c.b16 %v1157, %v1155
      %v1232 = vpack.c.b16 %v1158, %v1156
      %v1233 = vpack.c.b16 %v1161, %v1159
      %v1234 = vpack.c.b16 %v1162, %v1160
      %v1235 = vpack.c.b16 %v1165, %v1163
      %v1236 = vpack.c.b16 %v1166, %v1164
      %v1237 = vpack.c.b16 %v1169, %v1167
      %v1238 = vpack.c.b16 %v1170, %v1168
      %v1239 = vpack.c.b16 %v1173, %v1171
      %v1240 = vpack.c.b16 %v1174, %v1172
      %v1241 = vpack.c.b16 %v1177, %v1175
      %v1242 = vpack.c.b16 %v1178, %v1176
      %1307 = vmatprep.subr.bf16.mxu0 %v1194
      %1308 = vmatpush1.bf16.msra.mxu0 %v1193
      %1309 = vmatprep.subr.bf16.mxu0 %v1192
      %1310 = vmatpush1.bf16.msra.mxu0 %v1191
      %1311 = vmatprep.subr.bf16.mxu0 %v1190
      %1312 = vmatpush1.bf16.msra.mxu0 %v1189
      %1313 = vmatprep.subr.bf16.mxu0 %v1188
      %1314 = vmatpush1.bf16.msra.mxu0 %v1187
      %1315 = vmatprep.subr.bf16.mxu0 %v1186
      %1316 = vmatpush1.bf16.msra.mxu0 %v1185
      %1317 = vmatprep.subr.bf16.mxu0 %v1184
      %1318 = vmatpush1.bf16.msra.mxu0 %v1183
      %1319 = vmatprep.subr.bf16.mxu0 %v1182
      %1320 = vmatpush1.bf16.msra.mxu0 %v1181
      %1321 = vmatprep.subr.bf16.mxu0 %v1180
      %1322 = vmatpush1.bf16.msra.mxu0 %v1179
      %1323 = vmatprep.subr.bf16.mxu0 %v1210
      %1324 = vmatpush2.bf16.msra.mxu0 %v1209
      %1325 = vmatprep.subr.bf16.mxu0 %v1208
      %1326 = vmatpush2.bf16.msra.mxu0 %v1207
      %1327 = vmatprep.subr.bf16.mxu0 %v1206
      %1328 = vmatpush2.bf16.msra.mxu0 %v1205
      %1329 = vmatprep.subr.bf16.mxu0 %v1204
      %1330 = vmatpush2.bf16.msra.mxu0 %v1203
      %1331 = vmatprep.subr.bf16.mxu0 %v1202
      %1332 = vmatpush2.bf16.msra.mxu0 %v1201
      %1333 = vmatprep.subr.bf16.mxu0 %v1200
      %1334 = vmatpush2.bf16.msra.mxu0 %v1199
      %1335 = vmatprep.subr.bf16.mxu0 %v1198
      %1336 = vmatpush2.bf16.msra.mxu0 %v1197
      %1337 = vmatprep.subr.bf16.mxu0 %v1196
      %1338 = vmatpush2.bf16.msra.mxu0 %v1195
      %1339 = vmatprep.mubr.bf16.mxu0 %v880
      %1340 = vmatmul.mubr.bf16.gmra.mxu0 %v879
      %v1341 = vpop.f32.mrf.mxu0
      %v1342 = vadd.f32 %v980, %v1341
      %v1343 = vpop.f32.mrf.mxu0
      %v1344 = vadd.f32 %v984, %v1343
      %v1345 = vpop.f32.mrf.mxu0
      %v1346 = vadd.f32 %v980, %v1345
      %v1347 = vpop.f32.mrf.mxu0
      %v1348 = vadd.f32 %v984, %v1347
      %1349 = vmatprep.mubr.bf16.mxu0 %v884
      %1350 = vmatmul.mubr.bf16.gmra.mxu0 %v883
      %v1351 = vpop.f32.mrf.mxu0
      %v1352 = vadd.f32 %v980, %v1351
      %v1353 = vpop.f32.mrf.mxu0
      %v1354 = vadd.f32 %v984, %v1353
      %v1355 = vpop.f32.mrf.mxu0
      %v1356 = vadd.f32 %v980, %v1355
      %v1357 = vpop.f32.mrf.mxu0
      %v1358 = vadd.f32 %v984, %v1357
      %1359 = vmatprep.mubr.bf16.mxu0 %v888
      %1360 = vmatmul.mubr.bf16.gmra.mxu0 %v887
      %v1361 = vpop.f32.mrf.mxu0
      %v1362 = vadd.f32 %v980, %v1361
      %v1363 = vpop.f32.mrf.mxu0
      %v1364 = vadd.f32 %v984, %v1363
      %v1365 = vpop.f32.mrf.mxu0
      %v1366 = vadd.f32 %v980, %v1365
      %v1367 = vpop.f32.mrf.mxu0
      %v1368 = vadd.f32 %v984, %v1367
      %1369 = vmatprep.mubr.bf16.mxu0 %v892
      %1370 = vmatmul.mubr.bf16.gmra.mxu0 %v891
      %v1371 = vpop.f32.mrf.mxu0
      %v1372 = vadd.f32 %v980, %v1371
      %v1373 = vpop.f32.mrf.mxu0
      %v1374 = vadd.f32 %v984, %v1373
      %v1375 = vpop.f32.mrf.mxu0
      %v1376 = vadd.f32 %v980, %v1375
      %v1377 = vpop.f32.mrf.mxu0
      %v1378 = vadd.f32 %v984, %v1377
      %1379 = vmatprep.mubr.bf16.mxu0 %v896
      %1380 = vmatmul.mubr.bf16.gmra.mxu0 %v895
      %v1381 = vpop.f32.mrf.mxu0
      %v1382 = vadd.f32 %v980, %v1381
      %v1383 = vpop.f32.mrf.mxu0
      %v1384 = vadd.f32 %v984, %v1383
      %v1385 = vpop.f32.mrf.mxu0
      %v1386 = vadd.f32 %v980, %v1385
      %v1387 = vpop.f32.mrf.mxu0
      %v1388 = vadd.f32 %v984, %v1387
      %1389 = vmatprep.mubr.bf16.mxu0 %v900
      %1390 = vmatmul.mubr.bf16.gmra.mxu0 %v899
      %v1391 = vpop.f32.mrf.mxu0
      %v1392 = vadd.f32 %v980, %v1391
      %v1393 = vpop.f32.mrf.mxu0
      %v1394 = vadd.f32 %v984, %v1393
      %v1395 = vpop.f32.mrf.mxu0
      %v1396 = vadd.f32 %v980, %v1395
      %v1397 = vpop.f32.mrf.mxu0
      %v1398 = vadd.f32 %v984, %v1397
      %1399 = vmatprep.mubr.bf16.mxu0 %v904
      %1400 = vmatmul.mubr.bf16.gmra.mxu0 %v903
      %v1401 = vpop.f32.mrf.mxu0
      %v1402 = vadd.f32 %v980, %v1401
      %v1403 = vpop.f32.mrf.mxu0
      %v1404 = vadd.f32 %v984, %v1403
      %v1405 = vpop.f32.mrf.mxu0
      %v1406 = vadd.f32 %v980, %v1405
      %v1407 = vpop.f32.mrf.mxu0
      %v1408 = vadd.f32 %v984, %v1407
      %1409 = vmatprep.mubr.bf16.mxu0 %v908
      %1410 = vmatmul.mubr.bf16.gmra.mxu0 %v907
      %v1411 = vpop.f32.mrf.mxu0
      %v1412 = vadd.f32 %v980, %v1411
      %v1413 = vpop.f32.mrf.mxu0
      %v1414 = vadd.f32 %v984, %v1413
      %v1415 = vpop.f32.mrf.mxu0
      %v1416 = vadd.f32 %v980, %v1415
      %v1417 = vpop.f32.mrf.mxu0
      %v1418 = vadd.f32 %v984, %v1417
      %1419 = vdwg.mxu0
      %1420 = vmatprep.subr.bf16.mxu0 %v1226
      %1421 = vmatpush1.bf16.msra.mxu0 %v1225
      %1422 = vmatprep.subr.bf16.mxu0 %v1224
      %1423 = vmatpush1.bf16.msra.mxu0 %v1223
      %1424 = vmatprep.subr.bf16.mxu0 %v1222
      %1425 = vmatpush1.bf16.msra.mxu0 %v1221
      %1426 = vmatprep.subr.bf16.mxu0 %v1220
      %1427 = vmatpush1.bf16.msra.mxu0 %v1219
      %1428 = vmatprep.subr.bf16.mxu0 %v1218
      %1429 = vmatpush1.bf16.msra.mxu0 %v1217
      %1430 = vmatprep.subr.bf16.mxu0 %v1216
      %1431 = vmatpush1.bf16.msra.mxu0 %v1215
      %1432 = vmatprep.subr.bf16.mxu0 %v1214
      %1433 = vmatpush1.bf16.msra.mxu0 %v1213
      %1434 = vmatprep.subr.bf16.mxu0 %v1212
      %1435 = vmatpush1.bf16.msra.mxu0 %v1211
      %1436 = vmatprep.subr.bf16.mxu0 %v1242
      %1437 = vmatpush2.bf16.msra.mxu0 %v1241
      %1438 = vmatprep.subr.bf16.mxu0 %v1240
      %1439 = vmatpush2.bf16.msra.mxu0 %v1239
      %1440 = vmatprep.subr.bf16.mxu0 %v1238
      %1441 = vmatpush2.bf16.msra.mxu0 %v1237
      %1442 = vmatprep.subr.bf16.mxu0 %v1236
      %1443 = vmatpush2.bf16.msra.mxu0 %v1235
      %1444 = vmatprep.subr.bf16.mxu0 %v1234
      %1445 = vmatpush2.bf16.msra.mxu0 %v1233
      %1446 = vmatprep.subr.bf16.mxu0 %v1232
      %1447 = vmatpush2.bf16.msra.mxu0 %v1231
      %1448 = vmatprep.subr.bf16.mxu0 %v1230
      %1449 = vmatpush2.bf16.msra.mxu0 %v1229
      %1450 = vmatprep.subr.bf16.mxu0 %v1228
      %1451 = vmatpush2.bf16.msra.mxu0 %v1227
      %1452 = vmatprep.mubr.bf16.mxu0 %v882
      %1453 = vmatmul.mubr.bf16.gmra.mxu0 %v881
      %v1454 = vpop.f32.mrf.mxu0
      %v1455 = vadd.f32 %v1342, %v1454
      %v1456 = vpop.f32.mrf.mxu0
      %v1457 = vadd.f32 %v1344, %v1456
      %v1458 = vpop.f32.mrf.mxu0
      %v1459 = vadd.f32 %v1346, %v1458
      %v1460 = vpop.f32.mrf.mxu0
      %v1461 = vadd.f32 %v1348, %v1460
      %1462 = vmatprep.mubr.bf16.mxu0 %v886
      %1463 = vmatmul.mubr.bf16.gmra.mxu0 %v885
      %v1464 = vpop.f32.mrf.mxu0
      %v1465 = vadd.f32 %v1352, %v1464
      %v1466 = vpop.f32.mrf.mxu0
      %v1467 = vadd.f32 %v1354, %v1466
      %v1468 = vpop.f32.mrf.mxu0
      %v1469 = vadd.f32 %v1356, %v1468
      %v1470 = vpop.f32.mrf.mxu0
      %v1471 = vadd.f32 %v1358, %v1470
      %1472 = vmatprep.mubr.bf16.mxu0 %v890
      %1473 = vmatmul.mubr.bf16.gmra.mxu0 %v889
      %v1474 = vpop.f32.mrf.mxu0
      %v1475 = vadd.f32 %v1362, %v1474
      %v1476 = vpop.f32.mrf.mxu0
      %v1477 = vadd.f32 %v1364, %v1476
      %v1478 = vpop.f32.mrf.mxu0
      %v1479 = vadd.f32 %v1366, %v1478
      %v1480 = vpop.f32.mrf.mxu0
      %v1481 = vadd.f32 %v1368, %v1480
      %1482 = vmatprep.mubr.bf16.mxu0 %v894
      %1483 = vmatmul.mubr.bf16.gmra.mxu0 %v893
      %v1484 = vpop.f32.mrf.mxu0
      %v1485 = vadd.f32 %v1372, %v1484
      %v1486 = vpop.f32.mrf.mxu0
      %v1487 = vadd.f32 %v1374, %v1486
      %v1488 = vpop.f32.mrf.mxu0
      %v1489 = vadd.f32 %v1376, %v1488
      %v1490 = vpop.f32.mrf.mxu0
      %v1491 = vadd.f32 %v1378, %v1490
      %1492 = vmatprep.mubr.bf16.mxu0 %v898
      %1493 = vmatmul.mubr.bf16.gmra.mxu0 %v897
      %v1494 = vpop.f32.mrf.mxu0
      %v1495 = vadd.f32 %v1382, %v1494
      %v1496 = vpop.f32.mrf.mxu0
      %v1497 = vadd.f32 %v1384, %v1496
      %v1498 = vpop.f32.mrf.mxu0
      %v1499 = vadd.f32 %v1386, %v1498
      %v1500 = vpop.f32.mrf.mxu0
      %v1501 = vadd.f32 %v1388, %v1500
      %1502 = vmatprep.mubr.bf16.mxu0 %v902
      %1503 = vmatmul.mubr.bf16.gmra.mxu0 %v901
      %v1504 = vpop.f32.mrf.mxu0
      %v1505 = vadd.f32 %v1392, %v1504
      %v1506 = vpop.f32.mrf.mxu0
      %v1507 = vadd.f32 %v1394, %v1506
      %v1508 = vpop.f32.mrf.mxu0
      %v1509 = vadd.f32 %v1396, %v1508
      %v1510 = vpop.f32.mrf.mxu0
      %v1511 = vadd.f32 %v1398, %v1510
      %1512 = vmatprep.mubr.bf16.mxu0 %v906
      %1513 = vmatmul.mubr.bf16.gmra.mxu0 %v905
      %v1514 = vpop.f32.mrf.mxu0
      %v1515 = vadd.f32 %v1402, %v1514
      %v1516 = vpop.f32.mrf.mxu0
      %v1517 = vadd.f32 %v1404, %v1516
      %v1518 = vpop.f32.mrf.mxu0
      %v1519 = vadd.f32 %v1406, %v1518
      %v1520 = vpop.f32.mrf.mxu0
      %v1521 = vadd.f32 %v1408, %v1520
      %1522 = vmatprep.mubr.bf16.mxu0 %v910
      %1523 = vmatmul.mubr.bf16.gmra.mxu0 %v909
      %v1524 = vpop.f32.mrf.mxu0
      %v1525 = vadd.f32 %v1412, %v1524
      %v1526 = vpop.f32.mrf.mxu0
      %v1527 = vadd.f32 %v1414, %v1526
      %v1528 = vpop.f32.mrf.mxu0
      %v1529 = vadd.f32 %v1416, %v1528
      %v1530 = vpop.f32.mrf.mxu0
      %v1531 = vadd.f32 %v1418, %v1530
      %1532 = vdwg.mxu0
      %v1533 = vmax.f32 %v1455, 0.0
      %v1534 = vmax.f32 %v1457, 0.0
      %v1535 = vmax.f32 %v1459, 0.0
      %v1536 = vmax.f32 %v1461, 0.0
      %v1537 = vmax.f32 %v1465, 0.0
      %v1538 = vmax.f32 %v1467, 0.0
      %v1539 = vmax.f32 %v1469, 0.0
      %v1540 = vmax.f32 %v1471, 0.0
      %v1541 = vmax.f32 %v1475, 0.0
      %v1542 = vmax.f32 %v1477, 0.0
      %v1543 = vmax.f32 %v1479, 0.0
      %v1544 = vmax.f32 %v1481, 0.0
      %v1545 = vmax.f32 %v1485, 0.0
      %v1546 = vmax.f32 %v1487, 0.0
      %v1547 = vmax.f32 %v1489, 0.0
      %v1548 = vmax.f32 %v1491, 0.0
      %v1549 = vmax.f32 %v1495, 0.0
      %v1550 = vmax.f32 %v1497, 0.0
      %v1551 = vmax.f32 %v1499, 0.0
      %v1552 = vmax.f32 %v1501, 0.0
      %v1553 = vmax.f32 %v1505, 0.0
      %v1554 = vmax.f32 %v1507, 0.0
      %v1555 = vmax.f32 %v1509, 0.0
      %v1556 = vmax.f32 %v1511, 0.0
      %v1557 = vmax.f32 %v1515, 0.0
      %v1558 = vmax.f32 %v1517, 0.0
      %v1559 = vmax.f32 %v1519, 0.0
      %v1560 = vmax.f32 %v1521, 0.0
      %v1561 = vmax.f32 %v1525, 0.0
      %v1562 = vmax.f32 %v1527, 0.0
      %v1563 = vmax.f32 %v1529, 0.0
      %v1564 = vmax.f32 %v1531, 0.0
      %v1565 = vpack.c.bf16 %v1535, %v1533
      %v1566 = vpack.c.bf16 %v1536, %v1534
      %v1567 = vpack.c.bf16 %v1539, %v1537
      %v1568 = vpack.c.bf16 %v1540, %v1538
      %v1569 = vpack.c.bf16 %v1543, %v1541
      %v1570 = vpack.c.bf16 %v1544, %v1542
      %v1571 = vpack.c.bf16 %v1547, %v1545
      %v1572 = vpack.c.bf16 %v1548, %v1546
      %v1573 = vpack.c.bf16 %v1551, %v1549
      %v1574 = vpack.c.bf16 %v1552, %v1550
      %v1575 = vpack.c.bf16 %v1555, %v1553
      %v1576 = vpack.c.bf16 %v1556, %v1554
      %v1577 = vpack.c.bf16 %v1559, %v1557
      %v1578 = vpack.c.bf16 %v1560, %v1558
      %v1579 = vpack.c.bf16 %v1563, %v1561
      %v1580 = vpack.c.bf16 %v1564, %v1562
      %v1581 = vld [vmem:[%s5] sm:$0xf]
      %v1582 = vld [vmem:[%s5 + $0x4] sm:$0xf]
      %v1583 = vld [vmem:[%s5 + $0x8] sm:$0xf]
      %v1584 = vld [vmem:[%s5 + $0xc] sm:$0xf]
      %v1585 = vld [vmem:[%s5 + $0x10] sm:$0xf]
      %v1586 = vld [vmem:[%s5 + $0x14] sm:$0xf]
      %v1587 = vld [vmem:[%s5 + $0x18] sm:$0xf]
      %v1588 = vld [vmem:[%s5 + $0x1c] sm:$0xf]
      %v1589 = vld [vmem:[%s5 + $0x20] sm:$0xf]
      %v1590 = vld [vmem:[%s5 + $0x24] sm:$0xf]
      %v1591 = vld [vmem:[%s5 + $0x28] sm:$0xf]
      %v1592 = vld [vmem:[%s5 + $0x2c] sm:$0xf]
      %v1593 = vld [vmem:[%s5 + $0x30] sm:$0xf]
      %v1594 = vld [vmem:[%s5 + $0x34] sm:$0xf]
      %v1595 = vld [vmem:[%s5 + $0x38] sm:$0xf]
      %v1596 = vld [vmem:[%s5 + $0x3c] sm:$0xf]
      %v1597 = vld [vmem:[%s5 + $0x40] sm:$0xf]
      %v1598 = vld [vmem:[%s5 + $0x44] sm:$0xf]
      %v1599 = vld [vmem:[%s5 + $0x48] sm:$0xf]
      %v1600 = vld [vmem:[%s5 + $0x4c] sm:$0xf]
      %v1601 = vld [vmem:[%s5 + $0x50] sm:$0xf]
      %v1602 = vld [vmem:[%s5 + $0x54] sm:$0xf]
      %v1603 = vld [vmem:[%s5 + $0x58] sm:$0xf]
      %v1604 = vld [vmem:[%s5 + $0x5c] sm:$0xf]
      %v1605 = vld [vmem:[%s5 + $0x60] sm:$0xf]
      %v1606 = vld [vmem:[%s5 + $0x64] sm:$0xf]
      %v1607 = vld [vmem:[%s5 + $0x68] sm:$0xf]
      %v1608 = vld [vmem:[%s5 + $0x6c] sm:$0xf]
      %v1609 = vld [vmem:[%s5 + $0x70] sm:$0xf]
      %v1610 = vld [vmem:[%s5 + $0x74] sm:$0xf]
      %v1611 = vld [vmem:[%s5 + $0x78] sm:$0xf]
      %v1612 = vld [vmem:[%s5 + $0x7c] sm:$0xf]
      %v1613 = vld [vmem:[%s6] sm:$0x1]
      %v1615 = vlaneseq
      %v1616 = vshrl.u32 %v1615, 7
      %v1617 = vsub.s32 0, %v1616
      %v1618 = vrot.slane %v1613, %v1617
      %v1652 = vunpack.c.l.b16 %v1581
      %v1653 = vunpack.c.l.b16 %v1582
      %v1654 = vunpack.c.l.b16 %v1583
      %v1655 = vunpack.c.l.b16 %v1584
      %v1656 = vunpack.c.l.b16 %v1585
      %v1657 = vunpack.c.l.b16 %v1586
      %v1658 = vunpack.c.l.b16 %v1587
      %v1659 = vunpack.c.l.b16 %v1588
      %v1660 = vunpack.c.l.b16 %v1589
      %v1661 = vunpack.c.l.b16 %v1590
      %v1662 = vunpack.c.l.b16 %v1591
      %v1663 = vunpack.c.l.b16 %v1592
      %v1664 = vunpack.c.l.b16 %v1593
      %v1665 = vunpack.c.l.b16 %v1594
      %v1666 = vunpack.c.l.b16 %v1595
      %v1667 = vunpack.c.l.b16 %v1596
      %v1668 = vunpack.c.l.b16 %v1597
      %v1669 = vunpack.c.l.b16 %v1598
      %v1670 = vunpack.c.l.b16 %v1599
      %v1671 = vunpack.c.l.b16 %v1600
      %v1672 = vunpack.c.l.b16 %v1601
      %v1673 = vunpack.c.l.b16 %v1602
      %v1674 = vunpack.c.l.b16 %v1603
      %v1675 = vunpack.c.l.b16 %v1604
      %v1676 = vunpack.c.l.b16 %v1605
      %v1677 = vunpack.c.l.b16 %v1606
      %v1678 = vunpack.c.l.b16 %v1607
      %v1679 = vunpack.c.l.b16 %v1608
      %v1680 = vunpack.c.l.b16 %v1609
      %v1681 = vunpack.c.l.b16 %v1610
      %v1682 = vunpack.c.l.b16 %v1611
      %v1683 = vunpack.c.l.b16 %v1612
      %v1684 = vpack.c.b16 %v1653, %v1652
      %v1685 = vpack.c.b16 %v1655, %v1654
      %v1686 = vpack.c.b16 %v1657, %v1656
      %v1687 = vpack.c.b16 %v1659, %v1658
      %v1688 = vpack.c.b16 %v1661, %v1660
      %v1689 = vpack.c.b16 %v1663, %v1662
      %v1690 = vpack.c.b16 %v1665, %v1664
      %v1691 = vpack.c.b16 %v1667, %v1666
      %v1692 = vpack.c.b16 %v1669, %v1668
      %v1693 = vpack.c.b16 %v1671, %v1670
      %v1694 = vpack.c.b16 %v1673, %v1672
      %v1695 = vpack.c.b16 %v1675, %v1674
      %v1696 = vpack.c.b16 %v1677, %v1676
      %v1697 = vpack.c.b16 %v1679, %v1678
      %v1698 = vpack.c.b16 %v1681, %v1680
      %v1699 = vpack.c.b16 %v1683, %v1682
      %1716 = vmatprep.subr.bf16.mxu0 0
      %1717 = vmatpush1.bf16.msra.mxu0 %v1691
      %1718 = vmatprep.subr.bf16.mxu0 0
      %1719 = vmatpush1.bf16.msra.mxu0 %v1690
      %1720 = vmatprep.subr.bf16.mxu0 0
      %1721 = vmatpush1.bf16.msra.mxu0 %v1689
      %1722 = vmatprep.subr.bf16.mxu0 0
      %1723 = vmatpush1.bf16.msra.mxu0 %v1688
      %1724 = vmatprep.subr.bf16.mxu0 0
      %1725 = vmatpush1.bf16.msra.mxu0 %v1687
      %1726 = vmatprep.subr.bf16.mxu0 0
      %1727 = vmatpush1.bf16.msra.mxu0 %v1686
      %1728 = vmatprep.subr.bf16.mxu0 0
      %1729 = vmatpush1.bf16.msra.mxu0 %v1685
      %1730 = vmatprep.subr.bf16.mxu0 0
      %1731 = vmatpush1.bf16.msra.mxu0 %v1684
      %1732 = vmatprep.subr.bf16.mxu0 0
      %1733 = vmatpush2.bf16.msra.mxu0 %v1699
      %1734 = vmatprep.subr.bf16.mxu0 0
      %1735 = vmatpush2.bf16.msra.mxu0 %v1698
      %1736 = vmatprep.subr.bf16.mxu0 0
      %1737 = vmatpush2.bf16.msra.mxu0 %v1697
      %1738 = vmatprep.subr.bf16.mxu0 0
      %1739 = vmatpush2.bf16.msra.mxu0 %v1696
      %1740 = vmatprep.subr.bf16.mxu0 0
      %1741 = vmatpush2.bf16.msra.mxu0 %v1695
      %1742 = vmatprep.subr.bf16.mxu0 0
      %1743 = vmatpush2.bf16.msra.mxu0 %v1694
      %1744 = vmatprep.subr.bf16.mxu0 0
      %1745 = vmatpush2.bf16.msra.mxu0 %v1693
      %1746 = vmatprep.subr.bf16.mxu0 0
      %1747 = vmatpush2.bf16.msra.mxu0 %v1692
      %1748 = vmatprep.mubr.bf16.mxu0 %v1566
      %1749 = vmatmul.mubr.bf16.gmra.mxu0 %v1565
      %v1750 = vpop.f32.mrf.mxu0
      %v1751 = vadd.f32 %v1618, %v1750
      %v1752 = vpop.f32.mrf.mxu0
      %v1753 = vpop.f32.mrf.mxu0
      %v1754 = vadd.f32 %v1618, %v1753
      %v1755 = vpop.f32.mrf.mxu0
      %1756 = vmatprep.mubr.bf16.mxu0 %v1568
      %1757 = vmatmul.mubr.bf16.gmra.mxu0 %v1567
      %v1758 = vpop.f32.mrf.mxu0
      %v1759 = vadd.f32 %v1618, %v1758
      %v1760 = vpop.f32.mrf.mxu0
      %v1761 = vpop.f32.mrf.mxu0
      %v1762 = vadd.f32 %v1618, %v1761
      %v1763 = vpop.f32.mrf.mxu0
      %1764 = vmatprep.mubr.bf16.mxu0 %v1570
      %1765 = vmatmul.mubr.bf16.gmra.mxu0 %v1569
      %v1766 = vpop.f32.mrf.mxu0
      %v1767 = vadd.f32 %v1618, %v1766
      %v1768 = vpop.f32.mrf.mxu0
      %v1769 = vpop.f32.mrf.mxu0
      %v1770 = vadd.f32 %v1618, %v1769
      %v1771 = vpop.f32.mrf.mxu0
      %1772 = vmatprep.mubr.bf16.mxu0 %v1572
      %1773 = vmatmul.mubr.bf16.gmra.mxu0 %v1571
      %v1774 = vpop.f32.mrf.mxu0
      %v1775 = vadd.f32 %v1618, %v1774
      %v1776 = vpop.f32.mrf.mxu0
      %v1777 = vpop.f32.mrf.mxu0
      %v1778 = vadd.f32 %v1618, %v1777
      %v1779 = vpop.f32.mrf.mxu0
      %1780 = vmatprep.mubr.bf16.mxu0 %v1574
      %1781 = vmatmul.mubr.bf16.gmra.mxu0 %v1573
      %v1782 = vpop.f32.mrf.mxu0
      %v1783 = vadd.f32 %v1618, %v1782
      %v1784 = vpop.f32.mrf.mxu0
      %v1785 = vpop.f32.mrf.mxu0
      %v1786 = vadd.f32 %v1618, %v1785
      %v1787 = vpop.f32.mrf.mxu0
      %1788 = vmatprep.mubr.bf16.mxu0 %v1576
      %1789 = vmatmul.mubr.bf16.gmra.mxu0 %v1575
      %v1790 = vpop.f32.mrf.mxu0
      %v1791 = vadd.f32 %v1618, %v1790
      %v1792 = vpop.f32.mrf.mxu0
      %v1793 = vpop.f32.mrf.mxu0
      %v1794 = vadd.f32 %v1618, %v1793
      %v1795 = vpop.f32.mrf.mxu0
      %1796 = vmatprep.mubr.bf16.mxu0 %v1578
      %1797 = vmatmul.mubr.bf16.gmra.mxu0 %v1577
      %v1798 = vpop.f32.mrf.mxu0
      %v1799 = vadd.f32 %v1618, %v1798
      %v1800 = vpop.f32.mrf.mxu0
      %v1801 = vpop.f32.mrf.mxu0
      %v1802 = vadd.f32 %v1618, %v1801
      %v1803 = vpop.f32.mrf.mxu0
      %1804 = vmatprep.mubr.bf16.mxu0 %v1580
      %1805 = vmatmul.mubr.bf16.gmra.mxu0 %v1579
      %v1806 = vpop.f32.mrf.mxu0
      %v1807 = vadd.f32 %v1618, %v1806
      %v1808 = vpop.f32.mrf.mxu0
      %v1809 = vpop.f32.mrf.mxu0
      %v1810 = vadd.f32 %v1618, %v1809
      %v1811 = vpop.f32.mrf.mxu0
      %1812 = vdwg.mxu0
      %v1813 = vmax.f32 %v1751, 0.0
      %v1814 = vmax.f32 %v1754, 0.0
      %v1815 = vmax.f32 %v1759, 0.0
      %v1816 = vmax.f32 %v1762, 0.0
      %v1817 = vmax.f32 %v1767, 0.0
      %v1818 = vmax.f32 %v1770, 0.0
      %v1819 = vmax.f32 %v1775, 0.0
      %v1820 = vmax.f32 %v1778, 0.0
      %v1821 = vmax.f32 %v1783, 0.0
      %v1822 = vmax.f32 %v1786, 0.0
      %v1823 = vmax.f32 %v1791, 0.0
      %v1824 = vmax.f32 %v1794, 0.0
      %v1825 = vmax.f32 %v1799, 0.0
      %v1826 = vmax.f32 %v1802, 0.0
      %v1827 = vmax.f32 %v1807, 0.0
      %v1828 = vmax.f32 %v1810, 0.0
      %v1829 = vpack.c.bf16 %v1814, %v1813
      %v1830 = vpack.c.bf16 %v1816, %v1815
      %v1831 = vpack.c.bf16 %v1818, %v1817
      %v1832 = vpack.c.bf16 %v1820, %v1819
      %v1833 = vpack.c.bf16 %v1822, %v1821
      %v1834 = vpack.c.bf16 %v1824, %v1823
      %v1835 = vpack.c.bf16 %v1826, %v1825
      %v1836 = vpack.c.bf16 %v1828, %v1827
      %v1837 = vld [vmem:[%s7] sm:$0xf]
      %v1838 = vld [vmem:[%s7 + $0x4] sm:$0xf]
      %v1839 = vld [vmem:[%s7 + $0x8] sm:$0xf]
      %v1840 = vld [vmem:[%s7 + $0xc] sm:$0xf]
      %v1841 = vld [vmem:[%s7 + $0x10] sm:$0xf]
      %v1842 = vld [vmem:[%s7 + $0x14] sm:$0xf]
      %v1843 = vld [vmem:[%s7 + $0x18] sm:$0xf]
      %v1844 = vld [vmem:[%s7 + $0x1c] sm:$0xf]
      %v1845 = vld [vmem:[%s7 + $0x20] sm:$0xf]
      %v1846 = vld [vmem:[%s7 + $0x24] sm:$0xf]
      %v1847 = vld [vmem:[%s7 + $0x28] sm:$0xf]
      %v1848 = vld [vmem:[%s7 + $0x2c] sm:$0xf]
      %v1849 = vld [vmem:[%s7 + $0x30] sm:$0xf]
      %v1850 = vld [vmem:[%s7 + $0x34] sm:$0xf]
      %v1851 = vld [vmem:[%s7 + $0x38] sm:$0xf]
      %v1852 = vld [vmem:[%s7 + $0x3c] sm:$0xf]
      %v1853 = vld [vmem:[%s8] sm:$0x1]
      %v1855 = vlaneseq
      %v1856 = vshrl.u32 %v1855, 7
      %v1857 = vsub.s32 0, %v1856
      %v1858 = vrot.slane %v1853, %v1857
      %v1876 = vunpack.c.l.b16 %v1837
      %v1877 = vunpack.c.l.b16 %v1838
      %v1878 = vunpack.c.l.b16 %v1839
      %v1879 = vunpack.c.l.b16 %v1840
      %v1880 = vunpack.c.l.b16 %v1841
      %v1881 = vunpack.c.l.b16 %v1842
      %v1882 = vunpack.c.l.b16 %v1843
      %v1883 = vunpack.c.l.b16 %v1844
      %v1884 = vunpack.c.l.b16 %v1845
      %v1885 = vunpack.c.l.b16 %v1846
      %v1886 = vunpack.c.l.b16 %v1847
      %v1887 = vunpack.c.l.b16 %v1848
      %v1888 = vunpack.c.l.b16 %v1849
      %v1889 = vunpack.c.l.b16 %v1850
      %v1890 = vunpack.c.l.b16 %v1851
      %v1891 = vunpack.c.l.b16 %v1852
      %v1892 = vpack.c.b16 %v1877, %v1876
      %v1893 = vpack.c.b16 %v1879, %v1878
      %v1894 = vpack.c.b16 %v1881, %v1880
      %v1895 = vpack.c.b16 %v1883, %v1882
      %v1896 = vpack.c.b16 %v1885, %v1884
      %v1897 = vpack.c.b16 %v1887, %v1886
      %v1898 = vpack.c.b16 %v1889, %v1888
      %v1899 = vpack.c.b16 %v1891, %v1890
      %1908 = vmatprep.subr.bf16.mxu0 0
      %1909 = vmatpush1.bf16.msra.mxu0 %v1899
      %1910 = vmatprep.subr.bf16.mxu0 0
      %1911 = vmatpush1.bf16.msra.mxu0 %v1898
      %1912 = vmatprep.subr.bf16.mxu0 0
      %1913 = vmatpush1.bf16.msra.mxu0 %v1897
      %1914 = vmatprep.subr.bf16.mxu0 0
      %1915 = vmatpush1.bf16.msra.mxu0 %v1896
      %1916 = vmatprep.subr.bf16.mxu0 0
      %1917 = vmatpush1.bf16.msra.mxu0 %v1895
      %1918 = vmatprep.subr.bf16.mxu0 0
      %1919 = vmatpush1.bf16.msra.mxu0 %v1894
      %1920 = vmatprep.subr.bf16.mxu0 0
      %1921 = vmatpush1.bf16.msra.mxu0 %v1893
      %1922 = vmatprep.subr.bf16.mxu0 0
      %1923 = vmatpush1.bf16.msra.mxu0 %v1892
      %1924 = vmatprep.subr.bf16.mxu0 0
      %1925 = vmatpush2.bf16.msra.mxu0 0
      %1926 = vmatprep.subr.bf16.mxu0 0
      %1927 = vmatpush2.bf16.msra.mxu0 0
      %1928 = vmatprep.subr.bf16.mxu0 0
      %1929 = vmatpush2.bf16.msra.mxu0 0
      %1930 = vmatprep.subr.bf16.mxu0 0
      %1931 = vmatpush2.bf16.msra.mxu0 0
      %1932 = vmatprep.subr.bf16.mxu0 0
      %1933 = vmatpush2.bf16.msra.mxu0 0
      %1934 = vmatprep.subr.bf16.mxu0 0
      %1935 = vmatpush2.bf16.msra.mxu0 0
      %1936 = vmatprep.subr.bf16.mxu0 0
      %1937 = vmatpush2.bf16.msra.mxu0 0
      %1938 = vmatprep.subr.bf16.mxu0 0
      %1939 = vmatpush2.bf16.msra.mxu0 0
      %1940 = vmatprep.mubr.bf16.mxu0 0
      %1941 = vmatmul.mubr.bf16.gmra.mxu0 %v1829
      %v1942 = vpop.f32.mrf.mxu0
      %v1943 = vadd.f32 %v1858, %v1942
      %v1944 = vpop.f32.mrf.mxu0
      %v1945 = vpop.f32.mrf.mxu0
      %v1946 = vadd.f32 %v1858, %v1945
      %v1947 = vpop.f32.mrf.mxu0
      %1948 = vmatprep.mubr.bf16.mxu0 0
      %1949 = vmatmul.mubr.bf16.gmra.mxu0 %v1830
      %v1950 = vpop.f32.mrf.mxu0
      %v1951 = vadd.f32 %v1858, %v1950
      %v1952 = vpop.f32.mrf.mxu0
      %v1953 = vpop.f32.mrf.mxu0
      %v1954 = vadd.f32 %v1858, %v1953
      %v1955 = vpop.f32.mrf.mxu0
      %1956 = vmatprep.mubr.bf16.mxu0 0
      %1957 = vmatmul.mubr.bf16.gmra.mxu0 %v1831
      %v1958 = vpop.f32.mrf.mxu0
      %v1959 = vadd.f32 %v1858, %v1958
      %v1960 = vpop.f32.mrf.mxu0
      %v1961 = vpop.f32.mrf.mxu0
      %v1962 = vadd.f32 %v1858, %v1961
      %v1963 = vpop.f32.mrf.mxu0
      %1964 = vmatprep.mubr.bf16.mxu0 0
      %1965 = vmatmul.mubr.bf16.gmra.mxu0 %v1832
      %v1966 = vpop.f32.mrf.mxu0
      %v1967 = vadd.f32 %v1858, %v1966
      %v1968 = vpop.f32.mrf.mxu0
      %v1969 = vpop.f32.mrf.mxu0
      %v1970 = vadd.f32 %v1858, %v1969
      %v1971 = vpop.f32.mrf.mxu0
      %1972 = vmatprep.mubr.bf16.mxu0 0
      %1973 = vmatmul.mubr.bf16.gmra.mxu0 %v1833
      %v1974 = vpop.f32.mrf.mxu0
      %v1975 = vadd.f32 %v1858, %v1974
      %v1976 = vpop.f32.mrf.mxu0
      %v1977 = vpop.f32.mrf.mxu0
      %v1978 = vadd.f32 %v1858, %v1977
      %v1979 = vpop.f32.mrf.mxu0
      %1980 = vmatprep.mubr.bf16.mxu0 0
      %1981 = vmatmul.mubr.bf16.gmra.mxu0 %v1834
      %v1982 = vpop.f32.mrf.mxu0
      %v1983 = vadd.f32 %v1858, %v1982
      %v1984 = vpop.f32.mrf.mxu0
      %v1985 = vpop.f32.mrf.mxu0
      %v1986 = vadd.f32 %v1858, %v1985
      %v1987 = vpop.f32.mrf.mxu0
      %1988 = vmatprep.mubr.bf16.mxu0 0
      %1989 = vmatmul.mubr.bf16.gmra.mxu0 %v1835
      %v1990 = vpop.f32.mrf.mxu0
      %v1991 = vadd.f32 %v1858, %v1990
      %v1992 = vpop.f32.mrf.mxu0
      %v1993 = vpop.f32.mrf.mxu0
      %v1994 = vadd.f32 %v1858, %v1993
      %v1995 = vpop.f32.mrf.mxu0
      %1996 = vmatprep.mubr.bf16.mxu0 0
      %1997 = vmatmul.mubr.bf16.gmra.mxu0 %v1836
      %v1998 = vpop.f32.mrf.mxu0
      %v1999 = vadd.f32 %v1858, %v1998
      %v2000 = vpop.f32.mrf.mxu0
      %v2001 = vpop.f32.mrf.mxu0
      %v2002 = vadd.f32 %v1858, %v2001
      %v2003 = vpop.f32.mrf.mxu0
      %2004 = vdwg.mxu0
      %vm2005 = vcmask 15360
      %v2006 = vsel %vm2005, %v1943, -inf
      %2007 = vmax.xlane.f32.xlu0 %v2006
      %v2008 = vpop.xlane.xlu0 %2007
      %v2009 = vsel %vm2005, %v1946, -inf
      %2010 = vmax.xlane.f32.xlu0 %v2009
      %v2011 = vpop.xlane.xlu0 %2010
      %v2012 = vsel %vm2005, %v1951, -inf
      %2013 = vmax.xlane.f32.xlu0 %v2012
      %v2014 = vpop.xlane.xlu0 %2013
      %v2015 = vsel %vm2005, %v1954, -inf
      %2016 = vmax.xlane.f32.xlu0 %v2015
      %v2017 = vpop.xlane.xlu0 %2016
      %v2018 = vsel %vm2005, %v1959, -inf
      %2019 = vmax.xlane.f32.xlu0 %v2018
      %v2020 = vpop.xlane.xlu0 %2019
      %v2021 = vsel %vm2005, %v1962, -inf
      %2022 = vmax.xlane.f32.xlu0 %v2021
      %v2023 = vpop.xlane.xlu0 %2022
      %v2024 = vsel %vm2005, %v1967, -inf
      %2025 = vmax.xlane.f32.xlu0 %v2024
      %v2026 = vpop.xlane.xlu0 %2025
      %v2027 = vsel %vm2005, %v1970, -inf
      %2028 = vmax.xlane.f32.xlu0 %v2027
      %v2029 = vpop.xlane.xlu0 %2028
      %v2030 = vsel %vm2005, %v1975, -inf
      %2031 = vmax.xlane.f32.xlu0 %v2030
      %v2032 = vpop.xlane.xlu0 %2031
      %v2033 = vsel %vm2005, %v1978, -inf
      %2034 = vmax.xlane.f32.xlu0 %v2033
      %v2035 = vpop.xlane.xlu0 %2034
      %v2036 = vsel %vm2005, %v1983, -inf
      %2037 = vmax.xlane.f32.xlu0 %v2036
      %v2038 = vpop.xlane.xlu0 %2037
      %v2039 = vsel %vm2005, %v1986, -inf
      %2040 = vmax.xlane.f32.xlu0 %v2039
      %v2041 = vpop.xlane.xlu0 %2040
      %v2042 = vsel %vm2005, %v1991, -inf
      %2043 = vmax.xlane.f32.xlu0 %v2042
      %v2044 = vpop.xlane.xlu0 %2043
      %v2045 = vsel %vm2005, %v1994, -inf
      %2046 = vmax.xlane.f32.xlu0 %v2045
      %v2047 = vpop.xlane.xlu0 %2046
      %v2048 = vsel %vm2005, %v1999, -inf
      %2049 = vmax.xlane.f32.xlu0 %v2048
      %v2050 = vpop.xlane.xlu0 %2049
      %v2051 = vsel %vm2005, %v2002, -inf
      %2052 = vmax.xlane.f32.xlu0 %v2051
      %v2053 = vpop.xlane.xlu0 %2052
      %v2054 = vsub.f32 %v1943, %v2008
      %v2055 = vsub.f32 %v1946, %v2011
      %v2056 = vsub.f32 %v1951, %v2014
      %v2057 = vsub.f32 %v1954, %v2017
      %v2058 = vsub.f32 %v1959, %v2020
      %v2059 = vsub.f32 %v1962, %v2023
      %v2060 = vsub.f32 %v1967, %v2026
      %v2061 = vsub.f32 %v1970, %v2029
      %v2062 = vsub.f32 %v1975, %v2032
      %v2063 = vsub.f32 %v1978, %v2035
      %v2064 = vsub.f32 %v1983, %v2038
      %v2065 = vsub.f32 %v1986, %v2041
      %v2066 = vsub.f32 %v1991, %v2044
      %v2067 = vsub.f32 %v1994, %v2047
      %v2068 = vsub.f32 %v1999, %v2050
      %v2069 = vsub.f32 %v2002, %v2053
      %v2070 = vmul.f32 %v2054, 1.442695
      %v2071 = vpow.pop %v2070
      %v2072 = vmul.f32 %v2055, 1.442695
      %v2073 = vpow.pop %v2072
      %v2074 = vmul.f32 %v2056, 1.442695
      %v2075 = vpow.pop %v2074
      %v2076 = vmul.f32 %v2057, 1.442695
      %v2077 = vpow.pop %v2076
      %v2078 = vmul.f32 %v2058, 1.442695
      %v2079 = vpow.pop %v2078
      %v2080 = vmul.f32 %v2059, 1.442695
      %v2081 = vpow.pop %v2080
      %v2082 = vmul.f32 %v2060, 1.442695
      %v2083 = vpow.pop %v2082
      %v2084 = vmul.f32 %v2061, 1.442695
      %v2085 = vpow.pop %v2084
      %v2086 = vmul.f32 %v2062, 1.442695
      %v2087 = vpow.pop %v2086
      %v2088 = vmul.f32 %v2063, 1.442695
      %v2089 = vpow.pop %v2088
      %v2090 = vmul.f32 %v2064, 1.442695
      %v2091 = vpow.pop %v2090
      %v2092 = vmul.f32 %v2065, 1.442695
      %v2093 = vpow.pop %v2092
      %v2094 = vmul.f32 %v2066, 1.442695
      %v2095 = vpow.pop %v2094
      %v2096 = vmul.f32 %v2067, 1.442695
      %v2097 = vpow.pop %v2096
      %v2098 = vmul.f32 %v2068, 1.442695
      %v2099 = vpow.pop %v2098
      %v2100 = vmul.f32 %v2069, 1.442695
      %v2101 = vpow.pop %v2100
      %v2102 = vsel %vm2005, %v2071, 0.0
      %2103 = vadd.xlane.f32.xlu0 %v2102
      %v2104 = vpop.xlane.xlu0 %2103
      %v2105 = vsel %vm2005, %v2073, 0.0
      %2106 = vadd.xlane.f32.xlu0 %v2105
      %v2107 = vpop.xlane.xlu0 %2106
      %v2108 = vsel %vm2005, %v2075, 0.0
      %2109 = vadd.xlane.f32.xlu0 %v2108
      %v2110 = vpop.xlane.xlu0 %2109
      %v2111 = vsel %vm2005, %v2077, 0.0
      %2112 = vadd.xlane.f32.xlu0 %v2111
      %v2113 = vpop.xlane.xlu0 %2112
      %v2114 = vsel %vm2005, %v2079, 0.0
      %2115 = vadd.xlane.f32.xlu0 %v2114
      %v2116 = vpop.xlane.xlu0 %2115
      %v2117 = vsel %vm2005, %v2081, 0.0
      %2118 = vadd.xlane.f32.xlu0 %v2117
      %v2119 = vpop.xlane.xlu0 %2118
      %v2120 = vsel %vm2005, %v2083, 0.0
      %2121 = vadd.xlane.f32.xlu0 %v2120
      %v2122 = vpop.xlane.xlu0 %2121
      %v2123 = vsel %vm2005, %v2085, 0.0
      %2124 = vadd.xlane.f32.xlu0 %v2123
      %v2125 = vpop.xlane.xlu0 %2124
      %v2126 = vsel %vm2005, %v2087, 0.0
      %2127 = vadd.xlane.f32.xlu0 %v2126
      %v2128 = vpop.xlane.xlu0 %2127
      %v2129 = vsel %vm2005, %v2089, 0.0
      %2130 = vadd.xlane.f32.xlu0 %v2129
      %v2131 = vpop.xlane.xlu0 %2130
      %v2132 = vsel %vm2005, %v2091, 0.0
      %2133 = vadd.xlane.f32.xlu0 %v2132
      %v2134 = vpop.xlane.xlu0 %2133
      %v2135 = vsel %vm2005, %v2093, 0.0
      %2136 = vadd.xlane.f32.xlu0 %v2135
      %v2137 = vpop.xlane.xlu0 %2136
      %v2138 = vsel %vm2005, %v2095, 0.0
      %2139 = vadd.xlane.f32.xlu0 %v2138
      %v2140 = vpop.xlane.xlu0 %2139
      %v2141 = vsel %vm2005, %v2097, 0.0
      %2142 = vadd.xlane.f32.xlu0 %v2141
      %v2143 = vpop.xlane.xlu0 %2142
      %v2144 = vsel %vm2005, %v2099, 0.0
      %2145 = vadd.xlane.f32.xlu0 %v2144
      %v2146 = vpop.xlane.xlu0 %2145
      %v2147 = vsel %vm2005, %v2101, 0.0
      %2148 = vadd.xlane.f32.xlu0 %v2147
      %v2149 = vpop.xlane.xlu0 %2148
      %v2150 = vlog2.pop %v2104
      %v2151 = vmul.f32 %v2150, 0.6931472
      %v2152 = vlog2.pop %v2107
      %v2153 = vmul.f32 %v2152, 0.6931472
      %v2154 = vlog2.pop %v2110
      %v2155 = vmul.f32 %v2154, 0.6931472
      %v2156 = vlog2.pop %v2113
      %v2157 = vmul.f32 %v2156, 0.6931472
      %v2158 = vlog2.pop %v2116
      %v2159 = vmul.f32 %v2158, 0.6931472
      %v2160 = vlog2.pop %v2119
      %v2161 = vmul.f32 %v2160, 0.6931472
      %v2162 = vlog2.pop %v2122
      %v2163 = vmul.f32 %v2162, 0.6931472
      %v2164 = vlog2.pop %v2125
      %v2165 = vmul.f32 %v2164, 0.6931472
      %v2166 = vlog2.pop %v2128
      %v2167 = vmul.f32 %v2166, 0.6931472
      %v2168 = vlog2.pop %v2131
      %v2169 = vmul.f32 %v2168, 0.6931472
      %v2170 = vlog2.pop %v2134
      %v2171 = vmul.f32 %v2170, 0.6931472
      %v2172 = vlog2.pop %v2137
      %v2173 = vmul.f32 %v2172, 0.6931472
      %v2174 = vlog2.pop %v2140
      %v2175 = vmul.f32 %v2174, 0.6931472
      %v2176 = vlog2.pop %v2143
      %v2177 = vmul.f32 %v2176, 0.6931472
      %v2178 = vlog2.pop %v2146
      %v2179 = vmul.f32 %v2178, 0.6931472
      %v2180 = vlog2.pop %v2149
      %v2181 = vmul.f32 %v2180, 0.6931472
      %v2182 = vsub.f32 %v2054, %v2151
      %v2183 = vsub.f32 %v2055, %v2153
      %v2184 = vsub.f32 %v2056, %v2155
      %v2185 = vsub.f32 %v2057, %v2157
      %v2186 = vsub.f32 %v2058, %v2159
      %v2187 = vsub.f32 %v2059, %v2161
      %v2188 = vsub.f32 %v2060, %v2163
      %v2189 = vsub.f32 %v2061, %v2165
      %v2190 = vsub.f32 %v2062, %v2167
      %v2191 = vsub.f32 %v2063, %v2169
      %v2192 = vsub.f32 %v2064, %v2171
      %v2193 = vsub.f32 %v2065, %v2173
      %v2194 = vsub.f32 %v2066, %v2175
      %v2195 = vsub.f32 %v2067, %v2177
      %v2196 = vsub.f32 %v2068, %v2179
      %v2197 = vsub.f32 %v2069, %v2181
      %2198 = vst.msk [vmem:[%s387] sm:$0xff] %vm2005, %v2182
      %2199 = vst.msk [vmem:[%s387 + $0x8] sm:$0xff] %vm2005, %v2183
      %2200 = vst.msk [vmem:[%s387 + $0x10] sm:$0xff] %vm2005, %v2184
      %2201 = vst.msk [vmem:[%s387 + $0x18] sm:$0xff] %vm2005, %v2185
      %2202 = vst.msk [vmem:[%s387 + $0x20] sm:$0xff] %vm2005, %v2186
      %2203 = vst.msk [vmem:[%s387 + $0x28] sm:$0xff] %vm2005, %v2187
      %2204 = vst.msk [vmem:[%s387 + $0x30] sm:$0xff] %vm2005, %v2188
      %2205 = vst.msk [vmem:[%s387 + $0x38] sm:$0xff] %vm2005, %v2189
      %2206 = vst.msk [vmem:[%s387 + $0x40] sm:$0xff] %vm2005, %v2190
      %2207 = vst.msk [vmem:[%s387 + $0x48] sm:$0xff] %vm2005, %v2191
      %2208 = vst.msk [vmem:[%s387 + $0x50] sm:$0xff] %vm2005, %v2192
      %2209 = vst.msk [vmem:[%s387 + $0x58] sm:$0xff] %vm2005, %v2193
      %2210 = vst.msk [vmem:[%s387 + $0x60] sm:$0xff] %vm2005, %v2194
      %2211 = vst.msk [vmem:[%s387 + $0x68] sm:$0xff] %vm2005, %v2195
      %2212 = vst.msk [vmem:[%s387 + $0x70] sm:$0xff] %vm2005, %v2196
      %2213 = vst.msk [vmem:[%s387 + $0x78] sm:$0xff] %vm2005, %v2197
      %s2214 = smul.u32 16, %s25
      %p2215 = scmp.lt.s32.totalorder %s24, 1
      %s2216 = scalar_select %p2215, %s24, 1
      %p2217 = scmp.lt.s32.totalorder %s2214, 31
      %s2218 = scalar_select %p2217, %s2214, 31
      %s2219 = smul.addr %s2216, 32
      %s2220 = sadd.s32 %s2218, %s2219
      %s2221 = smul.addr %s2220, 8
      %s2222 = scalar_lea.vmem %s9, %s2221
      // Predicated region
      $region57: #{pointnet_densecls.7} parent=55 // pred_check
        %p2223 = pneg %p253
      $region58: #{pointnet_densecls.7} parent=55 // pred_check_branch
        %2225 = sbr.rel (%p2223) target = $region60
      $region59: #{pointnet_densecls.7} parent=55 // pred_region
        %s2226 = smul.u32 16, %s25
      $region60: #{pointnet_densecls.7} parent=55 // pred_fallthru
        _
    $region56: #{pointnet_densecls.7} parent=5 // pred_fallthru
      _
    %p2227 = scmp.le.s32.totalorder 2, %s15
    // Predicated region
    $region61: #{pointnet_densecls.7} parent=5 // pred_check
      %p2228 = pneg %p2227
    $region62: #{pointnet_densecls.7} parent=5 // pred_check_branch
      %2230 = sbr.rel (%p2228) target = $region64
    $region63: #{pointnet_densecls.7} parent=5 // pred_region
      %s2231 = ssub.s32 %s15, 2
      // Predicated region
      $region65: #{pointnet_densecls.7} parent=63 // pred_check
        %p2232 = pneg %p259
      $region66: #{pointnet_densecls.7} parent=63 // pred_check_branch
        %2234 = sbr.rel (%p2232) target = $region68
      $region67: #{pointnet_densecls.7} parent=63 // pred_region
        %s2235 = smul.u32 16, %s27
        %p2236 = scmp.lt.s32.totalorder %s26, 1
        %s2237 = scalar_select %p2236, %s26, 1
        %p2238 = scmp.lt.s32.totalorder %s2235, 31
        %s2239 = scalar_select %p2238, %s2235, 31
        %s2240 = smul.addr %s2237, 32
        %s2241 = sadd.s32 %s2239, %s2240
        %s2242 = smul.addr %s2241, 8
        %s2243 = scalar_lea.vmem %s9, %s2242
      $region68: #{pointnet_densecls.7} parent=63 // pred_fallthru
        _
    $region64: #{pointnet_densecls.7} parent=5 // pred_fallthru
      _
  $region6: #{pointnet_densecls.7} parent=0 // loop_footer
    %s19 = sadd.s32 1, %s15
  $region7: #{pointnet_densecls.7} parent=0 // loop_footer_branch
    %14 = sbr.rel target = $region3
  $region8: #{pointnet_densecls.7} parent=0 // loop_exit
    _

</llo_original>
